<compile_context>
chip_gen: v5e
topology: v5e:2x2
jax: 0.10.0
libtpu: 0.0.40
codegen_flags: <defaults>
</compile_context>

<pallas_src>
import functools
import math

import jax
import jax.numpy as jnp
from jax import lax
from jax.experimental import pallas as pl
from jax.experimental.pallas import tpu as pltpu

LN_EPS = 1e-5      # PyTorch nn.LayerNorm default
D_FF = 2048        # nn.Transformer default dim_feedforward
FF_CHUNK = 512     # FFN processed in 512-lane chunks (vreg-pressure control)


# ----------------------------------------------------------------------------
# helpers
# ----------------------------------------------------------------------------
def _softmax_lastdim(s, approx=False):
    m = jnp.max(s, axis=-1, keepdims=True)
    e = jnp.exp(s - m)
    d = jnp.sum(e, axis=-1, keepdims=True)
    if approx:
        return e * pl.reciprocal(d, approx=True)   # EUP slot, otherwise idle
    return e / d


def _build_layout(app_dim, d_model, n_enc, n_dec):
    """Row offsets inside the packed (R, d_model) misc parameter slab."""
    r = {}
    off = 0
    r["sp_w0"] = off; off += 8                  # rows 0:4 valid ((4, d) bbox proj)
    r["sp_w1"] = off; off += d_model
    r["sp_w2"] = off; off += d_model
    r["app_w"] = off; off += app_dim
    r["sp_b0"] = off; off += 1
    r["sp_b1"] = off; off += 1
    r["sp_b2"] = off; off += 1
    r["app_b"] = off; off += 1
    r["null"] = off; off += 1
    r["ln_enc"] = off; off += 4 * n_enc         # (g1, b1, g2, b2) per layer
    r["ln_dec"] = off; off += 6 * n_dec         # (g1, b1, g2, b2, g3, b3)
    r["ffn_b2"] = off; off += n_enc + n_dec
    r["rows"] = ((off + 7) // 8) * 8
    return r


# ----------------------------------------------------------------------------
# the single fused kernel
# ----------------------------------------------------------------------------
def _tadn_kernel(
    bbox_t_ref, app_t_ref, bbox_d_ref, app_d_ref,      # activations
    misc_ref, attn_ref, ffn_b1_ref,                     # packed small params (VMEM)
    ffn_w1_hbm, ffn_w2_hbm,                             # big FFN weights (HBM)
    o_ref,                                              # output
    w1_buf, w2_buf, dma_sem,                            # scratch
    *, nhead, n_enc, n_dec, n_targets, layout,
):
    f32 = jnp.float32
    E = misc_ref.shape[1]                # d_model
    hd = E // nhead
    n_ffn = n_enc + n_dec
    L = layout

    # --- kick off FFN weight fetches first; they hide behind emb/attention ----
    def _ffn_copies(l):
        return (
            pltpu.make_async_copy(ffn_w1_hbm.at[l], w1_buf.at[l], dma_sem.at[0, l]),
            pltpu.make_async_copy(ffn_w2_hbm.at[l], w2_buf.at[l], dma_sem.at[1, l]),
        )

    for l in range(n_ffn):
        for cp in _ffn_copies(l):
            cp.start()

    # --- views into the packed misc slab --------------------------------------
    def row(i):
        return misc_ref[i, :]                           # (E,)

    sp_w0 = misc_ref[L["sp_w0"]:L["sp_w0"] + 4, :]       # (4, E)
    sp_w1 = misc_ref[L["sp_w1"]:L["sp_w1"] + E, :]       # (E, E)
    sp_w2 = misc_ref[L["sp_w2"]:L["sp_w2"] + E, :]       # (E, E)
    app_w = misc_ref[L["app_w"]:L["app_w"] + app_t_ref.shape[1], :]   # (app_dim, E)
    sp_b0, sp_b1, sp_b2 = row(L["sp_b0"]), row(L["sp_b1"]), row(L["sp_b2"])
    app_b = row(L["app_b"])
    null_row = row(L["null"])

    # --- embedding (spatial -> lanes 0:16, appearance -> lanes 16:32) ---------
    def embed(bbox, app):
        s = jnp.tanh(jnp.dot(bbox, sp_w0, preferred_element_type=f32) + sp_b0)
        s = jnp.tanh(jnp.dot(s, sp_w1, preferred_element_type=f32) + sp_b1)
        s = jnp.dot(s, sp_w2, preferred_element_type=f32) + sp_b2
        a = jnp.dot(app, app_w, preferred_element_type=f32) + app_b
        return s + a                                    # disjoint lanes => free concat

    x = embed(bbox_t_ref[...], app_t_ref[...])          # (n_targets + 1, E)
    ridx = lax.broadcasted_iota(jnp.int32, x.shape, 0)
    x = jnp.where(ridx == n_targets, null_row, x)       # write null-target row
    y = embed(bbox_d_ref[...], app_d_ref[...])          # (n_detections, E)

    # --- LayerNorm -------------------------------------------------------------
    def ln(z, g_row):
        g, b = row(g_row), row(g_row + 1)
        mean = jnp.mean(z, axis=-1, keepdims=True)
        var = jnp.mean((z - mean) ** 2, axis=-1, keepdims=True)
        return (z - mean) * lax.rsqrt(var + LN_EPS) * g + b

    # --- multi-head attention: fused Q / KV projections, per-head fold --------
    scale = 1.0 / math.sqrt(hd)

    def mha(xq, xkv, blk):
        wq = attn_ref[blk, 0:E, 0:E]                     # (E, E)
        wkv = attn_ref[blk, 0:E, E:3 * E]                # (E, 2E)
        bq = attn_ref[blk, E, 0:E]
        bkv = attn_ref[blk, E, E:3 * E]
        bo = attn_ref[blk, E, 3 * E:4 * E]
        q_all = jnp.dot(xq, wq, preferred_element_type=f32) + bq       # (Lq, E)
        kv_all = jnp.dot(xkv, wkv, preferred_element_type=f32) + bkv   # (Lk, 2E)
        out = None
        for h in range(nhead):                           # static (=2)
            qh = q_all[:, h * hd:(h + 1) * hd]
            kh = kv_all[:, h * hd:(h + 1) * hd]
            vh = kv_all[:, E + h * hd:E + (h + 1) * hd]
            s = lax.dot_general(qh, kh, (((1,), (1,)), ((), ())),
                                preferred_element_type=f32) * scale
            p = _softmax_lastdim(s, approx=True)
            ctx = jnp.dot(p, vh, preferred_element_type=f32)            # (Lq, hd)
            wo_h = attn_ref[blk, h * hd:(h + 1) * hd, 3 * E:4 * E]      # (hd, E)
            yh = jnp.dot(ctx, wo_h, preferred_element_type=f32)
            out = yh if out is None else out + yh
        return out + bo

    # --- chunked feed-forward (bf16 operands, f32 accumulation) ---------------
    def ffn(z, idx):
        for cp in _ffn_copies(idx):                      # wait just-in-time
            cp.wait()
        zb = z.astype(jnp.bfloat16)
        acc = jnp.zeros(z.shape, f32)
        for c in range(0, D_FF, FF_CHUNK):
            w1c = w1_buf[idx, :, c:c + FF_CHUNK]         # (E, chunk) bf16
            h = jnp.dot(zb, w1c, preferred_element_type=f32)
            h = jnp.maximum(h + ffn_b1_ref[idx, c:c + FF_CHUNK], 0.0)
            w2c = w2_buf[idx, :, c:c + FF_CHUNK]         # (E, chunk) bf16 (= W2 slice)
            acc = acc + lax.dot_general(h.astype(jnp.bfloat16), w2c,
                                        (((1,), (1,)), ((), ())),
                                        preferred_element_type=f32)
        return acc + row(L["ffn_b2"] + idx)

    # --- encoder over targets (+ null target) ----------------------------------
    for l in range(n_enc):
        x = ln(x + mha(x, x, blk=l), L["ln_enc"] + 4 * l)
        x = ln(x + ffn(x, idx=l), L["ln_enc"] + 4 * l + 2)

    # --- decoder over detections with encoder memory ---------------------------
    for l in range(n_dec):
        base = L["ln_dec"] + 6 * l
        y = ln(y + mha(y, y, blk=n_enc + 2 * l), base)
        y = ln(y + mha(y, x, blk=n_enc + 2 * l + 1), base + 2)
        y = ln(y + ffn(y, idx=n_enc + l), base + 4)

    # --- scaled-dot-product similarity + exact row softmax ---------------------
    sim = lax.dot_general(y, x, (((1,), (1,)), ((), ())),
                          preferred_element_type=f32) * (1.0 / math.sqrt(E))
    o_ref[...] = _softmax_lastdim(sim, approx=False)


# ----------------------------------------------------------------------------
# deterministic parameter construction (PyTorch __init__ shapes / layout)
# ----------------------------------------------------------------------------
def init_params(key, app_dim, app_emb_dim, spatial_emb_dim, nhead,
                n_enc, n_dec, d_ff=D_FF):
    d_model = app_emb_dim + spatial_emb_dim
    keys = iter(jax.random.split(key, 256))

    def w(shape):
        scale = 1.0 / math.sqrt(shape[-1])
        return jax.random.uniform(next(keys), shape, jnp.float32, -1.0, 1.0) * scale

    def attn():
        return {
            "in_proj_weight": w((3 * d_model, d_model)),
            "in_proj_bias": w((3 * d_model,)),
            "out_proj_weight": w((d_model, d_model)),
            "out_proj_bias": w((d_model,)),
        }

    def ln():
        return (jnp.ones((d_model,), jnp.float32), jnp.zeros((d_model,), jnp.float32))

    params = {
        "spatial": [
            (w((spatial_emb_dim // 4, 4)), w((spatial_emb_dim // 4,))),
            (w((spatial_emb_dim // 2, spatial_emb_dim // 4)), w((spatial_emb_dim // 2,))),
            (w((spatial_emb_dim, spatial_emb_dim // 2)), w((spatial_emb_dim,))),
        ],
        "app": (w((app_emb_dim, app_dim)), w((app_emb_dim,))),
        "null_target": w((1, d_model)),          # nn.Embedding(1, d_model)
        "nhead": nhead,
        "d_model": d_model,
    }
    params["encoder"] = [
        {"self_attn": attn(), "norm1": ln(),
         "ffn": (w((d_ff, d_model)), w((d_ff,)), w((d_model, d_ff)), w((d_model,))),
         "norm2": ln()}
        for _ in range(n_enc)
    ]
    params["decoder"] = [
        {"self_attn": attn(), "norm1": ln(),
         "cross_attn": attn(), "norm2": ln(),
         "ffn": (w((d_ff, d_model)), w((d_ff,)), w((d_model, d_ff)), w((d_model,))),
         "norm3": ln()}
        for _ in range(n_dec)
    ]
    return params


# ----------------------------------------------------------------------------
# one-time layout conversion: PyTorch layout -> packed kernel slabs
# ----------------------------------------------------------------------------
def preprocess_params(params):
    f32 = jnp.float32
    nhead = params["nhead"]
    E = params["d_model"]
    enc, dec = params["encoder"], params["decoder"]
    n_enc, n_dec = len(enc), len(dec)
    aw, ab = params["app"]
    app_emb, app_dim = aw.shape
    sp_dim = E - app_emb

    lay = _build_layout(app_dim, E, n_enc, n_dec)

    # --- misc slab: spatial/app MLP (lane-padded), null, LayerNorms, b2 -------
    misc = jnp.zeros((lay["rows"], E), f32)
    (sw0, sb0), (sw1, sb1), (sw2, sb2) = params["spatial"]
    misc = misc.at[lay["sp_w0"]:lay["sp_w0"] + sw0.shape[1], 0:sw0.shape[0]].set(sw0.T)
    misc = misc.at[lay["sp_w1"]:lay["sp_w1"] + sw1.shape[1], 0:sw1.shape[0]].set(sw1.T)
    misc = misc.at[lay["sp_w2"]:lay["sp_w2"] + sw2.shape[1], 0:sw2.shape[0]].set(sw2.T)
    misc = misc.at[lay["app_w"]:lay["app_w"] + app_dim, sp_dim:sp_dim + app_emb].set(aw.T)
    misc = misc.at[lay["sp_b0"], 0:sb0.shape[0]].set(sb0)
    misc = misc.at[lay["sp_b1"], 0:sb1.shape[0]].set(sb1)
    misc = misc.at[lay["sp_b2"], 0:sb2.shape[0]].set(sb2)
    misc = misc.at[lay["app_b"], sp_dim:sp_dim + app_emb].set(ab)
    misc = misc.at[lay["null"], :].set(params["null_target"][0])

    for l in range(n_enc):
        r = lay["ln_enc"] + 4 * l
        misc = misc.at[r + 0].set(enc[l]["norm1"][0])
        misc = misc.at[r + 1].set(enc[l]["norm1"][1])
        misc = misc.at[r + 2].set(enc[l]["norm2"][0])
        misc = misc.at[r + 3].set(enc[l]["norm2"][1])
    for l in range(n_dec):
        r = lay["ln_dec"] + 6 * l
        for i, k in enumerate(("norm1", "norm2", "norm3")):
            misc = misc.at[r + 2 * i].set(dec[l][k][0])
            misc = misc.at[r + 2 * i + 1].set(dec[l][k][1])

    ffn_layers = [enc[l]["ffn"] for l in range(n_enc)] + [dec[l]["ffn"] for l in range(n_dec)]
    for i, f in enumerate(ffn_layers):
        misc = misc.at[lay["ffn_b2"] + i].set(f[3])

    # --- attention slab: (n_blocks, E+8, 4E) = [Wq | Wkv | Wo] + bias row ------
    def attn_block(p):
        W, B = p["in_proj_weight"], p["in_proj_bias"]
        blk = jnp.zeros((E + 8, 4 * E), f32)
        blk = blk.at[0:E, 0:E].set(W[0:E].T)                      # Wq (in, out)
        blk = blk.at[0:E, E:2 * E].set(W[E:2 * E].T)              # Wk
        blk = blk.at[0:E, 2 * E:3 * E].set(W[2 * E:3 * E].T)      # Wv
        blk = blk.at[0:E, 3 * E:4 * E].set(p["out_proj_weight"].T)  # Wo (concat-head, out)
        blk = blk.at[E, 0:3 * E].set(B)                           # bq | bk | bv
        blk = blk.at[E, 3 * E:4 * E].set(p["out_proj_bias"])      # bo
        return blk

    blocks = [attn_block(enc[l]["self_attn"]) for l in range(n_enc)]
    for l in range(n_dec):
        blocks.append(attn_block(dec[l]["self_attn"]))
        blocks.append(attn_block(dec[l]["cross_attn"]))
    attn_slab = jnp.stack(blocks)                                  # (6, E+8, 4E)

    # --- big FFN weights: bf16, stay in HBM, kernel DMAs them itself ----------
    ffn_w1 = jnp.stack([f[0].T for f in ffn_layers]).astype(jnp.bfloat16)  # (n, E, D_FF)
    ffn_w2 = jnp.stack([f[2] for f in ffn_layers]).astype(jnp.bfloat16)    # (n, E, D_FF)
    ffn_b1 = jnp.stack([f[1] for f in ffn_layers]).astype(f32)             # (n, D_FF)

    return {"nhead": nhead, "n_enc": n_enc, "n_dec": n_dec, "d_model": E,
            "layout": lay, "misc": misc, "attn": attn_slab,
            "ffn_b1": ffn_b1, "ffn_w1": ffn_w1, "ffn_w2": ffn_w2}


# ----------------------------------------------------------------------------
# forward wrapper
# ----------------------------------------------------------------------------
def tadn_forward(kp, targets, track_app_vec, detections, det_app_vectors):
    # TODO(synk): the PyTorch forward's tracker-object attribute extraction and
    # the `len(all_targets) == 0 -> return []` early exit are host-side control
    # flow with no kernel equivalent; this wrapper takes the extracted tensors.
    nt = targets.shape[0]
    nd = detections.shape[0]
    d_model = kp["d_model"]
    n_ffn = kp["n_enc"] + kp["n_dec"]

    # one dummy row for the null-target slot (rewritten inside the kernel)
    bbox_t = jnp.concatenate([targets, jnp.zeros((1, 4), targets.dtype)], axis=0)
    app_t = jnp.concatenate(
        [track_app_vec,
         jnp.zeros((1, track_app_vec.shape[1]), track_app_vec.dtype)], axis=0)

    kern = functools.partial(
        _tadn_kernel, nhead=kp["nhead"], n_enc=kp["n_enc"], n_dec=kp["n_dec"],
        n_targets=nt, layout=kp["layout"])

    param_bytes = sum(int(kp[k].nbytes) for k in ("misc", "attn", "ffn_b1",
                                                  "ffn_w1", "ffn_w2"))
    act_bytes = int(bbox_t.nbytes + app_t.nbytes + detections.nbytes
                    + det_app_vectors.nbytes)
    ffn_flops = 4 * D_FF * d_model * (kp["n_enc"] * (nt + 1) + kp["n_dec"] * nd)
    cost = pl.CostEstimate(flops=int(ffn_flops * 1.15),
                           transcendentals=4096,
                           bytes_accessed=param_bytes + act_bytes)

    def vmem():
        return pl.BlockSpec(memory_space=pltpu.MemorySpace.VMEM)

    return pl.pallas_call(
        kern,
        out_shape=jax.ShapeDtypeStruct((nd, nt + 1), jnp.float32),
        in_specs=[vmem(), vmem(), vmem(), vmem(),          # bbox_t, app_t, bbox_d, app_d
                  vmem(), vmem(), vmem(),                  # misc, attn, ffn_b1
                  pl.BlockSpec(memory_space=pl.ANY),       # ffn_w1 (stays in HBM)
                  pl.BlockSpec(memory_space=pl.ANY)],      # ffn_w2 (stays in HBM)
        out_specs=vmem(),
        scratch_shapes=[
            pltpu.VMEM((n_ffn, d_model, D_FF), jnp.bfloat16),   # w1 staging
            pltpu.VMEM((n_ffn, d_model, D_FF), jnp.bfloat16),   # w2 staging
            pltpu.SemaphoreType.DMA((2, n_ffn)),
        ],
        cost_estimate=cost,
    )(bbox_t, app_t, detections, det_app_vectors,
      kp["misc"], kp["attn"], kp["ffn_b1"], kp["ffn_w1"], kp["ffn_w2"])


if __name__ == "__main__":
    APP_DIM = 64
    APP_EMB_DIM = 16
    SPATIAL_EMB_DIM = 16          # d_model = 32
    NHEAD = 2
    NUM_TARGETS = 5
    NUM_DETECTIONS = 6

    params = init_params(jax.random.PRNGKey(42), APP_DIM, APP_EMB_DIM,
                         SPATIAL_EMB_DIM, NHEAD, n_enc=2, n_dec=2)
    kp = preprocess_params(params)

    key = jax.random.PRNGKey(0)
    k1, k2, k3, k4 = jax.random.split(key, 4)
    targets = jax.random.uniform(k1, (NUM_TARGETS, 4), jnp.float32)
    track_app_vec = jax.random.normal(k2, (NUM_TARGETS, APP_DIM), jnp.float32)
    detections = jax.random.uniform(k3, (NUM_DETECTIONS, 4), jnp.float32)
    det_app_vectors = jax.random.normal(k4, (NUM_DETECTIONS, APP_DIM), jnp.float32)

    fwd = jax.jit(functools.partial(tadn_forward, kp))
    sim = jax.block_until_ready(fwd(targets, track_app_vec, detections, det_app_vectors))

    assert sim.shape == (NUM_DETECTIONS, NUM_TARGETS + 1), sim.shape
    assert bool(jnp.all(jnp.isfinite(sim)))
    assert bool(jnp.allclose(jnp.sum(sim, axis=-1), 1.0, atol=1e-5))
    print("KERNEL_OK")
</pallas_src>

<mosaic_0001>
module attributes {stable_mosaic.version = 11 : i64} {
  func.func @_tadn_kernel(%arg0: memref<6x4xf32, #tpu.memory_space<vmem>>, %arg1: memref<6x64xf32, #tpu.memory_space<vmem>>, %arg2: memref<6x4xf32, #tpu.memory_space<vmem>>, %arg3: memref<6x64xf32, #tpu.memory_space<vmem>>, %arg4: memref<168x32xf32, #tpu.memory_space<vmem>>, %arg5: memref<6x40x128xf32, #tpu.memory_space<vmem>>, %arg6: memref<4x2048xf32, #tpu.memory_space<vmem>>, %arg7: memref<4x32x2048xbf16, #tpu.memory_space<any>>, %arg8: memref<4x32x2048xbf16, #tpu.memory_space<any>>, %arg9: memref<6x6xf32, #tpu.memory_space<vmem>>, %arg10: memref<4x32x2048xbf16, #tpu.memory_space<vmem>>, %arg11: memref<4x32x2048xbf16, #tpu.memory_space<vmem>>, %arg12: memref<2x4x!tpu.dma_semaphore, #tpu.memory_space<semaphore_mem>>) attributes {dimension_semantics = [], scalar_prefetch = 0 : i64, scratch_operands = 3 : i64, tpu.core_type = #tpu.core_type<tc>} {
    %c0_i32 = arith.constant 0 : i32
    %c0_i32_0 = arith.constant 0 : i32
    %c0_i32_1 = arith.constant 0 : i32
    %c0_i32_2 = arith.constant 0 : i32
    %c0_i32_3 = arith.constant 0 : i32
    %c0_i32_4 = arith.constant 0 : i32
    %0 = tpu.memref_slice %arg7[%c0_i32, %c0_i32_3, %c0_i32_4] : memref<4x32x2048xbf16, #tpu.memory_space<any>> -> memref<1x32x2048xbf16, #tpu.memory_space<any>>
    %1 = tpu.memref_squeeze %0 : memref<1x32x2048xbf16, #tpu.memory_space<any>> -> memref<32x2048xbf16, #tpu.memory_space<any>>
    %c0_i32_5 = arith.constant 0 : i32
    %c0_i32_6 = arith.constant 0 : i32
    %2 = tpu.memref_slice %arg10[%c0_i32_0, %c0_i32_5, %c0_i32_6] : memref<4x32x2048xbf16, #tpu.memory_space<vmem>> -> memref<1x32x2048xbf16, #tpu.memory_space<vmem>>
    %3 = tpu.memref_squeeze %2 : memref<1x32x2048xbf16, #tpu.memory_space<vmem>> -> memref<32x2048xbf16, #tpu.memory_space<vmem>>
    %4 = tpu.memref_slice %arg12[%c0_i32_1, %c0_i32_2] : memref<2x4x!tpu.dma_semaphore, #tpu.memory_space<semaphore_mem>> -> memref<1x1x!tpu.dma_semaphore, #tpu.memory_space<semaphore_mem>>
    %5 = tpu.memref_squeeze %4 : memref<1x1x!tpu.dma_semaphore, #tpu.memory_space<semaphore_mem>> -> memref<!tpu.dma_semaphore, #tpu.memory_space<semaphore_mem>>
    tpu.enqueue_dma source(%1 : memref<32x2048xbf16, #tpu.memory_space<any>>) target(%3 : memref<32x2048xbf16, #tpu.memory_space<vmem>>) target_semaphore(%5 : memref<!tpu.dma_semaphore, #tpu.memory_space<semaphore_mem>>)
    %c0_i32_7 = arith.constant 0 : i32
    %c0_i32_8 = arith.constant 0 : i32
    %c1_i32 = arith.constant 1 : i32
    %c0_i32_9 = arith.constant 0 : i32
    %c0_i32_10 = arith.constant 0 : i32
    %c0_i32_11 = arith.constant 0 : i32
    %6 = tpu.memref_slice %arg8[%c0_i32_7, %c0_i32_10, %c0_i32_11] : memref<4x32x2048xbf16, #tpu.memory_space<any>> -> memref<1x32x2048xbf16, #tpu.memory_space<any>>
    %7 = tpu.memref_squeeze %6 : memref<1x32x2048xbf16, #tpu.memory_space<any>> -> memref<32x2048xbf16, #tpu.memory_space<any>>
    %c0_i32_12 = arith.constant 0 : i32
    %c0_i32_13 = arith.constant 0 : i32
    %8 = tpu.memref_slice %arg11[%c0_i32_8, %c0_i32_12, %c0_i32_13] : memref<4x32x2048xbf16, #tpu.memory_space<vmem>> -> memref<1x32x2048xbf16, #tpu.memory_space<vmem>>
    %9 = tpu.memref_squeeze %8 : memref<1x32x2048xbf16, #tpu.memory_space<vmem>> -> memref<32x2048xbf16, #tpu.memory_space<vmem>>
    %10 = tpu.memref_slice %arg12[%c1_i32, %c0_i32_9] : memref<2x4x!tpu.dma_semaphore, #tpu.memory_space<semaphore_mem>> -> memref<1x1x!tpu.dma_semaphore, #tpu.memory_space<semaphore_mem>>
    %11 = tpu.memref_squeeze %10 : memref<1x1x!tpu.dma_semaphore, #tpu.memory_space<semaphore_mem>> -> memref<!tpu.dma_semaphore, #tpu.memory_space<semaphore_mem>>
    tpu.enqueue_dma source(%7 : memref<32x2048xbf16, #tpu.memory_space<any>>) target(%9 : memref<32x2048xbf16, #tpu.memory_space<vmem>>) target_semaphore(%11 : memref<!tpu.dma_semaphore, #tpu.memory_space<semaphore_mem>>)
    %c1_i32_14 = arith.constant 1 : i32
    %c1_i32_15 = arith.constant 1 : i32
    %c0_i32_16 = arith.constant 0 : i32
    %c1_i32_17 = arith.constant 1 : i32
    %c0_i32_18 = arith.constant 0 : i32
    %c0_i32_19 = arith.constant 0 : i32
    %12 = tpu.memref_slice %arg7[%c1_i32_14, %c0_i32_18, %c0_i32_19] : memref<4x32x2048xbf16, #tpu.memory_space<any>> -> memref<1x32x2048xbf16, #tpu.memory_space<any>>
    %13 = tpu.memref_squeeze %12 : memref<1x32x2048xbf16, #tpu.memory_space<any>> -> memref<32x2048xbf16, #tpu.memory_space<any>>
    %c0_i32_20 = arith.constant 0 : i32
    %c0_i32_21 = arith.constant 0 : i32
    %14 = tpu.memref_slice %arg10[%c1_i32_15, %c0_i32_20, %c0_i32_21] : memref<4x32x2048xbf16, #tpu.memory_space<vmem>> -> memref<1x32x2048xbf16, #tpu.memory_space<vmem>>
    %15 = tpu.memref_squeeze %14 : memref<1x32x2048xbf16, #tpu.memory_space<vmem>> -> memref<32x2048xbf16, #tpu.memory_space<vmem>>
    %16 = tpu.memref_slice %arg12[%c0_i32_16, %c1_i32_17] : memref<2x4x!tpu.dma_semaphore, #tpu.memory_space<semaphore_mem>> -> memref<1x1x!tpu.dma_semaphore, #tpu.memory_space<semaphore_mem>>
    %17 = tpu.memref_squeeze %16 : memref<1x1x!tpu.dma_semaphore, #tpu.memory_space<semaphore_mem>> -> memref<!tpu.dma_semaphore, #tpu.memory_space<semaphore_mem>>
    tpu.enqueue_dma source(%13 : memref<32x2048xbf16, #tpu.memory_space<any>>) target(%15 : memref<32x2048xbf16, #tpu.memory_space<vmem>>) target_semaphore(%17 : memref<!tpu.dma_semaphore, #tpu.memory_space<semaphore_mem>>)
    %c1_i32_22 = arith.constant 1 : i32
    %c1_i32_23 = arith.constant 1 : i32
    %c1_i32_24 = arith.constant 1 : i32
    %c1_i32_25 = arith.constant 1 : i32
    %c0_i32_26 = arith.constant 0 : i32
    %c0_i32_27 = arith.constant 0 : i32
    %18 = tpu.memref_slice %arg8[%c1_i32_22, %c0_i32_26, %c0_i32_27] : memref<4x32x2048xbf16, #tpu.memory_space<any>> -> memref<1x32x2048xbf16, #tpu.memory_space<any>>
    %19 = tpu.memref_squeeze %18 : memref<1x32x2048xbf16, #tpu.memory_space<any>> -> memref<32x2048xbf16, #tpu.memory_space<any>>
    %c0_i32_28 = arith.constant 0 : i32
    %c0_i32_29 = arith.constant 0 : i32
    %20 = tpu.memref_slice %arg11[%c1_i32_23, %c0_i32_28, %c0_i32_29] : memref<4x32x2048xbf16, #tpu.memory_space<vmem>> -> memref<1x32x2048xbf16, #tpu.memory_space<vmem>>
    %21 = tpu.memref_squeeze %20 : memref<1x32x2048xbf16, #tpu.memory_space<vmem>> -> memref<32x2048xbf16, #tpu.memory_space<vmem>>
    %22 = tpu.memref_slice %arg12[%c1_i32_24, %c1_i32_25] : memref<2x4x!tpu.dma_semaphore, #tpu.memory_space<semaphore_mem>> -> memref<1x1x!tpu.dma_semaphore, #tpu.memory_space<semaphore_mem>>
    %23 = tpu.memref_squeeze %22 : memref<1x1x!tpu.dma_semaphore, #tpu.memory_space<semaphore_mem>> -> memref<!tpu.dma_semaphore, #tpu.memory_space<semaphore_mem>>
    tpu.enqueue_dma source(%19 : memref<32x2048xbf16, #tpu.memory_space<any>>) target(%21 : memref<32x2048xbf16, #tpu.memory_space<vmem>>) target_semaphore(%23 : memref<!tpu.dma_semaphore, #tpu.memory_space<semaphore_mem>>)
    %c2_i32 = arith.constant 2 : i32
    %c2_i32_30 = arith.constant 2 : i32
    %c0_i32_31 = arith.constant 0 : i32
    %c2_i32_32 = arith.constant 2 : i32
    %c0_i32_33 = arith.constant 0 : i32
    %c0_i32_34 = arith.constant 0 : i32
    %24 = tpu.memref_slice %arg7[%c2_i32, %c0_i32_33, %c0_i32_34] : memref<4x32x2048xbf16, #tpu.memory_space<any>> -> memref<1x32x2048xbf16, #tpu.memory_space<any>>
    %25 = tpu.memref_squeeze %24 : memref<1x32x2048xbf16, #tpu.memory_space<any>> -> memref<32x2048xbf16, #tpu.memory_space<any>>
    %c0_i32_35 = arith.constant 0 : i32
    %c0_i32_36 = arith.constant 0 : i32
    %26 = tpu.memref_slice %arg10[%c2_i32_30, %c0_i32_35, %c0_i32_36] : memref<4x32x2048xbf16, #tpu.memory_space<vmem>> -> memref<1x32x2048xbf16, #tpu.memory_space<vmem>>
    %27 = tpu.memref_squeeze %26 : memref<1x32x2048xbf16, #tpu.memory_space<vmem>> -> memref<32x2048xbf16, #tpu.memory_space<vmem>>
    %28 = tpu.memref_slice %arg12[%c0_i32_31, %c2_i32_32] : memref<2x4x!tpu.dma_semaphore, #tpu.memory_space<semaphore_mem>> -> memref<1x1x!tpu.dma_semaphore, #tpu.memory_space<semaphore_mem>>
    %29 = tpu.memref_squeeze %28 : memref<1x1x!tpu.dma_semaphore, #tpu.memory_space<semaphore_mem>> -> memref<!tpu.dma_semaphore, #tpu.memory_space<semaphore_mem>>
    tpu.enqueue_dma source(%25 : memref<32x2048xbf16, #tpu.memory_space<any>>) target(%27 : memref<32x2048xbf16, #tpu.memory_space<vmem>>) target_semaphore(%29 : memref<!tpu.dma_semaphore, #tpu.memory_space<semaphore_mem>>)
    %c2_i32_37 = arith.constant 2 : i32
    %c2_i32_38 = arith.constant 2 : i32
    %c1_i32_39 = arith.constant 1 : i32
    %c2_i32_40 = arith.constant 2 : i32
    %c0_i32_41 = arith.constant 0 : i32
    %c0_i32_42 = arith.constant 0 : i32
    %30 = tpu.memref_slice %arg8[%c2_i32_37, %c0_i32_41, %c0_i32_42] : memref<4x32x2048xbf16, #tpu.memory_space<any>> -> memref<1x32x2048xbf16, #tpu.memory_space<any>>
    %31 = tpu.memref_squeeze %30 : memref<1x32x2048xbf16, #tpu.memory_space<any>> -> memref<32x2048xbf16, #tpu.memory_space<any>>
    %c0_i32_43 = arith.constant 0 : i32
    %c0_i32_44 = arith.constant 0 : i32
    %32 = tpu.memref_slice %arg11[%c2_i32_38, %c0_i32_43, %c0_i32_44] : memref<4x32x2048xbf16, #tpu.memory_space<vmem>> -> memref<1x32x2048xbf16, #tpu.memory_space<vmem>>
    %33 = tpu.memref_squeeze %32 : memref<1x32x2048xbf16, #tpu.memory_space<vmem>> -> memref<32x2048xbf16, #tpu.memory_space<vmem>>
    %34 = tpu.memref_slice %arg12[%c1_i32_39, %c2_i32_40] : memref<2x4x!tpu.dma_semaphore, #tpu.memory_space<semaphore_mem>> -> memref<1x1x!tpu.dma_semaphore, #tpu.memory_space<semaphore_mem>>
    %35 = tpu.memref_squeeze %34 : memref<1x1x!tpu.dma_semaphore, #tpu.memory_space<semaphore_mem>> -> memref<!tpu.dma_semaphore, #tpu.memory_space<semaphore_mem>>
    tpu.enqueue_dma source(%31 : memref<32x2048xbf16, #tpu.memory_space<any>>) target(%33 : memref<32x2048xbf16, #tpu.memory_space<vmem>>) target_semaphore(%35 : memref<!tpu.dma_semaphore, #tpu.memory_space<semaphore_mem>>)
    %c3_i32 = arith.constant 3 : i32
    %c3_i32_45 = arith.constant 3 : i32
    %c0_i32_46 = arith.constant 0 : i32
    %c3_i32_47 = arith.constant 3 : i32
    %c0_i32_48 = arith.constant 0 : i32
    %c0_i32_49 = arith.constant 0 : i32
    %36 = tpu.memref_slice %arg7[%c3_i32, %c0_i32_48, %c0_i32_49] : memref<4x32x2048xbf16, #tpu.memory_space<any>> -> memref<1x32x2048xbf16, #tpu.memory_space<any>>
    %37 = tpu.memref_squeeze %36 : memref<1x32x2048xbf16, #tpu.memory_space<any>> -> memref<32x2048xbf16, #tpu.memory_space<any>>
    %c0_i32_50 = arith.constant 0 : i32
    %c0_i32_51 = arith.constant 0 : i32
    %38 = tpu.memref_slice %arg10[%c3_i32_45, %c0_i32_50, %c0_i32_51] : memref<4x32x2048xbf16, #tpu.memory_space<vmem>> -> memref<1x32x2048xbf16, #tpu.memory_space<vmem>>
    %39 = tpu.memref_squeeze %38 : memref<1x32x2048xbf16, #tpu.memory_space<vmem>> -> memref<32x2048xbf16, #tpu.memory_space<vmem>>
    %40 = tpu.memref_slice %arg12[%c0_i32_46, %c3_i32_47] : memref<2x4x!tpu.dma_semaphore, #tpu.memory_space<semaphore_mem>> -> memref<1x1x!tpu.dma_semaphore, #tpu.memory_space<semaphore_mem>>
    %41 = tpu.memref_squeeze %40 : memref<1x1x!tpu.dma_semaphore, #tpu.memory_space<semaphore_mem>> -> memref<!tpu.dma_semaphore, #tpu.memory_space<semaphore_mem>>
    tpu.enqueue_dma source(%37 : memref<32x2048xbf16, #tpu.memory_space<any>>) target(%39 : memref<32x2048xbf16, #tpu.memory_space<vmem>>) target_semaphore(%41 : memref<!tpu.dma_semaphore, #tpu.memory_space<semaphore_mem>>)
    %c3_i32_52 = arith.constant 3 : i32
    %c3_i32_53 = arith.constant 3 : i32
    %c1_i32_54 = arith.constant 1 : i32
    %c3_i32_55 = arith.constant 3 : i32
    %c0_i32_56 = arith.constant 0 : i32
    %c0_i32_57 = arith.constant 0 : i32
    %42 = tpu.memref_slice %arg8[%c3_i32_52, %c0_i32_56, %c0_i32_57] : memref<4x32x2048xbf16, #tpu.memory_space<any>> -> memref<1x32x2048xbf16, #tpu.memory_space<any>>
    %43 = tpu.memref_squeeze %42 : memref<1x32x2048xbf16, #tpu.memory_space<any>> -> memref<32x2048xbf16, #tpu.memory_space<any>>
    %c0_i32_58 = arith.constant 0 : i32
    %c0_i32_59 = arith.constant 0 : i32
    %44 = tpu.memref_slice %arg11[%c3_i32_53, %c0_i32_58, %c0_i32_59] : memref<4x32x2048xbf16, #tpu.memory_space<vmem>> -> memref<1x32x2048xbf16, #tpu.memory_space<vmem>>
    %45 = tpu.memref_squeeze %44 : memref<1x32x2048xbf16, #tpu.memory_space<vmem>> -> memref<32x2048xbf16, #tpu.memory_space<vmem>>
    %46 = tpu.memref_slice %arg12[%c1_i32_54, %c3_i32_55] : memref<2x4x!tpu.dma_semaphore, #tpu.memory_space<semaphore_mem>> -> memref<1x1x!tpu.dma_semaphore, #tpu.memory_space<semaphore_mem>>
    %47 = tpu.memref_squeeze %46 : memref<1x1x!tpu.dma_semaphore, #tpu.memory_space<semaphore_mem>> -> memref<!tpu.dma_semaphore, #tpu.memory_space<semaphore_mem>>
    tpu.enqueue_dma source(%43 : memref<32x2048xbf16, #tpu.memory_space<any>>) target(%45 : memref<32x2048xbf16, #tpu.memory_space<vmem>>) target_semaphore(%47 : memref<!tpu.dma_semaphore, #tpu.memory_space<semaphore_mem>>)
    %c0 = arith.constant 0 : index
    %c0_60 = arith.constant 0 : index
    %48 = vector.load %arg4[%c0, %c0_60] : memref<168x32xf32, #tpu.memory_space<vmem>>, vector<4x32xf32>
    %c8 = arith.constant 8 : index
    %c0_61 = arith.constant 0 : index
    %49 = vector.load %arg4[%c8, %c0_61] : memref<168x32xf32, #tpu.memory_space<vmem>>, vector<32x32xf32>
    %c40 = arith.constant 40 : index
    %c0_62 = arith.constant 0 : index
    %50 = vector.load %arg4[%c40, %c0_62] : memref<168x32xf32, #tpu.memory_space<vmem>>, vector<32x32xf32>
    %c72 = arith.constant 72 : index
    %c0_63 = arith.constant 0 : index
    %51 = vector.load %arg4[%c72, %c0_63] : memref<168x32xf32, #tpu.memory_space<vmem>>, vector<64x32xf32>
    %c136 = arith.constant 136 : index
    %c0_64 = arith.constant 0 : index
    %52 = vector.load %arg4[%c136, %c0_64] : memref<168x32xf32, #tpu.memory_space<vmem>>, vector<1x32xf32>
    %53 = vector.shape_cast %52 : vector<1x32xf32> to vector<32xf32>
    %c137 = arith.constant 137 : index
    %c0_65 = arith.constant 0 : index
    %54 = vector.load %arg4[%c137, %c0_65] : memref<168x32xf32, #tpu.memory_space<vmem>>, vector<1x32xf32>
    %55 = vector.shape_cast %54 : vector<1x32xf32> to vector<32xf32>
    %c138 = arith.constant 138 : index
    %c0_66 = arith.constant 0 : index
    %56 = vector.load %arg4[%c138, %c0_66] : memref<168x32xf32, #tpu.memory_space<vmem>>, vector<1x32xf32>
    %57 = vector.shape_cast %56 : vector<1x32xf32> to vector<32xf32>
    %c139 = arith.constant 139 : index
    %c0_67 = arith.constant 0 : index
    %58 = vector.load %arg4[%c139, %c0_67] : memref<168x32xf32, #tpu.memory_space<vmem>>, vector<1x32xf32>
    %59 = vector.shape_cast %58 : vector<1x32xf32> to vector<32xf32>
    %c140 = arith.constant 140 : index
    %c0_68 = arith.constant 0 : index
    %60 = vector.load %arg4[%c140, %c0_68] : memref<168x32xf32, #tpu.memory_space<vmem>>, vector<1x32xf32>
    %61 = vector.shape_cast %60 : vector<1x32xf32> to vector<32xf32>
    %c0_69 = arith.constant 0 : index
    %c0_70 = arith.constant 0 : index
    %62 = vector.load %arg0[%c0_69, %c0_70] : memref<6x4xf32, #tpu.memory_space<vmem>>, vector<6x4xf32>
    %c0_71 = arith.constant 0 : index
    %c0_72 = arith.constant 0 : index
    %63 = vector.load %arg1[%c0_71, %c0_72] : memref<6x64xf32, #tpu.memory_space<vmem>>, vector<6x64xf32>
    %cst = arith.constant dense<0.000000e+00> : vector<6x32xf32>
    %64 = tpu.matmul %62, %48, %cst {dimension_numbers = #tpu.dot_dimension_numbers<[1], [0], [0], [1], [0, 0, 1, 1], [], []>} : vector<6x4xf32>, vector<4x32xf32>, vector<6x32xf32> -> vector<6x32xf32>
    %65 = vector.shape_cast %53 : vector<32xf32> to vector<1x32xf32>
    %66 = vector.broadcast %65 : vector<1x32xf32> to vector<6x32xf32>
    %67 = arith.addf %64, %66 : vector<6x32xf32>
    %68 = math.tanh %67 : vector<6x32xf32>
    %cst_73 = arith.constant dense<0.000000e+00> : vector<6x32xf32>
    %69 = tpu.matmul %68, %49, %cst_73 {dimension_numbers = #tpu.dot_dimension_numbers<[1], [0], [0], [1], [0, 0, 1, 1], [], []>} : vector<6x32xf32>, vector<32x32xf32>, vector<6x32xf32> -> vector<6x32xf32>
    %70 = vector.shape_cast %55 : vector<32xf32> to vector<1x32xf32>
    %71 = vector.broadcast %70 : vector<1x32xf32> to vector<6x32xf32>
    %72 = arith.addf %69, %71 : vector<6x32xf32>
    %73 = math.tanh %72 : vector<6x32xf32>
    %cst_74 = arith.constant dense<0.000000e+00> : vector<6x32xf32>
    %74 = tpu.matmul %73, %50, %cst_74 {dimension_numbers = #tpu.dot_dimension_numbers<[1], [0], [0], [1], [0, 0, 1, 1], [], []>} : vector<6x32xf32>, vector<32x32xf32>, vector<6x32xf32> -> vector<6x32xf32>
    %75 = vector.shape_cast %57 : vector<32xf32> to vector<1x32xf32>
    %76 = vector.broadcast %75 : vector<1x32xf32> to vector<6x32xf32>
    %77 = arith.addf %74, %76 : vector<6x32xf32>
    %cst_75 = arith.constant dense<0.000000e+00> : vector<6x32xf32>
    %78 = tpu.matmul %63, %51, %cst_75 {dimension_numbers = #tpu.dot_dimension_numbers<[1], [0], [0], [1], [0, 0, 1, 1], [], []>} : vector<6x64xf32>, vector<64x32xf32>, vector<6x32xf32> -> vector<6x32xf32>
    %79 = vector.shape_cast %59 : vector<32xf32> to vector<1x32xf32>
    %80 = vector.broadcast %79 : vector<1x32xf32> to vector<6x32xf32>
    %81 = arith.addf %78, %80 : vector<6x32xf32>
    %82 = arith.addf %77, %81 : vector<6x32xf32>
    %83 = tpu.iota {dimensions = array<i32: 0>} : vector<6x32xi32>
    %c5_i32 = arith.constant 5 : i32
    %84 = vector.broadcast %c5_i32 : i32 to vector<6x32xi32>
    %85 = arith.cmpi eq, %83, %84 : vector<6x32xi32>
    %86 = vector.shape_cast %61 : vector<32xf32> to vector<1x32xf32>
    %87 = vector.broadcast %86 : vector<1x32xf32> to vector<6x32xf32>
    %88 = arith.select %85, %87, %82 : vector<6x32xi1>, vector<6x32xf32>
    %c0_76 = arith.constant 0 : index
    %c0_77 = arith.constant 0 : index
    %89 = vector.load %arg2[%c0_76, %c0_77] : memref<6x4xf32, #tpu.memory_space<vmem>>, vector<6x4xf32>
    %c0_78 = arith.constant 0 : index
    %c0_79 = arith.constant 0 : index
    %90 = vector.load %arg3[%c0_78, %c0_79] : memref<6x64xf32, #tpu.memory_space<vmem>>, vector<6x64xf32>
    %cst_80 = arith.constant dense<0.000000e+00> : vector<6x32xf32>
    %91 = tpu.matmul %89, %48, %cst_80 {dimension_numbers = #tpu.dot_dimension_numbers<[1], [0], [0], [1], [0, 0, 1, 1], [], []>} : vector<6x4xf32>, vector<4x32xf32>, vector<6x32xf32> -> vector<6x32xf32>
    %92 = vector.shape_cast %53 : vector<32xf32> to vector<1x32xf32>
    %93 = vector.broadcast %92 : vector<1x32xf32> to vector<6x32xf32>
    %94 = arith.addf %91, %93 : vector<6x32xf32>
    %95 = math.tanh %94 : vector<6x32xf32>
    %cst_81 = arith.constant dense<0.000000e+00> : vector<6x32xf32>
    %96 = tpu.matmul %95, %49, %cst_81 {dimension_numbers = #tpu.dot_dimension_numbers<[1], [0], [0], [1], [0, 0, 1, 1], [], []>} : vector<6x32xf32>, vector<32x32xf32>, vector<6x32xf32> -> vector<6x32xf32>
    %97 = vector.shape_cast %55 : vector<32xf32> to vector<1x32xf32>
    %98 = vector.broadcast %97 : vector<1x32xf32> to vector<6x32xf32>
    %99 = arith.addf %96, %98 : vector<6x32xf32>
    %100 = math.tanh %99 : vector<6x32xf32>
    %cst_82 = arith.constant dense<0.000000e+00> : vector<6x32xf32>
    %101 = tpu.matmul %100, %50, %cst_82 {dimension_numbers = #tpu.dot_dimension_numbers<[1], [0], [0], [1], [0, 0, 1, 1], [], []>} : vector<6x32xf32>, vector<32x32xf32>, vector<6x32xf32> -> vector<6x32xf32>
    %102 = vector.shape_cast %57 : vector<32xf32> to vector<1x32xf32>
    %103 = vector.broadcast %102 : vector<1x32xf32> to vector<6x32xf32>
    %104 = arith.addf %101, %103 : vector<6x32xf32>
    %cst_83 = arith.constant dense<0.000000e+00> : vector<6x32xf32>
    %105 = tpu.matmul %90, %51, %cst_83 {dimension_numbers = #tpu.dot_dimension_numbers<[1], [0], [0], [1], [0, 0, 1, 1], [], []>} : vector<6x64xf32>, vector<64x32xf32>, vector<6x32xf32> -> vector<6x32xf32>
    %106 = vector.shape_cast %59 : vector<32xf32> to vector<1x32xf32>
    %107 = vector.broadcast %106 : vector<1x32xf32> to vector<6x32xf32>
    %108 = arith.addf %105, %107 : vector<6x32xf32>
    %109 = arith.addf %104, %108 : vector<6x32xf32>
    %c0_84 = arith.constant 0 : index
    %c0_85 = arith.constant 0 : index
    %c0_86 = arith.constant 0 : index
    %110 = vector.load %arg5[%c0_84, %c0_85, %c0_86] : memref<6x40x128xf32, #tpu.memory_space<vmem>>, vector<1x32x32xf32>
    %111 = vector.shape_cast %110 : vector<1x32x32xf32> to vector<32x32xf32>
    %c0_87 = arith.constant 0 : index
    %c0_88 = arith.constant 0 : index
    %c32 = arith.constant 32 : index
    %112 = vector.load %arg5[%c0_87, %c0_88, %c32] : memref<6x40x128xf32, #tpu.memory_space<vmem>>, vector<1x32x64xf32>
    %113 = vector.shape_cast %112 : vector<1x32x64xf32> to vector<32x64xf32>
    %c0_89 = arith.constant 0 : index
    %c32_90 = arith.constant 32 : index
    %c0_91 = arith.constant 0 : index
    %114 = vector.load %arg5[%c0_89, %c32_90, %c0_91] : memref<6x40x128xf32, #tpu.memory_space<vmem>>, vector<1x1x32xf32>
    %115 = vector.shape_cast %114 : vector<1x1x32xf32> to vector<32xf32>
    %c0_92 = arith.constant 0 : index
    %c32_93 = arith.constant 32 : index
    %c32_94 = arith.constant 32 : index
    %116 = vector.load %arg5[%c0_92, %c32_93, %c32_94] : memref<6x40x128xf32, #tpu.memory_space<vmem>>, vector<1x1x64xf32>
    %117 = vector.shape_cast %116 : vector<1x1x64xf32> to vector<64xf32>
    %c0_95 = arith.constant 0 : index
    %c32_96 = arith.constant 32 : index
    %c96 = arith.constant 96 : index
    %118 = vector.load %arg5[%c0_95, %c32_96, %c96] : memref<6x40x128xf32, #tpu.memory_space<vmem>>, vector<1x1x32xf32>
    %119 = vector.shape_cast %118 : vector<1x1x32xf32> to vector<32xf32>
    %cst_97 = arith.constant dense<0.000000e+00> : vector<6x32xf32>
    %120 = tpu.matmul %88, %111, %cst_97 {dimension_numbers = #tpu.dot_dimension_numbers<[1], [0], [0], [1], [0, 0, 1, 1], [], []>} : vector<6x32xf32>, vector<32x32xf32>, vector<6x32xf32> -> vector<6x32xf32>
    %121 = vector.shape_cast %115 : vector<32xf32> to vector<1x32xf32>
    %122 = vector.broadcast %121 : vector<1x32xf32> to vector<6x32xf32>
    %123 = arith.addf %120, %122 : vector<6x32xf32>
    %cst_98 = arith.constant dense<0.000000e+00> : vector<6x64xf32>
    %124 = tpu.matmul %88, %113, %cst_98 {dimension_numbers = #tpu.dot_dimension_numbers<[1], [0], [0], [1], [0, 0, 1, 1], [], []>} : vector<6x32xf32>, vector<32x64xf32>, vector<6x64xf32> -> vector<6x64xf32>
    %125 = vector.shape_cast %117 : vector<64xf32> to vector<1x64xf32>
    %126 = vector.broadcast %125 : vector<1x64xf32> to vector<6x64xf32>
    %127 = arith.addf %124, %126 : vector<6x64xf32>
    %128 = vector.extract_strided_slice %123 {offsets = [0, 0], sizes = [6, 16], strides = [1, 1]} : vector<6x32xf32> to vector<6x16xf32>
    %129 = vector.extract_strided_slice %127 {offsets = [0, 0], sizes = [6, 16], strides = [1, 1]} : vector<6x64xf32> to vector<6x16xf32>
    %130 = vector.extract_strided_slice %127 {offsets = [0, 32], sizes = [6, 16], strides = [1, 1]} : vector<6x64xf32> to vector<6x16xf32>
    %cst_99 = arith.constant dense<0.000000e+00> : vector<6x6xf32>
    %131 = tpu.matmul %128, %129, %cst_99 {dimension_numbers = #tpu.dot_dimension_numbers<[1], [1], [0], [0], [0, 0, 1, 0], [], []>} : vector<6x16xf32>, vector<6x16xf32>, vector<6x6xf32> -> vector<6x6xf32>
    %cst_100 = arith.constant 2.500000e-01 : f32
    %132 = vector.broadcast %cst_100 : f32 to vector<6x6xf32>
    %133 = arith.mulf %131, %132 : vector<6x6xf32>
    %cst_101 = arith.constant dense<0xFF800000> : vector<6xf32>
    %134 = vector.multi_reduction <maximumf>, %133, %cst_101 [1] : vector<6x6xf32> to vector<6xf32>
    %135 = vector.shape_cast %134 : vector<6xf32> to vector<6x1xf32>
    %136 = vector.broadcast %135 : vector<6x1xf32> to vector<6x6xf32>
    %137 = arith.subf %133, %136 : vector<6x6xf32>
    %138 = math.exp %137 : vector<6x6xf32>
    %cst_102 = arith.constant dense<0.000000e+00> : vector<6xf32>
    %139 = vector.multi_reduction <add>, %138, %cst_102 [1] : vector<6x6xf32> to vector<6xf32>
    %140 = vector.shape_cast %139 : vector<6xf32> to vector<6x1xf32>
    %141 = tpu.reciprocal %140 {approx = true} : vector<6x1xf32> -> vector<6x1xf32>
    %142 = vector.broadcast %141 : vector<6x1xf32> to vector<6x6xf32>
    %143 = arith.mulf %138, %142 : vector<6x6xf32>
    %cst_103 = arith.constant dense<0.000000e+00> : vector<6x16xf32>
    %144 = tpu.matmul %143, %130, %cst_103 {dimension_numbers = #tpu.dot_dimension_numbers<[1], [0], [0], [1], [0, 0, 1, 1], [], []>} : vector<6x6xf32>, vector<6x16xf32>, vector<6x16xf32> -> vector<6x16xf32>
    %c0_104 = arith.constant 0 : index
    %c0_105 = arith.constant 0 : index
    %c96_106 = arith.constant 96 : index
    %145 = vector.load %arg5[%c0_104, %c0_105, %c96_106] : memref<6x40x128xf32, #tpu.memory_space<vmem>>, vector<1x16x32xf32>
    %146 = vector.shape_cast %145 : vector<1x16x32xf32> to vector<16x32xf32>
    %cst_107 = arith.constant dense<0.000000e+00> : vector<6x32xf32>
    %147 = tpu.matmul %144, %146, %cst_107 {dimension_numbers = #tpu.dot_dimension_numbers<[1], [0], [0], [1], [0, 0, 1, 1], [], []>} : vector<6x16xf32>, vector<16x32xf32>, vector<6x32xf32> -> vector<6x32xf32>
    %148 = vector.extract_strided_slice %123 {offsets = [0, 16], sizes = [6, 16], strides = [1, 1]} : vector<6x32xf32> to vector<6x16xf32>
    %149 = vector.extract_strided_slice %127 {offsets = [0, 16], sizes = [6, 16], strides = [1, 1]} : vector<6x64xf32> to vector<6x16xf32>
    %150 = vector.extract_strided_slice %127 {offsets = [0, 48], sizes = [6, 16], strides = [1, 1]} : vector<6x64xf32> to vector<6x16xf32>
    %cst_108 = arith.constant dense<0.000000e+00> : vector<6x6xf32>
    %151 = tpu.matmul %148, %149, %cst_108 {dimension_numbers = #tpu.dot_dimension_numbers<[1], [1], [0], [0], [0, 0, 1, 0], [], []>} : vector<6x16xf32>, vector<6x16xf32>, vector<6x6xf32> -> vector<6x6xf32>
    %cst_109 = arith.constant 2.500000e-01 : f32
    %152 = vector.broadcast %cst_109 : f32 to vector<6x6xf32>
    %153 = arith.mulf %151, %152 : vector<6x6xf32>
    %cst_110 = arith.constant dense<0xFF800000> : vector<6xf32>
    %154 = vector.multi_reduction <maximumf>, %153, %cst_110 [1] : vector<6x6xf32> to vector<6xf32>
    %155 = vector.shape_cast %154 : vector<6xf32> to vector<6x1xf32>
    %156 = vector.broadcast %155 : vector<6x1xf32> to vector<6x6xf32>
    %157 = arith.subf %153, %156 : vector<6x6xf32>
    %158 = math.exp %157 : vector<6x6xf32>
    %cst_111 = arith.constant dense<0.000000e+00> : vector<6xf32>
    %159 = vector.multi_reduction <add>, %158, %cst_111 [1] : vector<6x6xf32> to vector<6xf32>
    %160 = vector.shape_cast %159 : vector<6xf32> to vector<6x1xf32>
    %161 = tpu.reciprocal %160 {approx = true} : vector<6x1xf32> -> vector<6x1xf32>
    %162 = vector.broadcast %161 : vector<6x1xf32> to vector<6x6xf32>
    %163 = arith.mulf %158, %162 : vector<6x6xf32>
    %cst_112 = arith.constant dense<0.000000e+00> : vector<6x16xf32>
    %164 = tpu.matmul %163, %150, %cst_112 {dimension_numbers = #tpu.dot_dimension_numbers<[1], [0], [0], [1], [0, 0, 1, 1], [], []>} : vector<6x6xf32>, vector<6x16xf32>, vector<6x16xf32> -> vector<6x16xf32>
    %c0_113 = arith.constant 0 : index
    %c16 = arith.constant 16 : index
    %c96_114 = arith.constant 96 : index
    %165 = vector.load %arg5[%c0_113, %c16, %c96_114] : memref<6x40x128xf32, #tpu.memory_space<vmem>>, vector<1x16x32xf32>
    %166 = vector.shape_cast %165 : vector<1x16x32xf32> to vector<16x32xf32>
    %cst_115 = arith.constant dense<0.000000e+00> : vector<6x32xf32>
    %167 = tpu.matmul %164, %166, %cst_115 {dimension_numbers = #tpu.dot_dimension_numbers<[1], [0], [0], [1], [0, 0, 1, 1], [], []>} : vector<6x16xf32>, vector<16x32xf32>, vector<6x32xf32> -> vector<6x32xf32>
    %168 = arith.addf %147, %167 : vector<6x32xf32>
    %169 = vector.shape_cast %119 : vector<32xf32> to vector<1x32xf32>
    %170 = vector.broadcast %169 : vector<1x32xf32> to vector<6x32xf32>
    %171 = arith.addf %168, %170 : vector<6x32xf32>
    %172 = arith.addf %88, %171 : vector<6x32xf32>
    %c141 = arith.constant 141 : index
    %c0_116 = arith.constant 0 : index
    %173 = vector.load %arg4[%c141, %c0_116] : memref<168x32xf32, #tpu.memory_space<vmem>>, vector<1x32xf32>
    %174 = vector.shape_cast %173 : vector<1x32xf32> to vector<32xf32>
    %c142 = arith.constant 142 : index
    %c0_117 = arith.constant 0 : index
    %175 = vector.load %arg4[%c142, %c0_117] : memref<168x32xf32, #tpu.memory_space<vmem>>, vector<1x32xf32>
    %176 = vector.shape_cast %175 : vector<1x32xf32> to vector<32xf32>
    %cst_118 = arith.constant dense<0.000000e+00> : vector<6xf32>
    %177 = vector.multi_reduction <add>, %172, %cst_118 [1] : vector<6x32xf32> to vector<6xf32>
    %178 = vector.shape_cast %177 : vector<6xf32> to vector<6x1xf32>
    %cst_119 = arith.constant 3.200000e+01 : f32
    %179 = vector.broadcast %cst_119 : f32 to vector<6x1xf32>
    %180 = arith.divf %178, %179 : vector<6x1xf32>
    %181 = vector.broadcast %180 : vector<6x1xf32> to vector<6x32xf32>
    %182 = arith.subf %172, %181 : vector<6x32xf32>
    %183 = arith.mulf %182, %182 : vector<6x32xf32>
    %cst_120 = arith.constant dense<0.000000e+00> : vector<6xf32>
    %184 = vector.multi_reduction <add>, %183, %cst_120 [1] : vector<6x32xf32> to vector<6xf32>
    %185 = vector.shape_cast %184 : vector<6xf32> to vector<6x1xf32>
    %cst_121 = arith.constant 3.200000e+01 : f32
    %186 = vector.broadcast %cst_121 : f32 to vector<6x1xf32>
    %187 = arith.divf %185, %186 : vector<6x1xf32>
    %188 = vector.broadcast %180 : vector<6x1xf32> to vector<6x32xf32>
    %189 = arith.subf %172, %188 : vector<6x32xf32>
    %cst_122 = arith.constant 9.99999974E-6 : f32
    %190 = vector.broadcast %cst_122 : f32 to vector<6x1xf32>
    %191 = arith.addf %187, %190 : vector<6x1xf32>
    %192 = math.rsqrt %191 : vector<6x1xf32>
    %193 = vector.broadcast %192 : vector<6x1xf32> to vector<6x32xf32>
    %194 = arith.mulf %189, %193 : vector<6x32xf32>
    %195 = vector.shape_cast %174 : vector<32xf32> to vector<1x32xf32>
    %196 = vector.broadcast %195 : vector<1x32xf32> to vector<6x32xf32>
    %197 = arith.mulf %194, %196 : vector<6x32xf32>
    %198 = vector.shape_cast %176 : vector<32xf32> to vector<1x32xf32>
    %199 = vector.broadcast %198 : vector<1x32xf32> to vector<6x32xf32>
    %200 = arith.addf %197, %199 : vector<6x32xf32>
    %c0_i32_123 = arith.constant 0 : i32
    %c0_i32_124 = arith.constant 0 : i32
    %c0_i32_125 = arith.constant 0 : i32
    %c0_i32_126 = arith.constant 0 : i32
    %c0_i32_127 = arith.constant 0 : i32
    %c0_i32_128 = arith.constant 0 : i32
    %201 = tpu.memref_slice %arg7[%c0_i32_123, %c0_i32_127, %c0_i32_128] : memref<4x32x2048xbf16, #tpu.memory_space<any>> -> memref<1x32x2048xbf16, #tpu.memory_space<any>>
    %202 = tpu.memref_squeeze %201 : memref<1x32x2048xbf16, #tpu.memory_space<any>> -> memref<32x2048xbf16, #tpu.memory_space<any>>
    %c0_i32_129 = arith.constant 0 : i32
    %c0_i32_130 = arith.constant 0 : i32
    %203 = tpu.memref_slice %arg10[%c0_i32_124, %c0_i32_129, %c0_i32_130] : memref<4x32x2048xbf16, #tpu.memory_space<vmem>> -> memref<1x32x2048xbf16, #tpu.memory_space<vmem>>
    %204 = tpu.memref_squeeze %203 : memref<1x32x2048xbf16, #tpu.memory_space<vmem>> -> memref<32x2048xbf16, #tpu.memory_space<vmem>>
    %205 = tpu.memref_slice %arg12[%c0_i32_125, %c0_i32_126] : memref<2x4x!tpu.dma_semaphore, #tpu.memory_space<semaphore_mem>> -> memref<1x1x!tpu.dma_semaphore, #tpu.memory_space<semaphore_mem>>
    %206 = tpu.memref_squeeze %205 : memref<1x1x!tpu.dma_semaphore, #tpu.memory_space<semaphore_mem>> -> memref<!tpu.dma_semaphore, #tpu.memory_space<semaphore_mem>>
    tpu.wait_dma2 semaphore(%206 : memref<!tpu.dma_semaphore, #tpu.memory_space<semaphore_mem>>) src(%202 : memref<32x2048xbf16, #tpu.memory_space<any>>) dst(%204 : memref<32x2048xbf16, #tpu.memory_space<vmem>>)
    %c0_i32_131 = arith.constant 0 : i32
    %c0_i32_132 = arith.constant 0 : i32
    %c1_i32_133 = arith.constant 1 : i32
    %c0_i32_134 = arith.constant 0 : i32
    %c0_i32_135 = arith.constant 0 : i32
    %c0_i32_136 = arith.constant 0 : i32
    %207 = tpu.memref_slice %arg8[%c0_i32_131, %c0_i32_135, %c0_i32_136] : memref<4x32x2048xbf16, #tpu.memory_space<any>> -> memref<1x32x2048xbf16, #tpu.memory_space<any>>
    %208 = tpu.memref_squeeze %207 : memref<1x32x2048xbf16, #tpu.memory_space<any>> -> memref<32x2048xbf16, #tpu.memory_space<any>>
    %c0_i32_137 = arith.constant 0 : i32
    %c0_i32_138 = arith.constant 0 : i32
    %209 = tpu.memref_slice %arg11[%c0_i32_132, %c0_i32_137, %c0_i32_138] : memref<4x32x2048xbf16, #tpu.memory_space<vmem>> -> memref<1x32x2048xbf16, #tpu.memory_space<vmem>>
    %210 = tpu.memref_squeeze %209 : memref<1x32x2048xbf16, #tpu.memory_space<vmem>> -> memref<32x2048xbf16, #tpu.memory_space<vmem>>
    %211 = tpu.memref_slice %arg12[%c1_i32_133, %c0_i32_134] : memref<2x4x!tpu.dma_semaphore, #tpu.memory_space<semaphore_mem>> -> memref<1x1x!tpu.dma_semaphore, #tpu.memory_space<semaphore_mem>>
    %212 = tpu.memref_squeeze %211 : memref<1x1x!tpu.dma_semaphore, #tpu.memory_space<semaphore_mem>> -> memref<!tpu.dma_semaphore, #tpu.memory_space<semaphore_mem>>
    tpu.wait_dma2 semaphore(%212 : memref<!tpu.dma_semaphore, #tpu.memory_space<semaphore_mem>>) src(%208 : memref<32x2048xbf16, #tpu.memory_space<any>>) dst(%210 : memref<32x2048xbf16, #tpu.memory_space<vmem>>)
    %213 = arith.truncf %200 : vector<6x32xf32> to vector<6x32xbf16>
    %cst_139 = arith.constant 0.000000e+00 : f32
    %214 = vector.broadcast %cst_139 : f32 to vector<6x32xf32>
    %c0_140 = arith.constant 0 : index
    %c0_141 = arith.constant 0 : index
    %c0_142 = arith.constant 0 : index
    %215 = vector.load %arg10[%c0_140, %c0_141, %c0_142] : memref<4x32x2048xbf16, #tpu.memory_space<vmem>>, vector<1x32x512xbf16>
    %216 = vector.shape_cast %215 : vector<1x32x512xbf16> to vector<32x512xbf16>
    %cst_143 = arith.constant dense<0.000000e+00> : vector<6x512xf32>
    %217 = tpu.matmul %213, %216, %cst_143 {dimension_numbers = #tpu.dot_dimension_numbers<[1], [0], [0], [1], [0, 0, 1, 1], [], []>} : vector<6x32xbf16>, vector<32x512xbf16>, vector<6x512xf32> -> vector<6x512xf32>
    %c0_144 = arith.constant 0 : index
    %c0_145 = arith.constant 0 : index
    %218 = vector.load %arg6[%c0_144, %c0_145] : memref<4x2048xf32, #tpu.memory_space<vmem>>, vector<1x512xf32>
    %219 = vector.shape_cast %218 : vector<1x512xf32> to vector<512xf32>
    %220 = vector.shape_cast %219 : vector<512xf32> to vector<1x512xf32>
    %221 = vector.broadcast %220 : vector<1x512xf32> to vector<6x512xf32>
    %222 = arith.addf %217, %221 : vector<6x512xf32>
    %cst_146 = arith.constant 0.000000e+00 : f32
    %223 = vector.broadcast %cst_146 : f32 to vector<6x512xf32>
    %224 = arith.maximumf %222, %223 : vector<6x512xf32>
    %c0_147 = arith.constant 0 : index
    %c0_148 = arith.constant 0 : index
    %c0_149 = arith.constant 0 : index
    %225 = vector.load %arg11[%c0_147, %c0_148, %c0_149] : memref<4x32x2048xbf16, #tpu.memory_space<vmem>>, vector<1x32x512xbf16>
    %226 = vector.shape_cast %225 : vector<1x32x512xbf16> to vector<32x512xbf16>
    %227 = arith.truncf %224 : vector<6x512xf32> to vector<6x512xbf16>
    %cst_150 = arith.constant dense<0.000000e+00> : vector<6x32xf32>
    %228 = tpu.matmul %227, %226, %cst_150 {dimension_numbers = #tpu.dot_dimension_numbers<[1], [1], [0], [0], [0, 0, 1, 0], [], []>} : vector<6x512xbf16>, vector<32x512xbf16>, vector<6x32xf32> -> vector<6x32xf32>
    %229 = arith.addf %214, %228 : vector<6x32xf32>
    %c0_151 = arith.constant 0 : index
    %c0_152 = arith.constant 0 : index
    %c512 = arith.constant 512 : index
    %230 = vector.load %arg10[%c0_151, %c0_152, %c512] : memref<4x32x2048xbf16, #tpu.memory_space<vmem>>, vector<1x32x512xbf16>
    %231 = vector.shape_cast %230 : vector<1x32x512xbf16> to vector<32x512xbf16>
    %cst_153 = arith.constant dense<0.000000e+00> : vector<6x512xf32>
    %232 = tpu.matmul %213, %231, %cst_153 {dimension_numbers = #tpu.dot_dimension_numbers<[1], [0], [0], [1], [0, 0, 1, 1], [], []>} : vector<6x32xbf16>, vector<32x512xbf16>, vector<6x512xf32> -> vector<6x512xf32>
    %c0_154 = arith.constant 0 : index
    %c512_155 = arith.constant 512 : index
    %233 = vector.load %arg6[%c0_154, %c512_155] : memref<4x2048xf32, #tpu.memory_space<vmem>>, vector<1x512xf32>
    %234 = vector.shape_cast %233 : vector<1x512xf32> to vector<512xf32>
    %235 = vector.shape_cast %234 : vector<512xf32> to vector<1x512xf32>
    %236 = vector.broadcast %235 : vector<1x512xf32> to vector<6x512xf32>
    %237 = arith.addf %232, %236 : vector<6x512xf32>
    %cst_156 = arith.constant 0.000000e+00 : f32
    %238 = vector.broadcast %cst_156 : f32 to vector<6x512xf32>
    %239 = arith.maximumf %237, %238 : vector<6x512xf32>
    %c0_157 = arith.constant 0 : index
    %c0_158 = arith.constant 0 : index
    %c512_159 = arith.constant 512 : index
    %240 = vector.load %arg11[%c0_157, %c0_158, %c512_159] : memref<4x32x2048xbf16, #tpu.memory_space<vmem>>, vector<1x32x512xbf16>
    %241 = vector.shape_cast %240 : vector<1x32x512xbf16> to vector<32x512xbf16>
    %242 = arith.truncf %239 : vector<6x512xf32> to vector<6x512xbf16>
    %cst_160 = arith.constant dense<0.000000e+00> : vector<6x32xf32>
    %243 = tpu.matmul %242, %241, %cst_160 {dimension_numbers = #tpu.dot_dimension_numbers<[1], [1], [0], [0], [0, 0, 1, 0], [], []>} : vector<6x512xbf16>, vector<32x512xbf16>, vector<6x32xf32> -> vector<6x32xf32>
    %244 = arith.addf %229, %243 : vector<6x32xf32>
    %c0_161 = arith.constant 0 : index
    %c0_162 = arith.constant 0 : index
    %c1024 = arith.constant 1024 : index
    %245 = vector.load %arg10[%c0_161, %c0_162, %c1024] : memref<4x32x2048xbf16, #tpu.memory_space<vmem>>, vector<1x32x512xbf16>
    %246 = vector.shape_cast %245 : vector<1x32x512xbf16> to vector<32x512xbf16>
    %cst_163 = arith.constant dense<0.000000e+00> : vector<6x512xf32>
    %247 = tpu.matmul %213, %246, %cst_163 {dimension_numbers = #tpu.dot_dimension_numbers<[1], [0], [0], [1], [0, 0, 1, 1], [], []>} : vector<6x32xbf16>, vector<32x512xbf16>, vector<6x512xf32> -> vector<6x512xf32>
    %c0_164 = arith.constant 0 : index
    %c1024_165 = arith.constant 1024 : index
    %248 = vector.load %arg6[%c0_164, %c1024_165] : memref<4x2048xf32, #tpu.memory_space<vmem>>, vector<1x512xf32>
    %249 = vector.shape_cast %248 : vector<1x512xf32> to vector<512xf32>
    %250 = vector.shape_cast %249 : vector<512xf32> to vector<1x512xf32>
    %251 = vector.broadcast %250 : vector<1x512xf32> to vector<6x512xf32>
    %252 = arith.addf %247, %251 : vector<6x512xf32>
    %cst_166 = arith.constant 0.000000e+00 : f32
    %253 = vector.broadcast %cst_166 : f32 to vector<6x512xf32>
    %254 = arith.maximumf %252, %253 : vector<6x512xf32>
    %c0_167 = arith.constant 0 : index
    %c0_168 = arith.constant 0 : index
    %c1024_169 = arith.constant 1024 : index
    %255 = vector.load %arg11[%c0_167, %c0_168, %c1024_169] : memref<4x32x2048xbf16, #tpu.memory_space<vmem>>, vector<1x32x512xbf16>
    %256 = vector.shape_cast %255 : vector<1x32x512xbf16> to vector<32x512xbf16>
    %257 = arith.truncf %254 : vector<6x512xf32> to vector<6x512xbf16>
    %cst_170 = arith.constant dense<0.000000e+00> : vector<6x32xf32>
    %258 = tpu.matmul %257, %256, %cst_170 {dimension_numbers = #tpu.dot_dimension_numbers<[1], [1], [0], [0], [0, 0, 1, 0], [], []>} : vector<6x512xbf16>, vector<32x512xbf16>, vector<6x32xf32> -> vector<6x32xf32>
    %259 = arith.addf %244, %258 : vector<6x32xf32>
    %c0_171 = arith.constant 0 : index
    %c0_172 = arith.constant 0 : index
    %c1536 = arith.constant 1536 : index
    %260 = vector.load %arg10[%c0_171, %c0_172, %c1536] : memref<4x32x2048xbf16, #tpu.memory_space<vmem>>, vector<1x32x512xbf16>
    %261 = vector.shape_cast %260 : vector<1x32x512xbf16> to vector<32x512xbf16>
    %cst_173 = arith.constant dense<0.000000e+00> : vector<6x512xf32>
    %262 = tpu.matmul %213, %261, %cst_173 {dimension_numbers = #tpu.dot_dimension_numbers<[1], [0], [0], [1], [0, 0, 1, 1], [], []>} : vector<6x32xbf16>, vector<32x512xbf16>, vector<6x512xf32> -> vector<6x512xf32>
    %c0_174 = arith.constant 0 : index
    %c1536_175 = arith.constant 1536 : index
    %263 = vector.load %arg6[%c0_174, %c1536_175] : memref<4x2048xf32, #tpu.memory_space<vmem>>, vector<1x512xf32>
    %264 = vector.shape_cast %263 : vector<1x512xf32> to vector<512xf32>
    %265 = vector.shape_cast %264 : vector<512xf32> to vector<1x512xf32>
    %266 = vector.broadcast %265 : vector<1x512xf32> to vector<6x512xf32>
    %267 = arith.addf %262, %266 : vector<6x512xf32>
    %cst_176 = arith.constant 0.000000e+00 : f32
    %268 = vector.broadcast %cst_176 : f32 to vector<6x512xf32>
    %269 = arith.maximumf %267, %268 : vector<6x512xf32>
    %c0_177 = arith.constant 0 : index
    %c0_178 = arith.constant 0 : index
    %c1536_179 = arith.constant 1536 : index
    %270 = vector.load %arg11[%c0_177, %c0_178, %c1536_179] : memref<4x32x2048xbf16, #tpu.memory_space<vmem>>, vector<1x32x512xbf16>
    %271 = vector.shape_cast %270 : vector<1x32x512xbf16> to vector<32x512xbf16>
    %272 = arith.truncf %269 : vector<6x512xf32> to vector<6x512xbf16>
    %cst_180 = arith.constant dense<0.000000e+00> : vector<6x32xf32>
    %273 = tpu.matmul %272, %271, %cst_180 {dimension_numbers = #tpu.dot_dimension_numbers<[1], [1], [0], [0], [0, 0, 1, 0], [], []>} : vector<6x512xbf16>, vector<32x512xbf16>, vector<6x32xf32> -> vector<6x32xf32>
    %274 = arith.addf %259, %273 : vector<6x32xf32>
    %c161 = arith.constant 161 : index
    %c0_181 = arith.constant 0 : index
    %275 = vector.load %arg4[%c161, %c0_181] : memref<168x32xf32, #tpu.memory_space<vmem>>, vector<1x32xf32>
    %276 = vector.shape_cast %275 : vector<1x32xf32> to vector<32xf32>
    %277 = vector.shape_cast %276 : vector<32xf32> to vector<1x32xf32>
    %278 = vector.broadcast %277 : vector<1x32xf32> to vector<6x32xf32>
    %279 = arith.addf %274, %278 : vector<6x32xf32>
    %280 = arith.addf %200, %279 : vector<6x32xf32>
    %c143 = arith.constant 143 : index
    %c0_182 = arith.constant 0 : index
    %281 = vector.load %arg4[%c143, %c0_182] : memref<168x32xf32, #tpu.memory_space<vmem>>, vector<1x32xf32>
    %282 = vector.shape_cast %281 : vector<1x32xf32> to vector<32xf32>
    %c144 = arith.constant 144 : index
    %c0_183 = arith.constant 0 : index
    %283 = vector.load %arg4[%c144, %c0_183] : memref<168x32xf32, #tpu.memory_space<vmem>>, vector<1x32xf32>
    %284 = vector.shape_cast %283 : vector<1x32xf32> to vector<32xf32>
    %cst_184 = arith.constant dense<0.000000e+00> : vector<6xf32>
    %285 = vector.multi_reduction <add>, %280, %cst_184 [1] : vector<6x32xf32> to vector<6xf32>
    %286 = vector.shape_cast %285 : vector<6xf32> to vector<6x1xf32>
    %cst_185 = arith.constant 3.200000e+01 : f32
    %287 = vector.broadcast %cst_185 : f32 to vector<6x1xf32>
    %288 = arith.divf %286, %287 : vector<6x1xf32>
    %289 = vector.broadcast %288 : vector<6x1xf32> to vector<6x32xf32>
    %290 = arith.subf %280, %289 : vector<6x32xf32>
    %291 = arith.mulf %290, %290 : vector<6x32xf32>
    %cst_186 = arith.constant dense<0.000000e+00> : vector<6xf32>
    %292 = vector.multi_reduction <add>, %291, %cst_186 [1] : vector<6x32xf32> to vector<6xf32>
    %293 = vector.shape_cast %292 : vector<6xf32> to vector<6x1xf32>
    %cst_187 = arith.constant 3.200000e+01 : f32
    %294 = vector.broadcast %cst_187 : f32 to vector<6x1xf32>
    %295 = arith.divf %293, %294 : vector<6x1xf32>
    %296 = vector.broadcast %288 : vector<6x1xf32> to vector<6x32xf32>
    %297 = arith.subf %280, %296 : vector<6x32xf32>
    %cst_188 = arith.constant 9.99999974E-6 : f32
    %298 = vector.broadcast %cst_188 : f32 to vector<6x1xf32>
    %299 = arith.addf %295, %298 : vector<6x1xf32>
    %300 = math.rsqrt %299 : vector<6x1xf32>
    %301 = vector.broadcast %300 : vector<6x1xf32> to vector<6x32xf32>
    %302 = arith.mulf %297, %301 : vector<6x32xf32>
    %303 = vector.shape_cast %282 : vector<32xf32> to vector<1x32xf32>
    %304 = vector.broadcast %303 : vector<1x32xf32> to vector<6x32xf32>
    %305 = arith.mulf %302, %304 : vector<6x32xf32>
    %306 = vector.shape_cast %284 : vector<32xf32> to vector<1x32xf32>
    %307 = vector.broadcast %306 : vector<1x32xf32> to vector<6x32xf32>
    %308 = arith.addf %305, %307 : vector<6x32xf32>
    %c1 = arith.constant 1 : index
    %c0_189 = arith.constant 0 : index
    %c0_190 = arith.constant 0 : index
    %309 = vector.load %arg5[%c1, %c0_189, %c0_190] : memref<6x40x128xf32, #tpu.memory_space<vmem>>, vector<1x32x32xf32>
    %310 = vector.shape_cast %309 : vector<1x32x32xf32> to vector<32x32xf32>
    %c1_191 = arith.constant 1 : index
    %c0_192 = arith.constant 0 : index
    %c32_193 = arith.constant 32 : index
    %311 = vector.load %arg5[%c1_191, %c0_192, %c32_193] : memref<6x40x128xf32, #tpu.memory_space<vmem>>, vector<1x32x64xf32>
    %312 = vector.shape_cast %311 : vector<1x32x64xf32> to vector<32x64xf32>
    %c1_194 = arith.constant 1 : index
    %c32_195 = arith.constant 32 : index
    %c0_196 = arith.constant 0 : index
    %313 = vector.load %arg5[%c1_194, %c32_195, %c0_196] : memref<6x40x128xf32, #tpu.memory_space<vmem>>, vector<1x1x32xf32>
    %314 = vector.shape_cast %313 : vector<1x1x32xf32> to vector<32xf32>
    %c1_197 = arith.constant 1 : index
    %c32_198 = arith.constant 32 : index
    %c32_199 = arith.constant 32 : index
    %315 = vector.load %arg5[%c1_197, %c32_198, %c32_199] : memref<6x40x128xf32, #tpu.memory_space<vmem>>, vector<1x1x64xf32>
    %316 = vector.shape_cast %315 : vector<1x1x64xf32> to vector<64xf32>
    %c1_200 = arith.constant 1 : index
    %c32_201 = arith.constant 32 : index
    %c96_202 = arith.constant 96 : index
    %317 = vector.load %arg5[%c1_200, %c32_201, %c96_202] : memref<6x40x128xf32, #tpu.memory_space<vmem>>, vector<1x1x32xf32>
    %318 = vector.shape_cast %317 : vector<1x1x32xf32> to vector<32xf32>
    %cst_203 = arith.constant dense<0.000000e+00> : vector<6x32xf32>
    %319 = tpu.matmul %308, %310, %cst_203 {dimension_numbers = #tpu.dot_dimension_numbers<[1], [0], [0], [1], [0, 0, 1, 1], [], []>} : vector<6x32xf32>, vector<32x32xf32>, vector<6x32xf32> -> vector<6x32xf32>
    %320 = vector.shape_cast %314 : vector<32xf32> to vector<1x32xf32>
    %321 = vector.broadcast %320 : vector<1x32xf32> to vector<6x32xf32>
    %322 = arith.addf %319, %321 : vector<6x32xf32>
    %cst_204 = arith.constant dense<0.000000e+00> : vector<6x64xf32>
    %323 = tpu.matmul %308, %312, %cst_204 {dimension_numbers = #tpu.dot_dimension_numbers<[1], [0], [0], [1], [0, 0, 1, 1], [], []>} : vector<6x32xf32>, vector<32x64xf32>, vector<6x64xf32> -> vector<6x64xf32>
    %324 = vector.shape_cast %316 : vector<64xf32> to vector<1x64xf32>
    %325 = vector.broadcast %324 : vector<1x64xf32> to vector<6x64xf32>
    %326 = arith.addf %323, %325 : vector<6x64xf32>
    %327 = vector.extract_strided_slice %322 {offsets = [0, 0], sizes = [6, 16], strides = [1, 1]} : vector<6x32xf32> to vector<6x16xf32>
    %328 = vector.extract_strided_slice %326 {offsets = [0, 0], sizes = [6, 16], strides = [1, 1]} : vector<6x64xf32> to vector<6x16xf32>
    %329 = vector.extract_strided_slice %326 {offsets = [0, 32], sizes = [6, 16], strides = [1, 1]} : vector<6x64xf32> to vector<6x16xf32>
    %cst_205 = arith.constant dense<0.000000e+00> : vector<6x6xf32>
    %330 = tpu.matmul %327, %328, %cst_205 {dimension_numbers = #tpu.dot_dimension_numbers<[1], [1], [0], [0], [0, 0, 1, 0], [], []>} : vector<6x16xf32>, vector<6x16xf32>, vector<6x6xf32> -> vector<6x6xf32>
    %cst_206 = arith.constant 2.500000e-01 : f32
    %331 = vector.broadcast %cst_206 : f32 to vector<6x6xf32>
    %332 = arith.mulf %330, %331 : vector<6x6xf32>
    %cst_207 = arith.constant dense<0xFF800000> : vector<6xf32>
    %333 = vector.multi_reduction <maximumf>, %332, %cst_207 [1] : vector<6x6xf32> to vector<6xf32>
    %334 = vector.shape_cast %333 : vector<6xf32> to vector<6x1xf32>
    %335 = vector.broadcast %334 : vector<6x1xf32> to vector<6x6xf32>
    %336 = arith.subf %332, %335 : vector<6x6xf32>
    %337 = math.exp %336 : vector<6x6xf32>
    %cst_208 = arith.constant dense<0.000000e+00> : vector<6xf32>
    %338 = vector.multi_reduction <add>, %337, %cst_208 [1] : vector<6x6xf32> to vector<6xf32>
    %339 = vector.shape_cast %338 : vector<6xf32> to vector<6x1xf32>
    %340 = tpu.reciprocal %339 {approx = true} : vector<6x1xf32> -> vector<6x1xf32>
    %341 = vector.broadcast %340 : vector<6x1xf32> to vector<6x6xf32>
    %342 = arith.mulf %337, %341 : vector<6x6xf32>
    %cst_209 = arith.constant dense<0.000000e+00> : vector<6x16xf32>
    %343 = tpu.matmul %342, %329, %cst_209 {dimension_numbers = #tpu.dot_dimension_numbers<[1], [0], [0], [1], [0, 0, 1, 1], [], []>} : vector<6x6xf32>, vector<6x16xf32>, vector<6x16xf32> -> vector<6x16xf32>
    %c1_210 = arith.constant 1 : index
    %c0_211 = arith.constant 0 : index
    %c96_212 = arith.constant 96 : index
    %344 = vector.load %arg5[%c1_210, %c0_211, %c96_212] : memref<6x40x128xf32, #tpu.memory_space<vmem>>, vector<1x16x32xf32>
    %345 = vector.shape_cast %344 : vector<1x16x32xf32> to vector<16x32xf32>
    %cst_213 = arith.constant dense<0.000000e+00> : vector<6x32xf32>
    %346 = tpu.matmul %343, %345, %cst_213 {dimension_numbers = #tpu.dot_dimension_numbers<[1], [0], [0], [1], [0, 0, 1, 1], [], []>} : vector<6x16xf32>, vector<16x32xf32>, vector<6x32xf32> -> vector<6x32xf32>
    %347 = vector.extract_strided_slice %322 {offsets = [0, 16], sizes = [6, 16], strides = [1, 1]} : vector<6x32xf32> to vector<6x16xf32>
    %348 = vector.extract_strided_slice %326 {offsets = [0, 16], sizes = [6, 16], strides = [1, 1]} : vector<6x64xf32> to vector<6x16xf32>
    %349 = vector.extract_strided_slice %326 {offsets = [0, 48], sizes = [6, 16], strides = [1, 1]} : vector<6x64xf32> to vector<6x16xf32>
    %cst_214 = arith.constant dense<0.000000e+00> : vector<6x6xf32>
    %350 = tpu.matmul %347, %348, %cst_214 {dimension_numbers = #tpu.dot_dimension_numbers<[1], [1], [0], [0], [0, 0, 1, 0], [], []>} : vector<6x16xf32>, vector<6x16xf32>, vector<6x6xf32> -> vector<6x6xf32>
    %cst_215 = arith.constant 2.500000e-01 : f32
    %351 = vector.broadcast %cst_215 : f32 to vector<6x6xf32>
    %352 = arith.mulf %350, %351 : vector<6x6xf32>
    %cst_216 = arith.constant dense<0xFF800000> : vector<6xf32>
    %353 = vector.multi_reduction <maximumf>, %352, %cst_216 [1] : vector<6x6xf32> to vector<6xf32>
    %354 = vector.shape_cast %353 : vector<6xf32> to vector<6x1xf32>
    %355 = vector.broadcast %354 : vector<6x1xf32> to vector<6x6xf32>
    %356 = arith.subf %352, %355 : vector<6x6xf32>
    %357 = math.exp %356 : vector<6x6xf32>
    %cst_217 = arith.constant dense<0.000000e+00> : vector<6xf32>
    %358 = vector.multi_reduction <add>, %357, %cst_217 [1] : vector<6x6xf32> to vector<6xf32>
    %359 = vector.shape_cast %358 : vector<6xf32> to vector<6x1xf32>
    %360 = tpu.reciprocal %359 {approx = true} : vector<6x1xf32> -> vector<6x1xf32>
    %361 = vector.broadcast %360 : vector<6x1xf32> to vector<6x6xf32>
    %362 = arith.mulf %357, %361 : vector<6x6xf32>
    %cst_218 = arith.constant dense<0.000000e+00> : vector<6x16xf32>
    %363 = tpu.matmul %362, %349, %cst_218 {dimension_numbers = #tpu.dot_dimension_numbers<[1], [0], [0], [1], [0, 0, 1, 1], [], []>} : vector<6x6xf32>, vector<6x16xf32>, vector<6x16xf32> -> vector<6x16xf32>
    %c1_219 = arith.constant 1 : index
    %c16_220 = arith.constant 16 : index
    %c96_221 = arith.constant 96 : index
    %364 = vector.load %arg5[%c1_219, %c16_220, %c96_221] : memref<6x40x128xf32, #tpu.memory_space<vmem>>, vector<1x16x32xf32>
    %365 = vector.shape_cast %364 : vector<1x16x32xf32> to vector<16x32xf32>
    %cst_222 = arith.constant dense<0.000000e+00> : vector<6x32xf32>
    %366 = tpu.matmul %363, %365, %cst_222 {dimension_numbers = #tpu.dot_dimension_numbers<[1], [0], [0], [1], [0, 0, 1, 1], [], []>} : vector<6x16xf32>, vector<16x32xf32>, vector<6x32xf32> -> vector<6x32xf32>
    %367 = arith.addf %346, %366 : vector<6x32xf32>
    %368 = vector.shape_cast %318 : vector<32xf32> to vector<1x32xf32>
    %369 = vector.broadcast %368 : vector<1x32xf32> to vector<6x32xf32>
    %370 = arith.addf %367, %369 : vector<6x32xf32>
    %371 = arith.addf %308, %370 : vector<6x32xf32>
    %c145 = arith.constant 145 : index
    %c0_223 = arith.constant 0 : index
    %372 = vector.load %arg4[%c145, %c0_223] : memref<168x32xf32, #tpu.memory_space<vmem>>, vector<1x32xf32>
    %373 = vector.shape_cast %372 : vector<1x32xf32> to vector<32xf32>
    %c146 = arith.constant 146 : index
    %c0_224 = arith.constant 0 : index
    %374 = vector.load %arg4[%c146, %c0_224] : memref<168x32xf32, #tpu.memory_space<vmem>>, vector<1x32xf32>
    %375 = vector.shape_cast %374 : vector<1x32xf32> to vector<32xf32>
    %cst_225 = arith.constant dense<0.000000e+00> : vector<6xf32>
    %376 = vector.multi_reduction <add>, %371, %cst_225 [1] : vector<6x32xf32> to vector<6xf32>
    %377 = vector.shape_cast %376 : vector<6xf32> to vector<6x1xf32>
    %cst_226 = arith.constant 3.200000e+01 : f32
    %378 = vector.broadcast %cst_226 : f32 to vector<6x1xf32>
    %379 = arith.divf %377, %378 : vector<6x1xf32>
    %380 = vector.broadcast %379 : vector<6x1xf32> to vector<6x32xf32>
    %381 = arith.subf %371, %380 : vector<6x32xf32>
    %382 = arith.mulf %381, %381 : vector<6x32xf32>
    %cst_227 = arith.constant dense<0.000000e+00> : vector<6xf32>
    %383 = vector.multi_reduction <add>, %382, %cst_227 [1] : vector<6x32xf32> to vector<6xf32>
    %384 = vector.shape_cast %383 : vector<6xf32> to vector<6x1xf32>
    %cst_228 = arith.constant 3.200000e+01 : f32
    %385 = vector.broadcast %cst_228 : f32 to vector<6x1xf32>
    %386 = arith.divf %384, %385 : vector<6x1xf32>
    %387 = vector.broadcast %379 : vector<6x1xf32> to vector<6x32xf32>
    %388 = arith.subf %371, %387 : vector<6x32xf32>
    %cst_229 = arith.constant 9.99999974E-6 : f32
    %389 = vector.broadcast %cst_229 : f32 to vector<6x1xf32>
    %390 = arith.addf %386, %389 : vector<6x1xf32>
    %391 = math.rsqrt %390 : vector<6x1xf32>
    %392 = vector.broadcast %391 : vector<6x1xf32> to vector<6x32xf32>
    %393 = arith.mulf %388, %392 : vector<6x32xf32>
    %394 = vector.shape_cast %373 : vector<32xf32> to vector<1x32xf32>
    %395 = vector.broadcast %394 : vector<1x32xf32> to vector<6x32xf32>
    %396 = arith.mulf %393, %395 : vector<6x32xf32>
    %397 = vector.shape_cast %375 : vector<32xf32> to vector<1x32xf32>
    %398 = vector.broadcast %397 : vector<1x32xf32> to vector<6x32xf32>
    %399 = arith.addf %396, %398 : vector<6x32xf32>
    %c1_i32_230 = arith.constant 1 : i32
    %c1_i32_231 = arith.constant 1 : i32
    %c0_i32_232 = arith.constant 0 : i32
    %c1_i32_233 = arith.constant 1 : i32
    %c0_i32_234 = arith.constant 0 : i32
    %c0_i32_235 = arith.constant 0 : i32
    %400 = tpu.memref_slice %arg7[%c1_i32_230, %c0_i32_234, %c0_i32_235] : memref<4x32x2048xbf16, #tpu.memory_space<any>> -> memref<1x32x2048xbf16, #tpu.memory_space<any>>
    %401 = tpu.memref_squeeze %400 : memref<1x32x2048xbf16, #tpu.memory_space<any>> -> memref<32x2048xbf16, #tpu.memory_space<any>>
    %c0_i32_236 = arith.constant 0 : i32
    %c0_i32_237 = arith.constant 0 : i32
    %402 = tpu.memref_slice %arg10[%c1_i32_231, %c0_i32_236, %c0_i32_237] : memref<4x32x2048xbf16, #tpu.memory_space<vmem>> -> memref<1x32x2048xbf16, #tpu.memory_space<vmem>>
    %403 = tpu.memref_squeeze %402 : memref<1x32x2048xbf16, #tpu.memory_space<vmem>> -> memref<32x2048xbf16, #tpu.memory_space<vmem>>
    %404 = tpu.memref_slice %arg12[%c0_i32_232, %c1_i32_233] : memref<2x4x!tpu.dma_semaphore, #tpu.memory_space<semaphore_mem>> -> memref<1x1x!tpu.dma_semaphore, #tpu.memory_space<semaphore_mem>>
    %405 = tpu.memref_squeeze %404 : memref<1x1x!tpu.dma_semaphore, #tpu.memory_space<semaphore_mem>> -> memref<!tpu.dma_semaphore, #tpu.memory_space<semaphore_mem>>
    tpu.wait_dma2 semaphore(%405 : memref<!tpu.dma_semaphore, #tpu.memory_space<semaphore_mem>>) src(%401 : memref<32x2048xbf16, #tpu.memory_space<any>>) dst(%403 : memref<32x2048xbf16, #tpu.memory_space<vmem>>)
    %c1_i32_238 = arith.constant 1 : i32
    %c1_i32_239 = arith.constant 1 : i32
    %c1_i32_240 = arith.constant 1 : i32
    %c1_i32_241 = arith.constant 1 : i32
    %c0_i32_242 = arith.constant 0 : i32
    %c0_i32_243 = arith.constant 0 : i32
    %406 = tpu.memref_slice %arg8[%c1_i32_238, %c0_i32_242, %c0_i32_243] : memref<4x32x2048xbf16, #tpu.memory_space<any>> -> memref<1x32x2048xbf16, #tpu.memory_space<any>>
    %407 = tpu.memref_squeeze %406 : memref<1x32x2048xbf16, #tpu.memory_space<any>> -> memref<32x2048xbf16, #tpu.memory_space<any>>
    %c0_i32_244 = arith.constant 0 : i32
    %c0_i32_245 = arith.constant 0 : i32
    %408 = tpu.memref_slice %arg11[%c1_i32_239, %c0_i32_244, %c0_i32_245] : memref<4x32x2048xbf16, #tpu.memory_space<vmem>> -> memref<1x32x2048xbf16, #tpu.memory_space<vmem>>
    %409 = tpu.memref_squeeze %408 : memref<1x32x2048xbf16, #tpu.memory_space<vmem>> -> memref<32x2048xbf16, #tpu.memory_space<vmem>>
    %410 = tpu.memref_slice %arg12[%c1_i32_240, %c1_i32_241] : memref<2x4x!tpu.dma_semaphore, #tpu.memory_space<semaphore_mem>> -> memref<1x1x!tpu.dma_semaphore, #tpu.memory_space<semaphore_mem>>
    %411 = tpu.memref_squeeze %410 : memref<1x1x!tpu.dma_semaphore, #tpu.memory_space<semaphore_mem>> -> memref<!tpu.dma_semaphore, #tpu.memory_space<semaphore_mem>>
    tpu.wait_dma2 semaphore(%411 : memref<!tpu.dma_semaphore, #tpu.memory_space<semaphore_mem>>) src(%407 : memref<32x2048xbf16, #tpu.memory_space<any>>) dst(%409 : memref<32x2048xbf16, #tpu.memory_space<vmem>>)
    %412 = arith.truncf %399 : vector<6x32xf32> to vector<6x32xbf16>
    %cst_246 = arith.constant 0.000000e+00 : f32
    %413 = vector.broadcast %cst_246 : f32 to vector<6x32xf32>
    %c1_247 = arith.constant 1 : index
    %c0_248 = arith.constant 0 : index
    %c0_249 = arith.constant 0 : index
    %414 = vector.load %arg10[%c1_247, %c0_248, %c0_249] : memref<4x32x2048xbf16, #tpu.memory_space<vmem>>, vector<1x32x512xbf16>
    %415 = vector.shape_cast %414 : vector<1x32x512xbf16> to vector<32x512xbf16>
    %cst_250 = arith.constant dense<0.000000e+00> : vector<6x512xf32>
    %416 = tpu.matmul %412, %415, %cst_250 {dimension_numbers = #tpu.dot_dimension_numbers<[1], [0], [0], [1], [0, 0, 1, 1], [], []>} : vector<6x32xbf16>, vector<32x512xbf16>, vector<6x512xf32> -> vector<6x512xf32>
    %c1_251 = arith.constant 1 : index
    %c0_252 = arith.constant 0 : index
    %417 = vector.load %arg6[%c1_251, %c0_252] : memref<4x2048xf32, #tpu.memory_space<vmem>>, vector<1x512xf32>
    %418 = vector.shape_cast %417 : vector<1x512xf32> to vector<512xf32>
    %419 = vector.shape_cast %418 : vector<512xf32> to vector<1x512xf32>
    %420 = vector.broadcast %419 : vector<1x512xf32> to vector<6x512xf32>
    %421 = arith.addf %416, %420 : vector<6x512xf32>
    %cst_253 = arith.constant 0.000000e+00 : f32
    %422 = vector.broadcast %cst_253 : f32 to vector<6x512xf32>
    %423 = arith.maximumf %421, %422 : vector<6x512xf32>
    %c1_254 = arith.constant 1 : index
    %c0_255 = arith.constant 0 : index
    %c0_256 = arith.constant 0 : index
    %424 = vector.load %arg11[%c1_254, %c0_255, %c0_256] : memref<4x32x2048xbf16, #tpu.memory_space<vmem>>, vector<1x32x512xbf16>
    %425 = vector.shape_cast %424 : vector<1x32x512xbf16> to vector<32x512xbf16>
    %426 = arith.truncf %423 : vector<6x512xf32> to vector<6x512xbf16>
    %cst_257 = arith.constant dense<0.000000e+00> : vector<6x32xf32>
    %427 = tpu.matmul %426, %425, %cst_257 {dimension_numbers = #tpu.dot_dimension_numbers<[1], [1], [0], [0], [0, 0, 1, 0], [], []>} : vector<6x512xbf16>, vector<32x512xbf16>, vector<6x32xf32> -> vector<6x32xf32>
    %428 = arith.addf %413, %427 : vector<6x32xf32>
    %c1_258 = arith.constant 1 : index
    %c0_259 = arith.constant 0 : index
    %c512_260 = arith.constant 512 : index
    %429 = vector.load %arg10[%c1_258, %c0_259, %c512_260] : memref<4x32x2048xbf16, #tpu.memory_space<vmem>>, vector<1x32x512xbf16>
    %430 = vector.shape_cast %429 : vector<1x32x512xbf16> to vector<32x512xbf16>
    %cst_261 = arith.constant dense<0.000000e+00> : vector<6x512xf32>
    %431 = tpu.matmul %412, %430, %cst_261 {dimension_numbers = #tpu.dot_dimension_numbers<[1], [0], [0], [1], [0, 0, 1, 1], [], []>} : vector<6x32xbf16>, vector<32x512xbf16>, vector<6x512xf32> -> vector<6x512xf32>
    %c1_262 = arith.constant 1 : index
    %c512_263 = arith.constant 512 : index
    %432 = vector.load %arg6[%c1_262, %c512_263] : memref<4x2048xf32, #tpu.memory_space<vmem>>, vector<1x512xf32>
    %433 = vector.shape_cast %432 : vector<1x512xf32> to vector<512xf32>
    %434 = vector.shape_cast %433 : vector<512xf32> to vector<1x512xf32>
    %435 = vector.broadcast %434 : vector<1x512xf32> to vector<6x512xf32>
    %436 = arith.addf %431, %435 : vector<6x512xf32>
    %cst_264 = arith.constant 0.000000e+00 : f32
    %437 = vector.broadcast %cst_264 : f32 to vector<6x512xf32>
    %438 = arith.maximumf %436, %437 : vector<6x512xf32>
    %c1_265 = arith.constant 1 : index
    %c0_266 = arith.constant 0 : index
    %c512_267 = arith.constant 512 : index
    %439 = vector.load %arg11[%c1_265, %c0_266, %c512_267] : memref<4x32x2048xbf16, #tpu.memory_space<vmem>>, vector<1x32x512xbf16>
    %440 = vector.shape_cast %439 : vector<1x32x512xbf16> to vector<32x512xbf16>
    %441 = arith.truncf %438 : vector<6x512xf32> to vector<6x512xbf16>
    %cst_268 = arith.constant dense<0.000000e+00> : vector<6x32xf32>
    %442 = tpu.matmul %441, %440, %cst_268 {dimension_numbers = #tpu.dot_dimension_numbers<[1], [1], [0], [0], [0, 0, 1, 0], [], []>} : vector<6x512xbf16>, vector<32x512xbf16>, vector<6x32xf32> -> vector<6x32xf32>
    %443 = arith.addf %428, %442 : vector<6x32xf32>
    %c1_269 = arith.constant 1 : index
    %c0_270 = arith.constant 0 : index
    %c1024_271 = arith.constant 1024 : index
    %444 = vector.load %arg10[%c1_269, %c0_270, %c1024_271] : memref<4x32x2048xbf16, #tpu.memory_space<vmem>>, vector<1x32x512xbf16>
    %445 = vector.shape_cast %444 : vector<1x32x512xbf16> to vector<32x512xbf16>
    %cst_272 = arith.constant dense<0.000000e+00> : vector<6x512xf32>
    %446 = tpu.matmul %412, %445, %cst_272 {dimension_numbers = #tpu.dot_dimension_numbers<[1], [0], [0], [1], [0, 0, 1, 1], [], []>} : vector<6x32xbf16>, vector<32x512xbf16>, vector<6x512xf32> -> vector<6x512xf32>
    %c1_273 = arith.constant 1 : index
    %c1024_274 = arith.constant 1024 : index
    %447 = vector.load %arg6[%c1_273, %c1024_274] : memref<4x2048xf32, #tpu.memory_space<vmem>>, vector<1x512xf32>
    %448 = vector.shape_cast %447 : vector<1x512xf32> to vector<512xf32>
    %449 = vector.shape_cast %448 : vector<512xf32> to vector<1x512xf32>
    %450 = vector.broadcast %449 : vector<1x512xf32> to vector<6x512xf32>
    %451 = arith.addf %446, %450 : vector<6x512xf32>
    %cst_275 = arith.constant 0.000000e+00 : f32
    %452 = vector.broadcast %cst_275 : f32 to vector<6x512xf32>
    %453 = arith.maximumf %451, %452 : vector<6x512xf32>
    %c1_276 = arith.constant 1 : index
    %c0_277 = arith.constant 0 : index
    %c1024_278 = arith.constant 1024 : index
    %454 = vector.load %arg11[%c1_276, %c0_277, %c1024_278] : memref<4x32x2048xbf16, #tpu.memory_space<vmem>>, vector<1x32x512xbf16>
    %455 = vector.shape_cast %454 : vector<1x32x512xbf16> to vector<32x512xbf16>
    %456 = arith.truncf %453 : vector<6x512xf32> to vector<6x512xbf16>
    %cst_279 = arith.constant dense<0.000000e+00> : vector<6x32xf32>
    %457 = tpu.matmul %456, %455, %cst_279 {dimension_numbers = #tpu.dot_dimension_numbers<[1], [1], [0], [0], [0, 0, 1, 0], [], []>} : vector<6x512xbf16>, vector<32x512xbf16>, vector<6x32xf32> -> vector<6x32xf32>
    %458 = arith.addf %443, %457 : vector<6x32xf32>
    %c1_280 = arith.constant 1 : index
    %c0_281 = arith.constant 0 : index
    %c1536_282 = arith.constant 1536 : index
    %459 = vector.load %arg10[%c1_280, %c0_281, %c1536_282] : memref<4x32x2048xbf16, #tpu.memory_space<vmem>>, vector<1x32x512xbf16>
    %460 = vector.shape_cast %459 : vector<1x32x512xbf16> to vector<32x512xbf16>
    %cst_283 = arith.constant dense<0.000000e+00> : vector<6x512xf32>
    %461 = tpu.matmul %412, %460, %cst_283 {dimension_numbers = #tpu.dot_dimension_numbers<[1], [0], [0], [1], [0, 0, 1, 1], [], []>} : vector<6x32xbf16>, vector<32x512xbf16>, vector<6x512xf32> -> vector<6x512xf32>
    %c1_284 = arith.constant 1 : index
    %c1536_285 = arith.constant 1536 : index
    %462 = vector.load %arg6[%c1_284, %c1536_285] : memref<4x2048xf32, #tpu.memory_space<vmem>>, vector<1x512xf32>
    %463 = vector.shape_cast %462 : vector<1x512xf32> to vector<512xf32>
    %464 = vector.shape_cast %463 : vector<512xf32> to vector<1x512xf32>
    %465 = vector.broadcast %464 : vector<1x512xf32> to vector<6x512xf32>
    %466 = arith.addf %461, %465 : vector<6x512xf32>
    %cst_286 = arith.constant 0.000000e+00 : f32
    %467 = vector.broadcast %cst_286 : f32 to vector<6x512xf32>
    %468 = arith.maximumf %466, %467 : vector<6x512xf32>
    %c1_287 = arith.constant 1 : index
    %c0_288 = arith.constant 0 : index
    %c1536_289 = arith.constant 1536 : index
    %469 = vector.load %arg11[%c1_287, %c0_288, %c1536_289] : memref<4x32x2048xbf16, #tpu.memory_space<vmem>>, vector<1x32x512xbf16>
    %470 = vector.shape_cast %469 : vector<1x32x512xbf16> to vector<32x512xbf16>
    %471 = arith.truncf %468 : vector<6x512xf32> to vector<6x512xbf16>
    %cst_290 = arith.constant dense<0.000000e+00> : vector<6x32xf32>
    %472 = tpu.matmul %471, %470, %cst_290 {dimension_numbers = #tpu.dot_dimension_numbers<[1], [1], [0], [0], [0, 0, 1, 0], [], []>} : vector<6x512xbf16>, vector<32x512xbf16>, vector<6x32xf32> -> vector<6x32xf32>
    %473 = arith.addf %458, %472 : vector<6x32xf32>
    %c162 = arith.constant 162 : index
    %c0_291 = arith.constant 0 : index
    %474 = vector.load %arg4[%c162, %c0_291] : memref<168x32xf32, #tpu.memory_space<vmem>>, vector<1x32xf32>
    %475 = vector.shape_cast %474 : vector<1x32xf32> to vector<32xf32>
    %476 = vector.shape_cast %475 : vector<32xf32> to vector<1x32xf32>
    %477 = vector.broadcast %476 : vector<1x32xf32> to vector<6x32xf32>
    %478 = arith.addf %473, %477 : vector<6x32xf32>
    %479 = arith.addf %399, %478 : vector<6x32xf32>
    %c147 = arith.constant 147 : index
    %c0_292 = arith.constant 0 : index
    %480 = vector.load %arg4[%c147, %c0_292] : memref<168x32xf32, #tpu.memory_space<vmem>>, vector<1x32xf32>
    %481 = vector.shape_cast %480 : vector<1x32xf32> to vector<32xf32>
    %c148 = arith.constant 148 : index
    %c0_293 = arith.constant 0 : index
    %482 = vector.load %arg4[%c148, %c0_293] : memref<168x32xf32, #tpu.memory_space<vmem>>, vector<1x32xf32>
    %483 = vector.shape_cast %482 : vector<1x32xf32> to vector<32xf32>
    %cst_294 = arith.constant dense<0.000000e+00> : vector<6xf32>
    %484 = vector.multi_reduction <add>, %479, %cst_294 [1] : vector<6x32xf32> to vector<6xf32>
    %485 = vector.shape_cast %484 : vector<6xf32> to vector<6x1xf32>
    %cst_295 = arith.constant 3.200000e+01 : f32
    %486 = vector.broadcast %cst_295 : f32 to vector<6x1xf32>
    %487 = arith.divf %485, %486 : vector<6x1xf32>
    %488 = vector.broadcast %487 : vector<6x1xf32> to vector<6x32xf32>
    %489 = arith.subf %479, %488 : vector<6x32xf32>
    %490 = arith.mulf %489, %489 : vector<6x32xf32>
    %cst_296 = arith.constant dense<0.000000e+00> : vector<6xf32>
    %491 = vector.multi_reduction <add>, %490, %cst_296 [1] : vector<6x32xf32> to vector<6xf32>
    %492 = vector.shape_cast %491 : vector<6xf32> to vector<6x1xf32>
    %cst_297 = arith.constant 3.200000e+01 : f32
    %493 = vector.broadcast %cst_297 : f32 to vector<6x1xf32>
    %494 = arith.divf %492, %493 : vector<6x1xf32>
    %495 = vector.broadcast %487 : vector<6x1xf32> to vector<6x32xf32>
    %496 = arith.subf %479, %495 : vector<6x32xf32>
    %cst_298 = arith.constant 9.99999974E-6 : f32
    %497 = vector.broadcast %cst_298 : f32 to vector<6x1xf32>
    %498 = arith.addf %494, %497 : vector<6x1xf32>
    %499 = math.rsqrt %498 : vector<6x1xf32>
    %500 = vector.broadcast %499 : vector<6x1xf32> to vector<6x32xf32>
    %501 = arith.mulf %496, %500 : vector<6x32xf32>
    %502 = vector.shape_cast %481 : vector<32xf32> to vector<1x32xf32>
    %503 = vector.broadcast %502 : vector<1x32xf32> to vector<6x32xf32>
    %504 = arith.mulf %501, %503 : vector<6x32xf32>
    %505 = vector.shape_cast %483 : vector<32xf32> to vector<1x32xf32>
    %506 = vector.broadcast %505 : vector<1x32xf32> to vector<6x32xf32>
    %507 = arith.addf %504, %506 : vector<6x32xf32>
    %c2 = arith.constant 2 : index
    %c0_299 = arith.constant 0 : index
    %c0_300 = arith.constant 0 : index
    %508 = vector.load %arg5[%c2, %c0_299, %c0_300] : memref<6x40x128xf32, #tpu.memory_space<vmem>>, vector<1x32x32xf32>
    %509 = vector.shape_cast %508 : vector<1x32x32xf32> to vector<32x32xf32>
    %c2_301 = arith.constant 2 : index
    %c0_302 = arith.constant 0 : index
    %c32_303 = arith.constant 32 : index
    %510 = vector.load %arg5[%c2_301, %c0_302, %c32_303] : memref<6x40x128xf32, #tpu.memory_space<vmem>>, vector<1x32x64xf32>
    %511 = vector.shape_cast %510 : vector<1x32x64xf32> to vector<32x64xf32>
    %c2_304 = arith.constant 2 : index
    %c32_305 = arith.constant 32 : index
    %c0_306 = arith.constant 0 : index
    %512 = vector.load %arg5[%c2_304, %c32_305, %c0_306] : memref<6x40x128xf32, #tpu.memory_space<vmem>>, vector<1x1x32xf32>
    %513 = vector.shape_cast %512 : vector<1x1x32xf32> to vector<32xf32>
    %c2_307 = arith.constant 2 : index
    %c32_308 = arith.constant 32 : index
    %c32_309 = arith.constant 32 : index
    %514 = vector.load %arg5[%c2_307, %c32_308, %c32_309] : memref<6x40x128xf32, #tpu.memory_space<vmem>>, vector<1x1x64xf32>
    %515 = vector.shape_cast %514 : vector<1x1x64xf32> to vector<64xf32>
    %c2_310 = arith.constant 2 : index
    %c32_311 = arith.constant 32 : index
    %c96_312 = arith.constant 96 : index
    %516 = vector.load %arg5[%c2_310, %c32_311, %c96_312] : memref<6x40x128xf32, #tpu.memory_space<vmem>>, vector<1x1x32xf32>
    %517 = vector.shape_cast %516 : vector<1x1x32xf32> to vector<32xf32>
    %cst_313 = arith.constant dense<0.000000e+00> : vector<6x32xf32>
    %518 = tpu.matmul %109, %509, %cst_313 {dimension_numbers = #tpu.dot_dimension_numbers<[1], [0], [0], [1], [0, 0, 1, 1], [], []>} : vector<6x32xf32>, vector<32x32xf32>, vector<6x32xf32> -> vector<6x32xf32>
    %519 = vector.shape_cast %513 : vector<32xf32> to vector<1x32xf32>
    %520 = vector.broadcast %519 : vector<1x32xf32> to vector<6x32xf32>
    %521 = arith.addf %518, %520 : vector<6x32xf32>
    %cst_314 = arith.constant dense<0.000000e+00> : vector<6x64xf32>
    %522 = tpu.matmul %109, %511, %cst_314 {dimension_numbers = #tpu.dot_dimension_numbers<[1], [0], [0], [1], [0, 0, 1, 1], [], []>} : vector<6x32xf32>, vector<32x64xf32>, vector<6x64xf32> -> vector<6x64xf32>
    %523 = vector.shape_cast %515 : vector<64xf32> to vector<1x64xf32>
    %524 = vector.broadcast %523 : vector<1x64xf32> to vector<6x64xf32>
    %525 = arith.addf %522, %524 : vector<6x64xf32>
    %526 = vector.extract_strided_slice %521 {offsets = [0, 0], sizes = [6, 16], strides = [1, 1]} : vector<6x32xf32> to vector<6x16xf32>
    %527 = vector.extract_strided_slice %525 {offsets = [0, 0], sizes = [6, 16], strides = [1, 1]} : vector<6x64xf32> to vector<6x16xf32>
    %528 = vector.extract_strided_slice %525 {offsets = [0, 32], sizes = [6, 16], strides = [1, 1]} : vector<6x64xf32> to vector<6x16xf32>
    %cst_315 = arith.constant dense<0.000000e+00> : vector<6x6xf32>
    %529 = tpu.matmul %526, %527, %cst_315 {dimension_numbers = #tpu.dot_dimension_numbers<[1], [1], [0], [0], [0, 0, 1, 0], [], []>} : vector<6x16xf32>, vector<6x16xf32>, vector<6x6xf32> -> vector<6x6xf32>
    %cst_316 = arith.constant 2.500000e-01 : f32
    %530 = vector.broadcast %cst_316 : f32 to vector<6x6xf32>
    %531 = arith.mulf %529, %530 : vector<6x6xf32>
    %cst_317 = arith.constant dense<0xFF800000> : vector<6xf32>
    %532 = vector.multi_reduction <maximumf>, %531, %cst_317 [1] : vector<6x6xf32> to vector<6xf32>
    %533 = vector.shape_cast %532 : vector<6xf32> to vector<6x1xf32>
    %534 = vector.broadcast %533 : vector<6x1xf32> to vector<6x6xf32>
    %535 = arith.subf %531, %534 : vector<6x6xf32>
    %536 = math.exp %535 : vector<6x6xf32>
    %cst_318 = arith.constant dense<0.000000e+00> : vector<6xf32>
    %537 = vector.multi_reduction <add>, %536, %cst_318 [1] : vector<6x6xf32> to vector<6xf32>
    %538 = vector.shape_cast %537 : vector<6xf32> to vector<6x1xf32>
    %539 = tpu.reciprocal %538 {approx = true} : vector<6x1xf32> -> vector<6x1xf32>
    %540 = vector.broadcast %539 : vector<6x1xf32> to vector<6x6xf32>
    %541 = arith.mulf %536, %540 : vector<6x6xf32>
    %cst_319 = arith.constant dense<0.000000e+00> : vector<6x16xf32>
    %542 = tpu.matmul %541, %528, %cst_319 {dimension_numbers = #tpu.dot_dimension_numbers<[1], [0], [0], [1], [0, 0, 1, 1], [], []>} : vector<6x6xf32>, vector<6x16xf32>, vector<6x16xf32> -> vector<6x16xf32>
    %c2_320 = arith.constant 2 : index
    %c0_321 = arith.constant 0 : index
    %c96_322 = arith.constant 96 : index
    %543 = vector.load %arg5[%c2_320, %c0_321, %c96_322] : memref<6x40x128xf32, #tpu.memory_space<vmem>>, vector<1x16x32xf32>
    %544 = vector.shape_cast %543 : vector<1x16x32xf32> to vector<16x32xf32>
    %cst_323 = arith.constant dense<0.000000e+00> : vector<6x32xf32>
    %545 = tpu.matmul %542, %544, %cst_323 {dimension_numbers = #tpu.dot_dimension_numbers<[1], [0], [0], [1], [0, 0, 1, 1], [], []>} : vector<6x16xf32>, vector<16x32xf32>, vector<6x32xf32> -> vector<6x32xf32>
    %546 = vector.extract_strided_slice %521 {offsets = [0, 16], sizes = [6, 16], strides = [1, 1]} : vector<6x32xf32> to vector<6x16xf32>
    %547 = vector.extract_strided_slice %525 {offsets = [0, 16], sizes = [6, 16], strides = [1, 1]} : vector<6x64xf32> to vector<6x16xf32>
    %548 = vector.extract_strided_slice %525 {offsets = [0, 48], sizes = [6, 16], strides = [1, 1]} : vector<6x64xf32> to vector<6x16xf32>
    %cst_324 = arith.constant dense<0.000000e+00> : vector<6x6xf32>
    %549 = tpu.matmul %546, %547, %cst_324 {dimension_numbers = #tpu.dot_dimension_numbers<[1], [1], [0], [0], [0, 0, 1, 0], [], []>} : vector<6x16xf32>, vector<6x16xf32>, vector<6x6xf32> -> vector<6x6xf32>
    %cst_325 = arith.constant 2.500000e-01 : f32
    %550 = vector.broadcast %cst_325 : f32 to vector<6x6xf32>
    %551 = arith.mulf %549, %550 : vector<6x6xf32>
    %cst_326 = arith.constant dense<0xFF800000> : vector<6xf32>
    %552 = vector.multi_reduction <maximumf>, %551, %cst_326 [1] : vector<6x6xf32> to vector<6xf32>
    %553 = vector.shape_cast %552 : vector<6xf32> to vector<6x1xf32>
    %554 = vector.broadcast %553 : vector<6x1xf32> to vector<6x6xf32>
    %555 = arith.subf %551, %554 : vector<6x6xf32>
    %556 = math.exp %555 : vector<6x6xf32>
    %cst_327 = arith.constant dense<0.000000e+00> : vector<6xf32>
    %557 = vector.multi_reduction <add>, %556, %cst_327 [1] : vector<6x6xf32> to vector<6xf32>
    %558 = vector.shape_cast %557 : vector<6xf32> to vector<6x1xf32>
    %559 = tpu.reciprocal %558 {approx = true} : vector<6x1xf32> -> vector<6x1xf32>
    %560 = vector.broadcast %559 : vector<6x1xf32> to vector<6x6xf32>
    %561 = arith.mulf %556, %560 : vector<6x6xf32>
    %cst_328 = arith.constant dense<0.000000e+00> : vector<6x16xf32>
    %562 = tpu.matmul %561, %548, %cst_328 {dimension_numbers = #tpu.dot_dimension_numbers<[1], [0], [0], [1], [0, 0, 1, 1], [], []>} : vector<6x6xf32>, vector<6x16xf32>, vector<6x16xf32> -> vector<6x16xf32>
    %c2_329 = arith.constant 2 : index
    %c16_330 = arith.constant 16 : index
    %c96_331 = arith.constant 96 : index
    %563 = vector.load %arg5[%c2_329, %c16_330, %c96_331] : memref<6x40x128xf32, #tpu.memory_space<vmem>>, vector<1x16x32xf32>
    %564 = vector.shape_cast %563 : vector<1x16x32xf32> to vector<16x32xf32>
    %cst_332 = arith.constant dense<0.000000e+00> : vector<6x32xf32>
    %565 = tpu.matmul %562, %564, %cst_332 {dimension_numbers = #tpu.dot_dimension_numbers<[1], [0], [0], [1], [0, 0, 1, 1], [], []>} : vector<6x16xf32>, vector<16x32xf32>, vector<6x32xf32> -> vector<6x32xf32>
    %566 = arith.addf %545, %565 : vector<6x32xf32>
    %567 = vector.shape_cast %517 : vector<32xf32> to vector<1x32xf32>
    %568 = vector.broadcast %567 : vector<1x32xf32> to vector<6x32xf32>
    %569 = arith.addf %566, %568 : vector<6x32xf32>
    %570 = arith.addf %109, %569 : vector<6x32xf32>
    %c149 = arith.constant 149 : index
    %c0_333 = arith.constant 0 : index
    %571 = vector.load %arg4[%c149, %c0_333] : memref<168x32xf32, #tpu.memory_space<vmem>>, vector<1x32xf32>
    %572 = vector.shape_cast %571 : vector<1x32xf32> to vector<32xf32>
    %c150 = arith.constant 150 : index
    %c0_334 = arith.constant 0 : index
    %573 = vector.load %arg4[%c150, %c0_334] : memref<168x32xf32, #tpu.memory_space<vmem>>, vector<1x32xf32>
    %574 = vector.shape_cast %573 : vector<1x32xf32> to vector<32xf32>
    %cst_335 = arith.constant dense<0.000000e+00> : vector<6xf32>
    %575 = vector.multi_reduction <add>, %570, %cst_335 [1] : vector<6x32xf32> to vector<6xf32>
    %576 = vector.shape_cast %575 : vector<6xf32> to vector<6x1xf32>
    %cst_336 = arith.constant 3.200000e+01 : f32
    %577 = vector.broadcast %cst_336 : f32 to vector<6x1xf32>
    %578 = arith.divf %576, %577 : vector<6x1xf32>
    %579 = vector.broadcast %578 : vector<6x1xf32> to vector<6x32xf32>
    %580 = arith.subf %570, %579 : vector<6x32xf32>
    %581 = arith.mulf %580, %580 : vector<6x32xf32>
    %cst_337 = arith.constant dense<0.000000e+00> : vector<6xf32>
    %582 = vector.multi_reduction <add>, %581, %cst_337 [1] : vector<6x32xf32> to vector<6xf32>
    %583 = vector.shape_cast %582 : vector<6xf32> to vector<6x1xf32>
    %cst_338 = arith.constant 3.200000e+01 : f32
    %584 = vector.broadcast %cst_338 : f32 to vector<6x1xf32>
    %585 = arith.divf %583, %584 : vector<6x1xf32>
    %586 = vector.broadcast %578 : vector<6x1xf32> to vector<6x32xf32>
    %587 = arith.subf %570, %586 : vector<6x32xf32>
    %cst_339 = arith.constant 9.99999974E-6 : f32
    %588 = vector.broadcast %cst_339 : f32 to vector<6x1xf32>
    %589 = arith.addf %585, %588 : vector<6x1xf32>
    %590 = math.rsqrt %589 : vector<6x1xf32>
    %591 = vector.broadcast %590 : vector<6x1xf32> to vector<6x32xf32>
    %592 = arith.mulf %587, %591 : vector<6x32xf32>
    %593 = vector.shape_cast %572 : vector<32xf32> to vector<1x32xf32>
    %594 = vector.broadcast %593 : vector<1x32xf32> to vector<6x32xf32>
    %595 = arith.mulf %592, %594 : vector<6x32xf32>
    %596 = vector.shape_cast %574 : vector<32xf32> to vector<1x32xf32>
    %597 = vector.broadcast %596 : vector<1x32xf32> to vector<6x32xf32>
    %598 = arith.addf %595, %597 : vector<6x32xf32>
    %c3 = arith.constant 3 : index
    %c0_340 = arith.constant 0 : index
    %c0_341 = arith.constant 0 : index
    %599 = vector.load %arg5[%c3, %c0_340, %c0_341] : memref<6x40x128xf32, #tpu.memory_space<vmem>>, vector<1x32x32xf32>
    %600 = vector.shape_cast %599 : vector<1x32x32xf32> to vector<32x32xf32>
    %c3_342 = arith.constant 3 : index
    %c0_343 = arith.constant 0 : index
    %c32_344 = arith.constant 32 : index
    %601 = vector.load %arg5[%c3_342, %c0_343, %c32_344] : memref<6x40x128xf32, #tpu.memory_space<vmem>>, vector<1x32x64xf32>
    %602 = vector.shape_cast %601 : vector<1x32x64xf32> to vector<32x64xf32>
    %c3_345 = arith.constant 3 : index
    %c32_346 = arith.constant 32 : index
    %c0_347 = arith.constant 0 : index
    %603 = vector.load %arg5[%c3_345, %c32_346, %c0_347] : memref<6x40x128xf32, #tpu.memory_space<vmem>>, vector<1x1x32xf32>
    %604 = vector.shape_cast %603 : vector<1x1x32xf32> to vector<32xf32>
    %c3_348 = arith.constant 3 : index
    %c32_349 = arith.constant 32 : index
    %c32_350 = arith.constant 32 : index
    %605 = vector.load %arg5[%c3_348, %c32_349, %c32_350] : memref<6x40x128xf32, #tpu.memory_space<vmem>>, vector<1x1x64xf32>
    %606 = vector.shape_cast %605 : vector<1x1x64xf32> to vector<64xf32>
    %c3_351 = arith.constant 3 : index
    %c32_352 = arith.constant 32 : index
    %c96_353 = arith.constant 96 : index
    %607 = vector.load %arg5[%c3_351, %c32_352, %c96_353] : memref<6x40x128xf32, #tpu.memory_space<vmem>>, vector<1x1x32xf32>
    %608 = vector.shape_cast %607 : vector<1x1x32xf32> to vector<32xf32>
    %cst_354 = arith.constant dense<0.000000e+00> : vector<6x32xf32>
    %609 = tpu.matmul %598, %600, %cst_354 {dimension_numbers = #tpu.dot_dimension_numbers<[1], [0], [0], [1], [0, 0, 1, 1], [], []>} : vector<6x32xf32>, vector<32x32xf32>, vector<6x32xf32> -> vector<6x32xf32>
    %610 = vector.shape_cast %604 : vector<32xf32> to vector<1x32xf32>
    %611 = vector.broadcast %610 : vector<1x32xf32> to vector<6x32xf32>
    %612 = arith.addf %609, %611 : vector<6x32xf32>
    %cst_355 = arith.constant dense<0.000000e+00> : vector<6x64xf32>
    %613 = tpu.matmul %507, %602, %cst_355 {dimension_numbers = #tpu.dot_dimension_numbers<[1], [0], [0], [1], [0, 0, 1, 1], [], []>} : vector<6x32xf32>, vector<32x64xf32>, vector<6x64xf32> -> vector<6x64xf32>
    %614 = vector.shape_cast %606 : vector<64xf32> to vector<1x64xf32>
    %615 = vector.broadcast %614 : vector<1x64xf32> to vector<6x64xf32>
    %616 = arith.addf %613, %615 : vector<6x64xf32>
    %617 = vector.extract_strided_slice %612 {offsets = [0, 0], sizes = [6, 16], strides = [1, 1]} : vector<6x32xf32> to vector<6x16xf32>
    %618 = vector.extract_strided_slice %616 {offsets = [0, 0], sizes = [6, 16], strides = [1, 1]} : vector<6x64xf32> to vector<6x16xf32>
    %619 = vector.extract_strided_slice %616 {offsets = [0, 32], sizes = [6, 16], strides = [1, 1]} : vector<6x64xf32> to vector<6x16xf32>
    %cst_356 = arith.constant dense<0.000000e+00> : vector<6x6xf32>
    %620 = tpu.matmul %617, %618, %cst_356 {dimension_numbers = #tpu.dot_dimension_numbers<[1], [1], [0], [0], [0, 0, 1, 0], [], []>} : vector<6x16xf32>, vector<6x16xf32>, vector<6x6xf32> -> vector<6x6xf32>
    %cst_357 = arith.constant 2.500000e-01 : f32
    %621 = vector.broadcast %cst_357 : f32 to vector<6x6xf32>
    %622 = arith.mulf %620, %621 : vector<6x6xf32>
    %cst_358 = arith.constant dense<0xFF800000> : vector<6xf32>
    %623 = vector.multi_reduction <maximumf>, %622, %cst_358 [1] : vector<6x6xf32> to vector<6xf32>
    %624 = vector.shape_cast %623 : vector<6xf32> to vector<6x1xf32>
    %625 = vector.broadcast %624 : vector<6x1xf32> to vector<6x6xf32>
    %626 = arith.subf %622, %625 : vector<6x6xf32>
    %627 = math.exp %626 : vector<6x6xf32>
    %cst_359 = arith.constant dense<0.000000e+00> : vector<6xf32>
    %628 = vector.multi_reduction <add>, %627, %cst_359 [1] : vector<6x6xf32> to vector<6xf32>
    %629 = vector.shape_cast %628 : vector<6xf32> to vector<6x1xf32>
    %630 = tpu.reciprocal %629 {approx = true} : vector<6x1xf32> -> vector<6x1xf32>
    %631 = vector.broadcast %630 : vector<6x1xf32> to vector<6x6xf32>
    %632 = arith.mulf %627, %631 : vector<6x6xf32>
    %cst_360 = arith.constant dense<0.000000e+00> : vector<6x16xf32>
    %633 = tpu.matmul %632, %619, %cst_360 {dimension_numbers = #tpu.dot_dimension_numbers<[1], [0], [0], [1], [0, 0, 1, 1], [], []>} : vector<6x6xf32>, vector<6x16xf32>, vector<6x16xf32> -> vector<6x16xf32>
    %c3_361 = arith.constant 3 : index
    %c0_362 = arith.constant 0 : index
    %c96_363 = arith.constant 96 : index
    %634 = vector.load %arg5[%c3_361, %c0_362, %c96_363] : memref<6x40x128xf32, #tpu.memory_space<vmem>>, vector<1x16x32xf32>
    %635 = vector.shape_cast %634 : vector<1x16x32xf32> to vector<16x32xf32>
    %cst_364 = arith.constant dense<0.000000e+00> : vector<6x32xf32>
    %636 = tpu.matmul %633, %635, %cst_364 {dimension_numbers = #tpu.dot_dimension_numbers<[1], [0], [0], [1], [0, 0, 1, 1], [], []>} : vector<6x16xf32>, vector<16x32xf32>, vector<6x32xf32> -> vector<6x32xf32>
    %637 = vector.extract_strided_slice %612 {offsets = [0, 16], sizes = [6, 16], strides = [1, 1]} : vector<6x32xf32> to vector<6x16xf32>
    %638 = vector.extract_strided_slice %616 {offsets = [0, 16], sizes = [6, 16], strides = [1, 1]} : vector<6x64xf32> to vector<6x16xf32>
    %639 = vector.extract_strided_slice %616 {offsets = [0, 48], sizes = [6, 16], strides = [1, 1]} : vector<6x64xf32> to vector<6x16xf32>
    %cst_365 = arith.constant dense<0.000000e+00> : vector<6x6xf32>
    %640 = tpu.matmul %637, %638, %cst_365 {dimension_numbers = #tpu.dot_dimension_numbers<[1], [1], [0], [0], [0, 0, 1, 0], [], []>} : vector<6x16xf32>, vector<6x16xf32>, vector<6x6xf32> -> vector<6x6xf32>
    %cst_366 = arith.constant 2.500000e-01 : f32
    %641 = vector.broadcast %cst_366 : f32 to vector<6x6xf32>
    %642 = arith.mulf %640, %641 : vector<6x6xf32>
    %cst_367 = arith.constant dense<0xFF800000> : vector<6xf32>
    %643 = vector.multi_reduction <maximumf>, %642, %cst_367 [1] : vector<6x6xf32> to vector<6xf32>
    %644 = vector.shape_cast %643 : vector<6xf32> to vector<6x1xf32>
    %645 = vector.broadcast %644 : vector<6x1xf32> to vector<6x6xf32>
    %646 = arith.subf %642, %645 : vector<6x6xf32>
    %647 = math.exp %646 : vector<6x6xf32>
    %cst_368 = arith.constant dense<0.000000e+00> : vector<6xf32>
    %648 = vector.multi_reduction <add>, %647, %cst_368 [1] : vector<6x6xf32> to vector<6xf32>
    %649 = vector.shape_cast %648 : vector<6xf32> to vector<6x1xf32>
    %650 = tpu.reciprocal %649 {approx = true} : vector<6x1xf32> -> vector<6x1xf32>
    %651 = vector.broadcast %650 : vector<6x1xf32> to vector<6x6xf32>
    %652 = arith.mulf %647, %651 : vector<6x6xf32>
    %cst_369 = arith.constant dense<0.000000e+00> : vector<6x16xf32>
    %653 = tpu.matmul %652, %639, %cst_369 {dimension_numbers = #tpu.dot_dimension_numbers<[1], [0], [0], [1], [0, 0, 1, 1], [], []>} : vector<6x6xf32>, vector<6x16xf32>, vector<6x16xf32> -> vector<6x16xf32>
    %c3_370 = arith.constant 3 : index
    %c16_371 = arith.constant 16 : index
    %c96_372 = arith.constant 96 : index
    %654 = vector.load %arg5[%c3_370, %c16_371, %c96_372] : memref<6x40x128xf32, #tpu.memory_space<vmem>>, vector<1x16x32xf32>
    %655 = vector.shape_cast %654 : vector<1x16x32xf32> to vector<16x32xf32>
    %cst_373 = arith.constant dense<0.000000e+00> : vector<6x32xf32>
    %656 = tpu.matmul %653, %655, %cst_373 {dimension_numbers = #tpu.dot_dimension_numbers<[1], [0], [0], [1], [0, 0, 1, 1], [], []>} : vector<6x16xf32>, vector<16x32xf32>, vector<6x32xf32> -> vector<6x32xf32>
    %657 = arith.addf %636, %656 : vector<6x32xf32>
    %658 = vector.shape_cast %608 : vector<32xf32> to vector<1x32xf32>
    %659 = vector.broadcast %658 : vector<1x32xf32> to vector<6x32xf32>
    %660 = arith.addf %657, %659 : vector<6x32xf32>
    %661 = arith.addf %598, %660 : vector<6x32xf32>
    %c151 = arith.constant 151 : index
    %c0_374 = arith.constant 0 : index
    %662 = vector.load %arg4[%c151, %c0_374] : memref<168x32xf32, #tpu.memory_space<vmem>>, vector<1x32xf32>
    %663 = vector.shape_cast %662 : vector<1x32xf32> to vector<32xf32>
    %c152 = arith.constant 152 : index
    %c0_375 = arith.constant 0 : index
    %664 = vector.load %arg4[%c152, %c0_375] : memref<168x32xf32, #tpu.memory_space<vmem>>, vector<1x32xf32>
    %665 = vector.shape_cast %664 : vector<1x32xf32> to vector<32xf32>
    %cst_376 = arith.constant dense<0.000000e+00> : vector<6xf32>
    %666 = vector.multi_reduction <add>, %661, %cst_376 [1] : vector<6x32xf32> to vector<6xf32>
    %667 = vector.shape_cast %666 : vector<6xf32> to vector<6x1xf32>
    %cst_377 = arith.constant 3.200000e+01 : f32
    %668 = vector.broadcast %cst_377 : f32 to vector<6x1xf32>
    %669 = arith.divf %667, %668 : vector<6x1xf32>
    %670 = vector.broadcast %669 : vector<6x1xf32> to vector<6x32xf32>
    %671 = arith.subf %661, %670 : vector<6x32xf32>
    %672 = arith.mulf %671, %671 : vector<6x32xf32>
    %cst_378 = arith.constant dense<0.000000e+00> : vector<6xf32>
    %673 = vector.multi_reduction <add>, %672, %cst_378 [1] : vector<6x32xf32> to vector<6xf32>
    %674 = vector.shape_cast %673 : vector<6xf32> to vector<6x1xf32>
    %cst_379 = arith.constant 3.200000e+01 : f32
    %675 = vector.broadcast %cst_379 : f32 to vector<6x1xf32>
    %676 = arith.divf %674, %675 : vector<6x1xf32>
    %677 = vector.broadcast %669 : vector<6x1xf32> to vector<6x32xf32>
    %678 = arith.subf %661, %677 : vector<6x32xf32>
    %cst_380 = arith.constant 9.99999974E-6 : f32
    %679 = vector.broadcast %cst_380 : f32 to vector<6x1xf32>
    %680 = arith.addf %676, %679 : vector<6x1xf32>
    %681 = math.rsqrt %680 : vector<6x1xf32>
    %682 = vector.broadcast %681 : vector<6x1xf32> to vector<6x32xf32>
    %683 = arith.mulf %678, %682 : vector<6x32xf32>
    %684 = vector.shape_cast %663 : vector<32xf32> to vector<1x32xf32>
    %685 = vector.broadcast %684 : vector<1x32xf32> to vector<6x32xf32>
    %686 = arith.mulf %683, %685 : vector<6x32xf32>
    %687 = vector.shape_cast %665 : vector<32xf32> to vector<1x32xf32>
    %688 = vector.broadcast %687 : vector<1x32xf32> to vector<6x32xf32>
    %689 = arith.addf %686, %688 : vector<6x32xf32>
    %c2_i32_381 = arith.constant 2 : i32
    %c2_i32_382 = arith.constant 2 : i32
    %c0_i32_383 = arith.constant 0 : i32
    %c2_i32_384 = arith.constant 2 : i32
    %c0_i32_385 = arith.constant 0 : i32
    %c0_i32_386 = arith.constant 0 : i32
    %690 = tpu.memref_slice %arg7[%c2_i32_381, %c0_i32_385, %c0_i32_386] : memref<4x32x2048xbf16, #tpu.memory_space<any>> -> memref<1x32x2048xbf16, #tpu.memory_space<any>>
    %691 = tpu.memref_squeeze %690 : memref<1x32x2048xbf16, #tpu.memory_space<any>> -> memref<32x2048xbf16, #tpu.memory_space<any>>
    %c0_i32_387 = arith.constant 0 : i32
    %c0_i32_388 = arith.constant 0 : i32
    %692 = tpu.memref_slice %arg10[%c2_i32_382, %c0_i32_387, %c0_i32_388] : memref<4x32x2048xbf16, #tpu.memory_space<vmem>> -> memref<1x32x2048xbf16, #tpu.memory_space<vmem>>
    %693 = tpu.memref_squeeze %692 : memref<1x32x2048xbf16, #tpu.memory_space<vmem>> -> memref<32x2048xbf16, #tpu.memory_space<vmem>>
    %694 = tpu.memref_slice %arg12[%c0_i32_383, %c2_i32_384] : memref<2x4x!tpu.dma_semaphore, #tpu.memory_space<semaphore_mem>> -> memref<1x1x!tpu.dma_semaphore, #tpu.memory_space<semaphore_mem>>
    %695 = tpu.memref_squeeze %694 : memref<1x1x!tpu.dma_semaphore, #tpu.memory_space<semaphore_mem>> -> memref<!tpu.dma_semaphore, #tpu.memory_space<semaphore_mem>>
    tpu.wait_dma2 semaphore(%695 : memref<!tpu.dma_semaphore, #tpu.memory_space<semaphore_mem>>) src(%691 : memref<32x2048xbf16, #tpu.memory_space<any>>) dst(%693 : memref<32x2048xbf16, #tpu.memory_space<vmem>>)
    %c2_i32_389 = arith.constant 2 : i32
    %c2_i32_390 = arith.constant 2 : i32
    %c1_i32_391 = arith.constant 1 : i32
    %c2_i32_392 = arith.constant 2 : i32
    %c0_i32_393 = arith.constant 0 : i32
    %c0_i32_394 = arith.constant 0 : i32
    %696 = tpu.memref_slice %arg8[%c2_i32_389, %c0_i32_393, %c0_i32_394] : memref<4x32x2048xbf16, #tpu.memory_space<any>> -> memref<1x32x2048xbf16, #tpu.memory_space<any>>
    %697 = tpu.memref_squeeze %696 : memref<1x32x2048xbf16, #tpu.memory_space<any>> -> memref<32x2048xbf16, #tpu.memory_space<any>>
    %c0_i32_395 = arith.constant 0 : i32
    %c0_i32_396 = arith.constant 0 : i32
    %698 = tpu.memref_slice %arg11[%c2_i32_390, %c0_i32_395, %c0_i32_396] : memref<4x32x2048xbf16, #tpu.memory_space<vmem>> -> memref<1x32x2048xbf16, #tpu.memory_space<vmem>>
    %699 = tpu.memref_squeeze %698 : memref<1x32x2048xbf16, #tpu.memory_space<vmem>> -> memref<32x2048xbf16, #tpu.memory_space<vmem>>
    %700 = tpu.memref_slice %arg12[%c1_i32_391, %c2_i32_392] : memref<2x4x!tpu.dma_semaphore, #tpu.memory_space<semaphore_mem>> -> memref<1x1x!tpu.dma_semaphore, #tpu.memory_space<semaphore_mem>>
    %701 = tpu.memref_squeeze %700 : memref<1x1x!tpu.dma_semaphore, #tpu.memory_space<semaphore_mem>> -> memref<!tpu.dma_semaphore, #tpu.memory_space<semaphore_mem>>
    tpu.wait_dma2 semaphore(%701 : memref<!tpu.dma_semaphore, #tpu.memory_space<semaphore_mem>>) src(%697 : memref<32x2048xbf16, #tpu.memory_space<any>>) dst(%699 : memref<32x2048xbf16, #tpu.memory_space<vmem>>)
    %702 = arith.truncf %689 : vector<6x32xf32> to vector<6x32xbf16>
    %cst_397 = arith.constant 0.000000e+00 : f32
    %703 = vector.broadcast %cst_397 : f32 to vector<6x32xf32>
    %c2_398 = arith.constant 2 : index
    %c0_399 = arith.constant 0 : index
    %c0_400 = arith.constant 0 : index
    %704 = vector.load %arg10[%c2_398, %c0_399, %c0_400] : memref<4x32x2048xbf16, #tpu.memory_space<vmem>>, vector<1x32x512xbf16>
    %705 = vector.shape_cast %704 : vector<1x32x512xbf16> to vector<32x512xbf16>
    %cst_401 = arith.constant dense<0.000000e+00> : vector<6x512xf32>
    %706 = tpu.matmul %702, %705, %cst_401 {dimension_numbers = #tpu.dot_dimension_numbers<[1], [0], [0], [1], [0, 0, 1, 1], [], []>} : vector<6x32xbf16>, vector<32x512xbf16>, vector<6x512xf32> -> vector<6x512xf32>
    %c2_402 = arith.constant 2 : index
    %c0_403 = arith.constant 0 : index
    %707 = vector.load %arg6[%c2_402, %c0_403] : memref<4x2048xf32, #tpu.memory_space<vmem>>, vector<1x512xf32>
    %708 = vector.shape_cast %707 : vector<1x512xf32> to vector<512xf32>
    %709 = vector.shape_cast %708 : vector<512xf32> to vector<1x512xf32>
    %710 = vector.broadcast %709 : vector<1x512xf32> to vector<6x512xf32>
    %711 = arith.addf %706, %710 : vector<6x512xf32>
    %cst_404 = arith.constant 0.000000e+00 : f32
    %712 = vector.broadcast %cst_404 : f32 to vector<6x512xf32>
    %713 = arith.maximumf %711, %712 : vector<6x512xf32>
    %c2_405 = arith.constant 2 : index
    %c0_406 = arith.constant 0 : index
    %c0_407 = arith.constant 0 : index
    %714 = vector.load %arg11[%c2_405, %c0_406, %c0_407] : memref<4x32x2048xbf16, #tpu.memory_space<vmem>>, vector<1x32x512xbf16>
    %715 = vector.shape_cast %714 : vector<1x32x512xbf16> to vector<32x512xbf16>
    %716 = arith.truncf %713 : vector<6x512xf32> to vector<6x512xbf16>
    %cst_408 = arith.constant dense<0.000000e+00> : vector<6x32xf32>
    %717 = tpu.matmul %716, %715, %cst_408 {dimension_numbers = #tpu.dot_dimension_numbers<[1], [1], [0], [0], [0, 0, 1, 0], [], []>} : vector<6x512xbf16>, vector<32x512xbf16>, vector<6x32xf32> -> vector<6x32xf32>
    %718 = arith.addf %703, %717 : vector<6x32xf32>
    %c2_409 = arith.constant 2 : index
    %c0_410 = arith.constant 0 : index
    %c512_411 = arith.constant 512 : index
    %719 = vector.load %arg10[%c2_409, %c0_410, %c512_411] : memref<4x32x2048xbf16, #tpu.memory_space<vmem>>, vector<1x32x512xbf16>
    %720 = vector.shape_cast %719 : vector<1x32x512xbf16> to vector<32x512xbf16>
    %cst_412 = arith.constant dense<0.000000e+00> : vector<6x512xf32>
    %721 = tpu.matmul %702, %720, %cst_412 {dimension_numbers = #tpu.dot_dimension_numbers<[1], [0], [0], [1], [0, 0, 1, 1], [], []>} : vector<6x32xbf16>, vector<32x512xbf16>, vector<6x512xf32> -> vector<6x512xf32>
    %c2_413 = arith.constant 2 : index
    %c512_414 = arith.constant 512 : index
    %722 = vector.load %arg6[%c2_413, %c512_414] : memref<4x2048xf32, #tpu.memory_space<vmem>>, vector<1x512xf32>
    %723 = vector.shape_cast %722 : vector<1x512xf32> to vector<512xf32>
    %724 = vector.shape_cast %723 : vector<512xf32> to vector<1x512xf32>
    %725 = vector.broadcast %724 : vector<1x512xf32> to vector<6x512xf32>
    %726 = arith.addf %721, %725 : vector<6x512xf32>
    %cst_415 = arith.constant 0.000000e+00 : f32
    %727 = vector.broadcast %cst_415 : f32 to vector<6x512xf32>
    %728 = arith.maximumf %726, %727 : vector<6x512xf32>
    %c2_416 = arith.constant 2 : index
    %c0_417 = arith.constant 0 : index
    %c512_418 = arith.constant 512 : index
    %729 = vector.load %arg11[%c2_416, %c0_417, %c512_418] : memref<4x32x2048xbf16, #tpu.memory_space<vmem>>, vector<1x32x512xbf16>
    %730 = vector.shape_cast %729 : vector<1x32x512xbf16> to vector<32x512xbf16>
    %731 = arith.truncf %728 : vector<6x512xf32> to vector<6x512xbf16>
    %cst_419 = arith.constant dense<0.000000e+00> : vector<6x32xf32>
    %732 = tpu.matmul %731, %730, %cst_419 {dimension_numbers = #tpu.dot_dimension_numbers<[1], [1], [0], [0], [0, 0, 1, 0], [], []>} : vector<6x512xbf16>, vector<32x512xbf16>, vector<6x32xf32> -> vector<6x32xf32>
    %733 = arith.addf %718, %732 : vector<6x32xf32>
    %c2_420 = arith.constant 2 : index
    %c0_421 = arith.constant 0 : index
    %c1024_422 = arith.constant 1024 : index
    %734 = vector.load %arg10[%c2_420, %c0_421, %c1024_422] : memref<4x32x2048xbf16, #tpu.memory_space<vmem>>, vector<1x32x512xbf16>
    %735 = vector.shape_cast %734 : vector<1x32x512xbf16> to vector<32x512xbf16>
    %cst_423 = arith.constant dense<0.000000e+00> : vector<6x512xf32>
    %736 = tpu.matmul %702, %735, %cst_423 {dimension_numbers = #tpu.dot_dimension_numbers<[1], [0], [0], [1], [0, 0, 1, 1], [], []>} : vector<6x32xbf16>, vector<32x512xbf16>, vector<6x512xf32> -> vector<6x512xf32>
    %c2_424 = arith.constant 2 : index
    %c1024_425 = arith.constant 1024 : index
    %737 = vector.load %arg6[%c2_424, %c1024_425] : memref<4x2048xf32, #tpu.memory_space<vmem>>, vector<1x512xf32>
    %738 = vector.shape_cast %737 : vector<1x512xf32> to vector<512xf32>
    %739 = vector.shape_cast %738 : vector<512xf32> to vector<1x512xf32>
    %740 = vector.broadcast %739 : vector<1x512xf32> to vector<6x512xf32>
    %741 = arith.addf %736, %740 : vector<6x512xf32>
    %cst_426 = arith.constant 0.000000e+00 : f32
    %742 = vector.broadcast %cst_426 : f32 to vector<6x512xf32>
    %743 = arith.maximumf %741, %742 : vector<6x512xf32>
    %c2_427 = arith.constant 2 : index
    %c0_428 = arith.constant 0 : index
    %c1024_429 = arith.constant 1024 : index
    %744 = vector.load %arg11[%c2_427, %c0_428, %c1024_429] : memref<4x32x2048xbf16, #tpu.memory_space<vmem>>, vector<1x32x512xbf16>
    %745 = vector.shape_cast %744 : vector<1x32x512xbf16> to vector<32x512xbf16>
    %746 = arith.truncf %743 : vector<6x512xf32> to vector<6x512xbf16>
    %cst_430 = arith.constant dense<0.000000e+00> : vector<6x32xf32>
    %747 = tpu.matmul %746, %745, %cst_430 {dimension_numbers = #tpu.dot_dimension_numbers<[1], [1], [0], [0], [0, 0, 1, 0], [], []>} : vector<6x512xbf16>, vector<32x512xbf16>, vector<6x32xf32> -> vector<6x32xf32>
    %748 = arith.addf %733, %747 : vector<6x32xf32>
    %c2_431 = arith.constant 2 : index
    %c0_432 = arith.constant 0 : index
    %c1536_433 = arith.constant 1536 : index
    %749 = vector.load %arg10[%c2_431, %c0_432, %c1536_433] : memref<4x32x2048xbf16, #tpu.memory_space<vmem>>, vector<1x32x512xbf16>
    %750 = vector.shape_cast %749 : vector<1x32x512xbf16> to vector<32x512xbf16>
    %cst_434 = arith.constant dense<0.000000e+00> : vector<6x512xf32>
    %751 = tpu.matmul %702, %750, %cst_434 {dimension_numbers = #tpu.dot_dimension_numbers<[1], [0], [0], [1], [0, 0, 1, 1], [], []>} : vector<6x32xbf16>, vector<32x512xbf16>, vector<6x512xf32> -> vector<6x512xf32>
    %c2_435 = arith.constant 2 : index
    %c1536_436 = arith.constant 1536 : index
    %752 = vector.load %arg6[%c2_435, %c1536_436] : memref<4x2048xf32, #tpu.memory_space<vmem>>, vector<1x512xf32>
    %753 = vector.shape_cast %752 : vector<1x512xf32> to vector<512xf32>
    %754 = vector.shape_cast %753 : vector<512xf32> to vector<1x512xf32>
    %755 = vector.broadcast %754 : vector<1x512xf32> to vector<6x512xf32>
    %756 = arith.addf %751, %755 : vector<6x512xf32>
    %cst_437 = arith.constant 0.000000e+00 : f32
    %757 = vector.broadcast %cst_437 : f32 to vector<6x512xf32>
    %758 = arith.maximumf %756, %757 : vector<6x512xf32>
    %c2_438 = arith.constant 2 : index
    %c0_439 = arith.constant 0 : index
    %c1536_440 = arith.constant 1536 : index
    %759 = vector.load %arg11[%c2_438, %c0_439, %c1536_440] : memref<4x32x2048xbf16, #tpu.memory_space<vmem>>, vector<1x32x512xbf16>
    %760 = vector.shape_cast %759 : vector<1x32x512xbf16> to vector<32x512xbf16>
    %761 = arith.truncf %758 : vector<6x512xf32> to vector<6x512xbf16>
    %cst_441 = arith.constant dense<0.000000e+00> : vector<6x32xf32>
    %762 = tpu.matmul %761, %760, %cst_441 {dimension_numbers = #tpu.dot_dimension_numbers<[1], [1], [0], [0], [0, 0, 1, 0], [], []>} : vector<6x512xbf16>, vector<32x512xbf16>, vector<6x32xf32> -> vector<6x32xf32>
    %763 = arith.addf %748, %762 : vector<6x32xf32>
    %c163 = arith.constant 163 : index
    %c0_442 = arith.constant 0 : index
    %764 = vector.load %arg4[%c163, %c0_442] : memref<168x32xf32, #tpu.memory_space<vmem>>, vector<1x32xf32>
    %765 = vector.shape_cast %764 : vector<1x32xf32> to vector<32xf32>
    %766 = vector.shape_cast %765 : vector<32xf32> to vector<1x32xf32>
    %767 = vector.broadcast %766 : vector<1x32xf32> to vector<6x32xf32>
    %768 = arith.addf %763, %767 : vector<6x32xf32>
    %769 = arith.addf %689, %768 : vector<6x32xf32>
    %c153 = arith.constant 153 : index
    %c0_443 = arith.constant 0 : index
    %770 = vector.load %arg4[%c153, %c0_443] : memref<168x32xf32, #tpu.memory_space<vmem>>, vector<1x32xf32>
    %771 = vector.shape_cast %770 : vector<1x32xf32> to vector<32xf32>
    %c154 = arith.constant 154 : index
    %c0_444 = arith.constant 0 : index
    %772 = vector.load %arg4[%c154, %c0_444] : memref<168x32xf32, #tpu.memory_space<vmem>>, vector<1x32xf32>
    %773 = vector.shape_cast %772 : vector<1x32xf32> to vector<32xf32>
    %cst_445 = arith.constant dense<0.000000e+00> : vector<6xf32>
    %774 = vector.multi_reduction <add>, %769, %cst_445 [1] : vector<6x32xf32> to vector<6xf32>
    %775 = vector.shape_cast %774 : vector<6xf32> to vector<6x1xf32>
    %cst_446 = arith.constant 3.200000e+01 : f32
    %776 = vector.broadcast %cst_446 : f32 to vector<6x1xf32>
    %777 = arith.divf %775, %776 : vector<6x1xf32>
    %778 = vector.broadcast %777 : vector<6x1xf32> to vector<6x32xf32>
    %779 = arith.subf %769, %778 : vector<6x32xf32>
    %780 = arith.mulf %779, %779 : vector<6x32xf32>
    %cst_447 = arith.constant dense<0.000000e+00> : vector<6xf32>
    %781 = vector.multi_reduction <add>, %780, %cst_447 [1] : vector<6x32xf32> to vector<6xf32>
    %782 = vector.shape_cast %781 : vector<6xf32> to vector<6x1xf32>
    %cst_448 = arith.constant 3.200000e+01 : f32
    %783 = vector.broadcast %cst_448 : f32 to vector<6x1xf32>
    %784 = arith.divf %782, %783 : vector<6x1xf32>
    %785 = vector.broadcast %777 : vector<6x1xf32> to vector<6x32xf32>
    %786 = arith.subf %769, %785 : vector<6x32xf32>
    %cst_449 = arith.constant 9.99999974E-6 : f32
    %787 = vector.broadcast %cst_449 : f32 to vector<6x1xf32>
    %788 = arith.addf %784, %787 : vector<6x1xf32>
    %789 = math.rsqrt %788 : vector<6x1xf32>
    %790 = vector.broadcast %789 : vector<6x1xf32> to vector<6x32xf32>
    %791 = arith.mulf %786, %790 : vector<6x32xf32>
    %792 = vector.shape_cast %771 : vector<32xf32> to vector<1x32xf32>
    %793 = vector.broadcast %792 : vector<1x32xf32> to vector<6x32xf32>
    %794 = arith.mulf %791, %793 : vector<6x32xf32>
    %795 = vector.shape_cast %773 : vector<32xf32> to vector<1x32xf32>
    %796 = vector.broadcast %795 : vector<1x32xf32> to vector<6x32xf32>
    %797 = arith.addf %794, %796 : vector<6x32xf32>
    %c4 = arith.constant 4 : index
    %c0_450 = arith.constant 0 : index
    %c0_451 = arith.constant 0 : index
    %798 = vector.load %arg5[%c4, %c0_450, %c0_451] : memref<6x40x128xf32, #tpu.memory_space<vmem>>, vector<1x32x32xf32>
    %799 = vector.shape_cast %798 : vector<1x32x32xf32> to vector<32x32xf32>
    %c4_452 = arith.constant 4 : index
    %c0_453 = arith.constant 0 : index
    %c32_454 = arith.constant 32 : index
    %800 = vector.load %arg5[%c4_452, %c0_453, %c32_454] : memref<6x40x128xf32, #tpu.memory_space<vmem>>, vector<1x32x64xf32>
    %801 = vector.shape_cast %800 : vector<1x32x64xf32> to vector<32x64xf32>
    %c4_455 = arith.constant 4 : index
    %c32_456 = arith.constant 32 : index
    %c0_457 = arith.constant 0 : index
    %802 = vector.load %arg5[%c4_455, %c32_456, %c0_457] : memref<6x40x128xf32, #tpu.memory_space<vmem>>, vector<1x1x32xf32>
    %803 = vector.shape_cast %802 : vector<1x1x32xf32> to vector<32xf32>
    %c4_458 = arith.constant 4 : index
    %c32_459 = arith.constant 32 : index
    %c32_460 = arith.constant 32 : index
    %804 = vector.load %arg5[%c4_458, %c32_459, %c32_460] : memref<6x40x128xf32, #tpu.memory_space<vmem>>, vector<1x1x64xf32>
    %805 = vector.shape_cast %804 : vector<1x1x64xf32> to vector<64xf32>
    %c4_461 = arith.constant 4 : index
    %c32_462 = arith.constant 32 : index
    %c96_463 = arith.constant 96 : index
    %806 = vector.load %arg5[%c4_461, %c32_462, %c96_463] : memref<6x40x128xf32, #tpu.memory_space<vmem>>, vector<1x1x32xf32>
    %807 = vector.shape_cast %806 : vector<1x1x32xf32> to vector<32xf32>
    %cst_464 = arith.constant dense<0.000000e+00> : vector<6x32xf32>
    %808 = tpu.matmul %797, %799, %cst_464 {dimension_numbers = #tpu.dot_dimension_numbers<[1], [0], [0], [1], [0, 0, 1, 1], [], []>} : vector<6x32xf32>, vector<32x32xf32>, vector<6x32xf32> -> vector<6x32xf32>
    %809 = vector.shape_cast %803 : vector<32xf32> to vector<1x32xf32>
    %810 = vector.broadcast %809 : vector<1x32xf32> to vector<6x32xf32>
    %811 = arith.addf %808, %810 : vector<6x32xf32>
    %cst_465 = arith.constant dense<0.000000e+00> : vector<6x64xf32>
    %812 = tpu.matmul %797, %801, %cst_465 {dimension_numbers = #tpu.dot_dimension_numbers<[1], [0], [0], [1], [0, 0, 1, 1], [], []>} : vector<6x32xf32>, vector<32x64xf32>, vector<6x64xf32> -> vector<6x64xf32>
    %813 = vector.shape_cast %805 : vector<64xf32> to vector<1x64xf32>
    %814 = vector.broadcast %813 : vector<1x64xf32> to vector<6x64xf32>
    %815 = arith.addf %812, %814 : vector<6x64xf32>
    %816 = vector.extract_strided_slice %811 {offsets = [0, 0], sizes = [6, 16], strides = [1, 1]} : vector<6x32xf32> to vector<6x16xf32>
    %817 = vector.extract_strided_slice %815 {offsets = [0, 0], sizes = [6, 16], strides = [1, 1]} : vector<6x64xf32> to vector<6x16xf32>
    %818 = vector.extract_strided_slice %815 {offsets = [0, 32], sizes = [6, 16], strides = [1, 1]} : vector<6x64xf32> to vector<6x16xf32>
    %cst_466 = arith.constant dense<0.000000e+00> : vector<6x6xf32>
    %819 = tpu.matmul %816, %817, %cst_466 {dimension_numbers = #tpu.dot_dimension_numbers<[1], [1], [0], [0], [0, 0, 1, 0], [], []>} : vector<6x16xf32>, vector<6x16xf32>, vector<6x6xf32> -> vector<6x6xf32>
    %cst_467 = arith.constant 2.500000e-01 : f32
    %820 = vector.broadcast %cst_467 : f32 to vector<6x6xf32>
    %821 = arith.mulf %819, %820 : vector<6x6xf32>
    %cst_468 = arith.constant dense<0xFF800000> : vector<6xf32>
    %822 = vector.multi_reduction <maximumf>, %821, %cst_468 [1] : vector<6x6xf32> to vector<6xf32>
    %823 = vector.shape_cast %822 : vector<6xf32> to vector<6x1xf32>
    %824 = vector.broadcast %823 : vector<6x1xf32> to vector<6x6xf32>
    %825 = arith.subf %821, %824 : vector<6x6xf32>
    %826 = math.exp %825 : vector<6x6xf32>
    %cst_469 = arith.constant dense<0.000000e+00> : vector<6xf32>
    %827 = vector.multi_reduction <add>, %826, %cst_469 [1] : vector<6x6xf32> to vector<6xf32>
    %828 = vector.shape_cast %827 : vector<6xf32> to vector<6x1xf32>
    %829 = tpu.reciprocal %828 {approx = true} : vector<6x1xf32> -> vector<6x1xf32>
    %830 = vector.broadcast %829 : vector<6x1xf32> to vector<6x6xf32>
    %831 = arith.mulf %826, %830 : vector<6x6xf32>
    %cst_470 = arith.constant dense<0.000000e+00> : vector<6x16xf32>
    %832 = tpu.matmul %831, %818, %cst_470 {dimension_numbers = #tpu.dot_dimension_numbers<[1], [0], [0], [1], [0, 0, 1, 1], [], []>} : vector<6x6xf32>, vector<6x16xf32>, vector<6x16xf32> -> vector<6x16xf32>
    %c4_471 = arith.constant 4 : index
    %c0_472 = arith.constant 0 : index
    %c96_473 = arith.constant 96 : index
    %833 = vector.load %arg5[%c4_471, %c0_472, %c96_473] : memref<6x40x128xf32, #tpu.memory_space<vmem>>, vector<1x16x32xf32>
    %834 = vector.shape_cast %833 : vector<1x16x32xf32> to vector<16x32xf32>
    %cst_474 = arith.constant dense<0.000000e+00> : vector<6x32xf32>
    %835 = tpu.matmul %832, %834, %cst_474 {dimension_numbers = #tpu.dot_dimension_numbers<[1], [0], [0], [1], [0, 0, 1, 1], [], []>} : vector<6x16xf32>, vector<16x32xf32>, vector<6x32xf32> -> vector<6x32xf32>
    %836 = vector.extract_strided_slice %811 {offsets = [0, 16], sizes = [6, 16], strides = [1, 1]} : vector<6x32xf32> to vector<6x16xf32>
    %837 = vector.extract_strided_slice %815 {offsets = [0, 16], sizes = [6, 16], strides = [1, 1]} : vector<6x64xf32> to vector<6x16xf32>
    %838 = vector.extract_strided_slice %815 {offsets = [0, 48], sizes = [6, 16], strides = [1, 1]} : vector<6x64xf32> to vector<6x16xf32>
    %cst_475 = arith.constant dense<0.000000e+00> : vector<6x6xf32>
    %839 = tpu.matmul %836, %837, %cst_475 {dimension_numbers = #tpu.dot_dimension_numbers<[1], [1], [0], [0], [0, 0, 1, 0], [], []>} : vector<6x16xf32>, vector<6x16xf32>, vector<6x6xf32> -> vector<6x6xf32>
    %cst_476 = arith.constant 2.500000e-01 : f32
    %840 = vector.broadcast %cst_476 : f32 to vector<6x6xf32>
    %841 = arith.mulf %839, %840 : vector<6x6xf32>
    %cst_477 = arith.constant dense<0xFF800000> : vector<6xf32>
    %842 = vector.multi_reduction <maximumf>, %841, %cst_477 [1] : vector<6x6xf32> to vector<6xf32>
    %843 = vector.shape_cast %842 : vector<6xf32> to vector<6x1xf32>
    %844 = vector.broadcast %843 : vector<6x1xf32> to vector<6x6xf32>
    %845 = arith.subf %841, %844 : vector<6x6xf32>
    %846 = math.exp %845 : vector<6x6xf32>
    %cst_478 = arith.constant dense<0.000000e+00> : vector<6xf32>
    %847 = vector.multi_reduction <add>, %846, %cst_478 [1] : vector<6x6xf32> to vector<6xf32>
    %848 = vector.shape_cast %847 : vector<6xf32> to vector<6x1xf32>
    %849 = tpu.reciprocal %848 {approx = true} : vector<6x1xf32> -> vector<6x1xf32>
    %850 = vector.broadcast %849 : vector<6x1xf32> to vector<6x6xf32>
    %851 = arith.mulf %846, %850 : vector<6x6xf32>
    %cst_479 = arith.constant dense<0.000000e+00> : vector<6x16xf32>
    %852 = tpu.matmul %851, %838, %cst_479 {dimension_numbers = #tpu.dot_dimension_numbers<[1], [0], [0], [1], [0, 0, 1, 1], [], []>} : vector<6x6xf32>, vector<6x16xf32>, vector<6x16xf32> -> vector<6x16xf32>
    %c4_480 = arith.constant 4 : index
    %c16_481 = arith.constant 16 : index
    %c96_482 = arith.constant 96 : index
    %853 = vector.load %arg5[%c4_480, %c16_481, %c96_482] : memref<6x40x128xf32, #tpu.memory_space<vmem>>, vector<1x16x32xf32>
    %854 = vector.shape_cast %853 : vector<1x16x32xf32> to vector<16x32xf32>
    %cst_483 = arith.constant dense<0.000000e+00> : vector<6x32xf32>
    %855 = tpu.matmul %852, %854, %cst_483 {dimension_numbers = #tpu.dot_dimension_numbers<[1], [0], [0], [1], [0, 0, 1, 1], [], []>} : vector<6x16xf32>, vector<16x32xf32>, vector<6x32xf32> -> vector<6x32xf32>
    %856 = arith.addf %835, %855 : vector<6x32xf32>
    %857 = vector.shape_cast %807 : vector<32xf32> to vector<1x32xf32>
    %858 = vector.broadcast %857 : vector<1x32xf32> to vector<6x32xf32>
    %859 = arith.addf %856, %858 : vector<6x32xf32>
    %860 = arith.addf %797, %859 : vector<6x32xf32>
    %c155 = arith.constant 155 : index
    %c0_484 = arith.constant 0 : index
    %861 = vector.load %arg4[%c155, %c0_484] : memref<168x32xf32, #tpu.memory_space<vmem>>, vector<1x32xf32>
    %862 = vector.shape_cast %861 : vector<1x32xf32> to vector<32xf32>
    %c156 = arith.constant 156 : index
    %c0_485 = arith.constant 0 : index
    %863 = vector.load %arg4[%c156, %c0_485] : memref<168x32xf32, #tpu.memory_space<vmem>>, vector<1x32xf32>
    %864 = vector.shape_cast %863 : vector<1x32xf32> to vector<32xf32>
    %cst_486 = arith.constant dense<0.000000e+00> : vector<6xf32>
    %865 = vector.multi_reduction <add>, %860, %cst_486 [1] : vector<6x32xf32> to vector<6xf32>
    %866 = vector.shape_cast %865 : vector<6xf32> to vector<6x1xf32>
    %cst_487 = arith.constant 3.200000e+01 : f32
    %867 = vector.broadcast %cst_487 : f32 to vector<6x1xf32>
    %868 = arith.divf %866, %867 : vector<6x1xf32>
    %869 = vector.broadcast %868 : vector<6x1xf32> to vector<6x32xf32>
    %870 = arith.subf %860, %869 : vector<6x32xf32>
    %871 = arith.mulf %870, %870 : vector<6x32xf32>
    %cst_488 = arith.constant dense<0.000000e+00> : vector<6xf32>
    %872 = vector.multi_reduction <add>, %871, %cst_488 [1] : vector<6x32xf32> to vector<6xf32>
    %873 = vector.shape_cast %872 : vector<6xf32> to vector<6x1xf32>
    %cst_489 = arith.constant 3.200000e+01 : f32
    %874 = vector.broadcast %cst_489 : f32 to vector<6x1xf32>
    %875 = arith.divf %873, %874 : vector<6x1xf32>
    %876 = vector.broadcast %868 : vector<6x1xf32> to vector<6x32xf32>
    %877 = arith.subf %860, %876 : vector<6x32xf32>
    %cst_490 = arith.constant 9.99999974E-6 : f32
    %878 = vector.broadcast %cst_490 : f32 to vector<6x1xf32>
    %879 = arith.addf %875, %878 : vector<6x1xf32>
    %880 = math.rsqrt %879 : vector<6x1xf32>
    %881 = vector.broadcast %880 : vector<6x1xf32> to vector<6x32xf32>
    %882 = arith.mulf %877, %881 : vector<6x32xf32>
    %883 = vector.shape_cast %862 : vector<32xf32> to vector<1x32xf32>
    %884 = vector.broadcast %883 : vector<1x32xf32> to vector<6x32xf32>
    %885 = arith.mulf %882, %884 : vector<6x32xf32>
    %886 = vector.shape_cast %864 : vector<32xf32> to vector<1x32xf32>
    %887 = vector.broadcast %886 : vector<1x32xf32> to vector<6x32xf32>
    %888 = arith.addf %885, %887 : vector<6x32xf32>
    %c5 = arith.constant 5 : index
    %c0_491 = arith.constant 0 : index
    %c0_492 = arith.constant 0 : index
    %889 = vector.load %arg5[%c5, %c0_491, %c0_492] : memref<6x40x128xf32, #tpu.memory_space<vmem>>, vector<1x32x32xf32>
    %890 = vector.shape_cast %889 : vector<1x32x32xf32> to vector<32x32xf32>
    %c5_493 = arith.constant 5 : index
    %c0_494 = arith.constant 0 : index
    %c32_495 = arith.constant 32 : index
    %891 = vector.load %arg5[%c5_493, %c0_494, %c32_495] : memref<6x40x128xf32, #tpu.memory_space<vmem>>, vector<1x32x64xf32>
    %892 = vector.shape_cast %891 : vector<1x32x64xf32> to vector<32x64xf32>
    %c5_496 = arith.constant 5 : index
    %c32_497 = arith.constant 32 : index
    %c0_498 = arith.constant 0 : index
    %893 = vector.load %arg5[%c5_496, %c32_497, %c0_498] : memref<6x40x128xf32, #tpu.memory_space<vmem>>, vector<1x1x32xf32>
    %894 = vector.shape_cast %893 : vector<1x1x32xf32> to vector<32xf32>
    %c5_499 = arith.constant 5 : index
    %c32_500 = arith.constant 32 : index
    %c32_501 = arith.constant 32 : index
    %895 = vector.load %arg5[%c5_499, %c32_500, %c32_501] : memref<6x40x128xf32, #tpu.memory_space<vmem>>, vector<1x1x64xf32>
    %896 = vector.shape_cast %895 : vector<1x1x64xf32> to vector<64xf32>
    %c5_502 = arith.constant 5 : index
    %c32_503 = arith.constant 32 : index
    %c96_504 = arith.constant 96 : index
    %897 = vector.load %arg5[%c5_502, %c32_503, %c96_504] : memref<6x40x128xf32, #tpu.memory_space<vmem>>, vector<1x1x32xf32>
    %898 = vector.shape_cast %897 : vector<1x1x32xf32> to vector<32xf32>
    %cst_505 = arith.constant dense<0.000000e+00> : vector<6x32xf32>
    %899 = tpu.matmul %888, %890, %cst_505 {dimension_numbers = #tpu.dot_dimension_numbers<[1], [0], [0], [1], [0, 0, 1, 1], [], []>} : vector<6x32xf32>, vector<32x32xf32>, vector<6x32xf32> -> vector<6x32xf32>
    %900 = vector.shape_cast %894 : vector<32xf32> to vector<1x32xf32>
    %901 = vector.broadcast %900 : vector<1x32xf32> to vector<6x32xf32>
    %902 = arith.addf %899, %901 : vector<6x32xf32>
    %cst_506 = arith.constant dense<0.000000e+00> : vector<6x64xf32>
    %903 = tpu.matmul %507, %892, %cst_506 {dimension_numbers = #tpu.dot_dimension_numbers<[1], [0], [0], [1], [0, 0, 1, 1], [], []>} : vector<6x32xf32>, vector<32x64xf32>, vector<6x64xf32> -> vector<6x64xf32>
    %904 = vector.shape_cast %896 : vector<64xf32> to vector<1x64xf32>
    %905 = vector.broadcast %904 : vector<1x64xf32> to vector<6x64xf32>
    %906 = arith.addf %903, %905 : vector<6x64xf32>
    %907 = vector.extract_strided_slice %902 {offsets = [0, 0], sizes = [6, 16], strides = [1, 1]} : vector<6x32xf32> to vector<6x16xf32>
    %908 = vector.extract_strided_slice %906 {offsets = [0, 0], sizes = [6, 16], strides = [1, 1]} : vector<6x64xf32> to vector<6x16xf32>
    %909 = vector.extract_strided_slice %906 {offsets = [0, 32], sizes = [6, 16], strides = [1, 1]} : vector<6x64xf32> to vector<6x16xf32>
    %cst_507 = arith.constant dense<0.000000e+00> : vector<6x6xf32>
    %910 = tpu.matmul %907, %908, %cst_507 {dimension_numbers = #tpu.dot_dimension_numbers<[1], [1], [0], [0], [0, 0, 1, 0], [], []>} : vector<6x16xf32>, vector<6x16xf32>, vector<6x6xf32> -> vector<6x6xf32>
    %cst_508 = arith.constant 2.500000e-01 : f32
    %911 = vector.broadcast %cst_508 : f32 to vector<6x6xf32>
    %912 = arith.mulf %910, %911 : vector<6x6xf32>
    %cst_509 = arith.constant dense<0xFF800000> : vector<6xf32>
    %913 = vector.multi_reduction <maximumf>, %912, %cst_509 [1] : vector<6x6xf32> to vector<6xf32>
    %914 = vector.shape_cast %913 : vector<6xf32> to vector<6x1xf32>
    %915 = vector.broadcast %914 : vector<6x1xf32> to vector<6x6xf32>
    %916 = arith.subf %912, %915 : vector<6x6xf32>
    %917 = math.exp %916 : vector<6x6xf32>
    %cst_510 = arith.constant dense<0.000000e+00> : vector<6xf32>
    %918 = vector.multi_reduction <add>, %917, %cst_510 [1] : vector<6x6xf32> to vector<6xf32>
    %919 = vector.shape_cast %918 : vector<6xf32> to vector<6x1xf32>
    %920 = tpu.reciprocal %919 {approx = true} : vector<6x1xf32> -> vector<6x1xf32>
    %921 = vector.broadcast %920 : vector<6x1xf32> to vector<6x6xf32>
    %922 = arith.mulf %917, %921 : vector<6x6xf32>
    %cst_511 = arith.constant dense<0.000000e+00> : vector<6x16xf32>
    %923 = tpu.matmul %922, %909, %cst_511 {dimension_numbers = #tpu.dot_dimension_numbers<[1], [0], [0], [1], [0, 0, 1, 1], [], []>} : vector<6x6xf32>, vector<6x16xf32>, vector<6x16xf32> -> vector<6x16xf32>
    %c5_512 = arith.constant 5 : index
    %c0_513 = arith.constant 0 : index
    %c96_514 = arith.constant 96 : index
    %924 = vector.load %arg5[%c5_512, %c0_513, %c96_514] : memref<6x40x128xf32, #tpu.memory_space<vmem>>, vector<1x16x32xf32>
    %925 = vector.shape_cast %924 : vector<1x16x32xf32> to vector<16x32xf32>
    %cst_515 = arith.constant dense<0.000000e+00> : vector<6x32xf32>
    %926 = tpu.matmul %923, %925, %cst_515 {dimension_numbers = #tpu.dot_dimension_numbers<[1], [0], [0], [1], [0, 0, 1, 1], [], []>} : vector<6x16xf32>, vector<16x32xf32>, vector<6x32xf32> -> vector<6x32xf32>
    %927 = vector.extract_strided_slice %902 {offsets = [0, 16], sizes = [6, 16], strides = [1, 1]} : vector<6x32xf32> to vector<6x16xf32>
    %928 = vector.extract_strided_slice %906 {offsets = [0, 16], sizes = [6, 16], strides = [1, 1]} : vector<6x64xf32> to vector<6x16xf32>
    %929 = vector.extract_strided_slice %906 {offsets = [0, 48], sizes = [6, 16], strides = [1, 1]} : vector<6x64xf32> to vector<6x16xf32>
    %cst_516 = arith.constant dense<0.000000e+00> : vector<6x6xf32>
    %930 = tpu.matmul %927, %928, %cst_516 {dimension_numbers = #tpu.dot_dimension_numbers<[1], [1], [0], [0], [0, 0, 1, 0], [], []>} : vector<6x16xf32>, vector<6x16xf32>, vector<6x6xf32> -> vector<6x6xf32>
    %cst_517 = arith.constant 2.500000e-01 : f32
    %931 = vector.broadcast %cst_517 : f32 to vector<6x6xf32>
    %932 = arith.mulf %930, %931 : vector<6x6xf32>
    %cst_518 = arith.constant dense<0xFF800000> : vector<6xf32>
    %933 = vector.multi_reduction <maximumf>, %932, %cst_518 [1] : vector<6x6xf32> to vector<6xf32>
    %934 = vector.shape_cast %933 : vector<6xf32> to vector<6x1xf32>
    %935 = vector.broadcast %934 : vector<6x1xf32> to vector<6x6xf32>
    %936 = arith.subf %932, %935 : vector<6x6xf32>
    %937 = math.exp %936 : vector<6x6xf32>
    %cst_519 = arith.constant dense<0.000000e+00> : vector<6xf32>
    %938 = vector.multi_reduction <add>, %937, %cst_519 [1] : vector<6x6xf32> to vector<6xf32>
    %939 = vector.shape_cast %938 : vector<6xf32> to vector<6x1xf32>
    %940 = tpu.reciprocal %939 {approx = true} : vector<6x1xf32> -> vector<6x1xf32>
    %941 = vector.broadcast %940 : vector<6x1xf32> to vector<6x6xf32>
    %942 = arith.mulf %937, %941 : vector<6x6xf32>
    %cst_520 = arith.constant dense<0.000000e+00> : vector<6x16xf32>
    %943 = tpu.matmul %942, %929, %cst_520 {dimension_numbers = #tpu.dot_dimension_numbers<[1], [0], [0], [1], [0, 0, 1, 1], [], []>} : vector<6x6xf32>, vector<6x16xf32>, vector<6x16xf32> -> vector<6x16xf32>
    %c5_521 = arith.constant 5 : index
    %c16_522 = arith.constant 16 : index
    %c96_523 = arith.constant 96 : index
    %944 = vector.load %arg5[%c5_521, %c16_522, %c96_523] : memref<6x40x128xf32, #tpu.memory_space<vmem>>, vector<1x16x32xf32>
    %945 = vector.shape_cast %944 : vector<1x16x32xf32> to vector<16x32xf32>
    %cst_524 = arith.constant dense<0.000000e+00> : vector<6x32xf32>
    %946 = tpu.matmul %943, %945, %cst_524 {dimension_numbers = #tpu.dot_dimension_numbers<[1], [0], [0], [1], [0, 0, 1, 1], [], []>} : vector<6x16xf32>, vector<16x32xf32>, vector<6x32xf32> -> vector<6x32xf32>
    %947 = arith.addf %926, %946 : vector<6x32xf32>
    %948 = vector.shape_cast %898 : vector<32xf32> to vector<1x32xf32>
    %949 = vector.broadcast %948 : vector<1x32xf32> to vector<6x32xf32>
    %950 = arith.addf %947, %949 : vector<6x32xf32>
    %951 = arith.addf %888, %950 : vector<6x32xf32>
    %c157 = arith.constant 157 : index
    %c0_525 = arith.constant 0 : index
    %952 = vector.load %arg4[%c157, %c0_525] : memref<168x32xf32, #tpu.memory_space<vmem>>, vector<1x32xf32>
    %953 = vector.shape_cast %952 : vector<1x32xf32> to vector<32xf32>
    %c158 = arith.constant 158 : index
    %c0_526 = arith.constant 0 : index
    %954 = vector.load %arg4[%c158, %c0_526] : memref<168x32xf32, #tpu.memory_space<vmem>>, vector<1x32xf32>
    %955 = vector.shape_cast %954 : vector<1x32xf32> to vector<32xf32>
    %cst_527 = arith.constant dense<0.000000e+00> : vector<6xf32>
    %956 = vector.multi_reduction <add>, %951, %cst_527 [1] : vector<6x32xf32> to vector<6xf32>
    %957 = vector.shape_cast %956 : vector<6xf32> to vector<6x1xf32>
    %cst_528 = arith.constant 3.200000e+01 : f32
    %958 = vector.broadcast %cst_528 : f32 to vector<6x1xf32>
    %959 = arith.divf %957, %958 : vector<6x1xf32>
    %960 = vector.broadcast %959 : vector<6x1xf32> to vector<6x32xf32>
    %961 = arith.subf %951, %960 : vector<6x32xf32>
    %962 = arith.mulf %961, %961 : vector<6x32xf32>
    %cst_529 = arith.constant dense<0.000000e+00> : vector<6xf32>
    %963 = vector.multi_reduction <add>, %962, %cst_529 [1] : vector<6x32xf32> to vector<6xf32>
    %964 = vector.shape_cast %963 : vector<6xf32> to vector<6x1xf32>
    %cst_530 = arith.constant 3.200000e+01 : f32
    %965 = vector.broadcast %cst_530 : f32 to vector<6x1xf32>
    %966 = arith.divf %964, %965 : vector<6x1xf32>
    %967 = vector.broadcast %959 : vector<6x1xf32> to vector<6x32xf32>
    %968 = arith.subf %951, %967 : vector<6x32xf32>
    %cst_531 = arith.constant 9.99999974E-6 : f32
    %969 = vector.broadcast %cst_531 : f32 to vector<6x1xf32>
    %970 = arith.addf %966, %969 : vector<6x1xf32>
    %971 = math.rsqrt %970 : vector<6x1xf32>
    %972 = vector.broadcast %971 : vector<6x1xf32> to vector<6x32xf32>
    %973 = arith.mulf %968, %972 : vector<6x32xf32>
    %974 = vector.shape_cast %953 : vector<32xf32> to vector<1x32xf32>
    %975 = vector.broadcast %974 : vector<1x32xf32> to vector<6x32xf32>
    %976 = arith.mulf %973, %975 : vector<6x32xf32>
    %977 = vector.shape_cast %955 : vector<32xf32> to vector<1x32xf32>
    %978 = vector.broadcast %977 : vector<1x32xf32> to vector<6x32xf32>
    %979 = arith.addf %976, %978 : vector<6x32xf32>
    %c3_i32_532 = arith.constant 3 : i32
    %c3_i32_533 = arith.constant 3 : i32
    %c0_i32_534 = arith.constant 0 : i32
    %c3_i32_535 = arith.constant 3 : i32
    %c0_i32_536 = arith.constant 0 : i32
    %c0_i32_537 = arith.constant 0 : i32
    %980 = tpu.memref_slice %arg7[%c3_i32_532, %c0_i32_536, %c0_i32_537] : memref<4x32x2048xbf16, #tpu.memory_space<any>> -> memref<1x32x2048xbf16, #tpu.memory_space<any>>
    %981 = tpu.memref_squeeze %980 : memref<1x32x2048xbf16, #tpu.memory_space<any>> -> memref<32x2048xbf16, #tpu.memory_space<any>>
    %c0_i32_538 = arith.constant 0 : i32
    %c0_i32_539 = arith.constant 0 : i32
    %982 = tpu.memref_slice %arg10[%c3_i32_533, %c0_i32_538, %c0_i32_539] : memref<4x32x2048xbf16, #tpu.memory_space<vmem>> -> memref<1x32x2048xbf16, #tpu.memory_space<vmem>>
    %983 = tpu.memref_squeeze %982 : memref<1x32x2048xbf16, #tpu.memory_space<vmem>> -> memref<32x2048xbf16, #tpu.memory_space<vmem>>
    %984 = tpu.memref_slice %arg12[%c0_i32_534, %c3_i32_535] : memref<2x4x!tpu.dma_semaphore, #tpu.memory_space<semaphore_mem>> -> memref<1x1x!tpu.dma_semaphore, #tpu.memory_space<semaphore_mem>>
    %985 = tpu.memref_squeeze %984 : memref<1x1x!tpu.dma_semaphore, #tpu.memory_space<semaphore_mem>> -> memref<!tpu.dma_semaphore, #tpu.memory_space<semaphore_mem>>
    tpu.wait_dma2 semaphore(%985 : memref<!tpu.dma_semaphore, #tpu.memory_space<semaphore_mem>>) src(%981 : memref<32x2048xbf16, #tpu.memory_space<any>>) dst(%983 : memref<32x2048xbf16, #tpu.memory_space<vmem>>)
    %c3_i32_540 = arith.constant 3 : i32
    %c3_i32_541 = arith.constant 3 : i32
    %c1_i32_542 = arith.constant 1 : i32
    %c3_i32_543 = arith.constant 3 : i32
    %c0_i32_544 = arith.constant 0 : i32
    %c0_i32_545 = arith.constant 0 : i32
    %986 = tpu.memref_slice %arg8[%c3_i32_540, %c0_i32_544, %c0_i32_545] : memref<4x32x2048xbf16, #tpu.memory_space<any>> -> memref<1x32x2048xbf16, #tpu.memory_space<any>>
    %987 = tpu.memref_squeeze %986 : memref<1x32x2048xbf16, #tpu.memory_space<any>> -> memref<32x2048xbf16, #tpu.memory_space<any>>
    %c0_i32_546 = arith.constant 0 : i32
    %c0_i32_547 = arith.constant 0 : i32
    %988 = tpu.memref_slice %arg11[%c3_i32_541, %c0_i32_546, %c0_i32_547] : memref<4x32x2048xbf16, #tpu.memory_space<vmem>> -> memref<1x32x2048xbf16, #tpu.memory_space<vmem>>
    %989 = tpu.memref_squeeze %988 : memref<1x32x2048xbf16, #tpu.memory_space<vmem>> -> memref<32x2048xbf16, #tpu.memory_space<vmem>>
    %990 = tpu.memref_slice %arg12[%c1_i32_542, %c3_i32_543] : memref<2x4x!tpu.dma_semaphore, #tpu.memory_space<semaphore_mem>> -> memref<1x1x!tpu.dma_semaphore, #tpu.memory_space<semaphore_mem>>
    %991 = tpu.memref_squeeze %990 : memref<1x1x!tpu.dma_semaphore, #tpu.memory_space<semaphore_mem>> -> memref<!tpu.dma_semaphore, #tpu.memory_space<semaphore_mem>>
    tpu.wait_dma2 semaphore(%991 : memref<!tpu.dma_semaphore, #tpu.memory_space<semaphore_mem>>) src(%987 : memref<32x2048xbf16, #tpu.memory_space<any>>) dst(%989 : memref<32x2048xbf16, #tpu.memory_space<vmem>>)
    %992 = arith.truncf %979 : vector<6x32xf32> to vector<6x32xbf16>
    %cst_548 = arith.constant 0.000000e+00 : f32
    %993 = vector.broadcast %cst_548 : f32 to vector<6x32xf32>
    %c3_549 = arith.constant 3 : index
    %c0_550 = arith.constant 0 : index
    %c0_551 = arith.constant 0 : index
    %994 = vector.load %arg10[%c3_549, %c0_550, %c0_551] : memref<4x32x2048xbf16, #tpu.memory_space<vmem>>, vector<1x32x512xbf16>
    %995 = vector.shape_cast %994 : vector<1x32x512xbf16> to vector<32x512xbf16>
    %cst_552 = arith.constant dense<0.000000e+00> : vector<6x512xf32>
    %996 = tpu.matmul %992, %995, %cst_552 {dimension_numbers = #tpu.dot_dimension_numbers<[1], [0], [0], [1], [0, 0, 1, 1], [], []>} : vector<6x32xbf16>, vector<32x512xbf16>, vector<6x512xf32> -> vector<6x512xf32>
    %c3_553 = arith.constant 3 : index
    %c0_554 = arith.constant 0 : index
    %997 = vector.load %arg6[%c3_553, %c0_554] : memref<4x2048xf32, #tpu.memory_space<vmem>>, vector<1x512xf32>
    %998 = vector.shape_cast %997 : vector<1x512xf32> to vector<512xf32>
    %999 = vector.shape_cast %998 : vector<512xf32> to vector<1x512xf32>
    %1000 = vector.broadcast %999 : vector<1x512xf32> to vector<6x512xf32>
    %1001 = arith.addf %996, %1000 : vector<6x512xf32>
    %cst_555 = arith.constant 0.000000e+00 : f32
    %1002 = vector.broadcast %cst_555 : f32 to vector<6x512xf32>
    %1003 = arith.maximumf %1001, %1002 : vector<6x512xf32>
    %c3_556 = arith.constant 3 : index
    %c0_557 = arith.constant 0 : index
    %c0_558 = arith.constant 0 : index
    %1004 = vector.load %arg11[%c3_556, %c0_557, %c0_558] : memref<4x32x2048xbf16, #tpu.memory_space<vmem>>, vector<1x32x512xbf16>
    %1005 = vector.shape_cast %1004 : vector<1x32x512xbf16> to vector<32x512xbf16>
    %1006 = arith.truncf %1003 : vector<6x512xf32> to vector<6x512xbf16>
    %cst_559 = arith.constant dense<0.000000e+00> : vector<6x32xf32>
    %1007 = tpu.matmul %1006, %1005, %cst_559 {dimension_numbers = #tpu.dot_dimension_numbers<[1], [1], [0], [0], [0, 0, 1, 0], [], []>} : vector<6x512xbf16>, vector<32x512xbf16>, vector<6x32xf32> -> vector<6x32xf32>
    %1008 = arith.addf %993, %1007 : vector<6x32xf32>
    %c3_560 = arith.constant 3 : index
    %c0_561 = arith.constant 0 : index
    %c512_562 = arith.constant 512 : index
    %1009 = vector.load %arg10[%c3_560, %c0_561, %c512_562] : memref<4x32x2048xbf16, #tpu.memory_space<vmem>>, vector<1x32x512xbf16>
    %1010 = vector.shape_cast %1009 : vector<1x32x512xbf16> to vector<32x512xbf16>
    %cst_563 = arith.constant dense<0.000000e+00> : vector<6x512xf32>
    %1011 = tpu.matmul %992, %1010, %cst_563 {dimension_numbers = #tpu.dot_dimension_numbers<[1], [0], [0], [1], [0, 0, 1, 1], [], []>} : vector<6x32xbf16>, vector<32x512xbf16>, vector<6x512xf32> -> vector<6x512xf32>
    %c3_564 = arith.constant 3 : index
    %c512_565 = arith.constant 512 : index
    %1012 = vector.load %arg6[%c3_564, %c512_565] : memref<4x2048xf32, #tpu.memory_space<vmem>>, vector<1x512xf32>
    %1013 = vector.shape_cast %1012 : vector<1x512xf32> to vector<512xf32>
    %1014 = vector.shape_cast %1013 : vector<512xf32> to vector<1x512xf32>
    %1015 = vector.broadcast %1014 : vector<1x512xf32> to vector<6x512xf32>
    %1016 = arith.addf %1011, %1015 : vector<6x512xf32>
    %cst_566 = arith.constant 0.000000e+00 : f32
    %1017 = vector.broadcast %cst_566 : f32 to vector<6x512xf32>
    %1018 = arith.maximumf %1016, %1017 : vector<6x512xf32>
    %c3_567 = arith.constant 3 : index
    %c0_568 = arith.constant 0 : index
    %c512_569 = arith.constant 512 : index
    %1019 = vector.load %arg11[%c3_567, %c0_568, %c512_569] : memref<4x32x2048xbf16, #tpu.memory_space<vmem>>, vector<1x32x512xbf16>
    %1020 = vector.shape_cast %1019 : vector<1x32x512xbf16> to vector<32x512xbf16>
    %1021 = arith.truncf %1018 : vector<6x512xf32> to vector<6x512xbf16>
    %cst_570 = arith.constant dense<0.000000e+00> : vector<6x32xf32>
    %1022 = tpu.matmul %1021, %1020, %cst_570 {dimension_numbers = #tpu.dot_dimension_numbers<[1], [1], [0], [0], [0, 0, 1, 0], [], []>} : vector<6x512xbf16>, vector<32x512xbf16>, vector<6x32xf32> -> vector<6x32xf32>
    %1023 = arith.addf %1008, %1022 : vector<6x32xf32>
    %c3_571 = arith.constant 3 : index
    %c0_572 = arith.constant 0 : index
    %c1024_573 = arith.constant 1024 : index
    %1024 = vector.load %arg10[%c3_571, %c0_572, %c1024_573] : memref<4x32x2048xbf16, #tpu.memory_space<vmem>>, vector<1x32x512xbf16>
    %1025 = vector.shape_cast %1024 : vector<1x32x512xbf16> to vector<32x512xbf16>
    %cst_574 = arith.constant dense<0.000000e+00> : vector<6x512xf32>
    %1026 = tpu.matmul %992, %1025, %cst_574 {dimension_numbers = #tpu.dot_dimension_numbers<[1], [0], [0], [1], [0, 0, 1, 1], [], []>} : vector<6x32xbf16>, vector<32x512xbf16>, vector<6x512xf32> -> vector<6x512xf32>
    %c3_575 = arith.constant 3 : index
    %c1024_576 = arith.constant 1024 : index
    %1027 = vector.load %arg6[%c3_575, %c1024_576] : memref<4x2048xf32, #tpu.memory_space<vmem>>, vector<1x512xf32>
    %1028 = vector.shape_cast %1027 : vector<1x512xf32> to vector<512xf32>
    %1029 = vector.shape_cast %1028 : vector<512xf32> to vector<1x512xf32>
    %1030 = vector.broadcast %1029 : vector<1x512xf32> to vector<6x512xf32>
    %1031 = arith.addf %1026, %1030 : vector<6x512xf32>
    %cst_577 = arith.constant 0.000000e+00 : f32
    %1032 = vector.broadcast %cst_577 : f32 to vector<6x512xf32>
    %1033 = arith.maximumf %1031, %1032 : vector<6x512xf32>
    %c3_578 = arith.constant 3 : index
    %c0_579 = arith.constant 0 : index
    %c1024_580 = arith.constant 1024 : index
    %1034 = vector.load %arg11[%c3_578, %c0_579, %c1024_580] : memref<4x32x2048xbf16, #tpu.memory_space<vmem>>, vector<1x32x512xbf16>
    %1035 = vector.shape_cast %1034 : vector<1x32x512xbf16> to vector<32x512xbf16>
    %1036 = arith.truncf %1033 : vector<6x512xf32> to vector<6x512xbf16>
    %cst_581 = arith.constant dense<0.000000e+00> : vector<6x32xf32>
    %1037 = tpu.matmul %1036, %1035, %cst_581 {dimension_numbers = #tpu.dot_dimension_numbers<[1], [1], [0], [0], [0, 0, 1, 0], [], []>} : vector<6x512xbf16>, vector<32x512xbf16>, vector<6x32xf32> -> vector<6x32xf32>
    %1038 = arith.addf %1023, %1037 : vector<6x32xf32>
    %c3_582 = arith.constant 3 : index
    %c0_583 = arith.constant 0 : index
    %c1536_584 = arith.constant 1536 : index
    %1039 = vector.load %arg10[%c3_582, %c0_583, %c1536_584] : memref<4x32x2048xbf16, #tpu.memory_space<vmem>>, vector<1x32x512xbf16>
    %1040 = vector.shape_cast %1039 : vector<1x32x512xbf16> to vector<32x512xbf16>
    %cst_585 = arith.constant dense<0.000000e+00> : vector<6x512xf32>
    %1041 = tpu.matmul %992, %1040, %cst_585 {dimension_numbers = #tpu.dot_dimension_numbers<[1], [0], [0], [1], [0, 0, 1, 1], [], []>} : vector<6x32xbf16>, vector<32x512xbf16>, vector<6x512xf32> -> vector<6x512xf32>
    %c3_586 = arith.constant 3 : index
    %c1536_587 = arith.constant 1536 : index
    %1042 = vector.load %arg6[%c3_586, %c1536_587] : memref<4x2048xf32, #tpu.memory_space<vmem>>, vector<1x512xf32>
    %1043 = vector.shape_cast %1042 : vector<1x512xf32> to vector<512xf32>
    %1044 = vector.shape_cast %1043 : vector<512xf32> to vector<1x512xf32>
    %1045 = vector.broadcast %1044 : vector<1x512xf32> to vector<6x512xf32>
    %1046 = arith.addf %1041, %1045 : vector<6x512xf32>
    %cst_588 = arith.constant 0.000000e+00 : f32
    %1047 = vector.broadcast %cst_588 : f32 to vector<6x512xf32>
    %1048 = arith.maximumf %1046, %1047 : vector<6x512xf32>
    %c3_589 = arith.constant 3 : index
    %c0_590 = arith.constant 0 : index
    %c1536_591 = arith.constant 1536 : index
    %1049 = vector.load %arg11[%c3_589, %c0_590, %c1536_591] : memref<4x32x2048xbf16, #tpu.memory_space<vmem>>, vector<1x32x512xbf16>
    %1050 = vector.shape_cast %1049 : vector<1x32x512xbf16> to vector<32x512xbf16>
    %1051 = arith.truncf %1048 : vector<6x512xf32> to vector<6x512xbf16>
    %cst_592 = arith.constant dense<0.000000e+00> : vector<6x32xf32>
    %1052 = tpu.matmul %1051, %1050, %cst_592 {dimension_numbers = #tpu.dot_dimension_numbers<[1], [1], [0], [0], [0, 0, 1, 0], [], []>} : vector<6x512xbf16>, vector<32x512xbf16>, vector<6x32xf32> -> vector<6x32xf32>
    %1053 = arith.addf %1038, %1052 : vector<6x32xf32>
    %c164 = arith.constant 164 : index
    %c0_593 = arith.constant 0 : index
    %1054 = vector.load %arg4[%c164, %c0_593] : memref<168x32xf32, #tpu.memory_space<vmem>>, vector<1x32xf32>
    %1055 = vector.shape_cast %1054 : vector<1x32xf32> to vector<32xf32>
    %1056 = vector.shape_cast %1055 : vector<32xf32> to vector<1x32xf32>
    %1057 = vector.broadcast %1056 : vector<1x32xf32> to vector<6x32xf32>
    %1058 = arith.addf %1053, %1057 : vector<6x32xf32>
    %1059 = arith.addf %979, %1058 : vector<6x32xf32>
    %c159 = arith.constant 159 : index
    %c0_594 = arith.constant 0 : index
    %1060 = vector.load %arg4[%c159, %c0_594] : memref<168x32xf32, #tpu.memory_space<vmem>>, vector<1x32xf32>
    %1061 = vector.shape_cast %1060 : vector<1x32xf32> to vector<32xf32>
    %c160 = arith.constant 160 : index
    %c0_595 = arith.constant 0 : index
    %1062 = vector.load %arg4[%c160, %c0_595] : memref<168x32xf32, #tpu.memory_space<vmem>>, vector<1x32xf32>
    %1063 = vector.shape_cast %1062 : vector<1x32xf32> to vector<32xf32>
    %cst_596 = arith.constant dense<0.000000e+00> : vector<6xf32>
    %1064 = vector.multi_reduction <add>, %1059, %cst_596 [1] : vector<6x32xf32> to vector<6xf32>
    %1065 = vector.shape_cast %1064 : vector<6xf32> to vector<6x1xf32>
    %cst_597 = arith.constant 3.200000e+01 : f32
    %1066 = vector.broadcast %cst_597 : f32 to vector<6x1xf32>
    %1067 = arith.divf %1065, %1066 : vector<6x1xf32>
    %1068 = vector.broadcast %1067 : vector<6x1xf32> to vector<6x32xf32>
    %1069 = arith.subf %1059, %1068 : vector<6x32xf32>
    %1070 = arith.mulf %1069, %1069 : vector<6x32xf32>
    %cst_598 = arith.constant dense<0.000000e+00> : vector<6xf32>
    %1071 = vector.multi_reduction <add>, %1070, %cst_598 [1] : vector<6x32xf32> to vector<6xf32>
    %1072 = vector.shape_cast %1071 : vector<6xf32> to vector<6x1xf32>
    %cst_599 = arith.constant 3.200000e+01 : f32
    %1073 = vector.broadcast %cst_599 : f32 to vector<6x1xf32>
    %1074 = arith.divf %1072, %1073 : vector<6x1xf32>
    %1075 = vector.broadcast %1067 : vector<6x1xf32> to vector<6x32xf32>
    %1076 = arith.subf %1059, %1075 : vector<6x32xf32>
    %cst_600 = arith.constant 9.99999974E-6 : f32
    %1077 = vector.broadcast %cst_600 : f32 to vector<6x1xf32>
    %1078 = arith.addf %1074, %1077 : vector<6x1xf32>
    %1079 = math.rsqrt %1078 : vector<6x1xf32>
    %1080 = vector.broadcast %1079 : vector<6x1xf32> to vector<6x32xf32>
    %1081 = arith.mulf %1076, %1080 : vector<6x32xf32>
    %1082 = vector.shape_cast %1061 : vector<32xf32> to vector<1x32xf32>
    %1083 = vector.broadcast %1082 : vector<1x32xf32> to vector<6x32xf32>
    %1084 = arith.mulf %1081, %1083 : vector<6x32xf32>
    %1085 = vector.shape_cast %1063 : vector<32xf32> to vector<1x32xf32>
    %1086 = vector.broadcast %1085 : vector<1x32xf32> to vector<6x32xf32>
    %1087 = arith.addf %1084, %1086 : vector<6x32xf32>
    %cst_601 = arith.constant dense<0.000000e+00> : vector<6x6xf32>
    %1088 = tpu.matmul %1087, %507, %cst_601 {dimension_numbers = #tpu.dot_dimension_numbers<[1], [1], [0], [0], [0, 0, 1, 0], [], []>} : vector<6x32xf32>, vector<6x32xf32>, vector<6x6xf32> -> vector<6x6xf32>
    %cst_602 = arith.constant 0.176776692 : f32
    %1089 = vector.broadcast %cst_602 : f32 to vector<6x6xf32>
    %1090 = arith.mulf %1088, %1089 : vector<6x6xf32>
    %cst_603 = arith.constant dense<0xFF800000> : vector<6xf32>
    %1091 = vector.multi_reduction <maximumf>, %1090, %cst_603 [1] : vector<6x6xf32> to vector<6xf32>
    %1092 = vector.shape_cast %1091 : vector<6xf32> to vector<6x1xf32>
    %1093 = vector.broadcast %1092 : vector<6x1xf32> to vector<6x6xf32>
    %1094 = arith.subf %1090, %1093 : vector<6x6xf32>
    %1095 = math.exp %1094 : vector<6x6xf32>
    %cst_604 = arith.constant dense<0.000000e+00> : vector<6xf32>
    %1096 = vector.multi_reduction <add>, %1095, %cst_604 [1] : vector<6x6xf32> to vector<6xf32>
    %1097 = vector.shape_cast %1096 : vector<6xf32> to vector<6x1xf32>
    %1098 = vector.broadcast %1097 : vector<6x1xf32> to vector<6x6xf32>
    %1099 = arith.divf %1095, %1098 : vector<6x6xf32>
    %c0_605 = arith.constant 0 : index
    %c0_606 = arith.constant 0 : index
    %1100 = vector.load %arg9[%c0_605, %c0_606] : memref<6x6xf32, #tpu.memory_space<vmem>>, vector<6x6xf32>
    tpu.vector_store %arg9[%c0_605, %c0_606], %1099 {strides = array<i32>} : memref<6x6xf32, #tpu.memory_space<vmem>>, vector<6x6xf32>,
    return
  }
}

</mosaic_0001>

<llo_original>
// kernel: tadn_forward.1
$region0: #{tadn_forward.1}
  #allocation0 [shape = 'u32[]', space=smem, size = 0x4, offset = 0x4, fixed_abs, tag = 'smem constant byte address 0x4 - core index']
  #allocation1 [shape = 'u32[72,128]{1,0:T(1,128)}', space=vmem, size = 0x9000, scoped, tag = 'internal scratch']
  #allocation2 [shape = 'bf16[4,32,2048]{2,1,0:T(8,128)(2,1)}', space=vmem, size = 0x80000, scoped, tag = 'scratch operand']
  #allocation3 [shape = 'bf16[4,32,2048]{2,1,0:T(8,128)(2,1)}', space=vmem, size = 0x80000, scoped, tag = 'scratch operand']
  #allocation4 [shape = 's32[8]{0}', space=sflag, size = 0x20, scoped, tag = 'scratch operand']
  #allocation12 [shape = 's32[]', space=sflag, size = 0x4, offset = 0, fixed_abs, tag = 'sflag constant byte address 0x0 - dummy sync flag']
  #allocation13 [shape = 's32[]', space=sflag, size = 0x4, offset = 0, fixed_abs, tag = 'sflag constant byte address 0x0 - dummy sync flag']
  #allocation14 [shape = 'u32[]', space=smem, size = 0x4, offset = 0x44, fixed_abs, tag = 'smem constant byte address 0x44 - assertion arg 0']
  #allocation15 [shape = 'u32[]', space=smem, size = 0x4, offset = 0x48, fixed_abs, tag = 'smem constant byte address 0x48 - assertion arg 1']
  #allocation16 [shape = 's32[]', space=sflag, size = 0x4, offset = 0, fixed_abs, tag = 'sflag constant byte address 0x0 - dummy sync flag']
  #allocation17 [shape = 's32[]', space=sflag, size = 0x4, offset = 0, fixed_abs, tag = 'sflag constant byte address 0x0 - dummy sync flag']
  #allocation18 [shape = 's32[]', space=sflag, size = 0x4, offset = 0, fixed_abs, tag = 'sflag constant byte address 0x0 - dummy sync flag']
  #allocation19 [shape = 's32[]', space=sflag, size = 0x4, offset = 0, fixed_abs, tag = 'sflag constant byte address 0x0 - dummy sync flag']
  #allocation20 [shape = 's32[]', space=sflag, size = 0x4, offset = 0, fixed_abs, tag = 'sflag constant byte address 0x0 - dummy sync flag']
  #allocation21 [shape = 's32[]', space=sflag, size = 0x4, offset = 0, fixed_abs, tag = 'sflag constant byte address 0x0 - dummy sync flag']
  #allocation22 [shape = 's32[]', space=sflag, size = 0x4, offset = 0, fixed_abs, tag = 'sflag constant byte address 0x0 - dummy sync flag']
  #allocation23 [shape = 's32[]', space=sflag, size = 0x4, offset = 0, fixed_abs, tag = 'sflag constant byte address 0x0 - dummy sync flag']
  #allocation24 [shape = 's32[]', space=sflag, size = 0x4, offset = 0, fixed_abs, tag = 'sflag constant byte address 0x0 - dummy sync flag']
  #allocation25 [shape = 's32[]', space=sflag, size = 0x4, offset = 0, fixed_abs, tag = 'sflag constant byte address 0x0 - dummy sync flag']
  #allocation26 [shape = 's32[]', space=sflag, size = 0x4, offset = 0, fixed_abs, tag = 'sflag constant byte address 0x0 - dummy sync flag']
  #allocation27 [shape = 's32[]', space=sflag, size = 0x4, offset = 0, fixed_abs, tag = 'sflag constant byte address 0x0 - dummy sync flag']
  #allocation28 [shape = 's32[]', space=sflag, size = 0x4, offset = 0, fixed_abs, tag = 'sflag constant byte address 0x0 - dummy sync flag']
  #allocation29 [shape = 's32[]', space=sflag, size = 0x4, offset = 0, fixed_abs, tag = 'sflag constant byte address 0x0 - dummy sync flag']
  %s0 = inlined_call_operand.vmem [shape: f32[6,4], index: 0, kind: input, shape index: {}]
  %s1 = inlined_call_operand.vmem [shape: f32[6,64], index: 1, kind: input, shape index: {}]
  %s2 = inlined_call_operand.vmem [shape: f32[6,4], index: 2, kind: input, shape index: {}]
  %s3 = inlined_call_operand.vmem [shape: f32[6,64], index: 3, kind: input, shape index: {}]
  %s4 = inlined_call_operand.hbm [shape: f32[168,32], index: 4, kind: input, shape index: {}]
  %s5 = inlined_call_operand.hbm [shape: f32[6,40,128], index: 5, kind: input, shape index: {}]
  %s6 = inlined_call_operand.hbm [shape: f32[4,2048], index: 6, kind: input, shape index: {}]
  %s7 = inlined_call_operand.hbm [shape: bf16[4,32,2048], index: 7, kind: input, shape index: {}]
  %s8 = inlined_call_operand.hbm [shape: bf16[4,32,2048], index: 8, kind: input, shape index: {}]
  %s9 = inlined_call_operand.hbm [shape: f32[6,6], index: 9, kind: output, shape index: {}]
  %s10 = sld [smem:[#allocation0]]
  $region82: #{tadn_forward.1} parent=0
    _
  %s12 = ssub.s32 1, %s10
  %s13 = scalar_select 0, %s12, %s10
  $region1: #{tadn_forward.1} parent=0
    #allocation5 [shape = 'u8[86016]{0}', space=vmem, size = 0x15000, scoped, tag = 'input window, operand 4, single buffered']
    #allocation6 [shape = 's32[1]{0}', space=sflag, size = 0x4, scoped, tag = 'scoped memory for tadn_forward.1']
    #allocation7 [shape = 's32[1]{0}', space=sflag, size = 0x4, scoped, tag = 'scoped memory for tadn_forward.1']
    #allocation8 [shape = 'u8[122880]{0}', space=vmem, size = 0x1e000, scoped, tag = 'input window, operand 5, single buffered']
    #allocation9 [shape = 's32[1]{0}', space=sflag, size = 0x4, scoped, tag = 'scoped memory for tadn_forward.1']
    #allocation10 [shape = 'u8[32768]{0}', space=vmem, size = 0x8000, scoped, tag = 'input window, operand 6, single buffered']
    #allocation11 [shape = 'u8[4096]{0}', space=vmem, size = 0x1000, scoped, tag = 'output window, operand 0, single buffered']
    %14 = vsyncpa [#allocation6], 0
    %15 = vsyncpa [#allocation9], 0
    %16 = vsyncpa [#allocation7], 0
    // Predicated region
    $region2: #{tadn_forward.1} parent=1 // pred_check
      _
    $region3: #{tadn_forward.1} parent=1 // pred_check_branch
      %18 = sbr.rel (0) target = $region5
    $region4: #{tadn_forward.1} parent=1 // pred_region
      _
    $region5: #{tadn_forward.1} parent=1 // pred_fallthru
      _
    // Predicated region
    $region6: #{tadn_forward.1} parent=1 // pred_check
      _
    $region7: #{tadn_forward.1} parent=1 // pred_check_branch
      %20 = sbr.rel (0) target = $region9
    $region8: #{tadn_forward.1} parent=1 // pred_region
      _
    $region9: #{tadn_forward.1} parent=1 // pred_fallthru
      _
    // Predicated region
    $region10: #{tadn_forward.1} parent=1 // pred_check
      _
    $region11: #{tadn_forward.1} parent=1 // pred_check_branch
      %22 = sbr.rel (0) target = $region13
    $region12: #{tadn_forward.1} parent=1 // pred_region
      _
    $region13: #{tadn_forward.1} parent=1 // pred_fallthru
      _
    // Predicated region
    $region14: #{tadn_forward.1} parent=1 // pred_check
      _
    $region15: #{tadn_forward.1} parent=1 // pred_check_branch
      %24 = sbr.rel (0) target = $region17
    $region16: #{tadn_forward.1} parent=1 // pred_region
      _
    $region17: #{tadn_forward.1} parent=1 // pred_fallthru
      _
    // Predicated region
    $region18: #{tadn_forward.1} parent=1 // pred_check
      _
    $region19: #{tadn_forward.1} parent=1 // pred_check_branch
      %26 = sbr.rel (0) target = $region21
    $region20: #{tadn_forward.1} parent=1 // pred_region
      %28 = vsyncadd [#allocation6], 0
      %s29 = sshll.u32 %s4, 4
      %s30 = int_to_ptr.hbm [resolvable:$true] %s29
      %s31 = sshll.u32 [#allocation5], 4
      %s32 = int_to_ptr.vmem [resolvable:$true] %s31
      %37 = dma.hbm_to_vmem [thread:$0]  %s30, 2688, %s32, [#allocation6], 128, 128, 8
    $region21: #{tadn_forward.1} parent=1 // pred_fallthru
      _
    // Predicated region
    $region22: #{tadn_forward.1} parent=1 // pred_check
      _
    $region23: #{tadn_forward.1} parent=1 // pred_check_branch
      %39 = sbr.rel (0) target = $region25
    $region24: #{tadn_forward.1} parent=1 // pred_region
      %41 = vsyncadd [#allocation9], 0
      %s42 = sshll.u32 %s5, 4
      %s43 = int_to_ptr.hbm [resolvable:$true] %s42
      %s44 = sshll.u32 [#allocation8], 4
      %s45 = int_to_ptr.vmem [resolvable:$true] %s44
      %50 = dma.hbm_to_vmem [thread:$0]  %s43, 3840, %s45, [#allocation9], 128, 128, 8
    $region25: #{tadn_forward.1} parent=1 // pred_fallthru
      _
    // Predicated region
    $region26: #{tadn_forward.1} parent=1 // pred_check
      _
    $region27: #{tadn_forward.1} parent=1 // pred_check_branch
      %52 = sbr.rel (0) target = $region29
    $region28: #{tadn_forward.1} parent=1 // pred_region
      %54 = vsyncadd [#allocation9], 0
      %s56 = sshll.u32 %s6, 4
      %s57 = int_to_ptr.hbm [resolvable:$true] %s56
      %s58 = sshll.u32 [#allocation10], 4
      %s59 = int_to_ptr.vmem [resolvable:$true] %s58
      %61 = dma.hbm_to_vmem [thread:$0]  %s57, 1024, %s59, [#allocation9]
    $region29: #{tadn_forward.1} parent=1 // pred_fallthru
      _
    // Predicated region
    $region30: #{tadn_forward.1} parent=1 // pred_check
      _
    $region31: #{tadn_forward.1} parent=1 // pred_check_branch
      %63 = sbr.rel (0) target = $region33
    $region32: #{tadn_forward.1} parent=1 // pred_region
      %65 = dma.done [#allocation6], 2688
    $region33: #{tadn_forward.1} parent=1 // pred_fallthru
      _
    // Predicated region
    $region34: #{tadn_forward.1} parent=1 // pred_check
      _
    $region35: #{tadn_forward.1} parent=1 // pred_check_branch
      %67 = sbr.rel (0) target = $region37
    $region36: #{tadn_forward.1} parent=1 // pred_region
      %69 = dma.done [#allocation9], 3840
    $region37: #{tadn_forward.1} parent=1 // pred_fallthru
      _
    // Predicated region
    $region38: #{tadn_forward.1} parent=1 // pred_check
      _
    $region39: #{tadn_forward.1} parent=1 // pred_check_branch
      %71 = sbr.rel (0) target = $region41
    $region40: #{tadn_forward.1} parent=1 // pred_region
      %73 = dma.done [#allocation9], 1024
    $region41: #{tadn_forward.1} parent=1 // pred_fallthru
      _
    // Predicated region
    $region42: #{tadn_forward.1} parent=1 // pred_check
      _
    $region43: #{tadn_forward.1} parent=1 // pred_check_branch
      %76 = sbr.rel target = $region45
    $region44: #{tadn_forward.1} parent=1 // pred_region
      %77 = sst [smem:[#allocation14]] [#allocation13]
      %78 = sst [smem:[#allocation15]] [#allocation12]
    $region45: #{tadn_forward.1} parent=1 // pred_fallthru
      _
    %80 = shalt.err (0)
    %s82 = sshll.u32 %s7, 4
    %s83 = int_to_ptr.hbm [resolvable:$true] %s82
    %s84 = sshll.u32 [#allocation2], 4
    %s85 = int_to_ptr.vmem [resolvable:$true] %s84
    %87 = dma.hbm_to_vmem [thread:$0]  %s83, 4096, %s85, [#allocation4]
    %s88 = scalar_lea.sflag [#allocation4], 4
    // Predicated region
    $region46: #{tadn_forward.1} parent=1 // pred_check
      _
    $region47: #{tadn_forward.1} parent=1 // pred_check_branch
      %90 = sbr.rel target = $region49
    $region48: #{tadn_forward.1} parent=1 // pred_region
      %91 = sst [smem:[#allocation14]] [#allocation17]
      %92 = sst [smem:[#allocation15]] [#allocation16]
    $region49: #{tadn_forward.1} parent=1 // pred_fallthru
      _
    %94 = shalt.err (0)
    %s96 = sshll.u32 %s8, 4
    %s97 = int_to_ptr.hbm [resolvable:$true] %s96
    %s98 = sshll.u32 [#allocation3], 4
    %s99 = int_to_ptr.vmem [resolvable:$true] %s98
    %101 = dma.hbm_to_vmem [thread:$0]  %s97, 4096, %s99, %s88
    %s102 = scalar_lea.hbm %s7, 256
    %s103 = scalar_lea.vmem [#allocation2], 256
    %s104 = scalar_lea.sflag [#allocation4], 1
    // Predicated region
    $region50: #{tadn_forward.1} parent=1 // pred_check
      _
    $region51: #{tadn_forward.1} parent=1 // pred_check_branch
      %106 = sbr.rel target = $region53
    $region52: #{tadn_forward.1} parent=1 // pred_region
      %107 = sst [smem:[#allocation14]] [#allocation19]
      %108 = sst [smem:[#allocation15]] [#allocation18]
    $region53: #{tadn_forward.1} parent=1 // pred_fallthru
      _
    %110 = shalt.err (0)
    %s112 = sshll.u32 %s102, 4
    %s113 = int_to_ptr.hbm [resolvable:$true] %s112
    %s114 = sshll.u32 %s103, 4
    %s115 = int_to_ptr.vmem [resolvable:$true] %s114
    %117 = dma.hbm_to_vmem [thread:$0]  %s113, 4096, %s115, %s104
    %s118 = scalar_lea.hbm %s8, 256
    %s119 = scalar_lea.vmem [#allocation3], 256
    %s120 = scalar_lea.sflag [#allocation4], 5
    // Predicated region
    $region54: #{tadn_forward.1} parent=1 // pred_check
      _
    $region55: #{tadn_forward.1} parent=1 // pred_check_branch
      %122 = sbr.rel target = $region57
    $region56: #{tadn_forward.1} parent=1 // pred_region
      %123 = sst [smem:[#allocation14]] [#allocation21]
      %124 = sst [smem:[#allocation15]] [#allocation20]
    $region57: #{tadn_forward.1} parent=1 // pred_fallthru
      _
    %126 = shalt.err (0)
    %s128 = sshll.u32 %s118, 4
    %s129 = int_to_ptr.hbm [resolvable:$true] %s128
    %s130 = sshll.u32 %s119, 4
    %s131 = int_to_ptr.vmem [resolvable:$true] %s130
    %133 = dma.hbm_to_vmem [thread:$0]  %s129, 4096, %s131, %s120
    %s134 = scalar_lea.hbm %s7, 512
    %s135 = scalar_lea.vmem [#allocation2], 512
    %s136 = scalar_lea.sflag [#allocation4], 2
    // Predicated region
    $region58: #{tadn_forward.1} parent=1 // pred_check
      _
    $region59: #{tadn_forward.1} parent=1 // pred_check_branch
      %138 = sbr.rel target = $region61
    $region60: #{tadn_forward.1} parent=1 // pred_region
      %139 = sst [smem:[#allocation14]] [#allocation23]
      %140 = sst [smem:[#allocation15]] [#allocation22]
    $region61: #{tadn_forward.1} parent=1 // pred_fallthru
      _
    %142 = shalt.err (0)
    %s144 = sshll.u32 %s134, 4
    %s145 = int_to_ptr.hbm [resolvable:$true] %s144
    %s146 = sshll.u32 %s135, 4
    %s147 = int_to_ptr.vmem [resolvable:$true] %s146
    %149 = dma.hbm_to_vmem [thread:$0]  %s145, 4096, %s147, %s136
    %s150 = scalar_lea.hbm %s8, 512
    %s151 = scalar_lea.vmem [#allocation3], 512
    %s152 = scalar_lea.sflag [#allocation4], 6
    // Predicated region
    $region62: #{tadn_forward.1} parent=1 // pred_check
      _
    $region63: #{tadn_forward.1} parent=1 // pred_check_branch
      %154 = sbr.rel target = $region65
    $region64: #{tadn_forward.1} parent=1 // pred_region
      %155 = sst [smem:[#allocation14]] [#allocation25]
      %156 = sst [smem:[#allocation15]] [#allocation24]
    $region65: #{tadn_forward.1} parent=1 // pred_fallthru
      _
    %158 = shalt.err (0)
    %s160 = sshll.u32 %s150, 4
    %s161 = int_to_ptr.hbm [resolvable:$true] %s160
    %s162 = sshll.u32 %s151, 4
    %s163 = int_to_ptr.vmem [resolvable:$true] %s162
    %165 = dma.hbm_to_vmem [thread:$0]  %s161, 4096, %s163, %s152
    %s166 = scalar_lea.hbm %s7, 768
    %s167 = scalar_lea.vmem [#allocation2], 768
    %s168 = scalar_lea.sflag [#allocation4], 3
    // Predicated region
    $region66: #{tadn_forward.1} parent=1 // pred_check
      _
    $region67: #{tadn_forward.1} parent=1 // pred_check_branch
      %170 = sbr.rel target = $region69
    $region68: #{tadn_forward.1} parent=1 // pred_region
      %171 = sst [smem:[#allocation14]] [#allocation27]
      %172 = sst [smem:[#allocation15]] [#allocation26]
    $region69: #{tadn_forward.1} parent=1 // pred_fallthru
      _
    %174 = shalt.err (0)
    %s176 = sshll.u32 %s166, 4
    %s177 = int_to_ptr.hbm [resolvable:$true] %s176
    %s178 = sshll.u32 %s167, 4
    %s179 = int_to_ptr.vmem [resolvable:$true] %s178
    %181 = dma.hbm_to_vmem [thread:$0]  %s177, 4096, %s179, %s168
    %s182 = scalar_lea.hbm %s8, 768
    %s183 = scalar_lea.vmem [#allocation3], 768
    %s184 = scalar_lea.sflag [#allocation4], 7
    // Predicated region
    $region70: #{tadn_forward.1} parent=1 // pred_check
      _
    $region71: #{tadn_forward.1} parent=1 // pred_check_branch
      %186 = sbr.rel target = $region73
    $region72: #{tadn_forward.1} parent=1 // pred_region
      %187 = sst [smem:[#allocation14]] [#allocation29]
      %188 = sst [smem:[#allocation15]] [#allocation28]
    $region73: #{tadn_forward.1} parent=1 // pred_fallthru
      _
    %190 = shalt.err (0)
    %s192 = sshll.u32 %s182, 4
    %s193 = int_to_ptr.hbm [resolvable:$true] %s192
    %s194 = sshll.u32 %s183, 4
    %s195 = int_to_ptr.vmem [resolvable:$true] %s194
    %197 = dma.hbm_to_vmem [thread:$0]  %s193, 4096, %s195, %s184
    %v198 = vld [vmem:[#allocation5] sm:$0xf]
    %v199 = vld [vmem:[#allocation5 + $0x8] sm:$0xff]
    %v200 = vld [vmem:[#allocation5 + $0x10] sm:$0xff]
    %v201 = vld [vmem:[#allocation5 + $0x18] sm:$0xff]
    %v202 = vld [vmem:[#allocation5 + $0x20] sm:$0xff]
    %v203 = vld [vmem:[#allocation5 + $0x28] sm:$0xff]
    %v204 = vld [vmem:[#allocation5 + $0x30] sm:$0xff]
    %v205 = vld [vmem:[#allocation5 + $0x38] sm:$0xff]
    %v206 = vld [vmem:[#allocation5 + $0x40] sm:$0xff]
    %v207 = vld [vmem:[#allocation5 + $0x48] sm:$0xff]
    %v208 = vld [vmem:[#allocation5 + $0x50] sm:$0xff]
    %v209 = vld [vmem:[#allocation5 + $0x58] sm:$0xff]
    %v210 = vld [vmem:[#allocation5 + $0x60] sm:$0xff]
    %v211 = vld [vmem:[#allocation5 + $0x68] sm:$0xff]
    %v212 = vld [vmem:[#allocation5 + $0x70] sm:$0xff]
    %v213 = vld [vmem:[#allocation5 + $0x78] sm:$0xff]
    %v214 = vld [vmem:[#allocation5 + $0x80] sm:$0xff]
    %v215 = vld [vmem:[#allocation5 + $0x88] sm:$0x1]
    %v216 = vld [vmem:[#allocation5 + $0x89] sm:$0x1]
    %v217 = vld [vmem:[#allocation5 + $0x8a] sm:$0x1]
    %v218 = vld [vmem:[#allocation5 + $0x8b] sm:$0x1]
    %v219 = vld [vmem:[#allocation5 + $0x8c] sm:$0x1]
    %v220 = vld [vmem:[%s0] sm:$0x3f]
    %v221 = vld [vmem:[%s1] sm:$0x3f]
    %v222 = vperm.slane %v215, 0
    %vm223 = vcmask 31744
    %v225 = vsel %vm223, %v220, 0
    %vm227 = vcmask 1043456
    %v229 = vsel %vm227, %v198, 0
    %231 = vmatpush.msra.mxu0 0.0
    %232 = vmatpush.msra.mxu0 0.0
    %233 = vmatpush.msra.mxu0 0.0
    %234 = vmatpush.msra.mxu0 0.0
    %235 = vmatpush.msra.mxu0 0.0
    %236 = vmatpush.msra.mxu0 0.0
    %237 = vmatpush.msra.mxu0 0.0
    %238 = vmatpush.msra.mxu0 0.0
    %239 = vmatpush.msra.mxu0 0.0
    %240 = vmatpush.msra.mxu0 0.0
    %241 = vmatpush.msra.mxu0 0.0
    %242 = vmatpush.msra.mxu0 0.0
    %243 = vmatpush.msra.mxu0 0.0
    %244 = vmatpush.msra.mxu0 0.0
    %245 = vmatpush.msra.mxu0 0.0
    %246 = vmatpush.msra.mxu0 %v229
    %247 = vmatmul.f32.gmra.mxu0 %v225
    %v248 = vpop.f32.mrf.mxu0
    %v249 = vadd.f32 %v222, %v248
    %250 = vdwg.mxu0
    %v251 = vtanh.pop %v249
    %v252 = vperm.slane %v216, 0
    %vm253 = vcmask 261120
    %v255 = vsel %vm253, %v251, 0
    %257 = vmatpush.msra.mxu0 0.0
    %258 = vmatpush.msra.mxu0 0.0
    %259 = vmatpush.msra.mxu0 0.0
    %260 = vmatpush.msra.mxu0 0.0
    %261 = vmatpush.msra.mxu0 0.0
    %262 = vmatpush.msra.mxu0 0.0
    %263 = vmatpush.msra.mxu0 0.0
    %264 = vmatpush.msra.mxu0 0.0
    %265 = vmatpush.msra.mxu0 0.0
    %266 = vmatpush.msra.mxu0 0.0
    %267 = vmatpush.msra.mxu0 0.0
    %268 = vmatpush.msra.mxu0 0.0
    %269 = vmatpush.msra.mxu0 %v202
    %270 = vmatpush.msra.mxu0 %v201
    %271 = vmatpush.msra.mxu0 %v200
    %272 = vmatpush.msra.mxu0 %v199
    %273 = vmatmul.f32.gmra.mxu0 %v255
    %v274 = vpop.f32.mrf.mxu0
    %v275 = vadd.f32 %v252, %v274
    %276 = vdwg.mxu0
    %v277 = vtanh.pop %v275
    %v278 = vperm.slane %v217, 0
    %v280 = vsel %vm253, %v277, 0
    %282 = vmatpush.msra.mxu0 0.0
    %283 = vmatpush.msra.mxu0 0.0
    %284 = vmatpush.msra.mxu0 0.0
    %285 = vmatpush.msra.mxu0 0.0
    %286 = vmatpush.msra.mxu0 0.0
    %287 = vmatpush.msra.mxu0 0.0
    %288 = vmatpush.msra.mxu0 0.0
    %289 = vmatpush.msra.mxu0 0.0
    %290 = vmatpush.msra.mxu0 0.0
    %291 = vmatpush.msra.mxu0 0.0
    %292 = vmatpush.msra.mxu0 0.0
    %293 = vmatpush.msra.mxu0 0.0
    %294 = vmatpush.msra.mxu0 %v206
    %295 = vmatpush.msra.mxu0 %v205
    %296 = vmatpush.msra.mxu0 %v204
    %297 = vmatpush.msra.mxu0 %v203
    %298 = vmatmul.f32.gmra.mxu0 %v280
    %v299 = vpop.f32.mrf.mxu0
    %v300 = vadd.f32 %v278, %v299
    %301 = vdwg.mxu0
    %v302 = vperm.slane %v218, 0
    %vm303 = vcmask 523264
    %v305 = vsel %vm303, %v221, 0
    %307 = vmatpush.msra.mxu0 0.0
    %308 = vmatpush.msra.mxu0 0.0
    %309 = vmatpush.msra.mxu0 0.0
    %310 = vmatpush.msra.mxu0 0.0
    %311 = vmatpush.msra.mxu0 0.0
    %312 = vmatpush.msra.mxu0 0.0
    %313 = vmatpush.msra.mxu0 0.0
    %314 = vmatpush.msra.mxu0 0.0
    %315 = vmatpush.msra.mxu0 %v214
    %316 = vmatpush.msra.mxu0 %v213
    %317 = vmatpush.msra.mxu0 %v212
    %318 = vmatpush.msra.mxu0 %v211
    %319 = vmatpush.msra.mxu0 %v210
    %320 = vmatpush.msra.mxu0 %v209
    %321 = vmatpush.msra.mxu0 %v208
    %322 = vmatpush.msra.mxu0 %v207
    %323 = vmatmul.f32.gmra.mxu0 %v305
    %v324 = vpop.f32.mrf.mxu0
    %v325 = vadd.f32 %v302, %v324
    %326 = vdwg.mxu0
    %v327 = vadd.f32 %v300, %v325
    %v328 = vlaneseq
    %v329 = vshrl.u32 %v328, 7
    %vm330 = vcmp.eq.s32.totalorder %v329, 5
    %v331 = vperm.slane %v219, 0
    %v332 = vsel %vm330, %v331, %v327
    %v333 = vld [vmem:[%s2] sm:$0x3f]
    %v334 = vld [vmem:[%s3] sm:$0x3f]
    %v336 = vsel %vm223, %v333, 0
    %338 = vmatpush.msra.mxu0 0.0
    %339 = vmatpush.msra.mxu0 0.0
    %340 = vmatpush.msra.mxu0 0.0
    %341 = vmatpush.msra.mxu0 0.0
    %342 = vmatpush.msra.mxu0 0.0
    %343 = vmatpush.msra.mxu0 0.0
    %344 = vmatpush.msra.mxu0 0.0
    %345 = vmatpush.msra.mxu0 0.0
    %346 = vmatpush.msra.mxu0 0.0
    %347 = vmatpush.msra.mxu0 0.0
    %348 = vmatpush.msra.mxu0 0.0
    %349 = vmatpush.msra.mxu0 0.0
    %350 = vmatpush.msra.mxu0 0.0
    %351 = vmatpush.msra.mxu0 0.0
    %352 = vmatpush.msra.mxu0 0.0
    %353 = vmatpush.msra.mxu0 %v229
    %354 = vmatmul.f32.gmra.mxu0 %v336
    %v355 = vpop.f32.mrf.mxu0
    %v356 = vadd.f32 %v222, %v355
    %357 = vdwg.mxu0
    %v358 = vtanh.pop %v356
    %v360 = vsel %vm253, %v358, 0
    %362 = vmatpush.msra.mxu0 0.0
    %363 = vmatpush.msra.mxu0 0.0
    %364 = vmatpush.msra.mxu0 0.0
    %365 = vmatpush.msra.mxu0 0.0
    %366 = vmatpush.msra.mxu0 0.0
    %367 = vmatpush.msra.mxu0 0.0
    %368 = vmatpush.msra.mxu0 0.0
    %369 = vmatpush.msra.mxu0 0.0
    %370 = vmatpush.msra.mxu0 0.0
    %371 = vmatpush.msra.mxu0 0.0
    %372 = vmatpush.msra.mxu0 0.0
    %373 = vmatpush.msra.mxu0 0.0
    %374 = vmatpush.msra.mxu0 %v202
    %375 = vmatpush.msra.mxu0 %v201
    %376 = vmatpush.msra.mxu0 %v200
    %377 = vmatpush.msra.mxu0 %v199
    %378 = vmatmul.f32.gmra.mxu0 %v360
    %v379 = vpop.f32.mrf.mxu0
    %v380 = vadd.f32 %v252, %v379
    %381 = vdwg.mxu0
    %v382 = vtanh.pop %v380
    %v384 = vsel %vm253, %v382, 0
    %386 = vmatpush.msra.mxu0 0.0
    %387 = vmatpush.msra.mxu0 0.0
    %388 = vmatpush.msra.mxu0 0.0
    %389 = vmatpush.msra.mxu0 0.0
    %390 = vmatpush.msra.mxu0 0.0
    %391 = vmatpush.msra.mxu0 0.0
    %392 = vmatpush.msra.mxu0 0.0
    %393 = vmatpush.msra.mxu0 0.0
    %394 = vmatpush.msra.mxu0 0.0
    %395 = vmatpush.msra.mxu0 0.0
    %396 = vmatpush.msra.mxu0 0.0
    %397 = vmatpush.msra.mxu0 0.0
    %398 = vmatpush.msra.mxu0 %v206
    %399 = vmatpush.msra.mxu0 %v205
    %400 = vmatpush.msra.mxu0 %v204
    %401 = vmatpush.msra.mxu0 %v203
    %402 = vmatmul.f32.gmra.mxu0 %v384
    %v403 = vpop.f32.mrf.mxu0
    %v404 = vadd.f32 %v278, %v403
    %405 = vdwg.mxu0
    %v407 = vsel %vm303, %v334, 0
    %409 = vmatpush.msra.mxu0 0.0
    %410 = vmatpush.msra.mxu0 0.0
    %411 = vmatpush.msra.mxu0 0.0
    %412 = vmatpush.msra.mxu0 0.0
    %413 = vmatpush.msra.mxu0 0.0
    %414 = vmatpush.msra.mxu0 0.0
    %415 = vmatpush.msra.mxu0 0.0
    %416 = vmatpush.msra.mxu0 0.0
    %417 = vmatpush.msra.mxu0 %v214
    %418 = vmatpush.msra.mxu0 %v213
    %419 = vmatpush.msra.mxu0 %v212
    %420 = vmatpush.msra.mxu0 %v211
    %421 = vmatpush.msra.mxu0 %v210
    %422 = vmatpush.msra.mxu0 %v209
    %423 = vmatpush.msra.mxu0 %v208
    %424 = vmatpush.msra.mxu0 %v207
    %425 = vmatmul.f32.gmra.mxu0 %v407
    %v426 = vpop.f32.mrf.mxu0
    %v427 = vadd.f32 %v302, %v426
    %428 = vdwg.mxu0
    %v429 = vadd.f32 %v404, %v427
    %v430 = vld [vmem:[#allocation8] sm:$0xff]
    %v431 = vld [vmem:[#allocation8 + $0x8] sm:$0xff]
    %v432 = vld [vmem:[#allocation8 + $0x10] sm:$0xff]
    %v433 = vld [vmem:[#allocation8 + $0x18] sm:$0xff]
    %v434 = vld [vmem:[#allocation8 + $0x20] sm:$0x1]
    %v435 = vperm.slane %v434, 0
    %v437 = vsel %vm253, %v332, 0
    %439 = vmatpush.msra.mxu0 0.0
    %440 = vmatpush.msra.mxu0 0.0
    %441 = vmatpush.msra.mxu0 0.0
    %442 = vmatpush.msra.mxu0 0.0
    %443 = vmatpush.msra.mxu0 0.0
    %444 = vmatpush.msra.mxu0 0.0
    %445 = vmatpush.msra.mxu0 0.0
    %446 = vmatpush.msra.mxu0 0.0
    %447 = vmatpush.msra.mxu0 0.0
    %448 = vmatpush.msra.mxu0 0.0
    %449 = vmatpush.msra.mxu0 0.0
    %450 = vmatpush.msra.mxu0 0.0
    %451 = vmatpush.msra.mxu0 %v433
    %452 = vmatpush.msra.mxu0 %v432
    %453 = vmatpush.msra.mxu0 %v431
    %454 = vmatpush.msra.mxu0 %v430
    %455 = vmatmul.f32.gmra.mxu0 %v437
    %v456 = vpop.f32.mrf.mxu0
    %v457 = vadd.f32 %v435, %v456
    %458 = vdwg.mxu0
    %463 = vrot.lane.b32.xlu0 %v430, 96
    %v464 = vpop.permute.xlu0 %463
    %465 = vrot.lane.b32.xlu0 %v431, 96
    %v466 = vpop.permute.xlu0 %465
    %467 = vrot.lane.b32.xlu0 %v432, 96
    %v468 = vpop.permute.xlu0 %467
    %469 = vrot.lane.b32.xlu0 %v433, 96
    %v470 = vpop.permute.xlu0 %469
    %476 = vrot.lane.b32.xlu0 %v435, 96
    %v477 = vpop.permute.xlu0 %476
    %479 = vmatpush.msra.mxu0 0.0
    %480 = vmatpush.msra.mxu0 0.0
    %481 = vmatpush.msra.mxu0 0.0
    %482 = vmatpush.msra.mxu0 0.0
    %483 = vmatpush.msra.mxu0 0.0
    %484 = vmatpush.msra.mxu0 0.0
    %485 = vmatpush.msra.mxu0 0.0
    %486 = vmatpush.msra.mxu0 0.0
    %487 = vmatpush.msra.mxu0 0.0
    %488 = vmatpush.msra.mxu0 0.0
    %489 = vmatpush.msra.mxu0 0.0
    %490 = vmatpush.msra.mxu0 0.0
    %491 = vmatpush.msra.mxu0 %v470
    %492 = vmatpush.msra.mxu0 %v468
    %493 = vmatpush.msra.mxu0 %v466
    %494 = vmatpush.msra.mxu0 %v464
    %495 = vmatmul.f32.gmra.mxu0 %v437
    %v496 = vpop.f32.mrf.mxu0
    %v497 = vadd.f32 %v477, %v496
    %498 = vdwg.mxu0
    %vm499 = vcmask 130048
    %v501 = vsel %vm499, %v457, 0
    %v504 = vsel %vm499, %v497, 0
    %506 = vmatpush.xpose.msra.mxu0 0.0
    %507 = vmatpush.xpose.msra.mxu0 0.0
    %508 = vmatpush.xpose.msra.mxu0 0.0
    %509 = vmatpush.xpose.msra.mxu0 0.0
    %510 = vmatpush.xpose.msra.mxu0 0.0
    %511 = vmatpush.xpose.msra.mxu0 0.0
    %512 = vmatpush.xpose.msra.mxu0 0.0
    %513 = vmatpush.xpose.msra.mxu0 0.0
    %514 = vmatpush.xpose.msra.mxu0 0.0
    %515 = vmatpush.xpose.msra.mxu0 0.0
    %516 = vmatpush.xpose.msra.mxu0 0.0
    %517 = vmatpush.xpose.msra.mxu0 0.0
    %518 = vmatpush.xpose.msra.mxu0 0.0
    %519 = vmatpush.xpose.msra.mxu0 0.0
    %520 = vmatpush.xpose.msra.mxu0 0.0
    %521 = vmatpush.xpose.msra.mxu0 %v504
    %522 = vmatmul.f32.gmra.mxu0 %v501
    %v523 = vpop.f32.mrf.mxu0
    %v524 = vadd.f32 0.0, %v523
    %525 = vdwg.mxu0
    %v526 = vmul.f32 %v524, 0.25
    %vm527 = vcmask 46080
    %v528 = vsel %vm527, %v526, -inf
    %529 = vmax.xlane.f32.xlu0 %v528
    %v530 = vpop.xlane.xlu0 %529
    %v531 = vsub.f32 %v526, %v530
    %v532 = vmul.f32 %v531, 1.442695
    %v533 = vpow.pop %v532
    %v534 = vsel %vm527, %v533, 0.0
    %535 = vadd.xlane.f32.xlu0 %v534
    %v536 = vpop.xlane.xlu0 %535
    %v537 = vrcp.pop %v536
    %v538 = vmul.f32 %v533, %v537
    %539 = vrot.lane.b32.xlu0 %v497, 96
    %v540 = vpop.permute.xlu0 %539
    %vm541 = vcmask 48128
    %v543 = vsel %vm541, %v538, 0
    %vm545 = vcmask 1045504
    %v546 = vsel %vm545, %v540, 0
    %548 = vmatpush.msra.mxu0 0.0
    %549 = vmatpush.msra.mxu0 0.0
    %550 = vmatpush.msra.mxu0 0.0
    %551 = vmatpush.msra.mxu0 0.0
    %552 = vmatpush.msra.mxu0 0.0
    %553 = vmatpush.msra.mxu0 0.0
    %554 = vmatpush.msra.mxu0 0.0
    %555 = vmatpush.msra.mxu0 0.0
    %556 = vmatpush.msra.mxu0 0.0
    %557 = vmatpush.msra.mxu0 0.0
    %558 = vmatpush.msra.mxu0 0.0
    %559 = vmatpush.msra.mxu0 0.0
    %560 = vmatpush.msra.mxu0 0.0
    %561 = vmatpush.msra.mxu0 0.0
    %562 = vmatpush.msra.mxu0 0.0
    %563 = vmatpush.msra.mxu0 %v546
    %564 = vmatmul.f32.gmra.mxu0 %v543
    %v565 = vpop.f32.mrf.mxu0
    %v566 = vadd.f32 0.0, %v565
    %567 = vdwg.mxu0
    %v568 = vld [vmem:[#allocation8] sm:$0xff]
    %v569 = vld [vmem:[#allocation8 + $0x8] sm:$0xff]
    %570 = vrot.lane.b32.xlu0 %v457, 112
    %v571 = vpop.permute.xlu0 %570
    %572 = vrot.lane.b32.xlu0 %v497, 112
    %v573 = vpop.permute.xlu0 %572
    %v574 = vsel %vm499, %v571, 0
    %v576 = vsel %vm499, %v573, 0
    %578 = vmatpush.xpose.msra.mxu0 0.0
    %579 = vmatpush.xpose.msra.mxu0 0.0
    %580 = vmatpush.xpose.msra.mxu0 0.0
    %581 = vmatpush.xpose.msra.mxu0 0.0
    %582 = vmatpush.xpose.msra.mxu0 0.0
    %583 = vmatpush.xpose.msra.mxu0 0.0
    %584 = vmatpush.xpose.msra.mxu0 0.0
    %585 = vmatpush.xpose.msra.mxu0 0.0
    %586 = vmatpush.xpose.msra.mxu0 0.0
    %587 = vmatpush.xpose.msra.mxu0 0.0
    %588 = vmatpush.xpose.msra.mxu0 0.0
    %589 = vmatpush.xpose.msra.mxu0 0.0
    %590 = vmatpush.xpose.msra.mxu0 0.0
    %591 = vmatpush.xpose.msra.mxu0 0.0
    %592 = vmatpush.xpose.msra.mxu0 0.0
    %593 = vmatpush.xpose.msra.mxu0 %v576
    %594 = vmatmul.f32.gmra.mxu0 %v574
    %v595 = vpop.f32.mrf.mxu0
    %v596 = vadd.f32 0.0, %v595
    %597 = vdwg.mxu0
    %v598 = vmul.f32 %v596, 0.25
    %v599 = vsel %vm527, %v598, -inf
    %600 = vmax.xlane.f32.xlu0 %v599
    %v601 = vpop.xlane.xlu0 %600
    %v602 = vsub.f32 %v598, %v601
    %v603 = vmul.f32 %v602, 1.442695
    %v604 = vpow.pop %v603
    %v605 = vsel %vm527, %v604, 0.0
    %606 = vadd.xlane.f32.xlu0 %v605
    %v607 = vpop.xlane.xlu0 %606
    %v608 = vrcp.pop %v607
    %v609 = vmul.f32 %v604, %v608
    %610 = vrot.lane.b32.xlu0 %v497, 80
    %v611 = vpop.permute.xlu0 %610
    %v613 = vsel %vm541, %v609, 0
    %v615 = vsel %vm545, %v611, 0
    %617 = vmatpush.msra.mxu0 0.0
    %618 = vmatpush.msra.mxu0 0.0
    %619 = vmatpush.msra.mxu0 0.0
    %620 = vmatpush.msra.mxu0 0.0
    %621 = vmatpush.msra.mxu0 0.0
    %622 = vmatpush.msra.mxu0 0.0
    %623 = vmatpush.msra.mxu0 0.0
    %624 = vmatpush.msra.mxu0 0.0
    %625 = vmatpush.msra.mxu0 0.0
    %626 = vmatpush.msra.mxu0 0.0
    %627 = vmatpush.msra.mxu0 0.0
    %628 = vmatpush.msra.mxu0 0.0
    %629 = vmatpush.msra.mxu0 0.0
    %630 = vmatpush.msra.mxu0 0.0
    %631 = vmatpush.msra.mxu0 0.0
    %632 = vmatpush.msra.mxu0 %v615
    %633 = vmatmul.f32.gmra.mxu0 %v613
    %v634 = vpop.f32.mrf.mxu0
    %v635 = vadd.f32 0.0, %v634
    %636 = vdwg.mxu0
    %637 = vrot.lane.b32.xlu0 %v432, 32
    %v638 = vpop.permute.xlu0 %637
    %639 = vrot.lane.b32.xlu0 %v433, 32
    %v640 = vpop.permute.xlu0 %639
    %v644 = vsel %vm499, %v635, 0
    %646 = vmatpush.msra.mxu0 0.0
    %647 = vmatpush.msra.mxu0 0.0
    %648 = vmatpush.msra.mxu0 0.0
    %649 = vmatpush.msra.mxu0 0.0
    %650 = vmatpush.msra.mxu0 0.0
    %651 = vmatpush.msra.mxu0 0.0
    %652 = vmatpush.msra.mxu0 0.0
    %653 = vmatpush.msra.mxu0 0.0
    %654 = vmatpush.msra.mxu0 0.0
    %655 = vmatpush.msra.mxu0 0.0
    %656 = vmatpush.msra.mxu0 0.0
    %657 = vmatpush.msra.mxu0 0.0
    %658 = vmatpush.msra.mxu0 0.0
    %659 = vmatpush.msra.mxu0 0.0
    %660 = vmatpush.msra.mxu0 %v640
    %661 = vmatpush.msra.mxu0 %v638
    %662 = vmatmul.f32.gmra.mxu0 %v644
    %v663 = vpop.f32.mrf.mxu0
    %v664 = vadd.f32 0.0, %v663
    %665 = vdwg.mxu0
    %668 = vrot.lane.b32.xlu0 %v568, 32
    %v669 = vpop.permute.xlu0 %668
    %670 = vrot.lane.b32.xlu0 %v569, 32
    %v671 = vpop.permute.xlu0 %670
    %v675 = vsel %vm499, %v566, 0
    %677 = vmatpush.msra.mxu0 0.0
    %678 = vmatpush.msra.mxu0 0.0
    %679 = vmatpush.msra.mxu0 0.0
    %680 = vmatpush.msra.mxu0 0.0
    %681 = vmatpush.msra.mxu0 0.0
    %682 = vmatpush.msra.mxu0 0.0
    %683 = vmatpush.msra.mxu0 0.0
    %684 = vmatpush.msra.mxu0 0.0
    %685 = vmatpush.msra.mxu0 0.0
    %686 = vmatpush.msra.mxu0 0.0
    %687 = vmatpush.msra.mxu0 0.0
    %688 = vmatpush.msra.mxu0 0.0
    %689 = vmatpush.msra.mxu0 0.0
    %690 = vmatpush.msra.mxu0 0.0
    %691 = vmatpush.msra.mxu0 %v671
    %692 = vmatpush.msra.mxu0 %v669
    %693 = vmatmul.f32.gmra.mxu0 %v675
    %v694 = vpop.f32.mrf.mxu0
    %v695 = vadd.f32 %v664, %v694
    %696 = vdwg.mxu0
    %697 = vrot.lane.b32.xlu0 %v435, 32
    %v698 = vpop.permute.xlu0 %697
    %v700 = vadd.f32 %v695, %v698
    %v701 = vadd.f32 %v332, %v700
    %v702 = vld [vmem:[#allocation5 + $0x8d] sm:$0x1]
    %v703 = vld [vmem:[#allocation5 + $0x8e] sm:$0x1]
    %vm704 = vcmask 259072
    %v705 = vsel %vm704, %v701, 0.0
    %706 = vadd.xlane.f32.xlu0 %v705
    %v707 = vpop.xlane.xlu0 %706
    %v708 = vrcp.pop 32.0
    %v709 = vmul.f32 32.0, %v708
    %v710 = vsub.f32 1.0, %v709
    %v711 = vmul.f32 %v708, %v710
    %v712 = vadd.f32 %v708, %v711
    %vm713 = vweird.f32 %v708
    %v714 = vsel %vm713, %v708, %v712
    %v715 = vmul.f32 %v707, %v714
    %v716 = vsub.f32 %v701, %v715
    %v717 = vmul.f32 %v716, %v716
    %v718 = vsel %vm704, %v717, 0.0
    %719 = vadd.xlane.f32.xlu0 %v718
    %v720 = vpop.xlane.xlu0 %719
    %v721 = vmul.f32 %v720, %v714
    %v722 = vadd.f32 %v721, 1e-05
    %v723 = vrsqrt.pop %v722
    %v724 = vmul.f32 %v723, %v722
    %v725 = vmul.f32 %v724, %v723
    %v726 = vmul.f32 0.5, %v725
    %v727 = vsub.f32 1.5, %v726
    %v728 = vmul.f32 %v723, %v727
    %vm729 = vweird.f32 %v722
    %vm730 = vweird.f32 %v723
    %vm731 = vmor %vm729, %vm730
    %v732 = vsel %vm731, %v723, %v728
    %v733 = vmul.f32 %v716, %v732
    %v734 = vperm.slane %v702, 0
    %v735 = vmul.f32 %v733, %v734
    %v736 = vperm.slane %v703, 0
    %v737 = vadd.f32 %v735, %v736
    %s738 = smul.u32 4, 4
    %s739 = smul.u32 %s738, 16
    %s740 = sshll.u32 %s739, 4
    %741 = dma.done [#allocation4], %s740
    %s742 = sshll.u32 %s739, 4
    %743 = dma.done %s88, %s742
    %v744 = vpack.c.bf16 %v737, %v737
    %v745 = vld [vmem:[#allocation2] sm:$0xff]
    %v746 = vld [vmem:[#allocation2 + $0x8] sm:$0xff]
    %v747 = vld [vmem:[#allocation2 + $0x40] sm:$0xff]
    %v748 = vld [vmem:[#allocation2 + $0x48] sm:$0xff]
    %v749 = vld [vmem:[#allocation2 + $0x80] sm:$0xff]
    %v750 = vld [vmem:[#allocation2 + $0x88] sm:$0xff]
    %v751 = vld [vmem:[#allocation2 + $0xc0] sm:$0xff]
    %v752 = vld [vmem:[#allocation2 + $0xc8] sm:$0xff]
    %v753 = vld [vmem:[#allocation10] ss:$4 sm:$0xf]
    %v755 = vperm.slane %v753, 0
    %v756 = vperm.slane %v753, 1
    %v757 = vperm.slane %v753, 2
    %v758 = vperm.slane %v753, 3
    %v771 = vunpack.c.l.b16 %v745
    %v772 = vunpack.c.h.b16 %v745
    %v773 = vunpack.c.l.b16 %v746
    %v774 = vunpack.c.h.b16 %v746
    %v775 = vunpack.c.l.b16 %v747
    %v776 = vunpack.c.h.b16 %v747
    %v777 = vunpack.c.l.b16 %v748
    %v778 = vunpack.c.h.b16 %v748
    %v779 = vunpack.c.l.b16 %v749
    %v780 = vunpack.c.h.b16 %v749
    %v781 = vunpack.c.l.b16 %v750
    %v782 = vunpack.c.h.b16 %v750
    %v783 = vunpack.c.l.b16 %v751
    %v784 = vunpack.c.h.b16 %v751
    %v785 = vunpack.c.l.b16 %v752
    %v786 = vunpack.c.h.b16 %v752
    %v787 = vpack.c.b16 %v775, %v771
    %v788 = vpack.c.b16 %v776, %v772
    %v789 = vpack.c.b16 %v777, %v773
    %v790 = vpack.c.b16 %v778, %v774
    %v791 = vpack.c.b16 %v783, %v779
    %v792 = vpack.c.b16 %v784, %v780
    %v793 = vpack.c.b16 %v785, %v781
    %v794 = vpack.c.b16 %v786, %v782
    %v804 = vsel %vm253, %v744, 0
    %806 = vmatpush.bf16.msra.mxu0 0
    %807 = vmatpush.bf16.msra.mxu0 0
    %808 = vmatpush.bf16.msra.mxu0 0
    %809 = vmatpush.bf16.msra.mxu0 0
    %810 = vmatpush.bf16.msra.mxu0 0
    %811 = vmatpush.bf16.msra.mxu0 0
    %812 = vmatpush.bf16.msra.mxu0 %v791
    %813 = vmatpush.bf16.msra.mxu0 %v787
    %814 = vmatmul.bf16.gmra.mxu0 %v804
    %v815 = vpop.f32.mrf.mxu0
    %v816 = vadd.f32 %v755, %v815
    %v817 = vpop.f32.mrf.mxu0
    %818 = vdwg.mxu0
    %819 = vmatpush.bf16.msra.mxu0 0
    %820 = vmatpush.bf16.msra.mxu0 0
    %821 = vmatpush.bf16.msra.mxu0 0
    %822 = vmatpush.bf16.msra.mxu0 0
    %823 = vmatpush.bf16.msra.mxu0 0
    %824 = vmatpush.bf16.msra.mxu0 0
    %825 = vmatpush.bf16.msra.mxu0 %v792
    %826 = vmatpush.bf16.msra.mxu0 %v788
    %827 = vmatmul.bf16.gmra.mxu0 %v804
    %v828 = vpop.f32.mrf.mxu0
    %v829 = vadd.f32 %v756, %v828
    %v830 = vpop.f32.mrf.mxu0
    %831 = vdwg.mxu0
    %832 = vmatpush.bf16.msra.mxu0 0
    %833 = vmatpush.bf16.msra.mxu0 0
    %834 = vmatpush.bf16.msra.mxu0 0
    %835 = vmatpush.bf16.msra.mxu0 0
    %836 = vmatpush.bf16.msra.mxu0 0
    %837 = vmatpush.bf16.msra.mxu0 0
    %838 = vmatpush.bf16.msra.mxu0 %v793
    %839 = vmatpush.bf16.msra.mxu0 %v789
    %840 = vmatmul.bf16.gmra.mxu0 %v804
    %v841 = vpop.f32.mrf.mxu0
    %v842 = vadd.f32 %v757, %v841
    %v843 = vpop.f32.mrf.mxu0
    %844 = vdwg.mxu0
    %845 = vmatpush.bf16.msra.mxu0 0
    %846 = vmatpush.bf16.msra.mxu0 0
    %847 = vmatpush.bf16.msra.mxu0 0
    %848 = vmatpush.bf16.msra.mxu0 0
    %849 = vmatpush.bf16.msra.mxu0 0
    %850 = vmatpush.bf16.msra.mxu0 0
    %851 = vmatpush.bf16.msra.mxu0 %v794
    %852 = vmatpush.bf16.msra.mxu0 %v790
    %853 = vmatmul.bf16.gmra.mxu0 %v804
    %v854 = vpop.f32.mrf.mxu0
    %v855 = vadd.f32 %v758, %v854
    %v856 = vpop.f32.mrf.mxu0
    %857 = vdwg.mxu0
    %v858 = vmax.f32 %v816, 0.0
    %v859 = vmax.f32 %v829, 0.0
    %v860 = vmax.f32 %v842, 0.0
    %v861 = vmax.f32 %v855, 0.0
    %v862 = vld [vmem:[#allocation3] sm:$0xff]
    %v863 = vld [vmem:[#allocation3 + $0x8] sm:$0xff]
    %v864 = vld [vmem:[#allocation3 + $0x40] sm:$0xff]
    %v865 = vld [vmem:[#allocation3 + $0x48] sm:$0xff]
    %v866 = vld [vmem:[#allocation3 + $0x80] sm:$0xff]
    %v867 = vld [vmem:[#allocation3 + $0x88] sm:$0xff]
    %v868 = vld [vmem:[#allocation3 + $0xc0] sm:$0xff]
    %v869 = vld [vmem:[#allocation3 + $0xc8] sm:$0xff]
    %v870 = vpack.c.bf16 %v858, %v858
    %v871 = vpack.c.bf16 %v859, %v859
    %v872 = vpack.c.bf16 %v860, %v860
    %v873 = vpack.c.bf16 %v861, %v861
    %v874 = vld [vmem:[#allocation2 + $0x10] sm:$0xff]
    %v875 = vld [vmem:[#allocation2 + $0x18] sm:$0xff]
    %v876 = vld [vmem:[#allocation2 + $0x50] sm:$0xff]
    %v877 = vld [vmem:[#allocation2 + $0x58] sm:$0xff]
    %v878 = vld [vmem:[#allocation2 + $0x90] sm:$0xff]
    %v879 = vld [vmem:[#allocation2 + $0x98] sm:$0xff]
    %v880 = vld [vmem:[#allocation2 + $0xd0] sm:$0xff]
    %v881 = vld [vmem:[#allocation2 + $0xd8] sm:$0xff]
    %s882 = scalar_lea.vmem [#allocation10], 16
    %v883 = vld [vmem:[%s882] ss:$4 sm:$0xf]
    %v885 = vperm.slane %v883, 0
    %v886 = vperm.slane %v883, 1
    %v887 = vperm.slane %v883, 2
    %v888 = vperm.slane %v883, 3
    %v901 = vunpack.c.l.b16 %v874
    %v902 = vunpack.c.h.b16 %v874
    %v903 = vunpack.c.l.b16 %v875
    %v904 = vunpack.c.h.b16 %v875
    %v905 = vunpack.c.l.b16 %v876
    %v906 = vunpack.c.h.b16 %v876
    %v907 = vunpack.c.l.b16 %v877
    %v908 = vunpack.c.h.b16 %v877
    %v909 = vunpack.c.l.b16 %v878
    %v910 = vunpack.c.h.b16 %v878
    %v911 = vunpack.c.l.b16 %v879
    %v912 = vunpack.c.h.b16 %v879
    %v913 = vunpack.c.l.b16 %v880
    %v914 = vunpack.c.h.b16 %v880
    %v915 = vunpack.c.l.b16 %v881
    %v916 = vunpack.c.h.b16 %v881
    %v917 = vpack.c.b16 %v905, %v901
    %v918 = vpack.c.b16 %v906, %v902
    %v919 = vpack.c.b16 %v907, %v903
    %v920 = vpack.c.b16 %v908, %v904
    %v921 = vpack.c.b16 %v913, %v909
    %v922 = vpack.c.b16 %v914, %v910
    %v923 = vpack.c.b16 %v915, %v911
    %v924 = vpack.c.b16 %v916, %v912
    %933 = vmatpush.bf16.msra.mxu0 0
    %934 = vmatpush.bf16.msra.mxu0 0
    %935 = vmatpush.bf16.msra.mxu0 0
    %936 = vmatpush.bf16.msra.mxu0 0
    %937 = vmatpush.bf16.msra.mxu0 0
    %938 = vmatpush.bf16.msra.mxu0 0
    %939 = vmatpush.bf16.msra.mxu0 %v921
    %940 = vmatpush.bf16.msra.mxu0 %v917
    %941 = vmatmul.bf16.gmra.mxu0 %v804
    %v942 = vpop.f32.mrf.mxu0
    %v943 = vadd.f32 %v885, %v942
    %v944 = vpop.f32.mrf.mxu0
    %945 = vdwg.mxu0
    %946 = vmatpush.bf16.msra.mxu0 0
    %947 = vmatpush.bf16.msra.mxu0 0
    %948 = vmatpush.bf16.msra.mxu0 0
    %949 = vmatpush.bf16.msra.mxu0 0
    %950 = vmatpush.bf16.msra.mxu0 0
    %951 = vmatpush.bf16.msra.mxu0 0
    %952 = vmatpush.bf16.msra.mxu0 %v922
    %953 = vmatpush.bf16.msra.mxu0 %v918
    %954 = vmatmul.bf16.gmra.mxu0 %v804
    %v955 = vpop.f32.mrf.mxu0
    %v956 = vadd.f32 %v886, %v955
    %v957 = vpop.f32.mrf.mxu0
    %958 = vdwg.mxu0
    %959 = vmatpush.bf16.msra.mxu0 0
    %960 = vmatpush.bf16.msra.mxu0 0
    %961 = vmatpush.bf16.msra.mxu0 0
    %962 = vmatpush.bf16.msra.mxu0 0
    %963 = vmatpush.bf16.msra.mxu0 0
    %964 = vmatpush.bf16.msra.mxu0 0
    %965 = vmatpush.bf16.msra.mxu0 %v923
    %966 = vmatpush.bf16.msra.mxu0 %v919
    %967 = vmatmul.bf16.gmra.mxu0 %v804
    %v968 = vpop.f32.mrf.mxu0
    %v969 = vadd.f32 %v887, %v968
    %v970 = vpop.f32.mrf.mxu0
    %971 = vdwg.mxu0
    %972 = vmatpush.bf16.msra.mxu0 0
    %973 = vmatpush.bf16.msra.mxu0 0
    %974 = vmatpush.bf16.msra.mxu0 0
    %975 = vmatpush.bf16.msra.mxu0 0
    %976 = vmatpush.bf16.msra.mxu0 0
    %977 = vmatpush.bf16.msra.mxu0 0
    %978 = vmatpush.bf16.msra.mxu0 %v924
    %979 = vmatpush.bf16.msra.mxu0 %v920
    %980 = vmatmul.bf16.gmra.mxu0 %v804
    %v981 = vpop.f32.mrf.mxu0
    %v982 = vadd.f32 %v888, %v981
    %v983 = vpop.f32.mrf.mxu0
    %984 = vdwg.mxu0
    %v985 = vmax.f32 %v943, 0.0
    %v986 = vmax.f32 %v956, 0.0
    %v987 = vmax.f32 %v969, 0.0
    %v988 = vmax.f32 %v982, 0.0
    %v989 = vld [vmem:[#allocation3 + $0x10] sm:$0xff]
    %v990 = vld [vmem:[#allocation3 + $0x18] sm:$0xff]
    %v991 = vld [vmem:[#allocation3 + $0x50] sm:$0xff]
    %v992 = vld [vmem:[#allocation3 + $0x58] sm:$0xff]
    %v993 = vld [vmem:[#allocation3 + $0x90] sm:$0xff]
    %v994 = vld [vmem:[#allocation3 + $0x98] sm:$0xff]
    %v995 = vld [vmem:[#allocation3 + $0xd0] sm:$0xff]
    %v996 = vld [vmem:[#allocation3 + $0xd8] sm:$0xff]
    %v997 = vpack.c.bf16 %v985, %v985
    %v998 = vpack.c.bf16 %v986, %v986
    %v999 = vpack.c.bf16 %v987, %v987
    %v1000 = vpack.c.bf16 %v988, %v988
    %v1009 = vunpack.c.l.b16 %v989
    %v1010 = vunpack.c.h.b16 %v989
    %v1011 = vunpack.c.l.b16 %v990
    %v1012 = vunpack.c.h.b16 %v990
    %v1013 = vunpack.c.l.b16 %v991
    %v1014 = vunpack.c.h.b16 %v991
    %v1015 = vunpack.c.l.b16 %v992
    %v1016 = vunpack.c.h.b16 %v992
    %v1017 = vunpack.c.l.b16 %v993
    %v1018 = vunpack.c.h.b16 %v993
    %v1019 = vunpack.c.l.b16 %v994
    %v1020 = vunpack.c.h.b16 %v994
    %v1021 = vunpack.c.l.b16 %v995
    %v1022 = vunpack.c.h.b16 %v995
    %v1023 = vunpack.c.l.b16 %v996
    %v1024 = vunpack.c.h.b16 %v996
    %v1025 = vpack.c.b16 %v1013, %v1009
    %v1026 = vpack.c.b16 %v1014, %v1010
    %v1027 = vpack.c.b16 %v1015, %v1011
    %v1028 = vpack.c.b16 %v1016, %v1012
    %v1029 = vpack.c.b16 %v1021, %v1017
    %v1030 = vpack.c.b16 %v1022, %v1018
    %v1031 = vpack.c.b16 %v1023, %v1019
    %v1032 = vpack.c.b16 %v1024, %v1020
    %1041 = vmatpush.bf16.xpose.msra.mxu0 0
    %1042 = vmatpush.bf16.xpose.msra.mxu0 0
    %1043 = vmatpush.bf16.xpose.msra.mxu0 0
    %1044 = vmatpush.bf16.xpose.msra.mxu0 0
    %1045 = vmatpush.bf16.xpose.msra.mxu0 0
    %1046 = vmatpush.bf16.xpose.msra.mxu0 0
    %1047 = vmatpush.bf16.xpose.msra.mxu0 %v1029
    %1048 = vmatpush.bf16.xpose.msra.mxu0 %v1025
    %1049 = vmatmul.bf16.gmra.mxu0 %v997
    %v1050 = vpop.f32.mrf.mxu0
    %v1051 = vadd.f32 0.0, %v1050
    %v1052 = vpop.f32.mrf.mxu0
    %1053 = vdwg.mxu0
    %1054 = vmatpush.bf16.xpose.msra.mxu0 0
    %1055 = vmatpush.bf16.xpose.msra.mxu0 0
    %1056 = vmatpush.bf16.xpose.msra.mxu0 0
    %1057 = vmatpush.bf16.xpose.msra.mxu0 0
    %1058 = vmatpush.bf16.xpose.msra.mxu0 0
    %1059 = vmatpush.bf16.xpose.msra.mxu0 0
    %1060 = vmatpush.bf16.xpose.msra.mxu0 %v1030
    %1061 = vmatpush.bf16.xpose.msra.mxu0 %v1026
    %1062 = vmatmul.bf16.gmra.mxu0 %v998
    %v1063 = vpop.f32.mrf.mxu0
    %v1064 = vadd.f32 %v1051, %v1063
    %v1065 = vpop.f32.mrf.mxu0
    %1066 = vdwg.mxu0
    %1067 = vmatpush.bf16.xpose.msra.mxu0 0
    %1068 = vmatpush.bf16.xpose.msra.mxu0 0
    %1069 = vmatpush.bf16.xpose.msra.mxu0 0
    %1070 = vmatpush.bf16.xpose.msra.mxu0 0
    %1071 = vmatpush.bf16.xpose.msra.mxu0 0
    %1072 = vmatpush.bf16.xpose.msra.mxu0 0
    %1073 = vmatpush.bf16.xpose.msra.mxu0 %v1031
    %1074 = vmatpush.bf16.xpose.msra.mxu0 %v1027
    %1075 = vmatmul.bf16.gmra.mxu0 %v999
    %v1076 = vpop.f32.mrf.mxu0
    %v1077 = vadd.f32 %v1064, %v1076
    %v1078 = vpop.f32.mrf.mxu0
    %1079 = vdwg.mxu0
    %1080 = vmatpush.bf16.xpose.msra.mxu0 0
    %1081 = vmatpush.bf16.xpose.msra.mxu0 0
    %1082 = vmatpush.bf16.xpose.msra.mxu0 0
    %1083 = vmatpush.bf16.xpose.msra.mxu0 0
    %1084 = vmatpush.bf16.xpose.msra.mxu0 0
    %1085 = vmatpush.bf16.xpose.msra.mxu0 0
    %1086 = vmatpush.bf16.xpose.msra.mxu0 %v1032
    %1087 = vmatpush.bf16.xpose.msra.mxu0 %v1028
    %1088 = vmatmul.bf16.gmra.mxu0 %v1000
    %v1089 = vpop.f32.mrf.mxu0
    %v1090 = vadd.f32 %v1077, %v1089
    %v1091 = vpop.f32.mrf.mxu0
    %1092 = vdwg.mxu0
    %v1101 = vunpack.c.l.b16 %v862
    %v1102 = vunpack.c.h.b16 %v862
    %v1103 = vunpack.c.l.b16 %v863
    %v1104 = vunpack.c.h.b16 %v863
    %v1105 = vunpack.c.l.b16 %v864
    %v1106 = vunpack.c.h.b16 %v864
    %v1107 = vunpack.c.l.b16 %v865
    %v1108 = vunpack.c.h.b16 %v865
    %v1109 = vunpack.c.l.b16 %v866
    %v1110 = vunpack.c.h.b16 %v866
    %v1111 = vunpack.c.l.b16 %v867
    %v1112 = vunpack.c.h.b16 %v867
    %v1113 = vunpack.c.l.b16 %v868
    %v1114 = vunpack.c.h.b16 %v868
    %v1115 = vunpack.c.l.b16 %v869
    %v1116 = vunpack.c.h.b16 %v869
    %v1117 = vpack.c.b16 %v1105, %v1101
    %v1118 = vpack.c.b16 %v1106, %v1102
    %v1119 = vpack.c.b16 %v1107, %v1103
    %v1120 = vpack.c.b16 %v1108, %v1104
    %v1121 = vpack.c.b16 %v1113, %v1109
    %v1122 = vpack.c.b16 %v1114, %v1110
    %v1123 = vpack.c.b16 %v1115, %v1111
    %v1124 = vpack.c.b16 %v1116, %v1112
    %1133 = vmatpush.bf16.xpose.msra.mxu0 0
    %1134 = vmatpush.bf16.xpose.msra.mxu0 0
    %1135 = vmatpush.bf16.xpose.msra.mxu0 0
    %1136 = vmatpush.bf16.xpose.msra.mxu0 0
    %1137 = vmatpush.bf16.xpose.msra.mxu0 0
    %1138 = vmatpush.bf16.xpose.msra.mxu0 0
    %1139 = vmatpush.bf16.xpose.msra.mxu0 %v1121
    %1140 = vmatpush.bf16.xpose.msra.mxu0 %v1117
    %1141 = vmatmul.bf16.gmra.mxu0 %v870
    %v1142 = vpop.f32.mrf.mxu0
    %v1143 = vadd.f32 %v1090, %v1142
    %v1144 = vpop.f32.mrf.mxu0
    %1145 = vdwg.mxu0
    %1146 = vmatpush.bf16.xpose.msra.mxu0 0
    %1147 = vmatpush.bf16.xpose.msra.mxu0 0
    %1148 = vmatpush.bf16.xpose.msra.mxu0 0
    %1149 = vmatpush.bf16.xpose.msra.mxu0 0
    %1150 = vmatpush.bf16.xpose.msra.mxu0 0
    %1151 = vmatpush.bf16.xpose.msra.mxu0 0
    %1152 = vmatpush.bf16.xpose.msra.mxu0 %v1122
    %1153 = vmatpush.bf16.xpose.msra.mxu0 %v1118
    %1154 = vmatmul.bf16.gmra.mxu0 %v871
    %v1155 = vpop.f32.mrf.mxu0
    %v1156 = vadd.f32 %v1143, %v1155
    %v1157 = vpop.f32.mrf.mxu0
    %1158 = vdwg.mxu0
    %1159 = vmatpush.bf16.xpose.msra.mxu0 0
    %1160 = vmatpush.bf16.xpose.msra.mxu0 0
    %1161 = vmatpush.bf16.xpose.msra.mxu0 0
    %1162 = vmatpush.bf16.xpose.msra.mxu0 0
    %1163 = vmatpush.bf16.xpose.msra.mxu0 0
    %1164 = vmatpush.bf16.xpose.msra.mxu0 0
    %1165 = vmatpush.bf16.xpose.msra.mxu0 %v1123
    %1166 = vmatpush.bf16.xpose.msra.mxu0 %v1119
    %1167 = vmatmul.bf16.gmra.mxu0 %v872
    %v1168 = vpop.f32.mrf.mxu0
    %v1169 = vadd.f32 %v1156, %v1168
    %v1170 = vpop.f32.mrf.mxu0
    %1171 = vdwg.mxu0
    %1172 = vmatpush.bf16.xpose.msra.mxu0 0
    %1173 = vmatpush.bf16.xpose.msra.mxu0 0
    %1174 = vmatpush.bf16.xpose.msra.mxu0 0
    %1175 = vmatpush.bf16.xpose.msra.mxu0 0
    %1176 = vmatpush.bf16.xpose.msra.mxu0 0
    %1177 = vmatpush.bf16.xpose.msra.mxu0 0
    %1178 = vmatpush.bf16.xpose.msra.mxu0 %v1124
    %1179 = vmatpush.bf16.xpose.msra.mxu0 %v1120
    %1180 = vmatmul.bf16.gmra.mxu0 %v873
    %v1181 = vpop.f32.mrf.mxu0
    %v1182 = vadd.f32 %v1169, %v1181
    %v1183 = vpop.f32.mrf.mxu0
    %1184 = vdwg.mxu0
    %v1185 = vld [vmem:[#allocation2 + $0x20] sm:$0xff]
    %v1186 = vld [vmem:[#allocation2 + $0x28] sm:$0xff]
    %v1187 = vld [vmem:[#allocation2 + $0x60] sm:$0xff]
    %v1188 = vld [vmem:[#allocation2 + $0x68] sm:$0xff]
    %v1189 = vld [vmem:[#allocation2 + $0xa0] sm:$0xff]
    %v1190 = vld [vmem:[#allocation2 + $0xa8] sm:$0xff]
    %v1191 = vld [vmem:[#allocation2 + $0xe0] sm:$0xff]
    %v1192 = vld [vmem:[#allocation2 + $0xe8] sm:$0xff]
    %s1193 = scalar_lea.vmem [#allocation10], 32
    %v1194 = vld [vmem:[%s1193] ss:$4 sm:$0xf]
    %v1196 = vperm.slane %v1194, 0
    %v1197 = vperm.slane %v1194, 1
    %v1198 = vperm.slane %v1194, 2
    %v1199 = vperm.slane %v1194, 3
    %v1212 = vunpack.c.l.b16 %v1185
    %v1213 = vunpack.c.h.b16 %v1185
    %v1214 = vunpack.c.l.b16 %v1186
    %v1215 = vunpack.c.h.b16 %v1186
    %v1216 = vunpack.c.l.b16 %v1187
    %v1217 = vunpack.c.h.b16 %v1187
    %v1218 = vunpack.c.l.b16 %v1188
    %v1219 = vunpack.c.h.b16 %v1188
    %v1220 = vunpack.c.l.b16 %v1189
    %v1221 = vunpack.c.h.b16 %v1189
    %v1222 = vunpack.c.l.b16 %v1190
    %v1223 = vunpack.c.h.b16 %v1190
    %v1224 = vunpack.c.l.b16 %v1191
    %v1225 = vunpack.c.h.b16 %v1191
    %v1226 = vunpack.c.l.b16 %v1192
    %v1227 = vunpack.c.h.b16 %v1192
    %v1228 = vpack.c.b16 %v1216, %v1212
    %v1229 = vpack.c.b16 %v1217, %v1213
    %v1230 = vpack.c.b16 %v1218, %v1214
    %v1231 = vpack.c.b16 %v1219, %v1215
    %v1232 = vpack.c.b16 %v1224, %v1220
    %v1233 = vpack.c.b16 %v1225, %v1221
    %v1234 = vpack.c.b16 %v1226, %v1222
    %v1235 = vpack.c.b16 %v1227, %v1223
    %1244 = vmatpush.bf16.msra.mxu0 0
    %1245 = vmatpush.bf16.msra.mxu0 0
    %1246 = vmatpush.bf16.msra.mxu0 0
    %1247 = vmatpush.bf16.msra.mxu0 0
    %1248 = vmatpush.bf16.msra.mxu0 0
    %1249 = vmatpush.bf16.msra.mxu0 0
    %1250 = vmatpush.bf16.msra.mxu0 %v1232
    %1251 = vmatpush.bf16.msra.mxu0 %v1228
    %1252 = vmatmul.bf16.gmra.mxu0 %v804
    %v1253 = vpop.f32.mrf.mxu0
    %v1254 = vadd.f32 %v1196, %v1253
    %v1255 = vpop.f32.mrf.mxu0
    %1256 = vdwg.mxu0
    %1257 = vmatpush.bf16.msra.mxu0 0
    %1258 = vmatpush.bf16.msra.mxu0 0
    %1259 = vmatpush.bf16.msra.mxu0 0
    %1260 = vmatpush.bf16.msra.mxu0 0
    %1261 = vmatpush.bf16.msra.mxu0 0
    %1262 = vmatpush.bf16.msra.mxu0 0
    %1263 = vmatpush.bf16.msra.mxu0 %v1233
    %1264 = vmatpush.bf16.msra.mxu0 %v1229
    %1265 = vmatmul.bf16.gmra.mxu0 %v804
    %v1266 = vpop.f32.mrf.mxu0
    %v1267 = vadd.f32 %v1197, %v1266
    %v1268 = vpop.f32.mrf.mxu0
    %1269 = vdwg.mxu0
    %1270 = vmatpush.bf16.msra.mxu0 0
    %1271 = vmatpush.bf16.msra.mxu0 0
    %1272 = vmatpush.bf16.msra.mxu0 0
    %1273 = vmatpush.bf16.msra.mxu0 0
    %1274 = vmatpush.bf16.msra.mxu0 0
    %1275 = vmatpush.bf16.msra.mxu0 0
    %1276 = vmatpush.bf16.msra.mxu0 %v1234
    %1277 = vmatpush.bf16.msra.mxu0 %v1230
    %1278 = vmatmul.bf16.gmra.mxu0 %v804
    %v1279 = vpop.f32.mrf.mxu0
    %v1280 = vadd.f32 %v1198, %v1279
    %v1281 = vpop.f32.mrf.mxu0
    %1282 = vdwg.mxu0
    %1283 = vmatpush.bf16.msra.mxu0 0
    %1284 = vmatpush.bf16.msra.mxu0 0
    %1285 = vmatpush.bf16.msra.mxu0 0
    %1286 = vmatpush.bf16.msra.mxu0 0
    %1287 = vmatpush.bf16.msra.mxu0 0
    %1288 = vmatpush.bf16.msra.mxu0 0
    %1289 = vmatpush.bf16.msra.mxu0 %v1235
    %1290 = vmatpush.bf16.msra.mxu0 %v1231
    %1291 = vmatmul.bf16.gmra.mxu0 %v804
    %v1292 = vpop.f32.mrf.mxu0
    %v1293 = vadd.f32 %v1199, %v1292
    %v1294 = vpop.f32.mrf.mxu0
    %1295 = vdwg.mxu0
    %v1296 = vmax.f32 %v1254, 0.0
    %v1297 = vmax.f32 %v1267, 0.0
    %v1298 = vmax.f32 %v1280, 0.0
    %v1299 = vmax.f32 %v1293, 0.0
    %v1300 = vld [vmem:[#allocation3 + $0x20] sm:$0xff]
    %v1301 = vld [vmem:[#allocation3 + $0x28] sm:$0xff]
    %v1302 = vld [vmem:[#allocation3 + $0x60] sm:$0xff]
    %v1303 = vld [vmem:[#allocation3 + $0x68] sm:$0xff]
    %v1304 = vld [vmem:[#allocation3 + $0xa0] sm:$0xff]
    %v1305 = vld [vmem:[#allocation3 + $0xa8] sm:$0xff]
    %v1306 = vld [vmem:[#allocation3 + $0xe0] sm:$0xff]
    %v1307 = vld [vmem:[#allocation3 + $0xe8] sm:$0xff]
    %v1308 = vpack.c.bf16 %v1296, %v1296
    %v1309 = vpack.c.bf16 %v1297, %v1297
    %v1310 = vpack.c.bf16 %v1298, %v1298
    %v1311 = vpack.c.bf16 %v1299, %v1299
    %v1320 = vunpack.c.l.b16 %v1300
    %v1321 = vunpack.c.h.b16 %v1300
    %v1322 = vunpack.c.l.b16 %v1301
    %v1323 = vunpack.c.h.b16 %v1301
    %v1324 = vunpack.c.l.b16 %v1302
    %v1325 = vunpack.c.h.b16 %v1302
    %v1326 = vunpack.c.l.b16 %v1303
    %v1327 = vunpack.c.h.b16 %v1303
    %v1328 = vunpack.c.l.b16 %v1304
    %v1329 = vunpack.c.h.b16 %v1304
    %v1330 = vunpack.c.l.b16 %v1305
    %v1331 = vunpack.c.h.b16 %v1305
    %v1332 = vunpack.c.l.b16 %v1306
    %v1333 = vunpack.c.h.b16 %v1306
    %v1334 = vunpack.c.l.b16 %v1307
    %v1335 = vunpack.c.h.b16 %v1307
    %v1336 = vpack.c.b16 %v1324, %v1320
    %v1337 = vpack.c.b16 %v1325, %v1321
    %v1338 = vpack.c.b16 %v1326, %v1322
    %v1339 = vpack.c.b16 %v1327, %v1323
    %v1340 = vpack.c.b16 %v1332, %v1328
    %v1341 = vpack.c.b16 %v1333, %v1329
    %v1342 = vpack.c.b16 %v1334, %v1330
    %v1343 = vpack.c.b16 %v1335, %v1331
    %1352 = vmatpush.bf16.xpose.msra.mxu0 0
    %1353 = vmatpush.bf16.xpose.msra.mxu0 0
    %1354 = vmatpush.bf16.xpose.msra.mxu0 0
    %1355 = vmatpush.bf16.xpose.msra.mxu0 0
    %1356 = vmatpush.bf16.xpose.msra.mxu0 0
    %1357 = vmatpush.bf16.xpose.msra.mxu0 0
    %1358 = vmatpush.bf16.xpose.msra.mxu0 %v1340
    %1359 = vmatpush.bf16.xpose.msra.mxu0 %v1336
    %1360 = vmatmul.bf16.gmra.mxu0 %v1308
    %v1361 = vpop.f32.mrf.mxu0
    %v1362 = vadd.f32 0.0, %v1361
    %v1363 = vpop.f32.mrf.mxu0
    %1364 = vdwg.mxu0
    %1365 = vmatpush.bf16.xpose.msra.mxu0 0
    %1366 = vmatpush.bf16.xpose.msra.mxu0 0
    %1367 = vmatpush.bf16.xpose.msra.mxu0 0
    %1368 = vmatpush.bf16.xpose.msra.mxu0 0
    %1369 = vmatpush.bf16.xpose.msra.mxu0 0
    %1370 = vmatpush.bf16.xpose.msra.mxu0 0
    %1371 = vmatpush.bf16.xpose.msra.mxu0 %v1341
    %1372 = vmatpush.bf16.xpose.msra.mxu0 %v1337
    %1373 = vmatmul.bf16.gmra.mxu0 %v1309
    %v1374 = vpop.f32.mrf.mxu0
    %v1375 = vadd.f32 %v1362, %v1374
    %v1376 = vpop.f32.mrf.mxu0
    %1377 = vdwg.mxu0
    %1378 = vmatpush.bf16.xpose.msra.mxu0 0
    %1379 = vmatpush.bf16.xpose.msra.mxu0 0
    %1380 = vmatpush.bf16.xpose.msra.mxu0 0
    %1381 = vmatpush.bf16.xpose.msra.mxu0 0
    %1382 = vmatpush.bf16.xpose.msra.mxu0 0
    %1383 = vmatpush.bf16.xpose.msra.mxu0 0
    %1384 = vmatpush.bf16.xpose.msra.mxu0 %v1342
    %1385 = vmatpush.bf16.xpose.msra.mxu0 %v1338
    %1386 = vmatmul.bf16.gmra.mxu0 %v1310
    %v1387 = vpop.f32.mrf.mxu0
    %v1388 = vadd.f32 %v1375, %v1387
    %v1389 = vpop.f32.mrf.mxu0
    %1390 = vdwg.mxu0
    %1391 = vmatpush.bf16.xpose.msra.mxu0 0
    %1392 = vmatpush.bf16.xpose.msra.mxu0 0
    %1393 = vmatpush.bf16.xpose.msra.mxu0 0
    %1394 = vmatpush.bf16.xpose.msra.mxu0 0
    %1395 = vmatpush.bf16.xpose.msra.mxu0 0
    %1396 = vmatpush.bf16.xpose.msra.mxu0 0
    %1397 = vmatpush.bf16.xpose.msra.mxu0 %v1343
    %1398 = vmatpush.bf16.xpose.msra.mxu0 %v1339
    %1399 = vmatmul.bf16.gmra.mxu0 %v1311
    %v1400 = vpop.f32.mrf.mxu0
    %v1401 = vadd.f32 %v1388, %v1400
    %v1402 = vpop.f32.mrf.mxu0
    %1403 = vdwg.mxu0
    %v1404 = vadd.f32 %v1182, %v1401
    %v1405 = vld [vmem:[#allocation2 + $0x30] sm:$0xff]
    %v1406 = vld [vmem:[#allocation2 + $0x38] sm:$0xff]
    %v1407 = vld [vmem:[#allocation2 + $0x70] sm:$0xff]
    %v1408 = vld [vmem:[#allocation2 + $0x78] sm:$0xff]
    %v1409 = vld [vmem:[#allocation2 + $0xb0] sm:$0xff]
    %v1410 = vld [vmem:[#allocation2 + $0xb8] sm:$0xff]
    %v1411 = vld [vmem:[#allocation2 + $0xf0] sm:$0xff]
    %v1412 = vld [vmem:[#allocation2 + $0xf8] sm:$0xff]
    %s1413 = scalar_lea.vmem [#allocation10], 48
    %v1414 = vld [vmem:[%s1413] ss:$4 sm:$0xf]
    %v1416 = vperm.slane %v1414, 0
    %v1417 = vperm.slane %v1414, 1
    %v1418 = vperm.slane %v1414, 2
    %v1419 = vperm.slane %v1414, 3
    %v1432 = vunpack.c.l.b16 %v1405
    %v1433 = vunpack.c.h.b16 %v1405
    %v1434 = vunpack.c.l.b16 %v1406
    %v1435 = vunpack.c.h.b16 %v1406
    %v1436 = vunpack.c.l.b16 %v1407
    %v1437 = vunpack.c.h.b16 %v1407
    %v1438 = vunpack.c.l.b16 %v1408
    %v1439 = vunpack.c.h.b16 %v1408
    %v1440 = vunpack.c.l.b16 %v1409
    %v1441 = vunpack.c.h.b16 %v1409
    %v1442 = vunpack.c.l.b16 %v1410
    %v1443 = vunpack.c.h.b16 %v1410
    %v1444 = vunpack.c.l.b16 %v1411
    %v1445 = vunpack.c.h.b16 %v1411
    %v1446 = vunpack.c.l.b16 %v1412
    %v1447 = vunpack.c.h.b16 %v1412
    %v1448 = vpack.c.b16 %v1436, %v1432
    %v1449 = vpack.c.b16 %v1437, %v1433
    %v1450 = vpack.c.b16 %v1438, %v1434
    %v1451 = vpack.c.b16 %v1439, %v1435
    %v1452 = vpack.c.b16 %v1444, %v1440
    %v1453 = vpack.c.b16 %v1445, %v1441
    %v1454 = vpack.c.b16 %v1446, %v1442
    %v1455 = vpack.c.b16 %v1447, %v1443
    %1464 = vmatpush.bf16.msra.mxu0 0
    %1465 = vmatpush.bf16.msra.mxu0 0
    %1466 = vmatpush.bf16.msra.mxu0 0
    %1467 = vmatpush.bf16.msra.mxu0 0
    %1468 = vmatpush.bf16.msra.mxu0 0
    %1469 = vmatpush.bf16.msra.mxu0 0
    %1470 = vmatpush.bf16.msra.mxu0 %v1452
    %1471 = vmatpush.bf16.msra.mxu0 %v1448
    %1472 = vmatmul.bf16.gmra.mxu0 %v804
    %v1473 = vpop.f32.mrf.mxu0
    %v1474 = vadd.f32 %v1416, %v1473
    %v1475 = vpop.f32.mrf.mxu0
    %1476 = vdwg.mxu0
    %1477 = vmatpush.bf16.msra.mxu0 0
    %1478 = vmatpush.bf16.msra.mxu0 0
    %1479 = vmatpush.bf16.msra.mxu0 0
    %1480 = vmatpush.bf16.msra.mxu0 0
    %1481 = vmatpush.bf16.msra.mxu0 0
    %1482 = vmatpush.bf16.msra.mxu0 0
    %1483 = vmatpush.bf16.msra.mxu0 %v1453
    %1484 = vmatpush.bf16.msra.mxu0 %v1449
    %1485 = vmatmul.bf16.gmra.mxu0 %v804
    %v1486 = vpop.f32.mrf.mxu0
    %v1487 = vadd.f32 %v1417, %v1486
    %v1488 = vpop.f32.mrf.mxu0
    %1489 = vdwg.mxu0
    %1490 = vmatpush.bf16.msra.mxu0 0
    %1491 = vmatpush.bf16.msra.mxu0 0
    %1492 = vmatpush.bf16.msra.mxu0 0
    %1493 = vmatpush.bf16.msra.mxu0 0
    %1494 = vmatpush.bf16.msra.mxu0 0
    %1495 = vmatpush.bf16.msra.mxu0 0
    %1496 = vmatpush.bf16.msra.mxu0 %v1454
    %1497 = vmatpush.bf16.msra.mxu0 %v1450
    %1498 = vmatmul.bf16.gmra.mxu0 %v804
    %v1499 = vpop.f32.mrf.mxu0
    %v1500 = vadd.f32 %v1418, %v1499
    %v1501 = vpop.f32.mrf.mxu0
    %1502 = vdwg.mxu0
    %1503 = vmatpush.bf16.msra.mxu0 0
    %1504 = vmatpush.bf16.msra.mxu0 0
    %1505 = vmatpush.bf16.msra.mxu0 0
    %1506 = vmatpush.bf16.msra.mxu0 0
    %1507 = vmatpush.bf16.msra.mxu0 0
    %1508 = vmatpush.bf16.msra.mxu0 0
    %1509 = vmatpush.bf16.msra.mxu0 %v1455
    %1510 = vmatpush.bf16.msra.mxu0 %v1451
    %1511 = vmatmul.bf16.gmra.mxu0 %v804
    %v1512 = vpop.f32.mrf.mxu0
    %v1513 = vadd.f32 %v1419, %v1512
    %v1514 = vpop.f32.mrf.mxu0
    %1515 = vdwg.mxu0
    %v1516 = vmax.f32 %v1474, 0.0
    %v1517 = vmax.f32 %v1487, 0.0
    %v1518 = vmax.f32 %v1500, 0.0
    %v1519 = vmax.f32 %v1513, 0.0
    %v1520 = vld [vmem:[#allocation3 + $0x30] sm:$0xff]
    %v1521 = vld [vmem:[#allocation3 + $0x38] sm:$0xff]
    %v1522 = vld [vmem:[#allocation3 + $0x70] sm:$0xff]
    %v1523 = vld [vmem:[#allocation3 + $0x78] sm:$0xff]
    %v1524 = vld [vmem:[#allocation3 + $0xb0] sm:$0xff]
    %v1525 = vld [vmem:[#allocation3 + $0xb8] sm:$0xff]
    %v1526 = vld [vmem:[#allocation3 + $0xf0] sm:$0xff]
    %v1527 = vld [vmem:[#allocation3 + $0xf8] sm:$0xff]
    %v1528 = vpack.c.bf16 %v1516, %v1516
    %v1529 = vpack.c.bf16 %v1517, %v1517
    %v1530 = vpack.c.bf16 %v1518, %v1518
    %v1531 = vpack.c.bf16 %v1519, %v1519
    %v1540 = vunpack.c.l.b16 %v1520
    %v1541 = vunpack.c.h.b16 %v1520
    %v1542 = vunpack.c.l.b16 %v1521
    %v1543 = vunpack.c.h.b16 %v1521
    %v1544 = vunpack.c.l.b16 %v1522
    %v1545 = vunpack.c.h.b16 %v1522
    %v1546 = vunpack.c.l.b16 %v1523
    %v1547 = vunpack.c.h.b16 %v1523
    %v1548 = vunpack.c.l.b16 %v1524
    %v1549 = vunpack.c.h.b16 %v1524
    %v1550 = vunpack.c.l.b16 %v1525
    %v1551 = vunpack.c.h.b16 %v1525
    %v1552 = vunpack.c.l.b16 %v1526
    %v1553 = vunpack.c.h.b16 %v1526
    %v1554 = vunpack.c.l.b16 %v1527
    %v1555 = vunpack.c.h.b16 %v1527
    %v1556 = vpack.c.b16 %v1544, %v1540
    %v1557 = vpack.c.b16 %v1545, %v1541
    %v1558 = vpack.c.b16 %v1546, %v1542
    %v1559 = vpack.c.b16 %v1547, %v1543
    %v1560 = vpack.c.b16 %v1552, %v1548
    %v1561 = vpack.c.b16 %v1553, %v1549
    %v1562 = vpack.c.b16 %v1554, %v1550
    %v1563 = vpack.c.b16 %v1555, %v1551
    %1572 = vmatpush.bf16.xpose.msra.mxu0 0
    %1573 = vmatpush.bf16.xpose.msra.mxu0 0
    %1574 = vmatpush.bf16.xpose.msra.mxu0 0
    %1575 = vmatpush.bf16.xpose.msra.mxu0 0
    %1576 = vmatpush.bf16.xpose.msra.mxu0 0
    %1577 = vmatpush.bf16.xpose.msra.mxu0 0
    %1578 = vmatpush.bf16.xpose.msra.mxu0 %v1560
    %1579 = vmatpush.bf16.xpose.msra.mxu0 %v1556
    %1580 = vmatmul.bf16.gmra.mxu0 %v1528
    %v1581 = vpop.f32.mrf.mxu0
    %v1582 = vadd.f32 0.0, %v1581
    %v1583 = vpop.f32.mrf.mxu0
    %1584 = vdwg.mxu0
    %1585 = vmatpush.bf16.xpose.msra.mxu0 0
    %1586 = vmatpush.bf16.xpose.msra.mxu0 0
    %1587 = vmatpush.bf16.xpose.msra.mxu0 0
    %1588 = vmatpush.bf16.xpose.msra.mxu0 0
    %1589 = vmatpush.bf16.xpose.msra.mxu0 0
    %1590 = vmatpush.bf16.xpose.msra.mxu0 0
    %1591 = vmatpush.bf16.xpose.msra.mxu0 %v1561
    %1592 = vmatpush.bf16.xpose.msra.mxu0 %v1557
    %1593 = vmatmul.bf16.gmra.mxu0 %v1529
    %v1594 = vpop.f32.mrf.mxu0
    %v1595 = vadd.f32 %v1582, %v1594
    %v1596 = vpop.f32.mrf.mxu0
    %1597 = vdwg.mxu0
    %1598 = vmatpush.bf16.xpose.msra.mxu0 0
    %1599 = vmatpush.bf16.xpose.msra.mxu0 0
    %1600 = vmatpush.bf16.xpose.msra.mxu0 0
    %1601 = vmatpush.bf16.xpose.msra.mxu0 0
    %1602 = vmatpush.bf16.xpose.msra.mxu0 0
    %1603 = vmatpush.bf16.xpose.msra.mxu0 0
    %1604 = vmatpush.bf16.xpose.msra.mxu0 %v1562
    %1605 = vmatpush.bf16.xpose.msra.mxu0 %v1558
    %1606 = vmatmul.bf16.gmra.mxu0 %v1530
    %v1607 = vpop.f32.mrf.mxu0
    %v1608 = vadd.f32 %v1595, %v1607
    %v1609 = vpop.f32.mrf.mxu0
    %1610 = vdwg.mxu0
    %1611 = vmatpush.bf16.xpose.msra.mxu0 0
    %1612 = vmatpush.bf16.xpose.msra.mxu0 0
    %1613 = vmatpush.bf16.xpose.msra.mxu0 0
    %1614 = vmatpush.bf16.xpose.msra.mxu0 0
    %1615 = vmatpush.bf16.xpose.msra.mxu0 0
    %1616 = vmatpush.bf16.xpose.msra.mxu0 0
    %1617 = vmatpush.bf16.xpose.msra.mxu0 %v1563
    %1618 = vmatpush.bf16.xpose.msra.mxu0 %v1559
    %1619 = vmatmul.bf16.gmra.mxu0 %v1531
    %v1620 = vpop.f32.mrf.mxu0
    %v1621 = vadd.f32 %v1608, %v1620
    %v1622 = vpop.f32.mrf.mxu0
    %1623 = vdwg.mxu0
    %v1624 = vadd.f32 %v1404, %v1621
    %v1625 = vld [vmem:[#allocation5 + $0xa1] sm:$0x1]
    %v1626 = vperm.slane %v1625, 0
    %v1627 = vadd.f32 %v1624, %v1626
    %v1628 = vadd.f32 %v737, %v1627
    %v1629 = vld [vmem:[#allocation5 + $0x8f] sm:$0x1]
    %v1630 = vld [vmem:[#allocation5 + $0x90] sm:$0x1]
    %v1631 = vsel %vm704, %v1628, 0.0
    %1632 = vadd.xlane.f32.xlu0 %v1631
    %v1633 = vpop.xlane.xlu0 %1632
    %v1634 = vmul.f32 %v1633, %v714
    %v1635 = vsub.f32 %v1628, %v1634
    %v1636 = vmul.f32 %v1635, %v1635
    %v1637 = vsel %vm704, %v1636, 0.0
    %1638 = vadd.xlane.f32.xlu0 %v1637
    %v1639 = vpop.xlane.xlu0 %1638
    %v1640 = vmul.f32 %v1639, %v714
    %v1641 = vadd.f32 %v1640, 1e-05
    %v1642 = vrsqrt.pop %v1641
    %v1643 = vmul.f32 %v1642, %v1641
    %v1644 = vmul.f32 %v1643, %v1642
    %v1645 = vmul.f32 0.5, %v1644
    %v1646 = vsub.f32 1.5, %v1645
    %v1647 = vmul.f32 %v1642, %v1646
    %vm1648 = vweird.f32 %v1641
    %vm1649 = vweird.f32 %v1642
    %vm1650 = vmor %vm1648, %vm1649
    %v1651 = vsel %vm1650, %v1642, %v1647
    %v1652 = vmul.f32 %v1635, %v1651
    %v1653 = vperm.slane %v1629, 0
    %v1654 = vmul.f32 %v1652, %v1653
    %v1655 = vperm.slane %v1630, 0
    %v1656 = vadd.f32 %v1654, %v1655
    %s1657 = scalar_lea.vmem [#allocation8], 40
    %v1658 = vld [vmem:[%s1657] sm:$0xff]
    %v1659 = vld [vmem:[%s1657 + $0x8] sm:$0xff]
    %v1660 = vld [vmem:[%s1657 + $0x10] sm:$0xff]
    %v1661 = vld [vmem:[%s1657 + $0x18] sm:$0xff]
    %v1662 = vld [vmem:[%s1657 + $0x20] sm:$0x1]
    %v1663 = vperm.slane %v1662, 0
    %v1665 = vsel %vm253, %v1656, 0
    %1667 = vmatpush.msra.mxu0 0.0
    %1668 = vmatpush.msra.mxu0 0.0
    %1669 = vmatpush.msra.mxu0 0.0
    %1670 = vmatpush.msra.mxu0 0.0
    %1671 = vmatpush.msra.mxu0 0.0
    %1672 = vmatpush.msra.mxu0 0.0
    %1673 = vmatpush.msra.mxu0 0.0
    %1674 = vmatpush.msra.mxu0 0.0
    %1675 = vmatpush.msra.mxu0 0.0
    %1676 = vmatpush.msra.mxu0 0.0
    %1677 = vmatpush.msra.mxu0 0.0
    %1678 = vmatpush.msra.mxu0 0.0
    %1679 = vmatpush.msra.mxu0 %v1661
    %1680 = vmatpush.msra.mxu0 %v1660
    %1681 = vmatpush.msra.mxu0 %v1659
    %1682 = vmatpush.msra.mxu0 %v1658
    %1683 = vmatmul.f32.gmra.mxu0 %v1665
    %v1684 = vpop.f32.mrf.mxu0
    %v1685 = vadd.f32 %v1663, %v1684
    %1686 = vdwg.mxu0
    %1691 = vrot.lane.b32.xlu0 %v1658, 96
    %v1692 = vpop.permute.xlu0 %1691
    %1693 = vrot.lane.b32.xlu0 %v1659, 96
    %v1694 = vpop.permute.xlu0 %1693
    %1695 = vrot.lane.b32.xlu0 %v1660, 96
    %v1696 = vpop.permute.xlu0 %1695
    %1697 = vrot.lane.b32.xlu0 %v1661, 96
    %v1698 = vpop.permute.xlu0 %1697
    %1704 = vrot.lane.b32.xlu0 %v1663, 96
    %v1705 = vpop.permute.xlu0 %1704
    %1707 = vmatpush.msra.mxu0 0.0
    %1708 = vmatpush.msra.mxu0 0.0
    %1709 = vmatpush.msra.mxu0 0.0
    %1710 = vmatpush.msra.mxu0 0.0
    %1711 = vmatpush.msra.mxu0 0.0
    %1712 = vmatpush.msra.mxu0 0.0
    %1713 = vmatpush.msra.mxu0 0.0
    %1714 = vmatpush.msra.mxu0 0.0
    %1715 = vmatpush.msra.mxu0 0.0
    %1716 = vmatpush.msra.mxu0 0.0
    %1717 = vmatpush.msra.mxu0 0.0
    %1718 = vmatpush.msra.mxu0 0.0
    %1719 = vmatpush.msra.mxu0 %v1698
    %1720 = vmatpush.msra.mxu0 %v1696
    %1721 = vmatpush.msra.mxu0 %v1694
    %1722 = vmatpush.msra.mxu0 %v1692
    %1723 = vmatmul.f32.gmra.mxu0 %v1665
    %v1724 = vpop.f32.mrf.mxu0
    %v1725 = vadd.f32 %v1705, %v1724
    %1726 = vdwg.mxu0
    %v1728 = vsel %vm499, %v1685, 0
    %v1731 = vsel %vm499, %v1725, 0
    %1733 = vmatpush.xpose.msra.mxu0 0.0
    %1734 = vmatpush.xpose.msra.mxu0 0.0
    %1735 = vmatpush.xpose.msra.mxu0 0.0
    %1736 = vmatpush.xpose.msra.mxu0 0.0
    %1737 = vmatpush.xpose.msra.mxu0 0.0
    %1738 = vmatpush.xpose.msra.mxu0 0.0
    %1739 = vmatpush.xpose.msra.mxu0 0.0
    %1740 = vmatpush.xpose.msra.mxu0 0.0
    %1741 = vmatpush.xpose.msra.mxu0 0.0
    %1742 = vmatpush.xpose.msra.mxu0 0.0
    %1743 = vmatpush.xpose.msra.mxu0 0.0
    %1744 = vmatpush.xpose.msra.mxu0 0.0
    %1745 = vmatpush.xpose.msra.mxu0 0.0
    %1746 = vmatpush.xpose.msra.mxu0 0.0
    %1747 = vmatpush.xpose.msra.mxu0 0.0
    %1748 = vmatpush.xpose.msra.mxu0 %v1731
    %1749 = vmatmul.f32.gmra.mxu0 %v1728
    %v1750 = vpop.f32.mrf.mxu0
    %v1751 = vadd.f32 0.0, %v1750
    %1752 = vdwg.mxu0
    %v1753 = vmul.f32 %v1751, 0.25
    %v1754 = vsel %vm527, %v1753, -inf
    %1755 = vmax.xlane.f32.xlu0 %v1754
    %v1756 = vpop.xlane.xlu0 %1755
    %v1757 = vsub.f32 %v1753, %v1756
    %v1758 = vmul.f32 %v1757, 1.442695
    %v1759 = vpow.pop %v1758
    %v1760 = vsel %vm527, %v1759, 0.0
    %1761 = vadd.xlane.f32.xlu0 %v1760
    %v1762 = vpop.xlane.xlu0 %1761
    %v1763 = vrcp.pop %v1762
    %v1764 = vmul.f32 %v1759, %v1763
    %1765 = vrot.lane.b32.xlu0 %v1725, 96
    %v1766 = vpop.permute.xlu0 %1765
    %v1768 = vsel %vm541, %v1764, 0
    %v1770 = vsel %vm545, %v1766, 0
    %1772 = vmatpush.msra.mxu0 0.0
    %1773 = vmatpush.msra.mxu0 0.0
    %1774 = vmatpush.msra.mxu0 0.0
    %1775 = vmatpush.msra.mxu0 0.0
    %1776 = vmatpush.msra.mxu0 0.0
    %1777 = vmatpush.msra.mxu0 0.0
    %1778 = vmatpush.msra.mxu0 0.0
    %1779 = vmatpush.msra.mxu0 0.0
    %1780 = vmatpush.msra.mxu0 0.0
    %1781 = vmatpush.msra.mxu0 0.0
    %1782 = vmatpush.msra.mxu0 0.0
    %1783 = vmatpush.msra.mxu0 0.0
    %1784 = vmatpush.msra.mxu0 0.0
    %1785 = vmatpush.msra.mxu0 0.0
    %1786 = vmatpush.msra.mxu0 0.0
    %1787 = vmatpush.msra.mxu0 %v1770
    %1788 = vmatmul.f32.gmra.mxu0 %v1768
    %v1789 = vpop.f32.mrf.mxu0
    %v1790 = vadd.f32 0.0, %v1789
    %1791 = vdwg.mxu0
    %v1792 = vld [vmem:[%s1657] sm:$0xff]
    %v1793 = vld [vmem:[%s1657 + $0x8] sm:$0xff]
    %1794 = vrot.lane.b32.xlu0 %v1685, 112
    %v1795 = vpop.permute.xlu0 %1794
    %1796 = vrot.lane.b32.xlu0 %v1725, 112
    %v1797 = vpop.permute.xlu0 %1796
    %v1798 = vsel %vm499, %v1795, 0
    %v1800 = vsel %vm499, %v1797, 0
    %1802 = vmatpush.xpose.msra.mxu0 0.0
    %1803 = vmatpush.xpose.msra.mxu0 0.0
    %1804 = vmatpush.xpose.msra.mxu0 0.0
    %1805 = vmatpush.xpose.msra.mxu0 0.0
    %1806 = vmatpush.xpose.msra.mxu0 0.0
    %1807 = vmatpush.xpose.msra.mxu0 0.0
    %1808 = vmatpush.xpose.msra.mxu0 0.0
    %1809 = vmatpush.xpose.msra.mxu0 0.0
    %1810 = vmatpush.xpose.msra.mxu0 0.0
    %1811 = vmatpush.xpose.msra.mxu0 0.0
    %1812 = vmatpush.xpose.msra.mxu0 0.0
    %1813 = vmatpush.xpose.msra.mxu0 0.0
    %1814 = vmatpush.xpose.msra.mxu0 0.0
    %1815 = vmatpush.xpose.msra.mxu0 0.0
    %1816 = vmatpush.xpose.msra.mxu0 0.0
    %1817 = vmatpush.xpose.msra.mxu0 %v1800
    %1818 = vmatmul.f32.gmra.mxu0 %v1798
    %v1819 = vpop.f32.mrf.mxu0
    %v1820 = vadd.f32 0.0, %v1819
    %1821 = vdwg.mxu0
    %v1822 = vmul.f32 %v1820, 0.25
    %v1823 = vsel %vm527, %v1822, -inf
    %1824 = vmax.xlane.f32.xlu0 %v1823
    %v1825 = vpop.xlane.xlu0 %1824
    %v1826 = vsub.f32 %v1822, %v1825
    %v1827 = vmul.f32 %v1826, 1.442695
    %v1828 = vpow.pop %v1827
    %v1829 = vsel %vm527, %v1828, 0.0
    %1830 = vadd.xlane.f32.xlu0 %v1829
    %v1831 = vpop.xlane.xlu0 %1830
    %v1832 = vrcp.pop %v1831
    %v1833 = vmul.f32 %v1828, %v1832
    %1834 = vrot.lane.b32.xlu0 %v1725, 80
    %v1835 = vpop.permute.xlu0 %1834
    %v1837 = vsel %vm541, %v1833, 0
    %v1839 = vsel %vm545, %v1835, 0
    %1841 = vmatpush.msra.mxu0 0.0
    %1842 = vmatpush.msra.mxu0 0.0
    %1843 = vmatpush.msra.mxu0 0.0
    %1844 = vmatpush.msra.mxu0 0.0
    %1845 = vmatpush.msra.mxu0 0.0
    %1846 = vmatpush.msra.mxu0 0.0
    %1847 = vmatpush.msra.mxu0 0.0
    %1848 = vmatpush.msra.mxu0 0.0
    %1849 = vmatpush.msra.mxu0 0.0
    %1850 = vmatpush.msra.mxu0 0.0
    %1851 = vmatpush.msra.mxu0 0.0
    %1852 = vmatpush.msra.mxu0 0.0
    %1853 = vmatpush.msra.mxu0 0.0
    %1854 = vmatpush.msra.mxu0 0.0
    %1855 = vmatpush.msra.mxu0 0.0
    %1856 = vmatpush.msra.mxu0 %v1839
    %1857 = vmatmul.f32.gmra.mxu0 %v1837
    %v1858 = vpop.f32.mrf.mxu0
    %v1859 = vadd.f32 0.0, %v1858
    %1860 = vdwg.mxu0
    %1861 = vrot.lane.b32.xlu0 %v1660, 32
    %v1862 = vpop.permute.xlu0 %1861
    %1863 = vrot.lane.b32.xlu0 %v1661, 32
    %v1864 = vpop.permute.xlu0 %1863
    %v1868 = vsel %vm499, %v1859, 0
    %1870 = vmatpush.msra.mxu0 0.0
    %1871 = vmatpush.msra.mxu0 0.0
    %1872 = vmatpush.msra.mxu0 0.0
    %1873 = vmatpush.msra.mxu0 0.0
    %1874 = vmatpush.msra.mxu0 0.0
    %1875 = vmatpush.msra.mxu0 0.0
    %1876 = vmatpush.msra.mxu0 0.0
    %1877 = vmatpush.msra.mxu0 0.0
    %1878 = vmatpush.msra.mxu0 0.0
    %1879 = vmatpush.msra.mxu0 0.0
    %1880 = vmatpush.msra.mxu0 0.0
    %1881 = vmatpush.msra.mxu0 0.0
    %1882 = vmatpush.msra.mxu0 0.0
    %1883 = vmatpush.msra.mxu0 0.0
    %1884 = vmatpush.msra.mxu0 %v1864
    %1885 = vmatpush.msra.mxu0 %v1862
    %1886 = vmatmul.f32.gmra.mxu0 %v1868
    %v1887 = vpop.f32.mrf.mxu0
    %v1888 = vadd.f32 0.0, %v1887
    %1889 = vdwg.mxu0
    %1892 = vrot.lane.b32.xlu0 %v1792, 32
    %v1893 = vpop.permute.xlu0 %1892
    %1894 = vrot.lane.b32.xlu0 %v1793, 32
    %v1895 = vpop.permute.xlu0 %1894
    %v1899 = vsel %vm499, %v1790, 0
    %1901 = vmatpush.msra.mxu0 0.0
    %1902 = vmatpush.msra.mxu0 0.0
    %1903 = vmatpush.msra.mxu0 0.0
    %1904 = vmatpush.msra.mxu0 0.0
    %1905 = vmatpush.msra.mxu0 0.0
    %1906 = vmatpush.msra.mxu0 0.0
    %1907 = vmatpush.msra.mxu0 0.0
    %1908 = vmatpush.msra.mxu0 0.0
    %1909 = vmatpush.msra.mxu0 0.0
    %1910 = vmatpush.msra.mxu0 0.0
    %1911 = vmatpush.msra.mxu0 0.0
    %1912 = vmatpush.msra.mxu0 0.0
    %1913 = vmatpush.msra.mxu0 0.0
    %1914 = vmatpush.msra.mxu0 0.0
    %1915 = vmatpush.msra.mxu0 %v1895
    %1916 = vmatpush.msra.mxu0 %v1893
    %1917 = vmatmul.f32.gmra.mxu0 %v1899
    %v1918 = vpop.f32.mrf.mxu0
    %v1919 = vadd.f32 %v1888, %v1918
    %1920 = vdwg.mxu0
    %1921 = vrot.lane.b32.xlu0 %v1663, 32
    %v1922 = vpop.permute.xlu0 %1921
    %v1924 = vadd.f32 %v1919, %v1922
    %v1925 = vadd.f32 %v1656, %v1924
    %v1926 = vld [vmem:[#allocation5 + $0x91] sm:$0x1]
    %v1927 = vld [vmem:[#allocation5 + $0x92] sm:$0x1]
    %v1928 = vsel %vm704, %v1925, 0.0
    %1929 = vadd.xlane.f32.xlu0 %v1928
    %v1930 = vpop.xlane.xlu0 %1929
    %v1931 = vmul.f32 %v1930, %v714
    %v1932 = vsub.f32 %v1925, %v1931
    %v1933 = vmul.f32 %v1932, %v1932
    %v1934 = vsel %vm704, %v1933, 0.0
    %1935 = vadd.xlane.f32.xlu0 %v1934
    %v1936 = vpop.xlane.xlu0 %1935
    %v1937 = vmul.f32 %v1936, %v714
    %v1938 = vadd.f32 %v1937, 1e-05
    %v1939 = vrsqrt.pop %v1938
    %v1940 = vmul.f32 %v1939, %v1938
    %v1941 = vmul.f32 %v1940, %v1939
    %v1942 = vmul.f32 0.5, %v1941
    %v1943 = vsub.f32 1.5, %v1942
    %v1944 = vmul.f32 %v1939, %v1943
    %vm1945 = vweird.f32 %v1938
    %vm1946 = vweird.f32 %v1939
    %vm1947 = vmor %vm1945, %vm1946
    %v1948 = vsel %vm1947, %v1939, %v1944
    %v1949 = vmul.f32 %v1932, %v1948
    %v1950 = vperm.slane %v1926, 0
    %v1951 = vmul.f32 %v1949, %v1950
    %v1952 = vperm.slane %v1927, 0
    %v1953 = vadd.f32 %v1951, %v1952
    %s1954 = sshll.u32 %s739, 4
    %1955 = dma.done %s104, %s1954
    %s1956 = sshll.u32 %s739, 4
    %1957 = dma.done %s120, %s1956
    %v1958 = vpack.c.bf16 %v1953, %v1953
    %v1959 = vld [vmem:[%s103] sm:$0xff]
    %v1960 = vld [vmem:[%s103 + $0x8] sm:$0xff]
    %v1961 = vld [vmem:[%s103 + $0x40] sm:$0xff]
    %v1962 = vld [vmem:[%s103 + $0x48] sm:$0xff]
    %v1963 = vld [vmem:[%s103 + $0x80] sm:$0xff]
    %v1964 = vld [vmem:[%s103 + $0x88] sm:$0xff]
    %v1965 = vld [vmem:[%s103 + $0xc0] sm:$0xff]
    %v1966 = vld [vmem:[%s103 + $0xc8] sm:$0xff]
    %s1967 = scalar_lea.vmem [#allocation10], 1
    %v1968 = vld [vmem:[%s1967] ss:$4 sm:$0xf]
    %v1970 = vperm.slane %v1968, 0
    %v1971 = vperm.slane %v1968, 1
    %v1972 = vperm.slane %v1968, 2
    %v1973 = vperm.slane %v1968, 3
    %v1986 = vunpack.c.l.b16 %v1959
    %v1987 = vunpack.c.h.b16 %v1959
    %v1988 = vunpack.c.l.b16 %v1960
    %v1989 = vunpack.c.h.b16 %v1960
    %v1990 = vunpack.c.l.b16 %v1961
    %v1991 = vunpack.c.h.b16 %v1961
    %v1992 = vunpack.c.l.b16 %v1962
    %v1993 = vunpack.c.h.b16 %v1962
    %v1994 = vunpack.c.l.b16 %v1963
    %v1995 = vunpack.c.h.b16 %v1963
    %v1996 = vunpack.c.l.b16 %v1964
    %v1997 = vunpack.c.h.b16 %v1964
    %v1998 = vunpack.c.l.b16 %v1965
    %v1999 = vunpack.c.h.b16 %v1965
    %v2000 = vunpack.c.l.b16 %v1966
    %v2001 = vunpack.c.h.b16 %v1966
    %v2002 = vpack.c.b16 %v1990, %v1986
    %v2003 = vpack.c.b16 %v1991, %v1987
    %v2004 = vpack.c.b16 %v1992, %v1988
    %v2005 = vpack.c.b16 %v1993, %v1989
    %v2006 = vpack.c.b16 %v1998, %v1994
    %v2007 = vpack.c.b16 %v1999, %v1995
    %v2008 = vpack.c.b16 %v2000, %v1996
    %v2009 = vpack.c.b16 %v2001, %v1997
    %v2019 = vsel %vm253, %v1958, 0
    %2021 = vmatpush.bf16.msra.mxu0 0
    %2022 = vmatpush.bf16.msra.mxu0 0
    %2023 = vmatpush.bf16.msra.mxu0 0
    %2024 = vmatpush.bf16.msra.mxu0 0
    %2025 = vmatpush.bf16.msra.mxu0 0
    %2026 = vmatpush.bf16.msra.mxu0 0
    %2027 = vmatpush.bf16.msra.mxu0 %v2006
    %2028 = vmatpush.bf16.msra.mxu0 %v2002
    %2029 = vmatmul.bf16.gmra.mxu0 %v2019
    %v2030 = vpop.f32.mrf.mxu0
    %v2031 = vadd.f32 %v1970, %v2030
    %v2032 = vpop.f32.mrf.mxu0
    %2033 = vdwg.mxu0
    %2034 = vmatpush.bf16.msra.mxu0 0
    %2035 = vmatpush.bf16.msra.mxu0 0
    %2036 = vmatpush.bf16.msra.mxu0 0
    %2037 = vmatpush.bf16.msra.mxu0 0
    %2038 = vmatpush.bf16.msra.mxu0 0
    %2039 = vmatpush.bf16.msra.mxu0 0
    %2040 = vmatpush.bf16.msra.mxu0 %v2007
    %2041 = vmatpush.bf16.msra.mxu0 %v2003
    %2042 = vmatmul.bf16.gmra.mxu0 %v2019
    %v2043 = vpop.f32.mrf.mxu0
    %v2044 = vadd.f32 %v1971, %v2043
    %v2045 = vpop.f32.mrf.mxu0
    %2046 = vdwg.mxu0
    %2047 = vmatpush.bf16.msra.mxu0 0
    %2048 = vmatpush.bf16.msra.mxu0 0
    %2049 = vmatpush.bf16.msra.mxu0 0
    %2050 = vmatpush.bf16.msra.mxu0 0
    %2051 = vmatpush.bf16.msra.mxu0 0
    %2052 = vmatpush.bf16.msra.mxu0 0
    %2053 = vmatpush.bf16.msra.mxu0 %v2008
    %2054 = vmatpush.bf16.msra.mxu0 %v2004
    %2055 = vmatmul.bf16.gmra.mxu0 %v2019
    %v2056 = vpop.f32.mrf.mxu0
    %v2057 = vadd.f32 %v1972, %v2056
    %v2058 = vpop.f32.mrf.mxu0
    %2059 = vdwg.mxu0
    %2060 = vmatpush.bf16.msra.mxu0 0
    %2061 = vmatpush.bf16.msra.mxu0 0
    %2062 = vmatpush.bf16.msra.mxu0 0
    %2063 = vmatpush.bf16.msra.mxu0 0
    %2064 = vmatpush.bf16.msra.mxu0 0
    %2065 = vmatpush.bf16.msra.mxu0 0
    %2066 = vmatpush.bf16.msra.mxu0 %v2009
    %2067 = vmatpush.bf16.msra.mxu0 %v2005
    %2068 = vmatmul.bf16.gmra.mxu0 %v2019
    %v2069 = vpop.f32.mrf.mxu0
    %v2070 = vadd.f32 %v1973, %v2069
    %v2071 = vpop.f32.mrf.mxu0
    %2072 = vdwg.mxu0
    %v2073 = vmax.f32 %v2031, 0.0
    %v2074 = vmax.f32 %v2044, 0.0
    %v2075 = vmax.f32 %v2057, 0.0
    %v2076 = vmax.f32 %v2070, 0.0
    %v2077 = vld [vmem:[%s119] sm:$0xff]
    %v2078 = vld [vmem:[%s119 + $0x8] sm:$0xff]
    %v2079 = vld [vmem:[%s119 + $0x40] sm:$0xff]
    %v2080 = vld [vmem:[%s119 + $0x48] sm:$0xff]
    %v2081 = vld [vmem:[%s119 + $0x80] sm:$0xff]
    %v2082 = vld [vmem:[%s119 + $0x88] sm:$0xff]
    %v2083 = vld [vmem:[%s119 + $0xc0] sm:$0xff]
    %v2084 = vld [vmem:[%s119 + $0xc8] sm:$0xff]
    %v2085 = vpack.c.bf16 %v2073, %v2073
    %v2086 = vpack.c.bf16 %v2074, %v2074
    %v2087 = vpack.c.bf16 %v2075, %v2075
    %v2088 = vpack.c.bf16 %v2076, %v2076
    %v2089 = vld [vmem:[%s103 + $0x10] sm:$0xff]
    %v2090 = vld [vmem:[%s103 + $0x18] sm:$0xff]
    %v2091 = vld [vmem:[%s103 + $0x50] sm:$0xff]
    %v2092 = vld [vmem:[%s103 + $0x58] sm:$0xff]
    %v2093 = vld [vmem:[%s103 + $0x90] sm:$0xff]
    %v2094 = vld [vmem:[%s103 + $0x98] sm:$0xff]
    %v2095 = vld [vmem:[%s103 + $0xd0] sm:$0xff]
    %v2096 = vld [vmem:[%s103 + $0xd8] sm:$0xff]
    %s2097 = scalar_lea.vmem [#allocation10], 17
    %v2098 = vld [vmem:[%s2097] ss:$4 sm:$0xf]
    %v2100 = vperm.slane %v2098, 0
    %v2101 = vperm.slane %v2098, 1
    %v2102 = vperm.slane %v2098, 2
    %v2103 = vperm.slane %v2098, 3
    %v2116 = vunpack.c.l.b16 %v2089
    %v2117 = vunpack.c.h.b16 %v2089
    %v2118 = vunpack.c.l.b16 %v2090
    %v2119 = vunpack.c.h.b16 %v2090
    %v2120 = vunpack.c.l.b16 %v2091
    %v2121 = vunpack.c.h.b16 %v2091
    %v2122 = vunpack.c.l.b16 %v2092
    %v2123 = vunpack.c.h.b16 %v2092
    %v2124 = vunpack.c.l.b16 %v2093
    %v2125 = vunpack.c.h.b16 %v2093
    %v2126 = vunpack.c.l.b16 %v2094
    %v2127 = vunpack.c.h.b16 %v2094
    %v2128 = vunpack.c.l.b16 %v2095
    %v2129 = vunpack.c.h.b16 %v2095
    %v2130 = vunpack.c.l.b16 %v2096
    %v2131 = vunpack.c.h.b16 %v2096
    %v2132 = vpack.c.b16 %v2120, %v2116
    %v2133 = vpack.c.b16 %v2121, %v2117
    %v2134 = vpack.c.b16 %v2122, %v2118
    %v2135 = vpack.c.b16 %v2123, %v2119
    %v2136 = vpack.c.b16 %v2128, %v2124
    %v2137 = vpack.c.b16 %v2129, %v2125
    %v2138 = vpack.c.b16 %v2130, %v2126
    %v2139 = vpack.c.b16 %v2131, %v2127
    %2148 = vmatpush.bf16.msra.mxu0 0
    %2149 = vmatpush.bf16.msra.mxu0 0
    %2150 = vmatpush.bf16.msra.mxu0 0
    %2151 = vmatpush.bf16.msra.mxu0 0
    %2152 = vmatpush.bf16.msra.mxu0 0
    %2153 = vmatpush.bf16.msra.mxu0 0
    %2154 = vmatpush.bf16.msra.mxu0 %v2136
    %2155 = vmatpush.bf16.msra.mxu0 %v2132
    %2156 = vmatmul.bf16.gmra.mxu0 %v2019
    %v2157 = vpop.f32.mrf.mxu0
    %v2158 = vadd.f32 %v2100, %v2157
    %v2159 = vpop.f32.mrf.mxu0
    %2160 = vdwg.mxu0
    %2161 = vmatpush.bf16.msra.mxu0 0
    %2162 = vmatpush.bf16.msra.mxu0 0
    %2163 = vmatpush.bf16.msra.mxu0 0
    %2164 = vmatpush.bf16.msra.mxu0 0
    %2165 = vmatpush.bf16.msra.mxu0 0
    %2166 = vmatpush.bf16.msra.mxu0 0
    %2167 = vmatpush.bf16.msra.mxu0 %v2137
    %2168 = vmatpush.bf16.msra.mxu0 %v2133
    %2169 = vmatmul.bf16.gmra.mxu0 %v2019
    %v2170 = vpop.f32.mrf.mxu0
    %v2171 = vadd.f32 %v2101, %v2170
    %v2172 = vpop.f32.mrf.mxu0
    %2173 = vdwg.mxu0
    %2174 = vmatpush.bf16.msra.mxu0 0
    %2175 = vmatpush.bf16.msra.mxu0 0
    %2176 = vmatpush.bf16.msra.mxu0 0
    %2177 = vmatpush.bf16.msra.mxu0 0
    %2178 = vmatpush.bf16.msra.mxu0 0
    %2179 = vmatpush.bf16.msra.mxu0 0
    %2180 = vmatpush.bf16.msra.mxu0 %v2138
    %2181 = vmatpush.bf16.msra.mxu0 %v2134
    %2182 = vmatmul.bf16.gmra.mxu0 %v2019
    %v2183 = vpop.f32.mrf.mxu0
    %v2184 = vadd.f32 %v2102, %v2183
    %v2185 = vpop.f32.mrf.mxu0
    %2186 = vdwg.mxu0
    %2187 = vmatpush.bf16.msra.mxu0 0
    %2188 = vmatpush.bf16.msra.mxu0 0
    %2189 = vmatpush.bf16.msra.mxu0 0
    %2190 = vmatpush.bf16.msra.mxu0 0
    %2191 = vmatpush.bf16.msra.mxu0 0
    %2192 = vmatpush.bf16.msra.mxu0 0
    %2193 = vmatpush.bf16.msra.mxu0 %v2139
    %2194 = vmatpush.bf16.msra.mxu0 %v2135
    %2195 = vmatmul.bf16.gmra.mxu0 %v2019
    %v2196 = vpop.f32.mrf.mxu0
    %v2197 = vadd.f32 %v2103, %v2196
    %v2198 = vpop.f32.mrf.mxu0
    %2199 = vdwg.mxu0
    %v2200 = vmax.f32 %v2158, 0.0
    %v2201 = vmax.f32 %v2171, 0.0
    %v2202 = vmax.f32 %v2184, 0.0
    %v2203 = vmax.f32 %v2197, 0.0
    %v2204 = vld [vmem:[%s119 + $0x10] sm:$0xff]
    %v2205 = vld [vmem:[%s119 + $0x18] sm:$0xff]
    %v2206 = vld [vmem:[%s119 + $0x50] sm:$0xff]
    %v2207 = vld [vmem:[%s119 + $0x58] sm:$0xff]
    %v2208 = vld [vmem:[%s119 + $0x90] sm:$0xff]
    %v2209 = vld [vmem:[%s119 + $0x98] sm:$0xff]
    %v2210 = vld [vmem:[%s119 + $0xd0] sm:$0xff]
    %v2211 = vld [vmem:[%s119 + $0xd8] sm:$0xff]
    %v2212 = vpack.c.bf16 %v2200, %v2200
    %v2213 = vpack.c.bf16 %v2201, %v2201
    %v2214 = vpack.c.bf16 %v2202, %v2202
    %v2215 = vpack.c.bf16 %v2203, %v2203
    %v2224 = vunpack.c.l.b16 %v2204
    %v2225 = vunpack.c.h.b16 %v2204
    %v2226 = vunpack.c.l.b16 %v2205
    %v2227 = vunpack.c.h.b16 %v2205
    %v2228 = vunpack.c.l.b16 %v2206
    %v2229 = vunpack.c.h.b16 %v2206
    %v2230 = vunpack.c.l.b16 %v2207
    %v2231 = vunpack.c.h.b16 %v2207
    %v2232 = vunpack.c.l.b16 %v2208
    %v2233 = vunpack.c.h.b16 %v2208
    %v2234 = vunpack.c.l.b16 %v2209
    %v2235 = vunpack.c.h.b16 %v2209
    %v2236 = vunpack.c.l.b16 %v2210
    %v2237 = vunpack.c.h.b16 %v2210
    %v2238 = vunpack.c.l.b16 %v2211
    %v2239 = vunpack.c.h.b16 %v2211
    %v2240 = vpack.c.b16 %v2228, %v2224
    %v2241 = vpack.c.b16 %v2229, %v2225
    %v2242 = vpack.c.b16 %v2230, %v2226
    %v2243 = vpack.c.b16 %v2231, %v2227
    %v2244 = vpack.c.b16 %v2236, %v2232
    %v2245 = vpack.c.b16 %v2237, %v2233
    %v2246 = vpack.c.b16 %v2238, %v2234
    %v2247 = vpack.c.b16 %v2239, %v2235
    %2256 = vmatpush.bf16.xpose.msra.mxu0 0
    %2257 = vmatpush.bf16.xpose.msra.mxu0 0
    %2258 = vmatpush.bf16.xpose.msra.mxu0 0
    %2259 = vmatpush.bf16.xpose.msra.mxu0 0
    %2260 = vmatpush.bf16.xpose.msra.mxu0 0
    %2261 = vmatpush.bf16.xpose.msra.mxu0 0
    %2262 = vmatpush.bf16.xpose.msra.mxu0 %v2244
    %2263 = vmatpush.bf16.xpose.msra.mxu0 %v2240
    %2264 = vmatmul.bf16.gmra.mxu0 %v2212
    %v2265 = vpop.f32.mrf.mxu0
    %v2266 = vadd.f32 0.0, %v2265
    %v2267 = vpop.f32.mrf.mxu0
    %2268 = vdwg.mxu0
    %2269 = vmatpush.bf16.xpose.msra.mxu0 0
    %2270 = vmatpush.bf16.xpose.msra.mxu0 0
    %2271 = vmatpush.bf16.xpose.msra.mxu0 0
    %2272 = vmatpush.bf16.xpose.msra.mxu0 0
    %2273 = vmatpush.bf16.xpose.msra.mxu0 0
    %2274 = vmatpush.bf16.xpose.msra.mxu0 0
    %2275 = vmatpush.bf16.xpose.msra.mxu0 %v2245
    %2276 = vmatpush.bf16.xpose.msra.mxu0 %v2241
    %2277 = vmatmul.bf16.gmra.mxu0 %v2213
    %v2278 = vpop.f32.mrf.mxu0
    %v2279 = vadd.f32 %v2266, %v2278
    %v2280 = vpop.f32.mrf.mxu0
    %2281 = vdwg.mxu0
    %2282 = vmatpush.bf16.xpose.msra.mxu0 0
    %2283 = vmatpush.bf16.xpose.msra.mxu0 0
    %2284 = vmatpush.bf16.xpose.msra.mxu0 0
    %2285 = vmatpush.bf16.xpose.msra.mxu0 0
    %2286 = vmatpush.bf16.xpose.msra.mxu0 0
    %2287 = vmatpush.bf16.xpose.msra.mxu0 0
    %2288 = vmatpush.bf16.xpose.msra.mxu0 %v2246
    %2289 = vmatpush.bf16.xpose.msra.mxu0 %v2242
    %2290 = vmatmul.bf16.gmra.mxu0 %v2214
    %v2291 = vpop.f32.mrf.mxu0
    %v2292 = vadd.f32 %v2279, %v2291
    %v2293 = vpop.f32.mrf.mxu0
    %2294 = vdwg.mxu0
    %2295 = vmatpush.bf16.xpose.msra.mxu0 0
    %2296 = vmatpush.bf16.xpose.msra.mxu0 0
    %2297 = vmatpush.bf16.xpose.msra.mxu0 0
    %2298 = vmatpush.bf16.xpose.msra.mxu0 0
    %2299 = vmatpush.bf16.xpose.msra.mxu0 0
    %2300 = vmatpush.bf16.xpose.msra.mxu0 0
    %2301 = vmatpush.bf16.xpose.msra.mxu0 %v2247
    %2302 = vmatpush.bf16.xpose.msra.mxu0 %v2243
    %2303 = vmatmul.bf16.gmra.mxu0 %v2215
    %v2304 = vpop.f32.mrf.mxu0
    %v2305 = vadd.f32 %v2292, %v2304
    %v2306 = vpop.f32.mrf.mxu0
    %2307 = vdwg.mxu0
    %v2316 = vunpack.c.l.b16 %v2077
    %v2317 = vunpack.c.h.b16 %v2077
    %v2318 = vunpack.c.l.b16 %v2078
    %v2319 = vunpack.c.h.b16 %v2078
    %v2320 = vunpack.c.l.b16 %v2079
    %v2321 = vunpack.c.h.b16 %v2079
    %v2322 = vunpack.c.l.b16 %v2080
    %v2323 = vunpack.c.h.b16 %v2080
    %v2324 = vunpack.c.l.b16 %v2081
    %v2325 = vunpack.c.h.b16 %v2081
    %v2326 = vunpack.c.l.b16 %v2082
    %v2327 = vunpack.c.h.b16 %v2082
    %v2328 = vunpack.c.l.b16 %v2083
    %v2329 = vunpack.c.h.b16 %v2083
    %v2330 = vunpack.c.l.b16 %v2084
    %v2331 = vunpack.c.h.b16 %v2084
    %v2332 = vpack.c.b16 %v2320, %v2316
    %v2333 = vpack.c.b16 %v2321, %v2317
    %v2334 = vpack.c.b16 %v2322, %v2318
    %v2335 = vpack.c.b16 %v2323, %v2319
    %v2336 = vpack.c.b16 %v2328, %v2324
    %v2337 = vpack.c.b16 %v2329, %v2325
    %v2338 = vpack.c.b16 %v2330, %v2326
    %v2339 = vpack.c.b16 %v2331, %v2327
    %2348 = vmatpush.bf16.xpose.msra.mxu0 0
    %2349 = vmatpush.bf16.xpose.msra.mxu0 0
    %2350 = vmatpush.bf16.xpose.msra.mxu0 0
    %2351 = vmatpush.bf16.xpose.msra.mxu0 0
    %2352 = vmatpush.bf16.xpose.msra.mxu0 0
    %2353 = vmatpush.bf16.xpose.msra.mxu0 0
    %2354 = vmatpush.bf16.xpose.msra.mxu0 %v2336
    %2355 = vmatpush.bf16.xpose.msra.mxu0 %v2332
    %2356 = vmatmul.bf16.gmra.mxu0 %v2085
    %v2357 = vpop.f32.mrf.mxu0
    %v2358 = vadd.f32 %v2305, %v2357
    %v2359 = vpop.f32.mrf.mxu0
    %2360 = vdwg.mxu0
    %2361 = vmatpush.bf16.xpose.msra.mxu0 0
    %2362 = vmatpush.bf16.xpose.msra.mxu0 0
    %2363 = vmatpush.bf16.xpose.msra.mxu0 0
    %2364 = vmatpush.bf16.xpose.msra.mxu0 0
    %2365 = vmatpush.bf16.xpose.msra.mxu0 0
    %2366 = vmatpush.bf16.xpose.msra.mxu0 0
    %2367 = vmatpush.bf16.xpose.msra.mxu0 %v2337
    %2368 = vmatpush.bf16.xpose.msra.mxu0 %v2333
    %2369 = vmatmul.bf16.gmra.mxu0 %v2086
    %v2370 = vpop.f32.mrf.mxu0
    %v2371 = vadd.f32 %v2358, %v2370
    %v2372 = vpop.f32.mrf.mxu0
    %2373 = vdwg.mxu0
    %2374 = vmatpush.bf16.xpose.msra.mxu0 0
    %2375 = vmatpush.bf16.xpose.msra.mxu0 0
    %2376 = vmatpush.bf16.xpose.msra.mxu0 0
    %2377 = vmatpush.bf16.xpose.msra.mxu0 0
    %2378 = vmatpush.bf16.xpose.msra.mxu0 0
    %2379 = vmatpush.bf16.xpose.msra.mxu0 0
    %2380 = vmatpush.bf16.xpose.msra.mxu0 %v2338
    %2381 = vmatpush.bf16.xpose.msra.mxu0 %v2334
    %2382 = vmatmul.bf16.gmra.mxu0 %v2087
    %v2383 = vpop.f32.mrf.mxu0
    %v2384 = vadd.f32 %v2371, %v2383
    %v2385 = vpop.f32.mrf.mxu0
    %2386 = vdwg.mxu0
    %2387 = vmatpush.bf16.xpose.msra.mxu0 0
    %2388 = vmatpush.bf16.xpose.msra.mxu0 0
    %2389 = vmatpush.bf16.xpose.msra.mxu0 0
    %2390 = vmatpush.bf16.xpose.msra.mxu0 0
    %2391 = vmatpush.bf16.xpose.msra.mxu0 0
    %2392 = vmatpush.bf16.xpose.msra.mxu0 0
    %2393 = vmatpush.bf16.xpose.msra.mxu0 %v2339
    %2394 = vmatpush.bf16.xpose.msra.mxu0 %v2335
    %2395 = vmatmul.bf16.gmra.mxu0 %v2088
    %v2396 = vpop.f32.mrf.mxu0
    %v2397 = vadd.f32 %v2384, %v2396
    %v2398 = vpop.f32.mrf.mxu0
    %2399 = vdwg.mxu0
    %v2400 = vld [vmem:[%s103 + $0x20] sm:$0xff]
    %v2401 = vld [vmem:[%s103 + $0x28] sm:$0xff]
    %v2402 = vld [vmem:[%s103 + $0x60] sm:$0xff]
    %v2403 = vld [vmem:[%s103 + $0x68] sm:$0xff]
    %v2404 = vld [vmem:[%s103 + $0xa0] sm:$0xff]
    %v2405 = vld [vmem:[%s103 + $0xa8] sm:$0xff]
    %v2406 = vld [vmem:[%s103 + $0xe0] sm:$0xff]
    %v2407 = vld [vmem:[%s103 + $0xe8] sm:$0xff]
    %s2408 = scalar_lea.vmem [#allocation10], 33
    %v2409 = vld [vmem:[%s2408] ss:$4 sm:$0xf]
    %v2411 = vperm.slane %v2409, 0
    %v2412 = vperm.slane %v2409, 1
    %v2413 = vperm.slane %v2409, 2
    %v2414 = vperm.slane %v2409, 3
    %v2427 = vunpack.c.l.b16 %v2400
    %v2428 = vunpack.c.h.b16 %v2400
    %v2429 = vunpack.c.l.b16 %v2401
    %v2430 = vunpack.c.h.b16 %v2401
    %v2431 = vunpack.c.l.b16 %v2402
    %v2432 = vunpack.c.h.b16 %v2402
    %v2433 = vunpack.c.l.b16 %v2403
    %v2434 = vunpack.c.h.b16 %v2403
    %v2435 = vunpack.c.l.b16 %v2404
    %v2436 = vunpack.c.h.b16 %v2404
    %v2437 = vunpack.c.l.b16 %v2405
    %v2438 = vunpack.c.h.b16 %v2405
    %v2439 = vunpack.c.l.b16 %v2406
    %v2440 = vunpack.c.h.b16 %v2406
    %v2441 = vunpack.c.l.b16 %v2407
    %v2442 = vunpack.c.h.b16 %v2407
    %v2443 = vpack.c.b16 %v2431, %v2427
    %v2444 = vpack.c.b16 %v2432, %v2428
    %v2445 = vpack.c.b16 %v2433, %v2429
    %v2446 = vpack.c.b16 %v2434, %v2430
    %v2447 = vpack.c.b16 %v2439, %v2435
    %v2448 = vpack.c.b16 %v2440, %v2436
    %v2449 = vpack.c.b16 %v2441, %v2437
    %v2450 = vpack.c.b16 %v2442, %v2438
    %2459 = vmatpush.bf16.msra.mxu0 0
    %2460 = vmatpush.bf16.msra.mxu0 0
    %2461 = vmatpush.bf16.msra.mxu0 0
    %2462 = vmatpush.bf16.msra.mxu0 0
    %2463 = vmatpush.bf16.msra.mxu0 0
    %2464 = vmatpush.bf16.msra.mxu0 0
    %2465 = vmatpush.bf16.msra.mxu0 %v2447
    %2466 = vmatpush.bf16.msra.mxu0 %v2443
    %2467 = vmatmul.bf16.gmra.mxu0 %v2019
    %v2468 = vpop.f32.mrf.mxu0
    %v2469 = vadd.f32 %v2411, %v2468
    %v2470 = vpop.f32.mrf.mxu0
    %2471 = vdwg.mxu0
    %2472 = vmatpush.bf16.msra.mxu0 0
    %2473 = vmatpush.bf16.msra.mxu0 0
    %2474 = vmatpush.bf16.msra.mxu0 0
    %2475 = vmatpush.bf16.msra.mxu0 0
    %2476 = vmatpush.bf16.msra.mxu0 0
    %2477 = vmatpush.bf16.msra.mxu0 0
    %2478 = vmatpush.bf16.msra.mxu0 %v2448
    %2479 = vmatpush.bf16.msra.mxu0 %v2444
    %2480 = vmatmul.bf16.gmra.mxu0 %v2019
    %v2481 = vpop.f32.mrf.mxu0
    %v2482 = vadd.f32 %v2412, %v2481
    %v2483 = vpop.f32.mrf.mxu0
    %2484 = vdwg.mxu0
    %2485 = vmatpush.bf16.msra.mxu0 0
    %2486 = vmatpush.bf16.msra.mxu0 0
    %2487 = vmatpush.bf16.msra.mxu0 0
    %2488 = vmatpush.bf16.msra.mxu0 0
    %2489 = vmatpush.bf16.msra.mxu0 0
    %2490 = vmatpush.bf16.msra.mxu0 0
    %2491 = vmatpush.bf16.msra.mxu0 %v2449
    %2492 = vmatpush.bf16.msra.mxu0 %v2445
    %2493 = vmatmul.bf16.gmra.mxu0 %v2019
    %v2494 = vpop.f32.mrf.mxu0
    %v2495 = vadd.f32 %v2413, %v2494
    %v2496 = vpop.f32.mrf.mxu0
    %2497 = vdwg.mxu0
    %2498 = vmatpush.bf16.msra.mxu0 0
    %2499 = vmatpush.bf16.msra.mxu0 0
    %2500 = vmatpush.bf16.msra.mxu0 0
    %2501 = vmatpush.bf16.msra.mxu0 0
    %2502 = vmatpush.bf16.msra.mxu0 0
    %2503 = vmatpush.bf16.msra.mxu0 0
    %2504 = vmatpush.bf16.msra.mxu0 %v2450
    %2505 = vmatpush.bf16.msra.mxu0 %v2446
    %2506 = vmatmul.bf16.gmra.mxu0 %v2019
    %v2507 = vpop.f32.mrf.mxu0
    %v2508 = vadd.f32 %v2414, %v2507
    %v2509 = vpop.f32.mrf.mxu0
    %2510 = vdwg.mxu0
    %v2511 = vmax.f32 %v2469, 0.0
    %v2512 = vmax.f32 %v2482, 0.0
    %v2513 = vmax.f32 %v2495, 0.0
    %v2514 = vmax.f32 %v2508, 0.0
    %v2515 = vld [vmem:[%s119 + $0x20] sm:$0xff]
    %v2516 = vld [vmem:[%s119 + $0x28] sm:$0xff]
    %v2517 = vld [vmem:[%s119 + $0x60] sm:$0xff]
    %v2518 = vld [vmem:[%s119 + $0x68] sm:$0xff]
    %v2519 = vld [vmem:[%s119 + $0xa0] sm:$0xff]
    %v2520 = vld [vmem:[%s119 + $0xa8] sm:$0xff]
    %v2521 = vld [vmem:[%s119 + $0xe0] sm:$0xff]
    %v2522 = vld [vmem:[%s119 + $0xe8] sm:$0xff]
    %v2523 = vpack.c.bf16 %v2511, %v2511
    %v2524 = vpack.c.bf16 %v2512, %v2512
    %v2525 = vpack.c.bf16 %v2513, %v2513
    %v2526 = vpack.c.bf16 %v2514, %v2514
    %v2535 = vunpack.c.l.b16 %v2515
    %v2536 = vunpack.c.h.b16 %v2515
    %v2537 = vunpack.c.l.b16 %v2516
    %v2538 = vunpack.c.h.b16 %v2516
    %v2539 = vunpack.c.l.b16 %v2517
    %v2540 = vunpack.c.h.b16 %v2517
    %v2541 = vunpack.c.l.b16 %v2518
    %v2542 = vunpack.c.h.b16 %v2518
    %v2543 = vunpack.c.l.b16 %v2519
    %v2544 = vunpack.c.h.b16 %v2519
    %v2545 = vunpack.c.l.b16 %v2520
    %v2546 = vunpack.c.h.b16 %v2520
    %v2547 = vunpack.c.l.b16 %v2521
    %v2548 = vunpack.c.h.b16 %v2521
    %v2549 = vunpack.c.l.b16 %v2522
    %v2550 = vunpack.c.h.b16 %v2522
    %v2551 = vpack.c.b16 %v2539, %v2535
    %v2552 = vpack.c.b16 %v2540, %v2536
    %v2553 = vpack.c.b16 %v2541, %v2537
    %v2554 = vpack.c.b16 %v2542, %v2538
    %v2555 = vpack.c.b16 %v2547, %v2543
    %v2556 = vpack.c.b16 %v2548, %v2544
    %v2557 = vpack.c.b16 %v2549, %v2545
    %v2558 = vpack.c.b16 %v2550, %v2546
    %2567 = vmatpush.bf16.xpose.msra.mxu0 0
    %2568 = vmatpush.bf16.xpose.msra.mxu0 0
    %2569 = vmatpush.bf16.xpose.msra.mxu0 0
    %2570 = vmatpush.bf16.xpose.msra.mxu0 0
    %2571 = vmatpush.bf16.xpose.msra.mxu0 0
    %2572 = vmatpush.bf16.xpose.msra.mxu0 0
    %2573 = vmatpush.bf16.xpose.msra.mxu0 %v2555
    %2574 = vmatpush.bf16.xpose.msra.mxu0 %v2551
    %2575 = vmatmul.bf16.gmra.mxu0 %v2523
    %v2576 = vpop.f32.mrf.mxu0
    %v2577 = vadd.f32 0.0, %v2576
    %v2578 = vpop.f32.mrf.mxu0
    %2579 = vdwg.mxu0
    %2580 = vmatpush.bf16.xpose.msra.mxu0 0
    %2581 = vmatpush.bf16.xpose.msra.mxu0 0
    %2582 = vmatpush.bf16.xpose.msra.mxu0 0
    %2583 = vmatpush.bf16.xpose.msra.mxu0 0
    %2584 = vmatpush.bf16.xpose.msra.mxu0 0
    %2585 = vmatpush.bf16.xpose.msra.mxu0 0
    %2586 = vmatpush.bf16.xpose.msra.mxu0 %v2556
    %2587 = vmatpush.bf16.xpose.msra.mxu0 %v2552
    %2588 = vmatmul.bf16.gmra.mxu0 %v2524
    %v2589 = vpop.f32.mrf.mxu0
    %v2590 = vadd.f32 %v2577, %v2589
    %v2591 = vpop.f32.mrf.mxu0
    %2592 = vdwg.mxu0
    %2593 = vmatpush.bf16.xpose.msra.mxu0 0
    %2594 = vmatpush.bf16.xpose.msra.mxu0 0
    %2595 = vmatpush.bf16.xpose.msra.mxu0 0
    %2596 = vmatpush.bf16.xpose.msra.mxu0 0
    %2597 = vmatpush.bf16.xpose.msra.mxu0 0
    %2598 = vmatpush.bf16.xpose.msra.mxu0 0
    %2599 = vmatpush.bf16.xpose.msra.mxu0 %v2557
    %2600 = vmatpush.bf16.xpose.msra.mxu0 %v2553
    %2601 = vmatmul.bf16.gmra.mxu0 %v2525
    %v2602 = vpop.f32.mrf.mxu0
    %v2603 = vadd.f32 %v2590, %v2602
    %v2604 = vpop.f32.mrf.mxu0
    %2605 = vdwg.mxu0
    %2606 = vmatpush.bf16.xpose.msra.mxu0 0
    %2607 = vmatpush.bf16.xpose.msra.mxu0 0
    %2608 = vmatpush.bf16.xpose.msra.mxu0 0
    %2609 = vmatpush.bf16.xpose.msra.mxu0 0
    %2610 = vmatpush.bf16.xpose.msra.mxu0 0
    %2611 = vmatpush.bf16.xpose.msra.mxu0 0
    %2612 = vmatpush.bf16.xpose.msra.mxu0 %v2558
    %2613 = vmatpush.bf16.xpose.msra.mxu0 %v2554
    %2614 = vmatmul.bf16.gmra.mxu0 %v2526
    %v2615 = vpop.f32.mrf.mxu0
    %v2616 = vadd.f32 %v2603, %v2615
    %v2617 = vpop.f32.mrf.mxu0
    %2618 = vdwg.mxu0
    %v2619 = vadd.f32 %v2397, %v2616
    %v2620 = vld [vmem:[%s103 + $0x30] sm:$0xff]
    %v2621 = vld [vmem:[%s103 + $0x38] sm:$0xff]
    %v2622 = vld [vmem:[%s103 + $0x70] sm:$0xff]
    %v2623 = vld [vmem:[%s103 + $0x78] sm:$0xff]
    %v2624 = vld [vmem:[%s103 + $0xb0] sm:$0xff]
    %v2625 = vld [vmem:[%s103 + $0xb8] sm:$0xff]
    %v2626 = vld [vmem:[%s103 + $0xf0] sm:$0xff]
    %v2627 = vld [vmem:[%s103 + $0xf8] sm:$0xff]
    %s2628 = scalar_lea.vmem [#allocation10], 49
    %v2629 = vld [vmem:[%s2628] ss:$4 sm:$0xf]
    %v2631 = vperm.slane %v2629, 0
    %v2632 = vperm.slane %v2629, 1
    %v2633 = vperm.slane %v2629, 2
    %v2634 = vperm.slane %v2629, 3
    %v2647 = vunpack.c.l.b16 %v2620
    %v2648 = vunpack.c.h.b16 %v2620
    %v2649 = vunpack.c.l.b16 %v2621
    %v2650 = vunpack.c.h.b16 %v2621
    %v2651 = vunpack.c.l.b16 %v2622
    %v2652 = vunpack.c.h.b16 %v2622
    %v2653 = vunpack.c.l.b16 %v2623
    %v2654 = vunpack.c.h.b16 %v2623
    %v2655 = vunpack.c.l.b16 %v2624
    %v2656 = vunpack.c.h.b16 %v2624
    %v2657 = vunpack.c.l.b16 %v2625
    %v2658 = vunpack.c.h.b16 %v2625
    %v2659 = vunpack.c.l.b16 %v2626
    %v2660 = vunpack.c.h.b16 %v2626
    %v2661 = vunpack.c.l.b16 %v2627
    %v2662 = vunpack.c.h.b16 %v2627
    %v2663 = vpack.c.b16 %v2651, %v2647
    %v2664 = vpack.c.b16 %v2652, %v2648
    %v2665 = vpack.c.b16 %v2653, %v2649
    %v2666 = vpack.c.b16 %v2654, %v2650
    %v2667 = vpack.c.b16 %v2659, %v2655
    %v2668 = vpack.c.b16 %v2660, %v2656
    %v2669 = vpack.c.b16 %v2661, %v2657
    %v2670 = vpack.c.b16 %v2662, %v2658
    %2679 = vmatpush.bf16.msra.mxu0 0
    %2680 = vmatpush.bf16.msra.mxu0 0
    %2681 = vmatpush.bf16.msra.mxu0 0
    %2682 = vmatpush.bf16.msra.mxu0 0
    %2683 = vmatpush.bf16.msra.mxu0 0
    %2684 = vmatpush.bf16.msra.mxu0 0
    %2685 = vmatpush.bf16.msra.mxu0 %v2667
    %2686 = vmatpush.bf16.msra.mxu0 %v2663
    %2687 = vmatmul.bf16.gmra.mxu0 %v2019
    %v2688 = vpop.f32.mrf.mxu0
    %v2689 = vadd.f32 %v2631, %v2688
    %v2690 = vpop.f32.mrf.mxu0
    %2691 = vdwg.mxu0
    %2692 = vmatpush.bf16.msra.mxu0 0
    %2693 = vmatpush.bf16.msra.mxu0 0
    %2694 = vmatpush.bf16.msra.mxu0 0
    %2695 = vmatpush.bf16.msra.mxu0 0
    %2696 = vmatpush.bf16.msra.mxu0 0
    %2697 = vmatpush.bf16.msra.mxu0 0
    %2698 = vmatpush.bf16.msra.mxu0 %v2668
    %2699 = vmatpush.bf16.msra.mxu0 %v2664
    %2700 = vmatmul.bf16.gmra.mxu0 %v2019
    %v2701 = vpop.f32.mrf.mxu0
    %v2702 = vadd.f32 %v2632, %v2701
    %v2703 = vpop.f32.mrf.mxu0
    %2704 = vdwg.mxu0
    %2705 = vmatpush.bf16.msra.mxu0 0
    %2706 = vmatpush.bf16.msra.mxu0 0
    %2707 = vmatpush.bf16.msra.mxu0 0
    %2708 = vmatpush.bf16.msra.mxu0 0
    %2709 = vmatpush.bf16.msra.mxu0 0
    %2710 = vmatpush.bf16.msra.mxu0 0
    %2711 = vmatpush.bf16.msra.mxu0 %v2669
    %2712 = vmatpush.bf16.msra.mxu0 %v2665
    %2713 = vmatmul.bf16.gmra.mxu0 %v2019
    %v2714 = vpop.f32.mrf.mxu0
    %v2715 = vadd.f32 %v2633, %v2714
    %v2716 = vpop.f32.mrf.mxu0
    %2717 = vdwg.mxu0
    %2718 = vmatpush.bf16.msra.mxu0 0
    %2719 = vmatpush.bf16.msra.mxu0 0
    %2720 = vmatpush.bf16.msra.mxu0 0
    %2721 = vmatpush.bf16.msra.mxu0 0
    %2722 = vmatpush.bf16.msra.mxu0 0
    %2723 = vmatpush.bf16.msra.mxu0 0
    %2724 = vmatpush.bf16.msra.mxu0 %v2670
    %2725 = vmatpush.bf16.msra.mxu0 %v2666
    %2726 = vmatmul.bf16.gmra.mxu0 %v2019
    %v2727 = vpop.f32.mrf.mxu0
    %v2728 = vadd.f32 %v2634, %v2727
    %v2729 = vpop.f32.mrf.mxu0
    %2730 = vdwg.mxu0
    %v2731 = vmax.f32 %v2689, 0.0
    %v2732 = vmax.f32 %v2702, 0.0
    %v2733 = vmax.f32 %v2715, 0.0
    %v2734 = vmax.f32 %v2728, 0.0
    %v2735 = vld [vmem:[%s119 + $0x30] sm:$0xff]
    %v2736 = vld [vmem:[%s119 + $0x38] sm:$0xff]
    %v2737 = vld [vmem:[%s119 + $0x70] sm:$0xff]
    %v2738 = vld [vmem:[%s119 + $0x78] sm:$0xff]
    %v2739 = vld [vmem:[%s119 + $0xb0] sm:$0xff]
    %v2740 = vld [vmem:[%s119 + $0xb8] sm:$0xff]
    %v2741 = vld [vmem:[%s119 + $0xf0] sm:$0xff]
    %v2742 = vld [vmem:[%s119 + $0xf8] sm:$0xff]
    %v2743 = vpack.c.bf16 %v2731, %v2731
    %v2744 = vpack.c.bf16 %v2732, %v2732
    %v2745 = vpack.c.bf16 %v2733, %v2733
    %v2746 = vpack.c.bf16 %v2734, %v2734
    %v2755 = vunpack.c.l.b16 %v2735
    %v2756 = vunpack.c.h.b16 %v2735
    %v2757 = vunpack.c.l.b16 %v2736
    %v2758 = vunpack.c.h.b16 %v2736
    %v2759 = vunpack.c.l.b16 %v2737
    %v2760 = vunpack.c.h.b16 %v2737
    %v2761 = vunpack.c.l.b16 %v2738
    %v2762 = vunpack.c.h.b16 %v2738
    %v2763 = vunpack.c.l.b16 %v2739
    %v2764 = vunpack.c.h.b16 %v2739
    %v2765 = vunpack.c.l.b16 %v2740
    %v2766 = vunpack.c.h.b16 %v2740
    %v2767 = vunpack.c.l.b16 %v2741
    %v2768 = vunpack.c.h.b16 %v2741
    %v2769 = vunpack.c.l.b16 %v2742
    %v2770 = vunpack.c.h.b16 %v2742
    %v2771 = vpack.c.b16 %v2759, %v2755
    %v2772 = vpack.c.b16 %v2760, %v2756
    %v2773 = vpack.c.b16 %v2761, %v2757
    %v2774 = vpack.c.b16 %v2762, %v2758
    %v2775 = vpack.c.b16 %v2767, %v2763
    %v2776 = vpack.c.b16 %v2768, %v2764
    %v2777 = vpack.c.b16 %v2769, %v2765
    %v2778 = vpack.c.b16 %v2770, %v2766
    %2787 = vmatpush.bf16.xpose.msra.mxu0 0
    %2788 = vmatpush.bf16.xpose.msra.mxu0 0
    %2789 = vmatpush.bf16.xpose.msra.mxu0 0
    %2790 = vmatpush.bf16.xpose.msra.mxu0 0
    %2791 = vmatpush.bf16.xpose.msra.mxu0 0
    %2792 = vmatpush.bf16.xpose.msra.mxu0 0
    %2793 = vmatpush.bf16.xpose.msra.mxu0 %v2775
    %2794 = vmatpush.bf16.xpose.msra.mxu0 %v2771
    %2795 = vmatmul.bf16.gmra.mxu0 %v2743
    %v2796 = vpop.f32.mrf.mxu0
    %v2797 = vadd.f32 0.0, %v2796
    %v2798 = vpop.f32.mrf.mxu0
    %2799 = vdwg.mxu0
    %2800 = vmatpush.bf16.xpose.msra.mxu0 0
    %2801 = vmatpush.bf16.xpose.msra.mxu0 0
    %2802 = vmatpush.bf16.xpose.msra.mxu0 0
    %2803 = vmatpush.bf16.xpose.msra.mxu0 0
    %2804 = vmatpush.bf16.xpose.msra.mxu0 0
    %2805 = vmatpush.bf16.xpose.msra.mxu0 0
    %2806 = vmatpush.bf16.xpose.msra.mxu0 %v2776
    %2807 = vmatpush.bf16.xpose.msra.mxu0 %v2772
    %2808 = vmatmul.bf16.gmra.mxu0 %v2744
    %v2809 = vpop.f32.mrf.mxu0
    %v2810 = vadd.f32 %v2797, %v2809
    %v2811 = vpop.f32.mrf.mxu0
    %2812 = vdwg.mxu0
    %2813 = vmatpush.bf16.xpose.msra.mxu0 0
    %2814 = vmatpush.bf16.xpose.msra.mxu0 0
    %2815 = vmatpush.bf16.xpose.msra.mxu0 0
    %2816 = vmatpush.bf16.xpose.msra.mxu0 0
    %2817 = vmatpush.bf16.xpose.msra.mxu0 0
    %2818 = vmatpush.bf16.xpose.msra.mxu0 0
    %2819 = vmatpush.bf16.xpose.msra.mxu0 %v2777
    %2820 = vmatpush.bf16.xpose.msra.mxu0 %v2773
    %2821 = vmatmul.bf16.gmra.mxu0 %v2745
    %v2822 = vpop.f32.mrf.mxu0
    %v2823 = vadd.f32 %v2810, %v2822
    %v2824 = vpop.f32.mrf.mxu0
    %2825 = vdwg.mxu0
    %2826 = vmatpush.bf16.xpose.msra.mxu0 0
    %2827 = vmatpush.bf16.xpose.msra.mxu0 0
    %2828 = vmatpush.bf16.xpose.msra.mxu0 0
    %2829 = vmatpush.bf16.xpose.msra.mxu0 0
    %2830 = vmatpush.bf16.xpose.msra.mxu0 0
    %2831 = vmatpush.bf16.xpose.msra.mxu0 0
    %2832 = vmatpush.bf16.xpose.msra.mxu0 %v2778
    %2833 = vmatpush.bf16.xpose.msra.mxu0 %v2774
    %2834 = vmatmul.bf16.gmra.mxu0 %v2746
    %v2835 = vpop.f32.mrf.mxu0
    %v2836 = vadd.f32 %v2823, %v2835
    %v2837 = vpop.f32.mrf.mxu0
    %2838 = vdwg.mxu0
    %v2839 = vadd.f32 %v2619, %v2836
    %v2840 = vld [vmem:[#allocation5 + $0xa2] sm:$0x1]
    %v2841 = vperm.slane %v2840, 0
    %v2842 = vadd.f32 %v2839, %v2841
    %v2843 = vadd.f32 %v1953, %v2842
    %v2844 = vld [vmem:[#allocation5 + $0x93] sm:$0x1]
    %v2845 = vld [vmem:[#allocation5 + $0x94] sm:$0x1]
    %v2846 = vsel %vm704, %v2843, 0.0
    %2847 = vadd.xlane.f32.xlu0 %v2846
    %v2848 = vpop.xlane.xlu0 %2847
    %v2849 = vmul.f32 %v2848, %v714
    %v2850 = vsub.f32 %v2843, %v2849
    %v2851 = vmul.f32 %v2850, %v2850
    %v2852 = vsel %vm704, %v2851, 0.0
    %2853 = vadd.xlane.f32.xlu0 %v2852
    %v2854 = vpop.xlane.xlu0 %2853
    %v2855 = vmul.f32 %v2854, %v714
    %v2856 = vadd.f32 %v2855, 1e-05
    %v2857 = vrsqrt.pop %v2856
    %v2858 = vmul.f32 %v2857, %v2856
    %v2859 = vmul.f32 %v2858, %v2857
    %v2860 = vmul.f32 0.5, %v2859
    %v2861 = vsub.f32 1.5, %v2860
    %v2862 = vmul.f32 %v2857, %v2861
    %vm2863 = vweird.f32 %v2856
    %vm2864 = vweird.f32 %v2857
    %vm2865 = vmor %vm2863, %vm2864
    %v2866 = vsel %vm2865, %v2857, %v2862
    %v2867 = vmul.f32 %v2850, %v2866
    %v2868 = vperm.slane %v2844, 0
    %v2869 = vmul.f32 %v2867, %v2868
    %v2870 = vperm.slane %v2845, 0
    %v2871 = vadd.f32 %v2869, %v2870
    %s2872 = scalar_lea.vmem [#allocation8], 80
    %v2873 = vld [vmem:[%s2872] sm:$0xff]
    %v2874 = vld [vmem:[%s2872 + $0x8] sm:$0xff]
    %v2875 = vld [vmem:[%s2872 + $0x10] sm:$0xff]
    %v2876 = vld [vmem:[%s2872 + $0x18] sm:$0xff]
    %v2877 = vld [vmem:[%s2872 + $0x20] sm:$0x1]
    %v2878 = vperm.slane %v2877, 0
    %v2880 = vsel %vm253, %v429, 0
    %2882 = vmatpush.msra.mxu0 0.0
    %2883 = vmatpush.msra.mxu0 0.0
    %2884 = vmatpush.msra.mxu0 0.0
    %2885 = vmatpush.msra.mxu0 0.0
    %2886 = vmatpush.msra.mxu0 0.0
    %2887 = vmatpush.msra.mxu0 0.0
    %2888 = vmatpush.msra.mxu0 0.0
    %2889 = vmatpush.msra.mxu0 0.0
    %2890 = vmatpush.msra.mxu0 0.0
    %2891 = vmatpush.msra.mxu0 0.0
    %2892 = vmatpush.msra.mxu0 0.0
    %2893 = vmatpush.msra.mxu0 0.0
    %2894 = vmatpush.msra.mxu0 %v2876
    %2895 = vmatpush.msra.mxu0 %v2875
    %2896 = vmatpush.msra.mxu0 %v2874
    %2897 = vmatpush.msra.mxu0 %v2873
    %2898 = vmatmul.f32.gmra.mxu0 %v2880
    %v2899 = vpop.f32.mrf.mxu0
    %v2900 = vadd.f32 %v2878, %v2899
    %2901 = vdwg.mxu0
    %2906 = vrot.lane.b32.xlu0 %v2873, 96
    %v2907 = vpop.permute.xlu0 %2906
    %2908 = vrot.lane.b32.xlu0 %v2874, 96
    %v2909 = vpop.permute.xlu0 %2908
    %2910 = vrot.lane.b32.xlu0 %v2875, 96
    %v2911 = vpop.permute.xlu0 %2910
    %2912 = vrot.lane.b32.xlu0 %v2876, 96
    %v2913 = vpop.permute.xlu0 %2912
    %2919 = vrot.lane.b32.xlu0 %v2878, 96
    %v2920 = vpop.permute.xlu0 %2919
    %2922 = vmatpush.msra.mxu0 0.0
    %2923 = vmatpush.msra.mxu0 0.0
    %2924 = vmatpush.msra.mxu0 0.0
    %2925 = vmatpush.msra.mxu0 0.0
    %2926 = vmatpush.msra.mxu0 0.0
    %2927 = vmatpush.msra.mxu0 0.0
    %2928 = vmatpush.msra.mxu0 0.0
    %2929 = vmatpush.msra.mxu0 0.0
    %2930 = vmatpush.msra.mxu0 0.0
    %2931 = vmatpush.msra.mxu0 0.0
    %2932 = vmatpush.msra.mxu0 0.0
    %2933 = vmatpush.msra.mxu0 0.0
    %2934 = vmatpush.msra.mxu0 %v2913
    %2935 = vmatpush.msra.mxu0 %v2911
    %2936 = vmatpush.msra.mxu0 %v2909
    %2937 = vmatpush.msra.mxu0 %v2907
    %2938 = vmatmul.f32.gmra.mxu0 %v2880
    %v2939 = vpop.f32.mrf.mxu0
    %v2940 = vadd.f32 %v2920, %v2939
    %2941 = vdwg.mxu0
    %v2943 = vsel %vm499, %v2900, 0
    %v2946 = vsel %vm499, %v2940, 0
    %2948 = vmatpush.xpose.msra.mxu0 0.0
    %2949 = vmatpush.xpose.msra.mxu0 0.0
    %2950 = vmatpush.xpose.msra.mxu0 0.0
    %2951 = vmatpush.xpose.msra.mxu0 0.0
    %2952 = vmatpush.xpose.msra.mxu0 0.0
    %2953 = vmatpush.xpose.msra.mxu0 0.0
    %2954 = vmatpush.xpose.msra.mxu0 0.0
    %2955 = vmatpush.xpose.msra.mxu0 0.0
    %2956 = vmatpush.xpose.msra.mxu0 0.0
    %2957 = vmatpush.xpose.msra.mxu0 0.0
    %2958 = vmatpush.xpose.msra.mxu0 0.0
    %2959 = vmatpush.xpose.msra.mxu0 0.0
    %2960 = vmatpush.xpose.msra.mxu0 0.0
    %2961 = vmatpush.xpose.msra.mxu0 0.0
    %2962 = vmatpush.xpose.msra.mxu0 0.0
    %2963 = vmatpush.xpose.msra.mxu0 %v2946
    %2964 = vmatmul.f32.gmra.mxu0 %v2943
    %v2965 = vpop.f32.mrf.mxu0
    %v2966 = vadd.f32 0.0, %v2965
    %2967 = vdwg.mxu0
    %v2968 = vmul.f32 %v2966, 0.25
    %v2969 = vsel %vm527, %v2968, -inf
    %2970 = vmax.xlane.f32.xlu0 %v2969
    %v2971 = vpop.xlane.xlu0 %2970
    %v2972 = vsub.f32 %v2968, %v2971
    %v2973 = vmul.f32 %v2972, 1.442695
    %v2974 = vpow.pop %v2973
    %v2975 = vsel %vm527, %v2974, 0.0
    %2976 = vadd.xlane.f32.xlu0 %v2975
    %v2977 = vpop.xlane.xlu0 %2976
    %v2978 = vrcp.pop %v2977
    %v2979 = vmul.f32 %v2974, %v2978
    %2980 = vrot.lane.b32.xlu0 %v2940, 96
    %v2981 = vpop.permute.xlu0 %2980
    %v2983 = vsel %vm541, %v2979, 0
    %v2985 = vsel %vm545, %v2981, 0
    %2987 = vmatpush.msra.mxu0 0.0
    %2988 = vmatpush.msra.mxu0 0.0
    %2989 = vmatpush.msra.mxu0 0.0
    %2990 = vmatpush.msra.mxu0 0.0
    %2991 = vmatpush.msra.mxu0 0.0
    %2992 = vmatpush.msra.mxu0 0.0
    %2993 = vmatpush.msra.mxu0 0.0
    %2994 = vmatpush.msra.mxu0 0.0
    %2995 = vmatpush.msra.mxu0 0.0
    %2996 = vmatpush.msra.mxu0 0.0
    %2997 = vmatpush.msra.mxu0 0.0
    %2998 = vmatpush.msra.mxu0 0.0
    %2999 = vmatpush.msra.mxu0 0.0
    %3000 = vmatpush.msra.mxu0 0.0
    %3001 = vmatpush.msra.mxu0 0.0
    %3002 = vmatpush.msra.mxu0 %v2985
    %3003 = vmatmul.f32.gmra.mxu0 %v2983
    %v3004 = vpop.f32.mrf.mxu0
    %v3005 = vadd.f32 0.0, %v3004
    %3006 = vdwg.mxu0
    %v3007 = vld [vmem:[%s2872] sm:$0xff]
    %v3008 = vld [vmem:[%s2872 + $0x8] sm:$0xff]
    %3009 = vrot.lane.b32.xlu0 %v2900, 112
    %v3010 = vpop.permute.xlu0 %3009
    %3011 = vrot.lane.b32.xlu0 %v2940, 112
    %v3012 = vpop.permute.xlu0 %3011
    %v3013 = vsel %vm499, %v3010, 0
    %v3015 = vsel %vm499, %v3012, 0
    %3017 = vmatpush.xpose.msra.mxu0 0.0
    %3018 = vmatpush.xpose.msra.mxu0 0.0
    %3019 = vmatpush.xpose.msra.mxu0 0.0
    %3020 = vmatpush.xpose.msra.mxu0 0.0
    %3021 = vmatpush.xpose.msra.mxu0 0.0
    %3022 = vmatpush.xpose.msra.mxu0 0.0
    %3023 = vmatpush.xpose.msra.mxu0 0.0
    %3024 = vmatpush.xpose.msra.mxu0 0.0
    %3025 = vmatpush.xpose.msra.mxu0 0.0
    %3026 = vmatpush.xpose.msra.mxu0 0.0
    %3027 = vmatpush.xpose.msra.mxu0 0.0
    %3028 = vmatpush.xpose.msra.mxu0 0.0
    %3029 = vmatpush.xpose.msra.mxu0 0.0
    %3030 = vmatpush.xpose.msra.mxu0 0.0
    %3031 = vmatpush.xpose.msra.mxu0 0.0
    %3032 = vmatpush.xpose.msra.mxu0 %v3015
    %3033 = vmatmul.f32.gmra.mxu0 %v3013
    %v3034 = vpop.f32.mrf.mxu0
    %v3035 = vadd.f32 0.0, %v3034
    %3036 = vdwg.mxu0
    %v3037 = vmul.f32 %v3035, 0.25
    %v3038 = vsel %vm527, %v3037, -inf
    %3039 = vmax.xlane.f32.xlu0 %v3038
    %v3040 = vpop.xlane.xlu0 %3039
    %v3041 = vsub.f32 %v3037, %v3040
    %v3042 = vmul.f32 %v3041, 1.442695
    %v3043 = vpow.pop %v3042
    %v3044 = vsel %vm527, %v3043, 0.0
    %3045 = vadd.xlane.f32.xlu0 %v3044
    %v3046 = vpop.xlane.xlu0 %3045
    %v3047 = vrcp.pop %v3046
    %v3048 = vmul.f32 %v3043, %v3047
    %3049 = vrot.lane.b32.xlu0 %v2940, 80
    %v3050 = vpop.permute.xlu0 %3049
    %v3052 = vsel %vm541, %v3048, 0
    %v3054 = vsel %vm545, %v3050, 0
    %3056 = vmatpush.msra.mxu0 0.0
    %3057 = vmatpush.msra.mxu0 0.0
    %3058 = vmatpush.msra.mxu0 0.0
    %3059 = vmatpush.msra.mxu0 0.0
    %3060 = vmatpush.msra.mxu0 0.0
    %3061 = vmatpush.msra.mxu0 0.0
    %3062 = vmatpush.msra.mxu0 0.0
    %3063 = vmatpush.msra.mxu0 0.0
    %3064 = vmatpush.msra.mxu0 0.0
    %3065 = vmatpush.msra.mxu0 0.0
    %3066 = vmatpush.msra.mxu0 0.0
    %3067 = vmatpush.msra.mxu0 0.0
    %3068 = vmatpush.msra.mxu0 0.0
    %3069 = vmatpush.msra.mxu0 0.0
    %3070 = vmatpush.msra.mxu0 0.0
    %3071 = vmatpush.msra.mxu0 %v3054
    %3072 = vmatmul.f32.gmra.mxu0 %v3052
    %v3073 = vpop.f32.mrf.mxu0
    %v3074 = vadd.f32 0.0, %v3073
    %3075 = vdwg.mxu0
    %3076 = vrot.lane.b32.xlu0 %v2875, 32
    %v3077 = vpop.permute.xlu0 %3076
    %3078 = vrot.lane.b32.xlu0 %v2876, 32
    %v3079 = vpop.permute.xlu0 %3078
    %v3083 = vsel %vm499, %v3074, 0
    %3085 = vmatpush.msra.mxu0 0.0
    %3086 = vmatpush.msra.mxu0 0.0
    %3087 = vmatpush.msra.mxu0 0.0
    %3088 = vmatpush.msra.mxu0 0.0
    %3089 = vmatpush.msra.mxu0 0.0
    %3090 = vmatpush.msra.mxu0 0.0
    %3091 = vmatpush.msra.mxu0 0.0
    %3092 = vmatpush.msra.mxu0 0.0
    %3093 = vmatpush.msra.mxu0 0.0
    %3094 = vmatpush.msra.mxu0 0.0
    %3095 = vmatpush.msra.mxu0 0.0
    %3096 = vmatpush.msra.mxu0 0.0
    %3097 = vmatpush.msra.mxu0 0.0
    %3098 = vmatpush.msra.mxu0 0.0
    %3099 = vmatpush.msra.mxu0 %v3079
    %3100 = vmatpush.msra.mxu0 %v3077
    %3101 = vmatmul.f32.gmra.mxu0 %v3083
    %v3102 = vpop.f32.mrf.mxu0
    %v3103 = vadd.f32 0.0, %v3102
    %3104 = vdwg.mxu0
    %3107 = vrot.lane.b32.xlu0 %v3007, 32
    %v3108 = vpop.permute.xlu0 %3107
    %3109 = vrot.lane.b32.xlu0 %v3008, 32
    %v3110 = vpop.permute.xlu0 %3109
    %v3114 = vsel %vm499, %v3005, 0
    %3116 = vmatpush.msra.mxu0 0.0
    %3117 = vmatpush.msra.mxu0 0.0
    %3118 = vmatpush.msra.mxu0 0.0
    %3119 = vmatpush.msra.mxu0 0.0
    %3120 = vmatpush.msra.mxu0 0.0
    %3121 = vmatpush.msra.mxu0 0.0
    %3122 = vmatpush.msra.mxu0 0.0
    %3123 = vmatpush.msra.mxu0 0.0
    %3124 = vmatpush.msra.mxu0 0.0
    %3125 = vmatpush.msra.mxu0 0.0
    %3126 = vmatpush.msra.mxu0 0.0
    %3127 = vmatpush.msra.mxu0 0.0
    %3128 = vmatpush.msra.mxu0 0.0
    %3129 = vmatpush.msra.mxu0 0.0
    %3130 = vmatpush.msra.mxu0 %v3110
    %3131 = vmatpush.msra.mxu0 %v3108
    %3132 = vmatmul.f32.gmra.mxu0 %v3114
    %v3133 = vpop.f32.mrf.mxu0
    %v3134 = vadd.f32 %v3103, %v3133
    %3135 = vdwg.mxu0
    %3136 = vrot.lane.b32.xlu0 %v2878, 32
    %v3137 = vpop.permute.xlu0 %3136
    %v3139 = vadd.f32 %v3134, %v3137
    %v3140 = vadd.f32 %v429, %v3139
    %v3141 = vld [vmem:[#allocation5 + $0x95] sm:$0x1]
    %v3142 = vld [vmem:[#allocation5 + $0x96] sm:$0x1]
    %v3143 = vsel %vm704, %v3140, 0.0
    %3144 = vadd.xlane.f32.xlu0 %v3143
    %v3145 = vpop.xlane.xlu0 %3144
    %v3146 = vmul.f32 %v3145, %v714
    %v3147 = vsub.f32 %v3140, %v3146
    %v3148 = vmul.f32 %v3147, %v3147
    %v3149 = vsel %vm704, %v3148, 0.0
    %3150 = vadd.xlane.f32.xlu0 %v3149
    %v3151 = vpop.xlane.xlu0 %3150
    %v3152 = vmul.f32 %v3151, %v714
    %v3153 = vadd.f32 %v3152, 1e-05
    %v3154 = vrsqrt.pop %v3153
    %v3155 = vmul.f32 %v3154, %v3153
    %v3156 = vmul.f32 %v3155, %v3154
    %v3157 = vmul.f32 0.5, %v3156
    %v3158 = vsub.f32 1.5, %v3157
    %v3159 = vmul.f32 %v3154, %v3158
    %vm3160 = vweird.f32 %v3153
    %vm3161 = vweird.f32 %v3154
    %vm3162 = vmor %vm3160, %vm3161
    %v3163 = vsel %vm3162, %v3154, %v3159
    %v3164 = vmul.f32 %v3147, %v3163
    %v3165 = vperm.slane %v3141, 0
    %v3166 = vmul.f32 %v3164, %v3165
    %v3167 = vperm.slane %v3142, 0
    %v3168 = vadd.f32 %v3166, %v3167
    %s3169 = scalar_lea.vmem [#allocation8], 120
    %v3170 = vld [vmem:[%s3169] sm:$0xff]
    %v3171 = vld [vmem:[%s3169 + $0x8] sm:$0xff]
    %v3172 = vld [vmem:[%s3169 + $0x10] sm:$0xff]
    %v3173 = vld [vmem:[%s3169 + $0x18] sm:$0xff]
    %v3174 = vld [vmem:[%s3169 + $0x20] sm:$0x1]
    %v3175 = vperm.slane %v3174, 0
    %v3177 = vsel %vm253, %v3168, 0
    %3179 = vmatpush.msra.mxu0 0.0
    %3180 = vmatpush.msra.mxu0 0.0
    %3181 = vmatpush.msra.mxu0 0.0
    %3182 = vmatpush.msra.mxu0 0.0
    %3183 = vmatpush.msra.mxu0 0.0
    %3184 = vmatpush.msra.mxu0 0.0
    %3185 = vmatpush.msra.mxu0 0.0
    %3186 = vmatpush.msra.mxu0 0.0
    %3187 = vmatpush.msra.mxu0 0.0
    %3188 = vmatpush.msra.mxu0 0.0
    %3189 = vmatpush.msra.mxu0 0.0
    %3190 = vmatpush.msra.mxu0 0.0
    %3191 = vmatpush.msra.mxu0 %v3173
    %3192 = vmatpush.msra.mxu0 %v3172
    %3193 = vmatpush.msra.mxu0 %v3171
    %3194 = vmatpush.msra.mxu0 %v3170
    %3195 = vmatmul.f32.gmra.mxu0 %v3177
    %v3196 = vpop.f32.mrf.mxu0
    %v3197 = vadd.f32 %v3175, %v3196
    %3198 = vdwg.mxu0
    %3203 = vrot.lane.b32.xlu0 %v3170, 96
    %v3204 = vpop.permute.xlu0 %3203
    %3205 = vrot.lane.b32.xlu0 %v3171, 96
    %v3206 = vpop.permute.xlu0 %3205
    %3207 = vrot.lane.b32.xlu0 %v3172, 96
    %v3208 = vpop.permute.xlu0 %3207
    %3209 = vrot.lane.b32.xlu0 %v3173, 96
    %v3210 = vpop.permute.xlu0 %3209
    %3216 = vrot.lane.b32.xlu0 %v3175, 96
    %v3217 = vpop.permute.xlu0 %3216
    %v3220 = vsel %vm253, %v2871, 0
    %3222 = vmatpush.msra.mxu0 0.0
    %3223 = vmatpush.msra.mxu0 0.0
    %3224 = vmatpush.msra.mxu0 0.0
    %3225 = vmatpush.msra.mxu0 0.0
    %3226 = vmatpush.msra.mxu0 0.0
    %3227 = vmatpush.msra.mxu0 0.0
    %3228 = vmatpush.msra.mxu0 0.0
    %3229 = vmatpush.msra.mxu0 0.0
    %3230 = vmatpush.msra.mxu0 0.0
    %3231 = vmatpush.msra.mxu0 0.0
    %3232 = vmatpush.msra.mxu0 0.0
    %3233 = vmatpush.msra.mxu0 0.0
    %3234 = vmatpush.msra.mxu0 %v3210
    %3235 = vmatpush.msra.mxu0 %v3208
    %3236 = vmatpush.msra.mxu0 %v3206
    %3237 = vmatpush.msra.mxu0 %v3204
    %3238 = vmatmul.f32.gmra.mxu0 %v3220
    %v3239 = vpop.f32.mrf.mxu0
    %v3240 = vadd.f32 %v3217, %v3239
    %3241 = vdwg.mxu0
    %v3243 = vsel %vm499, %v3197, 0
    %v3246 = vsel %vm499, %v3240, 0
    %3248 = vmatpush.xpose.msra.mxu0 0.0
    %3249 = vmatpush.xpose.msra.mxu0 0.0
    %3250 = vmatpush.xpose.msra.mxu0 0.0
    %3251 = vmatpush.xpose.msra.mxu0 0.0
    %3252 = vmatpush.xpose.msra.mxu0 0.0
    %3253 = vmatpush.xpose.msra.mxu0 0.0
    %3254 = vmatpush.xpose.msra.mxu0 0.0
    %3255 = vmatpush.xpose.msra.mxu0 0.0
    %3256 = vmatpush.xpose.msra.mxu0 0.0
    %3257 = vmatpush.xpose.msra.mxu0 0.0
    %3258 = vmatpush.xpose.msra.mxu0 0.0
    %3259 = vmatpush.xpose.msra.mxu0 0.0
    %3260 = vmatpush.xpose.msra.mxu0 0.0
    %3261 = vmatpush.xpose.msra.mxu0 0.0
    %3262 = vmatpush.xpose.msra.mxu0 0.0
    %3263 = vmatpush.xpose.msra.mxu0 %v3246
    %3264 = vmatmul.f32.gmra.mxu0 %v3243
    %v3265 = vpop.f32.mrf.mxu0
    %v3266 = vadd.f32 0.0, %v3265
    %3267 = vdwg.mxu0
    %v3268 = vmul.f32 %v3266, 0.25
    %v3269 = vsel %vm527, %v3268, -inf
    %3270 = vmax.xlane.f32.xlu0 %v3269
    %v3271 = vpop.xlane.xlu0 %3270
    %v3272 = vsub.f32 %v3268, %v3271
    %v3273 = vmul.f32 %v3272, 1.442695
    %v3274 = vpow.pop %v3273
    %v3275 = vsel %vm527, %v3274, 0.0
    %3276 = vadd.xlane.f32.xlu0 %v3275
    %v3277 = vpop.xlane.xlu0 %3276
    %v3278 = vrcp.pop %v3277
    %v3279 = vmul.f32 %v3274, %v3278
    %3280 = vrot.lane.b32.xlu0 %v3240, 96
    %v3281 = vpop.permute.xlu0 %3280
    %v3283 = vsel %vm541, %v3279, 0
    %v3285 = vsel %vm545, %v3281, 0
    %3287 = vmatpush.msra.mxu0 0.0
    %3288 = vmatpush.msra.mxu0 0.0
    %3289 = vmatpush.msra.mxu0 0.0
    %3290 = vmatpush.msra.mxu0 0.0
    %3291 = vmatpush.msra.mxu0 0.0
    %3292 = vmatpush.msra.mxu0 0.0
    %3293 = vmatpush.msra.mxu0 0.0
    %3294 = vmatpush.msra.mxu0 0.0
    %3295 = vmatpush.msra.mxu0 0.0
    %3296 = vmatpush.msra.mxu0 0.0
    %3297 = vmatpush.msra.mxu0 0.0
    %3298 = vmatpush.msra.mxu0 0.0
    %3299 = vmatpush.msra.mxu0 0.0
    %3300 = vmatpush.msra.mxu0 0.0
    %3301 = vmatpush.msra.mxu0 0.0
    %3302 = vmatpush.msra.mxu0 %v3285
    %3303 = vmatmul.f32.gmra.mxu0 %v3283
    %v3304 = vpop.f32.mrf.mxu0
    %v3305 = vadd.f32 0.0, %v3304
    %3306 = vdwg.mxu0
    %v3307 = vld [vmem:[%s3169] sm:$0xff]
    %v3308 = vld [vmem:[%s3169 + $0x8] sm:$0xff]
    %3309 = vrot.lane.b32.xlu0 %v3197, 112
    %v3310 = vpop.permute.xlu0 %3309
    %3311 = vrot.lane.b32.xlu0 %v3240, 112
    %v3312 = vpop.permute.xlu0 %3311
    %v3313 = vsel %vm499, %v3310, 0
    %v3315 = vsel %vm499, %v3312, 0
    %3317 = vmatpush.xpose.msra.mxu0 0.0
    %3318 = vmatpush.xpose.msra.mxu0 0.0
    %3319 = vmatpush.xpose.msra.mxu0 0.0
    %3320 = vmatpush.xpose.msra.mxu0 0.0
    %3321 = vmatpush.xpose.msra.mxu0 0.0
    %3322 = vmatpush.xpose.msra.mxu0 0.0
    %3323 = vmatpush.xpose.msra.mxu0 0.0
    %3324 = vmatpush.xpose.msra.mxu0 0.0
    %3325 = vmatpush.xpose.msra.mxu0 0.0
    %3326 = vmatpush.xpose.msra.mxu0 0.0
    %3327 = vmatpush.xpose.msra.mxu0 0.0
    %3328 = vmatpush.xpose.msra.mxu0 0.0
    %3329 = vmatpush.xpose.msra.mxu0 0.0
    %3330 = vmatpush.xpose.msra.mxu0 0.0
    %3331 = vmatpush.xpose.msra.mxu0 0.0
    %3332 = vmatpush.xpose.msra.mxu0 %v3315
    %3333 = vmatmul.f32.gmra.mxu0 %v3313
    %v3334 = vpop.f32.mrf.mxu0
    %v3335 = vadd.f32 0.0, %v3334
    %3336 = vdwg.mxu0
    %v3337 = vmul.f32 %v3335, 0.25
    %v3338 = vsel %vm527, %v3337, -inf
    %3339 = vmax.xlane.f32.xlu0 %v3338
    %v3340 = vpop.xlane.xlu0 %3339
    %v3341 = vsub.f32 %v3337, %v3340
    %v3342 = vmul.f32 %v3341, 1.442695
    %v3343 = vpow.pop %v3342
    %v3344 = vsel %vm527, %v3343, 0.0
    %3345 = vadd.xlane.f32.xlu0 %v3344
    %v3346 = vpop.xlane.xlu0 %3345
    %v3347 = vrcp.pop %v3346
    %v3348 = vmul.f32 %v3343, %v3347
    %3349 = vrot.lane.b32.xlu0 %v3240, 80
    %v3350 = vpop.permute.xlu0 %3349
    %v3352 = vsel %vm541, %v3348, 0
    %v3354 = vsel %vm545, %v3350, 0
    %3356 = vmatpush.msra.mxu0 0.0
    %3357 = vmatpush.msra.mxu0 0.0
    %3358 = vmatpush.msra.mxu0 0.0
    %3359 = vmatpush.msra.mxu0 0.0
    %3360 = vmatpush.msra.mxu0 0.0
    %3361 = vmatpush.msra.mxu0 0.0
    %3362 = vmatpush.msra.mxu0 0.0
    %3363 = vmatpush.msra.mxu0 0.0
    %3364 = vmatpush.msra.mxu0 0.0
    %3365 = vmatpush.msra.mxu0 0.0
    %3366 = vmatpush.msra.mxu0 0.0
    %3367 = vmatpush.msra.mxu0 0.0
    %3368 = vmatpush.msra.mxu0 0.0
    %3369 = vmatpush.msra.mxu0 0.0
    %3370 = vmatpush.msra.mxu0 0.0
    %3371 = vmatpush.msra.mxu0 %v3354
    %3372 = vmatmul.f32.gmra.mxu0 %v3352
    %v3373 = vpop.f32.mrf.mxu0
    %v3374 = vadd.f32 0.0, %v3373
    %3375 = vdwg.mxu0
    %3376 = vrot.lane.b32.xlu0 %v3172, 32
    %v3377 = vpop.permute.xlu0 %3376
    %3378 = vrot.lane.b32.xlu0 %v3173, 32
    %v3379 = vpop.permute.xlu0 %3378
    %v3383 = vsel %vm499, %v3374, 0
    %3385 = vmatpush.msra.mxu0 0.0
    %3386 = vmatpush.msra.mxu0 0.0
    %3387 = vmatpush.msra.mxu0 0.0
    %3388 = vmatpush.msra.mxu0 0.0
    %3389 = vmatpush.msra.mxu0 0.0
    %3390 = vmatpush.msra.mxu0 0.0
    %3391 = vmatpush.msra.mxu0 0.0
    %3392 = vmatpush.msra.mxu0 0.0
    %3393 = vmatpush.msra.mxu0 0.0
    %3394 = vmatpush.msra.mxu0 0.0
    %3395 = vmatpush.msra.mxu0 0.0
    %3396 = vmatpush.msra.mxu0 0.0
    %3397 = vmatpush.msra.mxu0 0.0
    %3398 = vmatpush.msra.mxu0 0.0
    %3399 = vmatpush.msra.mxu0 %v3379
    %3400 = vmatpush.msra.mxu0 %v3377
    %3401 = vmatmul.f32.gmra.mxu0 %v3383
    %v3402 = vpop.f32.mrf.mxu0
    %v3403 = vadd.f32 0.0, %v3402
    %3404 = vdwg.mxu0
    %3407 = vrot.lane.b32.xlu0 %v3307, 32
    %v3408 = vpop.permute.xlu0 %3407
    %3409 = vrot.lane.b32.xlu0 %v3308, 32
    %v3410 = vpop.permute.xlu0 %3409
    %v3414 = vsel %vm499, %v3305, 0
    %3416 = vmatpush.msra.mxu0 0.0
    %3417 = vmatpush.msra.mxu0 0.0
    %3418 = vmatpush.msra.mxu0 0.0
    %3419 = vmatpush.msra.mxu0 0.0
    %3420 = vmatpush.msra.mxu0 0.0
    %3421 = vmatpush.msra.mxu0 0.0
    %3422 = vmatpush.msra.mxu0 0.0
    %3423 = vmatpush.msra.mxu0 0.0
    %3424 = vmatpush.msra.mxu0 0.0
    %3425 = vmatpush.msra.mxu0 0.0
    %3426 = vmatpush.msra.mxu0 0.0
    %3427 = vmatpush.msra.mxu0 0.0
    %3428 = vmatpush.msra.mxu0 0.0
    %3429 = vmatpush.msra.mxu0 0.0
    %3430 = vmatpush.msra.mxu0 %v3410
    %3431 = vmatpush.msra.mxu0 %v3408
    %3432 = vmatmul.f32.gmra.mxu0 %v3414
    %v3433 = vpop.f32.mrf.mxu0
    %v3434 = vadd.f32 %v3403, %v3433
    %3435 = vdwg.mxu0
    %3436 = vrot.lane.b32.xlu0 %v3175, 32
    %v3437 = vpop.permute.xlu0 %3436
    %v3439 = vadd.f32 %v3434, %v3437
    %v3440 = vadd.f32 %v3168, %v3439
    %v3441 = vld [vmem:[#allocation5 + $0x97] sm:$0x1]
    %v3442 = vld [vmem:[#allocation5 + $0x98] sm:$0x1]
    %v3443 = vsel %vm704, %v3440, 0.0
    %3444 = vadd.xlane.f32.xlu0 %v3443
    %v3445 = vpop.xlane.xlu0 %3444
    %v3446 = vmul.f32 %v3445, %v714
    %v3447 = vsub.f32 %v3440, %v3446
    %v3448 = vmul.f32 %v3447, %v3447
    %v3449 = vsel %vm704, %v3448, 0.0
    %3450 = vadd.xlane.f32.xlu0 %v3449
    %v3451 = vpop.xlane.xlu0 %3450
    %v3452 = vmul.f32 %v3451, %v714
    %v3453 = vadd.f32 %v3452, 1e-05
    %v3454 = vrsqrt.pop %v3453
    %v3455 = vmul.f32 %v3454, %v3453
    %v3456 = vmul.f32 %v3455, %v3454
    %v3457 = vmul.f32 0.5, %v3456
    %v3458 = vsub.f32 1.5, %v3457
    %v3459 = vmul.f32 %v3454, %v3458
    %vm3460 = vweird.f32 %v3453
    %vm3461 = vweird.f32 %v3454
    %vm3462 = vmor %vm3460, %vm3461
    %v3463 = vsel %vm3462, %v3454, %v3459
    %v3464 = vmul.f32 %v3447, %v3463
    %v3465 = vperm.slane %v3441, 0
    %v3466 = vmul.f32 %v3464, %v3465
    %v3467 = vperm.slane %v3442, 0
    %v3468 = vadd.f32 %v3466, %v3467
    %s3469 = sshll.u32 %s739, 4
    %3470 = dma.done %s136, %s3469
    %s3471 = sshll.u32 %s739, 4
    %3472 = dma.done %s152, %s3471
    %v3473 = vpack.c.bf16 %v3468, %v3468
    %v3474 = vld [vmem:[%s135] sm:$0xff]
    %v3475 = vld [vmem:[%s135 + $0x8] sm:$0xff]
    %v3476 = vld [vmem:[%s135 + $0x40] sm:$0xff]
    %v3477 = vld [vmem:[%s135 + $0x48] sm:$0xff]
    %v3478 = vld [vmem:[%s135 + $0x80] sm:$0xff]
    %v3479 = vld [vmem:[%s135 + $0x88] sm:$0xff]
    %v3480 = vld [vmem:[%s135 + $0xc0] sm:$0xff]
    %v3481 = vld [vmem:[%s135 + $0xc8] sm:$0xff]
    %s3482 = scalar_lea.vmem [#allocation10], 2
    %v3483 = vld [vmem:[%s3482] ss:$4 sm:$0xf]
    %v3485 = vperm.slane %v3483, 0
    %v3486 = vperm.slane %v3483, 1
    %v3487 = vperm.slane %v3483, 2
    %v3488 = vperm.slane %v3483, 3
    %v3501 = vunpack.c.l.b16 %v3474
    %v3502 = vunpack.c.h.b16 %v3474
    %v3503 = vunpack.c.l.b16 %v3475
    %v3504 = vunpack.c.h.b16 %v3475
    %v3505 = vunpack.c.l.b16 %v3476
    %v3506 = vunpack.c.h.b16 %v3476
    %v3507 = vunpack.c.l.b16 %v3477
    %v3508 = vunpack.c.h.b16 %v3477
    %v3509 = vunpack.c.l.b16 %v3478
    %v3510 = vunpack.c.h.b16 %v3478
    %v3511 = vunpack.c.l.b16 %v3479
    %v3512 = vunpack.c.h.b16 %v3479
    %v3513 = vunpack.c.l.b16 %v3480
    %v3514 = vunpack.c.h.b16 %v3480
    %v3515 = vunpack.c.l.b16 %v3481
    %v3516 = vunpack.c.h.b16 %v3481
    %v3517 = vpack.c.b16 %v3505, %v3501
    %v3518 = vpack.c.b16 %v3506, %v3502
    %v3519 = vpack.c.b16 %v3507, %v3503
    %v3520 = vpack.c.b16 %v3508, %v3504
    %v3521 = vpack.c.b16 %v3513, %v3509
    %v3522 = vpack.c.b16 %v3514, %v3510
    %v3523 = vpack.c.b16 %v3515, %v3511
    %v3524 = vpack.c.b16 %v3516, %v3512
    %v3534 = vsel %vm253, %v3473, 0
    %3536 = vmatpush.bf16.msra.mxu0 0
    %3537 = vmatpush.bf16.msra.mxu0 0
    %3538 = vmatpush.bf16.msra.mxu0 0
    %3539 = vmatpush.bf16.msra.mxu0 0
    %3540 = vmatpush.bf16.msra.mxu0 0
    %3541 = vmatpush.bf16.msra.mxu0 0
    %3542 = vmatpush.bf16.msra.mxu0 %v3521
    %3543 = vmatpush.bf16.msra.mxu0 %v3517
    %3544 = vmatmul.bf16.gmra.mxu0 %v3534
    %v3545 = vpop.f32.mrf.mxu0
    %v3546 = vadd.f32 %v3485, %v3545
    %v3547 = vpop.f32.mrf.mxu0
    %3548 = vdwg.mxu0
    %3549 = vmatpush.bf16.msra.mxu0 0
    %3550 = vmatpush.bf16.msra.mxu0 0
    %3551 = vmatpush.bf16.msra.mxu0 0
    %3552 = vmatpush.bf16.msra.mxu0 0
    %3553 = vmatpush.bf16.msra.mxu0 0
    %3554 = vmatpush.bf16.msra.mxu0 0
    %3555 = vmatpush.bf16.msra.mxu0 %v3522
    %3556 = vmatpush.bf16.msra.mxu0 %v3518
    %3557 = vmatmul.bf16.gmra.mxu0 %v3534
    %v3558 = vpop.f32.mrf.mxu0
    %v3559 = vadd.f32 %v3486, %v3558
    %v3560 = vpop.f32.mrf.mxu0
    %3561 = vdwg.mxu0
    %3562 = vmatpush.bf16.msra.mxu0 0
    %3563 = vmatpush.bf16.msra.mxu0 0
    %3564 = vmatpush.bf16.msra.mxu0 0
    %3565 = vmatpush.bf16.msra.mxu0 0
    %3566 = vmatpush.bf16.msra.mxu0 0
    %3567 = vmatpush.bf16.msra.mxu0 0
    %3568 = vmatpush.bf16.msra.mxu0 %v3523
    %3569 = vmatpush.bf16.msra.mxu0 %v3519
    %3570 = vmatmul.bf16.gmra.mxu0 %v3534
    %v3571 = vpop.f32.mrf.mxu0
    %v3572 = vadd.f32 %v3487, %v3571
    %v3573 = vpop.f32.mrf.mxu0
    %3574 = vdwg.mxu0
    %3575 = vmatpush.bf16.msra.mxu0 0
    %3576 = vmatpush.bf16.msra.mxu0 0
    %3577 = vmatpush.bf16.msra.mxu0 0
    %3578 = vmatpush.bf16.msra.mxu0 0
    %3579 = vmatpush.bf16.msra.mxu0 0
    %3580 = vmatpush.bf16.msra.mxu0 0
    %3581 = vmatpush.bf16.msra.mxu0 %v3524
    %3582 = vmatpush.bf16.msra.mxu0 %v3520
    %3583 = vmatmul.bf16.gmra.mxu0 %v3534
    %v3584 = vpop.f32.mrf.mxu0
    %v3585 = vadd.f32 %v3488, %v3584
    %v3586 = vpop.f32.mrf.mxu0
    %3587 = vdwg.mxu0
    %v3588 = vmax.f32 %v3546, 0.0
    %v3589 = vmax.f32 %v3559, 0.0
    %v3590 = vmax.f32 %v3572, 0.0
    %v3591 = vmax.f32 %v3585, 0.0
    %v3592 = vld [vmem:[%s151] sm:$0xff]
    %v3593 = vld [vmem:[%s151 + $0x8] sm:$0xff]
    %v3594 = vld [vmem:[%s151 + $0x40] sm:$0xff]
    %v3595 = vld [vmem:[%s151 + $0x48] sm:$0xff]
    %v3596 = vld [vmem:[%s151 + $0x80] sm:$0xff]
    %v3597 = vld [vmem:[%s151 + $0x88] sm:$0xff]
    %v3598 = vld [vmem:[%s151 + $0xc0] sm:$0xff]
    %v3599 = vld [vmem:[%s151 + $0xc8] sm:$0xff]
    %v3600 = vpack.c.bf16 %v3588, %v3588
    %v3601 = vpack.c.bf16 %v3589, %v3589
    %v3602 = vpack.c.bf16 %v3590, %v3590
    %v3603 = vpack.c.bf16 %v3591, %v3591
    %v3604 = vld [vmem:[%s135 + $0x10] sm:$0xff]
    %v3605 = vld [vmem:[%s135 + $0x18] sm:$0xff]
    %v3606 = vld [vmem:[%s135 + $0x50] sm:$0xff]
    %v3607 = vld [vmem:[%s135 + $0x58] sm:$0xff]
    %v3608 = vld [vmem:[%s135 + $0x90] sm:$0xff]
    %v3609 = vld [vmem:[%s135 + $0x98] sm:$0xff]
    %v3610 = vld [vmem:[%s135 + $0xd0] sm:$0xff]
    %v3611 = vld [vmem:[%s135 + $0xd8] sm:$0xff]
    %s3612 = scalar_lea.vmem [#allocation10], 18
    %v3613 = vld [vmem:[%s3612] ss:$4 sm:$0xf]
    %v3615 = vperm.slane %v3613, 0
    %v3616 = vperm.slane %v3613, 1
    %v3617 = vperm.slane %v3613, 2
    %v3618 = vperm.slane %v3613, 3
    %v3631 = vunpack.c.l.b16 %v3604
    %v3632 = vunpack.c.h.b16 %v3604
    %v3633 = vunpack.c.l.b16 %v3605
    %v3634 = vunpack.c.h.b16 %v3605
    %v3635 = vunpack.c.l.b16 %v3606
    %v3636 = vunpack.c.h.b16 %v3606
    %v3637 = vunpack.c.l.b16 %v3607
    %v3638 = vunpack.c.h.b16 %v3607
    %v3639 = vunpack.c.l.b16 %v3608
    %v3640 = vunpack.c.h.b16 %v3608
    %v3641 = vunpack.c.l.b16 %v3609
    %v3642 = vunpack.c.h.b16 %v3609
    %v3643 = vunpack.c.l.b16 %v3610
    %v3644 = vunpack.c.h.b16 %v3610
    %v3645 = vunpack.c.l.b16 %v3611
    %v3646 = vunpack.c.h.b16 %v3611
    %v3647 = vpack.c.b16 %v3635, %v3631
    %v3648 = vpack.c.b16 %v3636, %v3632
    %v3649 = vpack.c.b16 %v3637, %v3633
    %v3650 = vpack.c.b16 %v3638, %v3634
    %v3651 = vpack.c.b16 %v3643, %v3639
    %v3652 = vpack.c.b16 %v3644, %v3640
    %v3653 = vpack.c.b16 %v3645, %v3641
    %v3654 = vpack.c.b16 %v3646, %v3642
    %3663 = vmatpush.bf16.msra.mxu0 0
    %3664 = vmatpush.bf16.msra.mxu0 0
    %3665 = vmatpush.bf16.msra.mxu0 0
    %3666 = vmatpush.bf16.msra.mxu0 0
    %3667 = vmatpush.bf16.msra.mxu0 0
    %3668 = vmatpush.bf16.msra.mxu0 0
    %3669 = vmatpush.bf16.msra.mxu0 %v3651
    %3670 = vmatpush.bf16.msra.mxu0 %v3647
    %3671 = vmatmul.bf16.gmra.mxu0 %v3534
    %v3672 = vpop.f32.mrf.mxu0
    %v3673 = vadd.f32 %v3615, %v3672
    %v3674 = vpop.f32.mrf.mxu0
    %3675 = vdwg.mxu0
    %3676 = vmatpush.bf16.msra.mxu0 0
    %3677 = vmatpush.bf16.msra.mxu0 0
    %3678 = vmatpush.bf16.msra.mxu0 0
    %3679 = vmatpush.bf16.msra.mxu0 0
    %3680 = vmatpush.bf16.msra.mxu0 0
    %3681 = vmatpush.bf16.msra.mxu0 0
    %3682 = vmatpush.bf16.msra.mxu0 %v3652
    %3683 = vmatpush.bf16.msra.mxu0 %v3648
    %3684 = vmatmul.bf16.gmra.mxu0 %v3534
    %v3685 = vpop.f32.mrf.mxu0
    %v3686 = vadd.f32 %v3616, %v3685
    %v3687 = vpop.f32.mrf.mxu0
    %3688 = vdwg.mxu0
    %3689 = vmatpush.bf16.msra.mxu0 0
    %3690 = vmatpush.bf16.msra.mxu0 0
    %3691 = vmatpush.bf16.msra.mxu0 0
    %3692 = vmatpush.bf16.msra.mxu0 0
    %3693 = vmatpush.bf16.msra.mxu0 0
    %3694 = vmatpush.bf16.msra.mxu0 0
    %3695 = vmatpush.bf16.msra.mxu0 %v3653
    %3696 = vmatpush.bf16.msra.mxu0 %v3649
    %3697 = vmatmul.bf16.gmra.mxu0 %v3534
    %v3698 = vpop.f32.mrf.mxu0
    %v3699 = vadd.f32 %v3617, %v3698
    %v3700 = vpop.f32.mrf.mxu0
    %3701 = vdwg.mxu0
    %3702 = vmatpush.bf16.msra.mxu0 0
    %3703 = vmatpush.bf16.msra.mxu0 0
    %3704 = vmatpush.bf16.msra.mxu0 0
    %3705 = vmatpush.bf16.msra.mxu0 0
    %3706 = vmatpush.bf16.msra.mxu0 0
    %3707 = vmatpush.bf16.msra.mxu0 0
    %3708 = vmatpush.bf16.msra.mxu0 %v3654
    %3709 = vmatpush.bf16.msra.mxu0 %v3650
    %3710 = vmatmul.bf16.gmra.mxu0 %v3534
    %v3711 = vpop.f32.mrf.mxu0
    %v3712 = vadd.f32 %v3618, %v3711
    %v3713 = vpop.f32.mrf.mxu0
    %3714 = vdwg.mxu0
    %v3715 = vmax.f32 %v3673, 0.0
    %v3716 = vmax.f32 %v3686, 0.0
    %v3717 = vmax.f32 %v3699, 0.0
    %v3718 = vmax.f32 %v3712, 0.0
    %v3719 = vld [vmem:[%s151 + $0x10] sm:$0xff]
    %v3720 = vld [vmem:[%s151 + $0x18] sm:$0xff]
    %v3721 = vld [vmem:[%s151 + $0x50] sm:$0xff]
    %v3722 = vld [vmem:[%s151 + $0x58] sm:$0xff]
    %v3723 = vld [vmem:[%s151 + $0x90] sm:$0xff]
    %v3724 = vld [vmem:[%s151 + $0x98] sm:$0xff]
    %v3725 = vld [vmem:[%s151 + $0xd0] sm:$0xff]
    %v3726 = vld [vmem:[%s151 + $0xd8] sm:$0xff]
    %v3727 = vpack.c.bf16 %v3715, %v3715
    %v3728 = vpack.c.bf16 %v3716, %v3716
    %v3729 = vpack.c.bf16 %v3717, %v3717
    %v3730 = vpack.c.bf16 %v3718, %v3718
    %v3739 = vunpack.c.l.b16 %v3719
    %v3740 = vunpack.c.h.b16 %v3719
    %v3741 = vunpack.c.l.b16 %v3720
    %v3742 = vunpack.c.h.b16 %v3720
    %v3743 = vunpack.c.l.b16 %v3721
    %v3744 = vunpack.c.h.b16 %v3721
    %v3745 = vunpack.c.l.b16 %v3722
    %v3746 = vunpack.c.h.b16 %v3722
    %v3747 = vunpack.c.l.b16 %v3723
    %v3748 = vunpack.c.h.b16 %v3723
    %v3749 = vunpack.c.l.b16 %v3724
    %v3750 = vunpack.c.h.b16 %v3724
    %v3751 = vunpack.c.l.b16 %v3725
    %v3752 = vunpack.c.h.b16 %v3725
    %v3753 = vunpack.c.l.b16 %v3726
    %v3754 = vunpack.c.h.b16 %v3726
    %v3755 = vpack.c.b16 %v3743, %v3739
    %v3756 = vpack.c.b16 %v3744, %v3740
    %v3757 = vpack.c.b16 %v3745, %v3741
    %v3758 = vpack.c.b16 %v3746, %v3742
    %v3759 = vpack.c.b16 %v3751, %v3747
    %v3760 = vpack.c.b16 %v3752, %v3748
    %v3761 = vpack.c.b16 %v3753, %v3749
    %v3762 = vpack.c.b16 %v3754, %v3750
    %3771 = vmatpush.bf16.xpose.msra.mxu0 0
    %3772 = vmatpush.bf16.xpose.msra.mxu0 0
    %3773 = vmatpush.bf16.xpose.msra.mxu0 0
    %3774 = vmatpush.bf16.xpose.msra.mxu0 0
    %3775 = vmatpush.bf16.xpose.msra.mxu0 0
    %3776 = vmatpush.bf16.xpose.msra.mxu0 0
    %3777 = vmatpush.bf16.xpose.msra.mxu0 %v3759
    %3778 = vmatpush.bf16.xpose.msra.mxu0 %v3755
    %3779 = vmatmul.bf16.gmra.mxu0 %v3727
    %v3780 = vpop.f32.mrf.mxu0
    %v3781 = vadd.f32 0.0, %v3780
    %v3782 = vpop.f32.mrf.mxu0
    %3783 = vdwg.mxu0
    %3784 = vmatpush.bf16.xpose.msra.mxu0 0
    %3785 = vmatpush.bf16.xpose.msra.mxu0 0
    %3786 = vmatpush.bf16.xpose.msra.mxu0 0
    %3787 = vmatpush.bf16.xpose.msra.mxu0 0
    %3788 = vmatpush.bf16.xpose.msra.mxu0 0
    %3789 = vmatpush.bf16.xpose.msra.mxu0 0
    %3790 = vmatpush.bf16.xpose.msra.mxu0 %v3760
    %3791 = vmatpush.bf16.xpose.msra.mxu0 %v3756
    %3792 = vmatmul.bf16.gmra.mxu0 %v3728
    %v3793 = vpop.f32.mrf.mxu0
    %v3794 = vadd.f32 %v3781, %v3793
    %v3795 = vpop.f32.mrf.mxu0
    %3796 = vdwg.mxu0
    %3797 = vmatpush.bf16.xpose.msra.mxu0 0
    %3798 = vmatpush.bf16.xpose.msra.mxu0 0
    %3799 = vmatpush.bf16.xpose.msra.mxu0 0
    %3800 = vmatpush.bf16.xpose.msra.mxu0 0
    %3801 = vmatpush.bf16.xpose.msra.mxu0 0
    %3802 = vmatpush.bf16.xpose.msra.mxu0 0
    %3803 = vmatpush.bf16.xpose.msra.mxu0 %v3761
    %3804 = vmatpush.bf16.xpose.msra.mxu0 %v3757
    %3805 = vmatmul.bf16.gmra.mxu0 %v3729
    %v3806 = vpop.f32.mrf.mxu0
    %v3807 = vadd.f32 %v3794, %v3806
    %v3808 = vpop.f32.mrf.mxu0
    %3809 = vdwg.mxu0
    %3810 = vmatpush.bf16.xpose.msra.mxu0 0
    %3811 = vmatpush.bf16.xpose.msra.mxu0 0
    %3812 = vmatpush.bf16.xpose.msra.mxu0 0
    %3813 = vmatpush.bf16.xpose.msra.mxu0 0
    %3814 = vmatpush.bf16.xpose.msra.mxu0 0
    %3815 = vmatpush.bf16.xpose.msra.mxu0 0
    %3816 = vmatpush.bf16.xpose.msra.mxu0 %v3762
    %3817 = vmatpush.bf16.xpose.msra.mxu0 %v3758
    %3818 = vmatmul.bf16.gmra.mxu0 %v3730
    %v3819 = vpop.f32.mrf.mxu0
    %v3820 = vadd.f32 %v3807, %v3819
    %v3821 = vpop.f32.mrf.mxu0
    %3822 = vdwg.mxu0
    %v3831 = vunpack.c.l.b16 %v3592
    %v3832 = vunpack.c.h.b16 %v3592
    %v3833 = vunpack.c.l.b16 %v3593
    %v3834 = vunpack.c.h.b16 %v3593
    %v3835 = vunpack.c.l.b16 %v3594
    %v3836 = vunpack.c.h.b16 %v3594
    %v3837 = vunpack.c.l.b16 %v3595
    %v3838 = vunpack.c.h.b16 %v3595
    %v3839 = vunpack.c.l.b16 %v3596
    %v3840 = vunpack.c.h.b16 %v3596
    %v3841 = vunpack.c.l.b16 %v3597
    %v3842 = vunpack.c.h.b16 %v3597
    %v3843 = vunpack.c.l.b16 %v3598
    %v3844 = vunpack.c.h.b16 %v3598
    %v3845 = vunpack.c.l.b16 %v3599
    %v3846 = vunpack.c.h.b16 %v3599
    %v3847 = vpack.c.b16 %v3835, %v3831
    %v3848 = vpack.c.b16 %v3836, %v3832
    %v3849 = vpack.c.b16 %v3837, %v3833
    %v3850 = vpack.c.b16 %v3838, %v3834
    %v3851 = vpack.c.b16 %v3843, %v3839
    %v3852 = vpack.c.b16 %v3844, %v3840
    %v3853 = vpack.c.b16 %v3845, %v3841
    %v3854 = vpack.c.b16 %v3846, %v3842
    %3863 = vmatpush.bf16.xpose.msra.mxu0 0
    %3864 = vmatpush.bf16.xpose.msra.mxu0 0
    %3865 = vmatpush.bf16.xpose.msra.mxu0 0
    %3866 = vmatpush.bf16.xpose.msra.mxu0 0
    %3867 = vmatpush.bf16.xpose.msra.mxu0 0
    %3868 = vmatpush.bf16.xpose.msra.mxu0 0
    %3869 = vmatpush.bf16.xpose.msra.mxu0 %v3851
    %3870 = vmatpush.bf16.xpose.msra.mxu0 %v3847
    %3871 = vmatmul.bf16.gmra.mxu0 %v3600
    %v3872 = vpop.f32.mrf.mxu0
    %v3873 = vadd.f32 %v3820, %v3872
    %v3874 = vpop.f32.mrf.mxu0
    %3875 = vdwg.mxu0
    %3876 = vmatpush.bf16.xpose.msra.mxu0 0
    %3877 = vmatpush.bf16.xpose.msra.mxu0 0
    %3878 = vmatpush.bf16.xpose.msra.mxu0 0
    %3879 = vmatpush.bf16.xpose.msra.mxu0 0
    %3880 = vmatpush.bf16.xpose.msra.mxu0 0
    %3881 = vmatpush.bf16.xpose.msra.mxu0 0
    %3882 = vmatpush.bf16.xpose.msra.mxu0 %v3852
    %3883 = vmatpush.bf16.xpose.msra.mxu0 %v3848
    %3884 = vmatmul.bf16.gmra.mxu0 %v3601
    %v3885 = vpop.f32.mrf.mxu0
    %v3886 = vadd.f32 %v3873, %v3885
    %v3887 = vpop.f32.mrf.mxu0
    %3888 = vdwg.mxu0
    %3889 = vmatpush.bf16.xpose.msra.mxu0 0
    %3890 = vmatpush.bf16.xpose.msra.mxu0 0
    %3891 = vmatpush.bf16.xpose.msra.mxu0 0
    %3892 = vmatpush.bf16.xpose.msra.mxu0 0
    %3893 = vmatpush.bf16.xpose.msra.mxu0 0
    %3894 = vmatpush.bf16.xpose.msra.mxu0 0
    %3895 = vmatpush.bf16.xpose.msra.mxu0 %v3853
    %3896 = vmatpush.bf16.xpose.msra.mxu0 %v3849
    %3897 = vmatmul.bf16.gmra.mxu0 %v3602
    %v3898 = vpop.f32.mrf.mxu0
    %v3899 = vadd.f32 %v3886, %v3898
    %v3900 = vpop.f32.mrf.mxu0
    %3901 = vdwg.mxu0
    %3902 = vmatpush.bf16.xpose.msra.mxu0 0
    %3903 = vmatpush.bf16.xpose.msra.mxu0 0
    %3904 = vmatpush.bf16.xpose.msra.mxu0 0
    %3905 = vmatpush.bf16.xpose.msra.mxu0 0
    %3906 = vmatpush.bf16.xpose.msra.mxu0 0
    %3907 = vmatpush.bf16.xpose.msra.mxu0 0
    %3908 = vmatpush.bf16.xpose.msra.mxu0 %v3854
    %3909 = vmatpush.bf16.xpose.msra.mxu0 %v3850
    %3910 = vmatmul.bf16.gmra.mxu0 %v3603
    %v3911 = vpop.f32.mrf.mxu0
    %v3912 = vadd.f32 %v3899, %v3911
    %v3913 = vpop.f32.mrf.mxu0
    %3914 = vdwg.mxu0
    %v3915 = vld [vmem:[%s135 + $0x20] sm:$0xff]
    %v3916 = vld [vmem:[%s135 + $0x28] sm:$0xff]
    %v3917 = vld [vmem:[%s135 + $0x60] sm:$0xff]
    %v3918 = vld [vmem:[%s135 + $0x68] sm:$0xff]
    %v3919 = vld [vmem:[%s135 + $0xa0] sm:$0xff]
    %v3920 = vld [vmem:[%s135 + $0xa8] sm:$0xff]
    %v3921 = vld [vmem:[%s135 + $0xe0] sm:$0xff]
    %v3922 = vld [vmem:[%s135 + $0xe8] sm:$0xff]
    %s3923 = scalar_lea.vmem [#allocation10], 34
    %v3924 = vld [vmem:[%s3923] ss:$4 sm:$0xf]
    %v3926 = vperm.slane %v3924, 0
    %v3927 = vperm.slane %v3924, 1
    %v3928 = vperm.slane %v3924, 2
    %v3929 = vperm.slane %v3924, 3
    %v3942 = vunpack.c.l.b16 %v3915
    %v3943 = vunpack.c.h.b16 %v3915
    %v3944 = vunpack.c.l.b16 %v3916
    %v3945 = vunpack.c.h.b16 %v3916
    %v3946 = vunpack.c.l.b16 %v3917
    %v3947 = vunpack.c.h.b16 %v3917
    %v3948 = vunpack.c.l.b16 %v3918
    %v3949 = vunpack.c.h.b16 %v3918
    %v3950 = vunpack.c.l.b16 %v3919
    %v3951 = vunpack.c.h.b16 %v3919
    %v3952 = vunpack.c.l.b16 %v3920
    %v3953 = vunpack.c.h.b16 %v3920
    %v3954 = vunpack.c.l.b16 %v3921
    %v3955 = vunpack.c.h.b16 %v3921
    %v3956 = vunpack.c.l.b16 %v3922
    %v3957 = vunpack.c.h.b16 %v3922
    %v3958 = vpack.c.b16 %v3946, %v3942
    %v3959 = vpack.c.b16 %v3947, %v3943
    %v3960 = vpack.c.b16 %v3948, %v3944
    %v3961 = vpack.c.b16 %v3949, %v3945
    %v3962 = vpack.c.b16 %v3954, %v3950
    %v3963 = vpack.c.b16 %v3955, %v3951
    %v3964 = vpack.c.b16 %v3956, %v3952
    %v3965 = vpack.c.b16 %v3957, %v3953
    %3974 = vmatpush.bf16.msra.mxu0 0
    %3975 = vmatpush.bf16.msra.mxu0 0
    %3976 = vmatpush.bf16.msra.mxu0 0
    %3977 = vmatpush.bf16.msra.mxu0 0
    %3978 = vmatpush.bf16.msra.mxu0 0
    %3979 = vmatpush.bf16.msra.mxu0 0
    %3980 = vmatpush.bf16.msra.mxu0 %v3962
    %3981 = vmatpush.bf16.msra.mxu0 %v3958
    %3982 = vmatmul.bf16.gmra.mxu0 %v3534
    %v3983 = vpop.f32.mrf.mxu0
    %v3984 = vadd.f32 %v3926, %v3983
    %v3985 = vpop.f32.mrf.mxu0
    %3986 = vdwg.mxu0
    %3987 = vmatpush.bf16.msra.mxu0 0
    %3988 = vmatpush.bf16.msra.mxu0 0
    %3989 = vmatpush.bf16.msra.mxu0 0
    %3990 = vmatpush.bf16.msra.mxu0 0
    %3991 = vmatpush.bf16.msra.mxu0 0
    %3992 = vmatpush.bf16.msra.mxu0 0
    %3993 = vmatpush.bf16.msra.mxu0 %v3963
    %3994 = vmatpush.bf16.msra.mxu0 %v3959
    %3995 = vmatmul.bf16.gmra.mxu0 %v3534
    %v3996 = vpop.f32.mrf.mxu0
    %v3997 = vadd.f32 %v3927, %v3996
    %v3998 = vpop.f32.mrf.mxu0
    %3999 = vdwg.mxu0
    %4000 = vmatpush.bf16.msra.mxu0 0
    %4001 = vmatpush.bf16.msra.mxu0 0
    %4002 = vmatpush.bf16.msra.mxu0 0
    %4003 = vmatpush.bf16.msra.mxu0 0
    %4004 = vmatpush.bf16.msra.mxu0 0
    %4005 = vmatpush.bf16.msra.mxu0 0
    %4006 = vmatpush.bf16.msra.mxu0 %v3964
    %4007 = vmatpush.bf16.msra.mxu0 %v3960
    %4008 = vmatmul.bf16.gmra.mxu0 %v3534
    %v4009 = vpop.f32.mrf.mxu0
    %v4010 = vadd.f32 %v3928, %v4009
    %v4011 = vpop.f32.mrf.mxu0
    %4012 = vdwg.mxu0
    %4013 = vmatpush.bf16.msra.mxu0 0
    %4014 = vmatpush.bf16.msra.mxu0 0
    %4015 = vmatpush.bf16.msra.mxu0 0
    %4016 = vmatpush.bf16.msra.mxu0 0
    %4017 = vmatpush.bf16.msra.mxu0 0
    %4018 = vmatpush.bf16.msra.mxu0 0
    %4019 = vmatpush.bf16.msra.mxu0 %v3965
    %4020 = vmatpush.bf16.msra.mxu0 %v3961
    %4021 = vmatmul.bf16.gmra.mxu0 %v3534
    %v4022 = vpop.f32.mrf.mxu0
    %v4023 = vadd.f32 %v3929, %v4022
    %v4024 = vpop.f32.mrf.mxu0
    %4025 = vdwg.mxu0
    %v4026 = vmax.f32 %v3984, 0.0
    %v4027 = vmax.f32 %v3997, 0.0
    %v4028 = vmax.f32 %v4010, 0.0
    %v4029 = vmax.f32 %v4023, 0.0
    %v4030 = vld [vmem:[%s151 + $0x20] sm:$0xff]
    %v4031 = vld [vmem:[%s151 + $0x28] sm:$0xff]
    %v4032 = vld [vmem:[%s151 + $0x60] sm:$0xff]
    %v4033 = vld [vmem:[%s151 + $0x68] sm:$0xff]
    %v4034 = vld [vmem:[%s151 + $0xa0] sm:$0xff]
    %v4035 = vld [vmem:[%s151 + $0xa8] sm:$0xff]
    %v4036 = vld [vmem:[%s151 + $0xe0] sm:$0xff]
    %v4037 = vld [vmem:[%s151 + $0xe8] sm:$0xff]
    %v4038 = vpack.c.bf16 %v4026, %v4026
    %v4039 = vpack.c.bf16 %v4027, %v4027
    %v4040 = vpack.c.bf16 %v4028, %v4028
    %v4041 = vpack.c.bf16 %v4029, %v4029
    %v4050 = vunpack.c.l.b16 %v4030
    %v4051 = vunpack.c.h.b16 %v4030
    %v4052 = vunpack.c.l.b16 %v4031
    %v4053 = vunpack.c.h.b16 %v4031
    %v4054 = vunpack.c.l.b16 %v4032
    %v4055 = vunpack.c.h.b16 %v4032
    %v4056 = vunpack.c.l.b16 %v4033
    %v4057 = vunpack.c.h.b16 %v4033
    %v4058 = vunpack.c.l.b16 %v4034
    %v4059 = vunpack.c.h.b16 %v4034
    %v4060 = vunpack.c.l.b16 %v4035
    %v4061 = vunpack.c.h.b16 %v4035
    %v4062 = vunpack.c.l.b16 %v4036
    %v4063 = vunpack.c.h.b16 %v4036
    %v4064 = vunpack.c.l.b16 %v4037
    %v4065 = vunpack.c.h.b16 %v4037
    %v4066 = vpack.c.b16 %v4054, %v4050
    %v4067 = vpack.c.b16 %v4055, %v4051
    %v4068 = vpack.c.b16 %v4056, %v4052
    %v4069 = vpack.c.b16 %v4057, %v4053
    %v4070 = vpack.c.b16 %v4062, %v4058
    %v4071 = vpack.c.b16 %v4063, %v4059
    %v4072 = vpack.c.b16 %v4064, %v4060
    %v4073 = vpack.c.b16 %v4065, %v4061
    %4082 = vmatpush.bf16.xpose.msra.mxu0 0
    %4083 = vmatpush.bf16.xpose.msra.mxu0 0
    %4084 = vmatpush.bf16.xpose.msra.mxu0 0
    %4085 = vmatpush.bf16.xpose.msra.mxu0 0
    %4086 = vmatpush.bf16.xpose.msra.mxu0 0
    %4087 = vmatpush.bf16.xpose.msra.mxu0 0
    %4088 = vmatpush.bf16.xpose.msra.mxu0 %v4070
    %4089 = vmatpush.bf16.xpose.msra.mxu0 %v4066
    %4090 = vmatmul.bf16.gmra.mxu0 %v4038
    %v4091 = vpop.f32.mrf.mxu0
    %v4092 = vadd.f32 0.0, %v4091
    %v4093 = vpop.f32.mrf.mxu0
    %4094 = vdwg.mxu0
    %4095 = vmatpush.bf16.xpose.msra.mxu0 0
    %4096 = vmatpush.bf16.xpose.msra.mxu0 0
    %4097 = vmatpush.bf16.xpose.msra.mxu0 0
    %4098 = vmatpush.bf16.xpose.msra.mxu0 0
    %4099 = vmatpush.bf16.xpose.msra.mxu0 0
    %4100 = vmatpush.bf16.xpose.msra.mxu0 0
    %4101 = vmatpush.bf16.xpose.msra.mxu0 %v4071
    %4102 = vmatpush.bf16.xpose.msra.mxu0 %v4067
    %4103 = vmatmul.bf16.gmra.mxu0 %v4039
    %v4104 = vpop.f32.mrf.mxu0
    %v4105 = vadd.f32 %v4092, %v4104
    %v4106 = vpop.f32.mrf.mxu0
    %4107 = vdwg.mxu0
    %4108 = vmatpush.bf16.xpose.msra.mxu0 0
    %4109 = vmatpush.bf16.xpose.msra.mxu0 0
    %4110 = vmatpush.bf16.xpose.msra.mxu0 0
    %4111 = vmatpush.bf16.xpose.msra.mxu0 0
    %4112 = vmatpush.bf16.xpose.msra.mxu0 0
    %4113 = vmatpush.bf16.xpose.msra.mxu0 0
    %4114 = vmatpush.bf16.xpose.msra.mxu0 %v4072
    %4115 = vmatpush.bf16.xpose.msra.mxu0 %v4068
    %4116 = vmatmul.bf16.gmra.mxu0 %v4040
    %v4117 = vpop.f32.mrf.mxu0
    %v4118 = vadd.f32 %v4105, %v4117
    %v4119 = vpop.f32.mrf.mxu0
    %4120 = vdwg.mxu0
    %4121 = vmatpush.bf16.xpose.msra.mxu0 0
    %4122 = vmatpush.bf16.xpose.msra.mxu0 0
    %4123 = vmatpush.bf16.xpose.msra.mxu0 0
    %4124 = vmatpush.bf16.xpose.msra.mxu0 0
    %4125 = vmatpush.bf16.xpose.msra.mxu0 0
    %4126 = vmatpush.bf16.xpose.msra.mxu0 0
    %4127 = vmatpush.bf16.xpose.msra.mxu0 %v4073
    %4128 = vmatpush.bf16.xpose.msra.mxu0 %v4069
    %4129 = vmatmul.bf16.gmra.mxu0 %v4041
    %v4130 = vpop.f32.mrf.mxu0
    %v4131 = vadd.f32 %v4118, %v4130
    %v4132 = vpop.f32.mrf.mxu0
    %4133 = vdwg.mxu0
    %v4134 = vadd.f32 %v3912, %v4131
    %v4135 = vld [vmem:[%s135 + $0x30] sm:$0xff]
    %v4136 = vld [vmem:[%s135 + $0x38] sm:$0xff]
    %v4137 = vld [vmem:[%s135 + $0x70] sm:$0xff]
    %v4138 = vld [vmem:[%s135 + $0x78] sm:$0xff]
    %v4139 = vld [vmem:[%s135 + $0xb0] sm:$0xff]
    %v4140 = vld [vmem:[%s135 + $0xb8] sm:$0xff]
    %v4141 = vld [vmem:[%s135 + $0xf0] sm:$0xff]
    %v4142 = vld [vmem:[%s135 + $0xf8] sm:$0xff]
    %s4143 = scalar_lea.vmem [#allocation10], 50
    %v4144 = vld [vmem:[%s4143] ss:$4 sm:$0xf]
    %v4146 = vperm.slane %v4144, 0
    %v4147 = vperm.slane %v4144, 1
    %v4148 = vperm.slane %v4144, 2
    %v4149 = vperm.slane %v4144, 3
    %v4162 = vunpack.c.l.b16 %v4135
    %v4163 = vunpack.c.h.b16 %v4135
    %v4164 = vunpack.c.l.b16 %v4136
    %v4165 = vunpack.c.h.b16 %v4136
    %v4166 = vunpack.c.l.b16 %v4137
    %v4167 = vunpack.c.h.b16 %v4137
    %v4168 = vunpack.c.l.b16 %v4138
    %v4169 = vunpack.c.h.b16 %v4138
    %v4170 = vunpack.c.l.b16 %v4139
    %v4171 = vunpack.c.h.b16 %v4139
    %v4172 = vunpack.c.l.b16 %v4140
    %v4173 = vunpack.c.h.b16 %v4140
    %v4174 = vunpack.c.l.b16 %v4141
    %v4175 = vunpack.c.h.b16 %v4141
    %v4176 = vunpack.c.l.b16 %v4142
    %v4177 = vunpack.c.h.b16 %v4142
    %v4178 = vpack.c.b16 %v4166, %v4162
    %v4179 = vpack.c.b16 %v4167, %v4163
    %v4180 = vpack.c.b16 %v4168, %v4164
    %v4181 = vpack.c.b16 %v4169, %v4165
    %v4182 = vpack.c.b16 %v4174, %v4170
    %v4183 = vpack.c.b16 %v4175, %v4171
    %v4184 = vpack.c.b16 %v4176, %v4172
    %v4185 = vpack.c.b16 %v4177, %v4173
    %4194 = vmatpush.bf16.msra.mxu0 0
    %4195 = vmatpush.bf16.msra.mxu0 0
    %4196 = vmatpush.bf16.msra.mxu0 0
    %4197 = vmatpush.bf16.msra.mxu0 0
    %4198 = vmatpush.bf16.msra.mxu0 0
    %4199 = vmatpush.bf16.msra.mxu0 0
    %4200 = vmatpush.bf16.msra.mxu0 %v4182
    %4201 = vmatpush.bf16.msra.mxu0 %v4178
    %4202 = vmatmul.bf16.gmra.mxu0 %v3534
    %v4203 = vpop.f32.mrf.mxu0
    %v4204 = vadd.f32 %v4146, %v4203
    %v4205 = vpop.f32.mrf.mxu0
    %4206 = vdwg.mxu0
    %4207 = vmatpush.bf16.msra.mxu0 0
    %4208 = vmatpush.bf16.msra.mxu0 0
    %4209 = vmatpush.bf16.msra.mxu0 0
    %4210 = vmatpush.bf16.msra.mxu0 0
    %4211 = vmatpush.bf16.msra.mxu0 0
    %4212 = vmatpush.bf16.msra.mxu0 0
    %4213 = vmatpush.bf16.msra.mxu0 %v4183
    %4214 = vmatpush.bf16.msra.mxu0 %v4179
    %4215 = vmatmul.bf16.gmra.mxu0 %v3534
    %v4216 = vpop.f32.mrf.mxu0
    %v4217 = vadd.f32 %v4147, %v4216
    %v4218 = vpop.f32.mrf.mxu0
    %4219 = vdwg.mxu0
    %4220 = vmatpush.bf16.msra.mxu0 0
    %4221 = vmatpush.bf16.msra.mxu0 0
    %4222 = vmatpush.bf16.msra.mxu0 0
    %4223 = vmatpush.bf16.msra.mxu0 0
    %4224 = vmatpush.bf16.msra.mxu0 0
    %4225 = vmatpush.bf16.msra.mxu0 0
    %4226 = vmatpush.bf16.msra.mxu0 %v4184
    %4227 = vmatpush.bf16.msra.mxu0 %v4180
    %4228 = vmatmul.bf16.gmra.mxu0 %v3534
    %v4229 = vpop.f32.mrf.mxu0
    %v4230 = vadd.f32 %v4148, %v4229
    %v4231 = vpop.f32.mrf.mxu0
    %4232 = vdwg.mxu0
    %4233 = vmatpush.bf16.msra.mxu0 0
    %4234 = vmatpush.bf16.msra.mxu0 0
    %4235 = vmatpush.bf16.msra.mxu0 0
    %4236 = vmatpush.bf16.msra.mxu0 0
    %4237 = vmatpush.bf16.msra.mxu0 0
    %4238 = vmatpush.bf16.msra.mxu0 0
    %4239 = vmatpush.bf16.msra.mxu0 %v4185
    %4240 = vmatpush.bf16.msra.mxu0 %v4181
    %4241 = vmatmul.bf16.gmra.mxu0 %v3534
    %v4242 = vpop.f32.mrf.mxu0
    %v4243 = vadd.f32 %v4149, %v4242
    %v4244 = vpop.f32.mrf.mxu0
    %4245 = vdwg.mxu0
    %v4246 = vmax.f32 %v4204, 0.0
    %v4247 = vmax.f32 %v4217, 0.0
    %v4248 = vmax.f32 %v4230, 0.0
    %v4249 = vmax.f32 %v4243, 0.0
    %v4250 = vld [vmem:[%s151 + $0x30] sm:$0xff]
    %v4251 = vld [vmem:[%s151 + $0x38] sm:$0xff]
    %v4252 = vld [vmem:[%s151 + $0x70] sm:$0xff]
    %v4253 = vld [vmem:[%s151 + $0x78] sm:$0xff]
    %v4254 = vld [vmem:[%s151 + $0xb0] sm:$0xff]
    %v4255 = vld [vmem:[%s151 + $0xb8] sm:$0xff]
    %v4256 = vld [vmem:[%s151 + $0xf0] sm:$0xff]
    %v4257 = vld [vmem:[%s151 + $0xf8] sm:$0xff]
    %v4258 = vpack.c.bf16 %v4246, %v4246
    %v4259 = vpack.c.bf16 %v4247, %v4247
    %v4260 = vpack.c.bf16 %v4248, %v4248
    %v4261 = vpack.c.bf16 %v4249, %v4249
    %v4270 = vunpack.c.l.b16 %v4250
    %v4271 = vunpack.c.h.b16 %v4250
    %v4272 = vunpack.c.l.b16 %v4251
    %v4273 = vunpack.c.h.b16 %v4251
    %v4274 = vunpack.c.l.b16 %v4252
    %v4275 = vunpack.c.h.b16 %v4252
    %v4276 = vunpack.c.l.b16 %v4253
    %v4277 = vunpack.c.h.b16 %v4253
    %v4278 = vunpack.c.l.b16 %v4254
    %v4279 = vunpack.c.h.b16 %v4254
    %v4280 = vunpack.c.l.b16 %v4255
    %v4281 = vunpack.c.h.b16 %v4255
    %v4282 = vunpack.c.l.b16 %v4256
    %v4283 = vunpack.c.h.b16 %v4256
    %v4284 = vunpack.c.l.b16 %v4257
    %v4285 = vunpack.c.h.b16 %v4257
    %v4286 = vpack.c.b16 %v4274, %v4270
    %v4287 = vpack.c.b16 %v4275, %v4271
    %v4288 = vpack.c.b16 %v4276, %v4272
    %v4289 = vpack.c.b16 %v4277, %v4273
    %v4290 = vpack.c.b16 %v4282, %v4278
    %v4291 = vpack.c.b16 %v4283, %v4279
    %v4292 = vpack.c.b16 %v4284, %v4280
    %v4293 = vpack.c.b16 %v4285, %v4281
    %4302 = vmatpush.bf16.xpose.msra.mxu0 0
    %4303 = vmatpush.bf16.xpose.msra.mxu0 0
    %4304 = vmatpush.bf16.xpose.msra.mxu0 0
    %4305 = vmatpush.bf16.xpose.msra.mxu0 0
    %4306 = vmatpush.bf16.xpose.msra.mxu0 0
    %4307 = vmatpush.bf16.xpose.msra.mxu0 0
    %4308 = vmatpush.bf16.xpose.msra.mxu0 %v4290
    %4309 = vmatpush.bf16.xpose.msra.mxu0 %v4286
    %4310 = vmatmul.bf16.gmra.mxu0 %v4258
    %v4311 = vpop.f32.mrf.mxu0
    %v4312 = vadd.f32 0.0, %v4311
    %v4313 = vpop.f32.mrf.mxu0
    %4314 = vdwg.mxu0
    %4315 = vmatpush.bf16.xpose.msra.mxu0 0
    %4316 = vmatpush.bf16.xpose.msra.mxu0 0
    %4317 = vmatpush.bf16.xpose.msra.mxu0 0
    %4318 = vmatpush.bf16.xpose.msra.mxu0 0
    %4319 = vmatpush.bf16.xpose.msra.mxu0 0
    %4320 = vmatpush.bf16.xpose.msra.mxu0 0
    %4321 = vmatpush.bf16.xpose.msra.mxu0 %v4291
    %4322 = vmatpush.bf16.xpose.msra.mxu0 %v4287
    %4323 = vmatmul.bf16.gmra.mxu0 %v4259
    %v4324 = vpop.f32.mrf.mxu0
    %v4325 = vadd.f32 %v4312, %v4324
    %v4326 = vpop.f32.mrf.mxu0
    %4327 = vdwg.mxu0
    %4328 = vmatpush.bf16.xpose.msra.mxu0 0
    %4329 = vmatpush.bf16.xpose.msra.mxu0 0
    %4330 = vmatpush.bf16.xpose.msra.mxu0 0
    %4331 = vmatpush.bf16.xpose.msra.mxu0 0
    %4332 = vmatpush.bf16.xpose.msra.mxu0 0
    %4333 = vmatpush.bf16.xpose.msra.mxu0 0
    %4334 = vmatpush.bf16.xpose.msra.mxu0 %v4292
    %4335 = vmatpush.bf16.xpose.msra.mxu0 %v4288
    %4336 = vmatmul.bf16.gmra.mxu0 %v4260
    %v4337 = vpop.f32.mrf.mxu0
    %v4338 = vadd.f32 %v4325, %v4337
    %v4339 = vpop.f32.mrf.mxu0
    %4340 = vdwg.mxu0
    %4341 = vmatpush.bf16.xpose.msra.mxu0 0
    %4342 = vmatpush.bf16.xpose.msra.mxu0 0
    %4343 = vmatpush.bf16.xpose.msra.mxu0 0
    %4344 = vmatpush.bf16.xpose.msra.mxu0 0
    %4345 = vmatpush.bf16.xpose.msra.mxu0 0
    %4346 = vmatpush.bf16.xpose.msra.mxu0 0
    %4347 = vmatpush.bf16.xpose.msra.mxu0 %v4293
    %4348 = vmatpush.bf16.xpose.msra.mxu0 %v4289
    %4349 = vmatmul.bf16.gmra.mxu0 %v4261
    %v4350 = vpop.f32.mrf.mxu0
    %v4351 = vadd.f32 %v4338, %v4350
    %v4352 = vpop.f32.mrf.mxu0
    %4353 = vdwg.mxu0
    %v4354 = vadd.f32 %v4134, %v4351
    %v4355 = vld [vmem:[#allocation5 + $0xa3] sm:$0x1]
    %v4356 = vperm.slane %v4355, 0
    %v4357 = vadd.f32 %v4354, %v4356
    %v4358 = vadd.f32 %v3468, %v4357
    %v4359 = vld [vmem:[#allocation5 + $0x99] sm:$0x1]
    %v4360 = vld [vmem:[#allocation5 + $0x9a] sm:$0x1]
    %v4361 = vsel %vm704, %v4358, 0.0
    %4362 = vadd.xlane.f32.xlu0 %v4361
    %v4363 = vpop.xlane.xlu0 %4362
    %v4364 = vmul.f32 %v4363, %v714
    %v4365 = vsub.f32 %v4358, %v4364
    %v4366 = vmul.f32 %v4365, %v4365
    %v4367 = vsel %vm704, %v4366, 0.0
    %4368 = vadd.xlane.f32.xlu0 %v4367
    %v4369 = vpop.xlane.xlu0 %4368
    %v4370 = vmul.f32 %v4369, %v714
    %v4371 = vadd.f32 %v4370, 1e-05
    %v4372 = vrsqrt.pop %v4371
    %v4373 = vmul.f32 %v4372, %v4371
    %v4374 = vmul.f32 %v4373, %v4372
    %v4375 = vmul.f32 0.5, %v4374
    %v4376 = vsub.f32 1.5, %v4375
    %v4377 = vmul.f32 %v4372, %v4376
    %vm4378 = vweird.f32 %v4371
    %vm4379 = vweird.f32 %v4372
    %vm4380 = vmor %vm4378, %vm4379
    %v4381 = vsel %vm4380, %v4372, %v4377
    %v4382 = vmul.f32 %v4365, %v4381
    %v4383 = vperm.slane %v4359, 0
    %v4384 = vmul.f32 %v4382, %v4383
    %v4385 = vperm.slane %v4360, 0
    %v4386 = vadd.f32 %v4384, %v4385
    %s4387 = scalar_lea.vmem [#allocation8], 160
    %v4388 = vld [vmem:[%s4387] sm:$0xff]
    %v4389 = vld [vmem:[%s4387 + $0x8] sm:$0xff]
    %v4390 = vld [vmem:[%s4387 + $0x10] sm:$0xff]
    %v4391 = vld [vmem:[%s4387 + $0x18] sm:$0xff]
    %v4392 = vld [vmem:[%s4387 + $0x20] sm:$0x1]
    %v4393 = vperm.slane %v4392, 0
    %v4395 = vsel %vm253, %v4386, 0
    %4397 = vmatpush.msra.mxu0 0.0
    %4398 = vmatpush.msra.mxu0 0.0
    %4399 = vmatpush.msra.mxu0 0.0
    %4400 = vmatpush.msra.mxu0 0.0
    %4401 = vmatpush.msra.mxu0 0.0
    %4402 = vmatpush.msra.mxu0 0.0
    %4403 = vmatpush.msra.mxu0 0.0
    %4404 = vmatpush.msra.mxu0 0.0
    %4405 = vmatpush.msra.mxu0 0.0
    %4406 = vmatpush.msra.mxu0 0.0
    %4407 = vmatpush.msra.mxu0 0.0
    %4408 = vmatpush.msra.mxu0 0.0
    %4409 = vmatpush.msra.mxu0 %v4391
    %4410 = vmatpush.msra.mxu0 %v4390
    %4411 = vmatpush.msra.mxu0 %v4389
    %4412 = vmatpush.msra.mxu0 %v4388
    %4413 = vmatmul.f32.gmra.mxu0 %v4395
    %v4414 = vpop.f32.mrf.mxu0
    %v4415 = vadd.f32 %v4393, %v4414
    %4416 = vdwg.mxu0
    %4421 = vrot.lane.b32.xlu0 %v4388, 96
    %v4422 = vpop.permute.xlu0 %4421
    %4423 = vrot.lane.b32.xlu0 %v4389, 96
    %v4424 = vpop.permute.xlu0 %4423
    %4425 = vrot.lane.b32.xlu0 %v4390, 96
    %v4426 = vpop.permute.xlu0 %4425
    %4427 = vrot.lane.b32.xlu0 %v4391, 96
    %v4428 = vpop.permute.xlu0 %4427
    %4434 = vrot.lane.b32.xlu0 %v4393, 96
    %v4435 = vpop.permute.xlu0 %4434
    %4437 = vmatpush.msra.mxu0 0.0
    %4438 = vmatpush.msra.mxu0 0.0
    %4439 = vmatpush.msra.mxu0 0.0
    %4440 = vmatpush.msra.mxu0 0.0
    %4441 = vmatpush.msra.mxu0 0.0
    %4442 = vmatpush.msra.mxu0 0.0
    %4443 = vmatpush.msra.mxu0 0.0
    %4444 = vmatpush.msra.mxu0 0.0
    %4445 = vmatpush.msra.mxu0 0.0
    %4446 = vmatpush.msra.mxu0 0.0
    %4447 = vmatpush.msra.mxu0 0.0
    %4448 = vmatpush.msra.mxu0 0.0
    %4449 = vmatpush.msra.mxu0 %v4428
    %4450 = vmatpush.msra.mxu0 %v4426
    %4451 = vmatpush.msra.mxu0 %v4424
    %4452 = vmatpush.msra.mxu0 %v4422
    %4453 = vmatmul.f32.gmra.mxu0 %v4395
    %v4454 = vpop.f32.mrf.mxu0
    %v4455 = vadd.f32 %v4435, %v4454
    %4456 = vdwg.mxu0
    %v4458 = vsel %vm499, %v4415, 0
    %v4461 = vsel %vm499, %v4455, 0
    %4463 = vmatpush.xpose.msra.mxu0 0.0
    %4464 = vmatpush.xpose.msra.mxu0 0.0
    %4465 = vmatpush.xpose.msra.mxu0 0.0
    %4466 = vmatpush.xpose.msra.mxu0 0.0
    %4467 = vmatpush.xpose.msra.mxu0 0.0
    %4468 = vmatpush.xpose.msra.mxu0 0.0
    %4469 = vmatpush.xpose.msra.mxu0 0.0
    %4470 = vmatpush.xpose.msra.mxu0 0.0
    %4471 = vmatpush.xpose.msra.mxu0 0.0
    %4472 = vmatpush.xpose.msra.mxu0 0.0
    %4473 = vmatpush.xpose.msra.mxu0 0.0
    %4474 = vmatpush.xpose.msra.mxu0 0.0
    %4475 = vmatpush.xpose.msra.mxu0 0.0
    %4476 = vmatpush.xpose.msra.mxu0 0.0
    %4477 = vmatpush.xpose.msra.mxu0 0.0
    %4478 = vmatpush.xpose.msra.mxu0 %v4461
    %4479 = vmatmul.f32.gmra.mxu0 %v4458
    %v4480 = vpop.f32.mrf.mxu0
    %v4481 = vadd.f32 0.0, %v4480
    %4482 = vdwg.mxu0
    %v4483 = vmul.f32 %v4481, 0.25
    %v4484 = vsel %vm527, %v4483, -inf
    %4485 = vmax.xlane.f32.xlu0 %v4484
    %v4486 = vpop.xlane.xlu0 %4485
    %v4487 = vsub.f32 %v4483, %v4486
    %v4488 = vmul.f32 %v4487, 1.442695
    %v4489 = vpow.pop %v4488
    %v4490 = vsel %vm527, %v4489, 0.0
    %4491 = vadd.xlane.f32.xlu0 %v4490
    %v4492 = vpop.xlane.xlu0 %4491
    %v4493 = vrcp.pop %v4492
    %v4494 = vmul.f32 %v4489, %v4493
    %4495 = vrot.lane.b32.xlu0 %v4455, 96
    %v4496 = vpop.permute.xlu0 %4495
    %v4498 = vsel %vm541, %v4494, 0
    %v4500 = vsel %vm545, %v4496, 0
    %4502 = vmatpush.msra.mxu0 0.0
    %4503 = vmatpush.msra.mxu0 0.0
    %4504 = vmatpush.msra.mxu0 0.0
    %4505 = vmatpush.msra.mxu0 0.0
    %4506 = vmatpush.msra.mxu0 0.0
    %4507 = vmatpush.msra.mxu0 0.0
    %4508 = vmatpush.msra.mxu0 0.0
    %4509 = vmatpush.msra.mxu0 0.0
    %4510 = vmatpush.msra.mxu0 0.0
    %4511 = vmatpush.msra.mxu0 0.0
    %4512 = vmatpush.msra.mxu0 0.0
    %4513 = vmatpush.msra.mxu0 0.0
    %4514 = vmatpush.msra.mxu0 0.0
    %4515 = vmatpush.msra.mxu0 0.0
    %4516 = vmatpush.msra.mxu0 0.0
    %4517 = vmatpush.msra.mxu0 %v4500
    %4518 = vmatmul.f32.gmra.mxu0 %v4498
    %v4519 = vpop.f32.mrf.mxu0
    %v4520 = vadd.f32 0.0, %v4519
    %4521 = vdwg.mxu0
    %v4522 = vld [vmem:[%s4387] sm:$0xff]
    %v4523 = vld [vmem:[%s4387 + $0x8] sm:$0xff]
    %4524 = vrot.lane.b32.xlu0 %v4415, 112
    %v4525 = vpop.permute.xlu0 %4524
    %4526 = vrot.lane.b32.xlu0 %v4455, 112
    %v4527 = vpop.permute.xlu0 %4526
    %v4528 = vsel %vm499, %v4525, 0
    %v4530 = vsel %vm499, %v4527, 0
    %4532 = vmatpush.xpose.msra.mxu0 0.0
    %4533 = vmatpush.xpose.msra.mxu0 0.0
    %4534 = vmatpush.xpose.msra.mxu0 0.0
    %4535 = vmatpush.xpose.msra.mxu0 0.0
    %4536 = vmatpush.xpose.msra.mxu0 0.0
    %4537 = vmatpush.xpose.msra.mxu0 0.0
    %4538 = vmatpush.xpose.msra.mxu0 0.0
    %4539 = vmatpush.xpose.msra.mxu0 0.0
    %4540 = vmatpush.xpose.msra.mxu0 0.0
    %4541 = vmatpush.xpose.msra.mxu0 0.0
    %4542 = vmatpush.xpose.msra.mxu0 0.0
    %4543 = vmatpush.xpose.msra.mxu0 0.0
    %4544 = vmatpush.xpose.msra.mxu0 0.0
    %4545 = vmatpush.xpose.msra.mxu0 0.0
    %4546 = vmatpush.xpose.msra.mxu0 0.0
    %4547 = vmatpush.xpose.msra.mxu0 %v4530
    %4548 = vmatmul.f32.gmra.mxu0 %v4528
    %v4549 = vpop.f32.mrf.mxu0
    %v4550 = vadd.f32 0.0, %v4549
    %4551 = vdwg.mxu0
    %v4552 = vmul.f32 %v4550, 0.25
    %v4553 = vsel %vm527, %v4552, -inf
    %4554 = vmax.xlane.f32.xlu0 %v4553
    %v4555 = vpop.xlane.xlu0 %4554
    %v4556 = vsub.f32 %v4552, %v4555
    %v4557 = vmul.f32 %v4556, 1.442695
    %v4558 = vpow.pop %v4557
    %v4559 = vsel %vm527, %v4558, 0.0
    %4560 = vadd.xlane.f32.xlu0 %v4559
    %v4561 = vpop.xlane.xlu0 %4560
    %v4562 = vrcp.pop %v4561
    %v4563 = vmul.f32 %v4558, %v4562
    %4564 = vrot.lane.b32.xlu0 %v4455, 80
    %v4565 = vpop.permute.xlu0 %4564
    %v4567 = vsel %vm541, %v4563, 0
    %v4569 = vsel %vm545, %v4565, 0
    %4571 = vmatpush.msra.mxu0 0.0
    %4572 = vmatpush.msra.mxu0 0.0
    %4573 = vmatpush.msra.mxu0 0.0
    %4574 = vmatpush.msra.mxu0 0.0
    %4575 = vmatpush.msra.mxu0 0.0
    %4576 = vmatpush.msra.mxu0 0.0
    %4577 = vmatpush.msra.mxu0 0.0
    %4578 = vmatpush.msra.mxu0 0.0
    %4579 = vmatpush.msra.mxu0 0.0
    %4580 = vmatpush.msra.mxu0 0.0
    %4581 = vmatpush.msra.mxu0 0.0
    %4582 = vmatpush.msra.mxu0 0.0
    %4583 = vmatpush.msra.mxu0 0.0
    %4584 = vmatpush.msra.mxu0 0.0
    %4585 = vmatpush.msra.mxu0 0.0
    %4586 = vmatpush.msra.mxu0 %v4569
    %4587 = vmatmul.f32.gmra.mxu0 %v4567
    %v4588 = vpop.f32.mrf.mxu0
    %v4589 = vadd.f32 0.0, %v4588
    %4590 = vdwg.mxu0
    %4591 = vrot.lane.b32.xlu0 %v4390, 32
    %v4592 = vpop.permute.xlu0 %4591
    %4593 = vrot.lane.b32.xlu0 %v4391, 32
    %v4594 = vpop.permute.xlu0 %4593
    %v4598 = vsel %vm499, %v4589, 0
    %4600 = vmatpush.msra.mxu0 0.0
    %4601 = vmatpush.msra.mxu0 0.0
    %4602 = vmatpush.msra.mxu0 0.0
    %4603 = vmatpush.msra.mxu0 0.0
    %4604 = vmatpush.msra.mxu0 0.0
    %4605 = vmatpush.msra.mxu0 0.0
    %4606 = vmatpush.msra.mxu0 0.0
    %4607 = vmatpush.msra.mxu0 0.0
    %4608 = vmatpush.msra.mxu0 0.0
    %4609 = vmatpush.msra.mxu0 0.0
    %4610 = vmatpush.msra.mxu0 0.0
    %4611 = vmatpush.msra.mxu0 0.0
    %4612 = vmatpush.msra.mxu0 0.0
    %4613 = vmatpush.msra.mxu0 0.0
    %4614 = vmatpush.msra.mxu0 %v4594
    %4615 = vmatpush.msra.mxu0 %v4592
    %4616 = vmatmul.f32.gmra.mxu0 %v4598
    %v4617 = vpop.f32.mrf.mxu0
    %v4618 = vadd.f32 0.0, %v4617
    %4619 = vdwg.mxu0
    %4622 = vrot.lane.b32.xlu0 %v4522, 32
    %v4623 = vpop.permute.xlu0 %4622
    %4624 = vrot.lane.b32.xlu0 %v4523, 32
    %v4625 = vpop.permute.xlu0 %4624
    %v4629 = vsel %vm499, %v4520, 0
    %4631 = vmatpush.msra.mxu0 0.0
    %4632 = vmatpush.msra.mxu0 0.0
    %4633 = vmatpush.msra.mxu0 0.0
    %4634 = vmatpush.msra.mxu0 0.0
    %4635 = vmatpush.msra.mxu0 0.0
    %4636 = vmatpush.msra.mxu0 0.0
    %4637 = vmatpush.msra.mxu0 0.0
    %4638 = vmatpush.msra.mxu0 0.0
    %4639 = vmatpush.msra.mxu0 0.0
    %4640 = vmatpush.msra.mxu0 0.0
    %4641 = vmatpush.msra.mxu0 0.0
    %4642 = vmatpush.msra.mxu0 0.0
    %4643 = vmatpush.msra.mxu0 0.0
    %4644 = vmatpush.msra.mxu0 0.0
    %4645 = vmatpush.msra.mxu0 %v4625
    %4646 = vmatpush.msra.mxu0 %v4623
    %4647 = vmatmul.f32.gmra.mxu0 %v4629
    %v4648 = vpop.f32.mrf.mxu0
    %v4649 = vadd.f32 %v4618, %v4648
    %4650 = vdwg.mxu0
    %4651 = vrot.lane.b32.xlu0 %v4393, 32
    %v4652 = vpop.permute.xlu0 %4651
    %v4654 = vadd.f32 %v4649, %v4652
    %v4655 = vadd.f32 %v4386, %v4654
    %v4656 = vld [vmem:[#allocation5 + $0x9b] sm:$0x1]
    %v4657 = vld [vmem:[#allocation5 + $0x9c] sm:$0x1]
    %v4658 = vsel %vm704, %v4655, 0.0
    %4659 = vadd.xlane.f32.xlu0 %v4658
    %v4660 = vpop.xlane.xlu0 %4659
    %v4661 = vmul.f32 %v4660, %v714
    %v4662 = vsub.f32 %v4655, %v4661
    %v4663 = vmul.f32 %v4662, %v4662
    %v4664 = vsel %vm704, %v4663, 0.0
    %4665 = vadd.xlane.f32.xlu0 %v4664
    %v4666 = vpop.xlane.xlu0 %4665
    %v4667 = vmul.f32 %v4666, %v714
    %v4668 = vadd.f32 %v4667, 1e-05
    %v4669 = vrsqrt.pop %v4668
    %v4670 = vmul.f32 %v4669, %v4668
    %v4671 = vmul.f32 %v4670, %v4669
    %v4672 = vmul.f32 0.5, %v4671
    %v4673 = vsub.f32 1.5, %v4672
    %v4674 = vmul.f32 %v4669, %v4673
    %vm4675 = vweird.f32 %v4668
    %vm4676 = vweird.f32 %v4669
    %vm4677 = vmor %vm4675, %vm4676
    %v4678 = vsel %vm4677, %v4669, %v4674
    %v4679 = vmul.f32 %v4662, %v4678
    %v4680 = vperm.slane %v4656, 0
    %v4681 = vmul.f32 %v4679, %v4680
    %v4682 = vperm.slane %v4657, 0
    %v4683 = vadd.f32 %v4681, %v4682
    %s4684 = scalar_lea.vmem [#allocation8], 200
    %v4685 = vld [vmem:[%s4684] sm:$0xff]
    %v4686 = vld [vmem:[%s4684 + $0x8] sm:$0xff]
    %v4687 = vld [vmem:[%s4684 + $0x10] sm:$0xff]
    %v4688 = vld [vmem:[%s4684 + $0x18] sm:$0xff]
    %v4689 = vld [vmem:[%s4684 + $0x20] sm:$0x1]
    %v4690 = vperm.slane %v4689, 0
    %v4692 = vsel %vm253, %v4683, 0
    %4694 = vmatpush.msra.mxu0 0.0
    %4695 = vmatpush.msra.mxu0 0.0
    %4696 = vmatpush.msra.mxu0 0.0
    %4697 = vmatpush.msra.mxu0 0.0
    %4698 = vmatpush.msra.mxu0 0.0
    %4699 = vmatpush.msra.mxu0 0.0
    %4700 = vmatpush.msra.mxu0 0.0
    %4701 = vmatpush.msra.mxu0 0.0
    %4702 = vmatpush.msra.mxu0 0.0
    %4703 = vmatpush.msra.mxu0 0.0
    %4704 = vmatpush.msra.mxu0 0.0
    %4705 = vmatpush.msra.mxu0 0.0
    %4706 = vmatpush.msra.mxu0 %v4688
    %4707 = vmatpush.msra.mxu0 %v4687
    %4708 = vmatpush.msra.mxu0 %v4686
    %4709 = vmatpush.msra.mxu0 %v4685
    %4710 = vmatmul.f32.gmra.mxu0 %v4692
    %v4711 = vpop.f32.mrf.mxu0
    %v4712 = vadd.f32 %v4690, %v4711
    %4713 = vdwg.mxu0
    %4718 = vrot.lane.b32.xlu0 %v4685, 96
    %v4719 = vpop.permute.xlu0 %4718
    %4720 = vrot.lane.b32.xlu0 %v4686, 96
    %v4721 = vpop.permute.xlu0 %4720
    %4722 = vrot.lane.b32.xlu0 %v4687, 96
    %v4723 = vpop.permute.xlu0 %4722
    %4724 = vrot.lane.b32.xlu0 %v4688, 96
    %v4725 = vpop.permute.xlu0 %4724
    %4731 = vrot.lane.b32.xlu0 %v4690, 96
    %v4732 = vpop.permute.xlu0 %4731
    %4734 = vmatpush.msra.mxu0 0.0
    %4735 = vmatpush.msra.mxu0 0.0
    %4736 = vmatpush.msra.mxu0 0.0
    %4737 = vmatpush.msra.mxu0 0.0
    %4738 = vmatpush.msra.mxu0 0.0
    %4739 = vmatpush.msra.mxu0 0.0
    %4740 = vmatpush.msra.mxu0 0.0
    %4741 = vmatpush.msra.mxu0 0.0
    %4742 = vmatpush.msra.mxu0 0.0
    %4743 = vmatpush.msra.mxu0 0.0
    %4744 = vmatpush.msra.mxu0 0.0
    %4745 = vmatpush.msra.mxu0 0.0
    %4746 = vmatpush.msra.mxu0 %v4725
    %4747 = vmatpush.msra.mxu0 %v4723
    %4748 = vmatpush.msra.mxu0 %v4721
    %4749 = vmatpush.msra.mxu0 %v4719
    %4750 = vmatmul.f32.gmra.mxu0 %v3220
    %v4751 = vpop.f32.mrf.mxu0
    %v4752 = vadd.f32 %v4732, %v4751
    %4753 = vdwg.mxu0
    %v4755 = vsel %vm499, %v4712, 0
    %v4758 = vsel %vm499, %v4752, 0
    %4760 = vmatpush.xpose.msra.mxu0 0.0
    %4761 = vmatpush.xpose.msra.mxu0 0.0
    %4762 = vmatpush.xpose.msra.mxu0 0.0
    %4763 = vmatpush.xpose.msra.mxu0 0.0
    %4764 = vmatpush.xpose.msra.mxu0 0.0
    %4765 = vmatpush.xpose.msra.mxu0 0.0
    %4766 = vmatpush.xpose.msra.mxu0 0.0
    %4767 = vmatpush.xpose.msra.mxu0 0.0
    %4768 = vmatpush.xpose.msra.mxu0 0.0
    %4769 = vmatpush.xpose.msra.mxu0 0.0
    %4770 = vmatpush.xpose.msra.mxu0 0.0
    %4771 = vmatpush.xpose.msra.mxu0 0.0
    %4772 = vmatpush.xpose.msra.mxu0 0.0
    %4773 = vmatpush.xpose.msra.mxu0 0.0
    %4774 = vmatpush.xpose.msra.mxu0 0.0
    %4775 = vmatpush.xpose.msra.mxu0 %v4758
    %4776 = vmatmul.f32.gmra.mxu0 %v4755
    %v4777 = vpop.f32.mrf.mxu0
    %v4778 = vadd.f32 0.0, %v4777
    %4779 = vdwg.mxu0
    %v4780 = vmul.f32 %v4778, 0.25
    %v4781 = vsel %vm527, %v4780, -inf
    %4782 = vmax.xlane.f32.xlu0 %v4781
    %v4783 = vpop.xlane.xlu0 %4782
    %v4784 = vsub.f32 %v4780, %v4783
    %v4785 = vmul.f32 %v4784, 1.442695
    %v4786 = vpow.pop %v4785
    %v4787 = vsel %vm527, %v4786, 0.0
    %4788 = vadd.xlane.f32.xlu0 %v4787
    %v4789 = vpop.xlane.xlu0 %4788
    %v4790 = vrcp.pop %v4789
    %v4791 = vmul.f32 %v4786, %v4790
    %4792 = vrot.lane.b32.xlu0 %v4752, 96
    %v4793 = vpop.permute.xlu0 %4792
    %v4795 = vsel %vm541, %v4791, 0
    %v4797 = vsel %vm545, %v4793, 0
    %4799 = vmatpush.msra.mxu0 0.0
    %4800 = vmatpush.msra.mxu0 0.0
    %4801 = vmatpush.msra.mxu0 0.0
    %4802 = vmatpush.msra.mxu0 0.0
    %4803 = vmatpush.msra.mxu0 0.0
    %4804 = vmatpush.msra.mxu0 0.0
    %4805 = vmatpush.msra.mxu0 0.0
    %4806 = vmatpush.msra.mxu0 0.0
    %4807 = vmatpush.msra.mxu0 0.0
    %4808 = vmatpush.msra.mxu0 0.0
    %4809 = vmatpush.msra.mxu0 0.0
    %4810 = vmatpush.msra.mxu0 0.0
    %4811 = vmatpush.msra.mxu0 0.0
    %4812 = vmatpush.msra.mxu0 0.0
    %4813 = vmatpush.msra.mxu0 0.0
    %4814 = vmatpush.msra.mxu0 %v4797
    %4815 = vmatmul.f32.gmra.mxu0 %v4795
    %v4816 = vpop.f32.mrf.mxu0
    %v4817 = vadd.f32 0.0, %v4816
    %4818 = vdwg.mxu0
    %v4819 = vld [vmem:[%s4684] sm:$0xff]
    %v4820 = vld [vmem:[%s4684 + $0x8] sm:$0xff]
    %4821 = vrot.lane.b32.xlu0 %v4712, 112
    %v4822 = vpop.permute.xlu0 %4821
    %4823 = vrot.lane.b32.xlu0 %v4752, 112
    %v4824 = vpop.permute.xlu0 %4823
    %v4825 = vsel %vm499, %v4822, 0
    %v4827 = vsel %vm499, %v4824, 0
    %4829 = vmatpush.xpose.msra.mxu0 0.0
    %4830 = vmatpush.xpose.msra.mxu0 0.0
    %4831 = vmatpush.xpose.msra.mxu0 0.0
    %4832 = vmatpush.xpose.msra.mxu0 0.0
    %4833 = vmatpush.xpose.msra.mxu0 0.0
    %4834 = vmatpush.xpose.msra.mxu0 0.0
    %4835 = vmatpush.xpose.msra.mxu0 0.0
    %4836 = vmatpush.xpose.msra.mxu0 0.0
    %4837 = vmatpush.xpose.msra.mxu0 0.0
    %4838 = vmatpush.xpose.msra.mxu0 0.0
    %4839 = vmatpush.xpose.msra.mxu0 0.0
    %4840 = vmatpush.xpose.msra.mxu0 0.0
    %4841 = vmatpush.xpose.msra.mxu0 0.0
    %4842 = vmatpush.xpose.msra.mxu0 0.0
    %4843 = vmatpush.xpose.msra.mxu0 0.0
    %4844 = vmatpush.xpose.msra.mxu0 %v4827
    %4845 = vmatmul.f32.gmra.mxu0 %v4825
    %v4846 = vpop.f32.mrf.mxu0
    %v4847 = vadd.f32 0.0, %v4846
    %4848 = vdwg.mxu0
    %v4849 = vmul.f32 %v4847, 0.25
    %v4850 = vsel %vm527, %v4849, -inf
    %4851 = vmax.xlane.f32.xlu0 %v4850
    %v4852 = vpop.xlane.xlu0 %4851
    %v4853 = vsub.f32 %v4849, %v4852
    %v4854 = vmul.f32 %v4853, 1.442695
    %v4855 = vpow.pop %v4854
    %v4856 = vsel %vm527, %v4855, 0.0
    %4857 = vadd.xlane.f32.xlu0 %v4856
    %v4858 = vpop.xlane.xlu0 %4857
    %v4859 = vrcp.pop %v4858
    %v4860 = vmul.f32 %v4855, %v4859
    %4861 = vrot.lane.b32.xlu0 %v4752, 80
    %v4862 = vpop.permute.xlu0 %4861
    %v4864 = vsel %vm541, %v4860, 0
    %v4866 = vsel %vm545, %v4862, 0
    %4868 = vmatpush.msra.mxu0 0.0
    %4869 = vmatpush.msra.mxu0 0.0
    %4870 = vmatpush.msra.mxu0 0.0
    %4871 = vmatpush.msra.mxu0 0.0
    %4872 = vmatpush.msra.mxu0 0.0
    %4873 = vmatpush.msra.mxu0 0.0
    %4874 = vmatpush.msra.mxu0 0.0
    %4875 = vmatpush.msra.mxu0 0.0
    %4876 = vmatpush.msra.mxu0 0.0
    %4877 = vmatpush.msra.mxu0 0.0
    %4878 = vmatpush.msra.mxu0 0.0
    %4879 = vmatpush.msra.mxu0 0.0
    %4880 = vmatpush.msra.mxu0 0.0
    %4881 = vmatpush.msra.mxu0 0.0
    %4882 = vmatpush.msra.mxu0 0.0
    %4883 = vmatpush.msra.mxu0 %v4866
    %4884 = vmatmul.f32.gmra.mxu0 %v4864
    %v4885 = vpop.f32.mrf.mxu0
    %v4886 = vadd.f32 0.0, %v4885
    %4887 = vdwg.mxu0
    %4888 = vrot.lane.b32.xlu0 %v4687, 32
    %v4889 = vpop.permute.xlu0 %4888
    %4890 = vrot.lane.b32.xlu0 %v4688, 32
    %v4891 = vpop.permute.xlu0 %4890
    %v4895 = vsel %vm499, %v4886, 0
    %4897 = vmatpush.msra.mxu0 0.0
    %4898 = vmatpush.msra.mxu0 0.0
    %4899 = vmatpush.msra.mxu0 0.0
    %4900 = vmatpush.msra.mxu0 0.0
    %4901 = vmatpush.msra.mxu0 0.0
    %4902 = vmatpush.msra.mxu0 0.0
    %4903 = vmatpush.msra.mxu0 0.0
    %4904 = vmatpush.msra.mxu0 0.0
    %4905 = vmatpush.msra.mxu0 0.0
    %4906 = vmatpush.msra.mxu0 0.0
    %4907 = vmatpush.msra.mxu0 0.0
    %4908 = vmatpush.msra.mxu0 0.0
    %4909 = vmatpush.msra.mxu0 0.0
    %4910 = vmatpush.msra.mxu0 0.0
    %4911 = vmatpush.msra.mxu0 %v4891
    %4912 = vmatpush.msra.mxu0 %v4889
    %4913 = vmatmul.f32.gmra.mxu0 %v4895
    %v4914 = vpop.f32.mrf.mxu0
    %v4915 = vadd.f32 0.0, %v4914
    %4916 = vdwg.mxu0
    %4919 = vrot.lane.b32.xlu0 %v4819, 32
    %v4920 = vpop.permute.xlu0 %4919
    %4921 = vrot.lane.b32.xlu0 %v4820, 32
    %v4922 = vpop.permute.xlu0 %4921
    %v4926 = vsel %vm499, %v4817, 0
    %4928 = vmatpush.msra.mxu0 0.0
    %4929 = vmatpush.msra.mxu0 0.0
    %4930 = vmatpush.msra.mxu0 0.0
    %4931 = vmatpush.msra.mxu0 0.0
    %4932 = vmatpush.msra.mxu0 0.0
    %4933 = vmatpush.msra.mxu0 0.0
    %4934 = vmatpush.msra.mxu0 0.0
    %4935 = vmatpush.msra.mxu0 0.0
    %4936 = vmatpush.msra.mxu0 0.0
    %4937 = vmatpush.msra.mxu0 0.0
    %4938 = vmatpush.msra.mxu0 0.0
    %4939 = vmatpush.msra.mxu0 0.0
    %4940 = vmatpush.msra.mxu0 0.0
    %4941 = vmatpush.msra.mxu0 0.0
    %4942 = vmatpush.msra.mxu0 %v4922
    %4943 = vmatpush.msra.mxu0 %v4920
    %4944 = vmatmul.f32.gmra.mxu0 %v4926
    %v4945 = vpop.f32.mrf.mxu0
    %v4946 = vadd.f32 %v4915, %v4945
    %4947 = vdwg.mxu0
    %4948 = vrot.lane.b32.xlu0 %v4690, 32
    %v4949 = vpop.permute.xlu0 %4948
    %v4951 = vadd.f32 %v4946, %v4949
    %v4952 = vadd.f32 %v4683, %v4951
    %v4953 = vld [vmem:[#allocation5 + $0x9d] sm:$0x1]
    %v4954 = vld [vmem:[#allocation5 + $0x9e] sm:$0x1]
    %v4955 = vsel %vm704, %v4952, 0.0
    %4956 = vadd.xlane.f32.xlu0 %v4955
    %v4957 = vpop.xlane.xlu0 %4956
    %v4958 = vmul.f32 %v4957, %v714
    %v4959 = vsub.f32 %v4952, %v4958
    %v4960 = vmul.f32 %v4959, %v4959
    %v4961 = vsel %vm704, %v4960, 0.0
    %4962 = vadd.xlane.f32.xlu0 %v4961
    %v4963 = vpop.xlane.xlu0 %4962
    %v4964 = vmul.f32 %v4963, %v714
    %v4965 = vadd.f32 %v4964, 1e-05
    %v4966 = vrsqrt.pop %v4965
    %v4967 = vmul.f32 %v4966, %v4965
    %v4968 = vmul.f32 %v4967, %v4966
    %v4969 = vmul.f32 0.5, %v4968
    %v4970 = vsub.f32 1.5, %v4969
    %v4971 = vmul.f32 %v4966, %v4970
    %vm4972 = vweird.f32 %v4965
    %vm4973 = vweird.f32 %v4966
    %vm4974 = vmor %vm4972, %vm4973
    %v4975 = vsel %vm4974, %v4966, %v4971
    %v4976 = vmul.f32 %v4959, %v4975
    %v4977 = vperm.slane %v4953, 0
    %v4978 = vmul.f32 %v4976, %v4977
    %v4979 = vperm.slane %v4954, 0
    %v4980 = vadd.f32 %v4978, %v4979
    %s4981 = sshll.u32 %s739, 4
    %4982 = dma.done %s168, %s4981
    %s4983 = sshll.u32 %s739, 4
    %4984 = dma.done %s184, %s4983
    %v4985 = vpack.c.bf16 %v4980, %v4980
    %v4986 = vld [vmem:[%s167] sm:$0xff]
    %v4987 = vld [vmem:[%s167 + $0x8] sm:$0xff]
    %v4988 = vld [vmem:[%s167 + $0x40] sm:$0xff]
    %v4989 = vld [vmem:[%s167 + $0x48] sm:$0xff]
    %v4990 = vld [vmem:[%s167 + $0x80] sm:$0xff]
    %v4991 = vld [vmem:[%s167 + $0x88] sm:$0xff]
    %v4992 = vld [vmem:[%s167 + $0xc0] sm:$0xff]
    %v4993 = vld [vmem:[%s167 + $0xc8] sm:$0xff]
    %s4994 = scalar_lea.vmem [#allocation10], 3
    %v4995 = vld [vmem:[%s4994] ss:$4 sm:$0xf]
    %v4997 = vperm.slane %v4995, 0
    %v4998 = vperm.slane %v4995, 1
    %v4999 = vperm.slane %v4995, 2
    %v5000 = vperm.slane %v4995, 3
    %v5013 = vunpack.c.l.b16 %v4986
    %v5014 = vunpack.c.h.b16 %v4986
    %v5015 = vunpack.c.l.b16 %v4987
    %v5016 = vunpack.c.h.b16 %v4987
    %v5017 = vunpack.c.l.b16 %v4988
    %v5018 = vunpack.c.h.b16 %v4988
    %v5019 = vunpack.c.l.b16 %v4989
    %v5020 = vunpack.c.h.b16 %v4989
    %v5021 = vunpack.c.l.b16 %v4990
    %v5022 = vunpack.c.h.b16 %v4990
    %v5023 = vunpack.c.l.b16 %v4991
    %v5024 = vunpack.c.h.b16 %v4991
    %v5025 = vunpack.c.l.b16 %v4992
    %v5026 = vunpack.c.h.b16 %v4992
    %v5027 = vunpack.c.l.b16 %v4993
    %v5028 = vunpack.c.h.b16 %v4993
    %v5029 = vpack.c.b16 %v5017, %v5013
    %v5030 = vpack.c.b16 %v5018, %v5014
    %v5031 = vpack.c.b16 %v5019, %v5015
    %v5032 = vpack.c.b16 %v5020, %v5016
    %v5033 = vpack.c.b16 %v5025, %v5021
    %v5034 = vpack.c.b16 %v5026, %v5022
    %v5035 = vpack.c.b16 %v5027, %v5023
    %v5036 = vpack.c.b16 %v5028, %v5024
    %v5046 = vsel %vm253, %v4985, 0
    %5048 = vmatpush.bf16.msra.mxu0 0
    %5049 = vmatpush.bf16.msra.mxu0 0
    %5050 = vmatpush.bf16.msra.mxu0 0
    %5051 = vmatpush.bf16.msra.mxu0 0
    %5052 = vmatpush.bf16.msra.mxu0 0
    %5053 = vmatpush.bf16.msra.mxu0 0
    %5054 = vmatpush.bf16.msra.mxu0 %v5033
    %5055 = vmatpush.bf16.msra.mxu0 %v5029
    %5056 = vmatmul.bf16.gmra.mxu0 %v5046
    %v5057 = vpop.f32.mrf.mxu0
    %v5058 = vadd.f32 %v4997, %v5057
    %v5059 = vpop.f32.mrf.mxu0
    %5060 = vdwg.mxu0
    %5061 = vmatpush.bf16.msra.mxu0 0
    %5062 = vmatpush.bf16.msra.mxu0 0
    %5063 = vmatpush.bf16.msra.mxu0 0
    %5064 = vmatpush.bf16.msra.mxu0 0
    %5065 = vmatpush.bf16.msra.mxu0 0
    %5066 = vmatpush.bf16.msra.mxu0 0
    %5067 = vmatpush.bf16.msra.mxu0 %v5034
    %5068 = vmatpush.bf16.msra.mxu0 %v5030
    %5069 = vmatmul.bf16.gmra.mxu0 %v5046
    %v5070 = vpop.f32.mrf.mxu0
    %v5071 = vadd.f32 %v4998, %v5070
    %v5072 = vpop.f32.mrf.mxu0
    %5073 = vdwg.mxu0
    %5074 = vmatpush.bf16.msra.mxu0 0
    %5075 = vmatpush.bf16.msra.mxu0 0
    %5076 = vmatpush.bf16.msra.mxu0 0
    %5077 = vmatpush.bf16.msra.mxu0 0
    %5078 = vmatpush.bf16.msra.mxu0 0
    %5079 = vmatpush.bf16.msra.mxu0 0
    %5080 = vmatpush.bf16.msra.mxu0 %v5035
    %5081 = vmatpush.bf16.msra.mxu0 %v5031
    %5082 = vmatmul.bf16.gmra.mxu0 %v5046
    %v5083 = vpop.f32.mrf.mxu0
    %v5084 = vadd.f32 %v4999, %v5083
    %v5085 = vpop.f32.mrf.mxu0
    %5086 = vdwg.mxu0
    %5087 = vmatpush.bf16.msra.mxu0 0
    %5088 = vmatpush.bf16.msra.mxu0 0
    %5089 = vmatpush.bf16.msra.mxu0 0
    %5090 = vmatpush.bf16.msra.mxu0 0
    %5091 = vmatpush.bf16.msra.mxu0 0
    %5092 = vmatpush.bf16.msra.mxu0 0
    %5093 = vmatpush.bf16.msra.mxu0 %v5036
    %5094 = vmatpush.bf16.msra.mxu0 %v5032
    %5095 = vmatmul.bf16.gmra.mxu0 %v5046
    %v5096 = vpop.f32.mrf.mxu0
    %v5097 = vadd.f32 %v5000, %v5096
    %v5098 = vpop.f32.mrf.mxu0
    %5099 = vdwg.mxu0
    %v5100 = vmax.f32 %v5058, 0.0
    %v5101 = vmax.f32 %v5071, 0.0
    %v5102 = vmax.f32 %v5084, 0.0
    %v5103 = vmax.f32 %v5097, 0.0
    %v5104 = vld [vmem:[%s183] sm:$0xff]
    %v5105 = vld [vmem:[%s183 + $0x8] sm:$0xff]
    %v5106 = vld [vmem:[%s183 + $0x40] sm:$0xff]
    %v5107 = vld [vmem:[%s183 + $0x48] sm:$0xff]
    %v5108 = vld [vmem:[%s183 + $0x80] sm:$0xff]
    %v5109 = vld [vmem:[%s183 + $0x88] sm:$0xff]
    %v5110 = vld [vmem:[%s183 + $0xc0] sm:$0xff]
    %v5111 = vld [vmem:[%s183 + $0xc8] sm:$0xff]
    %v5112 = vpack.c.bf16 %v5100, %v5100
    %v5113 = vpack.c.bf16 %v5101, %v5101
    %v5114 = vpack.c.bf16 %v5102, %v5102
    %v5115 = vpack.c.bf16 %v5103, %v5103
    %v5116 = vld [vmem:[%s167 + $0x10] sm:$0xff]
    %v5117 = vld [vmem:[%s167 + $0x18] sm:$0xff]
    %v5118 = vld [vmem:[%s167 + $0x50] sm:$0xff]
    %v5119 = vld [vmem:[%s167 + $0x58] sm:$0xff]
    %v5120 = vld [vmem:[%s167 + $0x90] sm:$0xff]
    %v5121 = vld [vmem:[%s167 + $0x98] sm:$0xff]
    %v5122 = vld [vmem:[%s167 + $0xd0] sm:$0xff]
    %v5123 = vld [vmem:[%s167 + $0xd8] sm:$0xff]
    %s5124 = scalar_lea.vmem [#allocation10], 19
    %v5125 = vld [vmem:[%s5124] ss:$4 sm:$0xf]
    %v5127 = vperm.slane %v5125, 0
    %v5128 = vperm.slane %v5125, 1
    %v5129 = vperm.slane %v5125, 2
    %v5130 = vperm.slane %v5125, 3
    %v5143 = vunpack.c.l.b16 %v5116
    %v5144 = vunpack.c.h.b16 %v5116
    %v5145 = vunpack.c.l.b16 %v5117
    %v5146 = vunpack.c.h.b16 %v5117
    %v5147 = vunpack.c.l.b16 %v5118
    %v5148 = vunpack.c.h.b16 %v5118
    %v5149 = vunpack.c.l.b16 %v5119
    %v5150 = vunpack.c.h.b16 %v5119
    %v5151 = vunpack.c.l.b16 %v5120
    %v5152 = vunpack.c.h.b16 %v5120
    %v5153 = vunpack.c.l.b16 %v5121
    %v5154 = vunpack.c.h.b16 %v5121
    %v5155 = vunpack.c.l.b16 %v5122
    %v5156 = vunpack.c.h.b16 %v5122
    %v5157 = vunpack.c.l.b16 %v5123
    %v5158 = vunpack.c.h.b16 %v5123
    %v5159 = vpack.c.b16 %v5147, %v5143
    %v5160 = vpack.c.b16 %v5148, %v5144
    %v5161 = vpack.c.b16 %v5149, %v5145
    %v5162 = vpack.c.b16 %v5150, %v5146
    %v5163 = vpack.c.b16 %v5155, %v5151
    %v5164 = vpack.c.b16 %v5156, %v5152
    %v5165 = vpack.c.b16 %v5157, %v5153
    %v5166 = vpack.c.b16 %v5158, %v5154
    %5175 = vmatpush.bf16.msra.mxu0 0
    %5176 = vmatpush.bf16.msra.mxu0 0
    %5177 = vmatpush.bf16.msra.mxu0 0
    %5178 = vmatpush.bf16.msra.mxu0 0
    %5179 = vmatpush.bf16.msra.mxu0 0
    %5180 = vmatpush.bf16.msra.mxu0 0
    %5181 = vmatpush.bf16.msra.mxu0 %v5163
    %5182 = vmatpush.bf16.msra.mxu0 %v5159
    %5183 = vmatmul.bf16.gmra.mxu0 %v5046
    %v5184 = vpop.f32.mrf.mxu0
    %v5185 = vadd.f32 %v5127, %v5184
    %v5186 = vpop.f32.mrf.mxu0
    %5187 = vdwg.mxu0
    %5188 = vmatpush.bf16.msra.mxu0 0
    %5189 = vmatpush.bf16.msra.mxu0 0
    %5190 = vmatpush.bf16.msra.mxu0 0
    %5191 = vmatpush.bf16.msra.mxu0 0
    %5192 = vmatpush.bf16.msra.mxu0 0
    %5193 = vmatpush.bf16.msra.mxu0 0
    %5194 = vmatpush.bf16.msra.mxu0 %v5164
    %5195 = vmatpush.bf16.msra.mxu0 %v5160
    %5196 = vmatmul.bf16.gmra.mxu0 %v5046
    %v5197 = vpop.f32.mrf.mxu0
    %v5198 = vadd.f32 %v5128, %v5197
    %v5199 = vpop.f32.mrf.mxu0
    %5200 = vdwg.mxu0
    %5201 = vmatpush.bf16.msra.mxu0 0
    %5202 = vmatpush.bf16.msra.mxu0 0
    %5203 = vmatpush.bf16.msra.mxu0 0
    %5204 = vmatpush.bf16.msra.mxu0 0
    %5205 = vmatpush.bf16.msra.mxu0 0
    %5206 = vmatpush.bf16.msra.mxu0 0
    %5207 = vmatpush.bf16.msra.mxu0 %v5165
    %5208 = vmatpush.bf16.msra.mxu0 %v5161
    %5209 = vmatmul.bf16.gmra.mxu0 %v5046
    %v5210 = vpop.f32.mrf.mxu0
    %v5211 = vadd.f32 %v5129, %v5210
    %v5212 = vpop.f32.mrf.mxu0
    %5213 = vdwg.mxu0
    %5214 = vmatpush.bf16.msra.mxu0 0
    %5215 = vmatpush.bf16.msra.mxu0 0
    %5216 = vmatpush.bf16.msra.mxu0 0
    %5217 = vmatpush.bf16.msra.mxu0 0
    %5218 = vmatpush.bf16.msra.mxu0 0
    %5219 = vmatpush.bf16.msra.mxu0 0
    %5220 = vmatpush.bf16.msra.mxu0 %v5166
    %5221 = vmatpush.bf16.msra.mxu0 %v5162
    %5222 = vmatmul.bf16.gmra.mxu0 %v5046
    %v5223 = vpop.f32.mrf.mxu0
    %v5224 = vadd.f32 %v5130, %v5223
    %v5225 = vpop.f32.mrf.mxu0
    %5226 = vdwg.mxu0
    %v5227 = vmax.f32 %v5185, 0.0
    %v5228 = vmax.f32 %v5198, 0.0
    %v5229 = vmax.f32 %v5211, 0.0
    %v5230 = vmax.f32 %v5224, 0.0
    %v5231 = vld [vmem:[%s183 + $0x10] sm:$0xff]
    %v5232 = vld [vmem:[%s183 + $0x18] sm:$0xff]
    %v5233 = vld [vmem:[%s183 + $0x50] sm:$0xff]
    %v5234 = vld [vmem:[%s183 + $0x58] sm:$0xff]
    %v5235 = vld [vmem:[%s183 + $0x90] sm:$0xff]
    %v5236 = vld [vmem:[%s183 + $0x98] sm:$0xff]
    %v5237 = vld [vmem:[%s183 + $0xd0] sm:$0xff]
    %v5238 = vld [vmem:[%s183 + $0xd8] sm:$0xff]
    %v5239 = vpack.c.bf16 %v5227, %v5227
    %v5240 = vpack.c.bf16 %v5228, %v5228
    %v5241 = vpack.c.bf16 %v5229, %v5229
    %v5242 = vpack.c.bf16 %v5230, %v5230
    %v5251 = vunpack.c.l.b16 %v5231
    %v5252 = vunpack.c.h.b16 %v5231
    %v5253 = vunpack.c.l.b16 %v5232
    %v5254 = vunpack.c.h.b16 %v5232
    %v5255 = vunpack.c.l.b16 %v5233
    %v5256 = vunpack.c.h.b16 %v5233
    %v5257 = vunpack.c.l.b16 %v5234
    %v5258 = vunpack.c.h.b16 %v5234
    %v5259 = vunpack.c.l.b16 %v5235
    %v5260 = vunpack.c.h.b16 %v5235
    %v5261 = vunpack.c.l.b16 %v5236
    %v5262 = vunpack.c.h.b16 %v5236
    %v5263 = vunpack.c.l.b16 %v5237
    %v5264 = vunpack.c.h.b16 %v5237
    %v5265 = vunpack.c.l.b16 %v5238
    %v5266 = vunpack.c.h.b16 %v5238
    %v5267 = vpack.c.b16 %v5255, %v5251
    %v5268 = vpack.c.b16 %v5256, %v5252
    %v5269 = vpack.c.b16 %v5257, %v5253
    %v5270 = vpack.c.b16 %v5258, %v5254
    %v5271 = vpack.c.b16 %v5263, %v5259
    %v5272 = vpack.c.b16 %v5264, %v5260
    %v5273 = vpack.c.b16 %v5265, %v5261
    %v5274 = vpack.c.b16 %v5266, %v5262
    %5283 = vmatpush.bf16.xpose.msra.mxu0 0
    %5284 = vmatpush.bf16.xpose.msra.mxu0 0
    %5285 = vmatpush.bf16.xpose.msra.mxu0 0
    %5286 = vmatpush.bf16.xpose.msra.mxu0 0
    %5287 = vmatpush.bf16.xpose.msra.mxu0 0
    %5288 = vmatpush.bf16.xpose.msra.mxu0 0
    %5289 = vmatpush.bf16.xpose.msra.mxu0 %v5271
    %5290 = vmatpush.bf16.xpose.msra.mxu0 %v5267
    %5291 = vmatmul.bf16.gmra.mxu0 %v5239
    %v5292 = vpop.f32.mrf.mxu0
    %v5293 = vadd.f32 0.0, %v5292
    %v5294 = vpop.f32.mrf.mxu0
    %5295 = vdwg.mxu0
    %5296 = vmatpush.bf16.xpose.msra.mxu0 0
    %5297 = vmatpush.bf16.xpose.msra.mxu0 0
    %5298 = vmatpush.bf16.xpose.msra.mxu0 0
    %5299 = vmatpush.bf16.xpose.msra.mxu0 0
    %5300 = vmatpush.bf16.xpose.msra.mxu0 0
    %5301 = vmatpush.bf16.xpose.msra.mxu0 0
    %5302 = vmatpush.bf16.xpose.msra.mxu0 %v5272
    %5303 = vmatpush.bf16.xpose.msra.mxu0 %v5268
    %5304 = vmatmul.bf16.gmra.mxu0 %v5240
    %v5305 = vpop.f32.mrf.mxu0
    %v5306 = vadd.f32 %v5293, %v5305
    %v5307 = vpop.f32.mrf.mxu0
    %5308 = vdwg.mxu0
    %5309 = vmatpush.bf16.xpose.msra.mxu0 0
    %5310 = vmatpush.bf16.xpose.msra.mxu0 0
    %5311 = vmatpush.bf16.xpose.msra.mxu0 0
    %5312 = vmatpush.bf16.xpose.msra.mxu0 0
    %5313 = vmatpush.bf16.xpose.msra.mxu0 0
    %5314 = vmatpush.bf16.xpose.msra.mxu0 0
    %5315 = vmatpush.bf16.xpose.msra.mxu0 %v5273
    %5316 = vmatpush.bf16.xpose.msra.mxu0 %v5269
    %5317 = vmatmul.bf16.gmra.mxu0 %v5241
    %v5318 = vpop.f32.mrf.mxu0
    %v5319 = vadd.f32 %v5306, %v5318
    %v5320 = vpop.f32.mrf.mxu0
    %5321 = vdwg.mxu0
    %5322 = vmatpush.bf16.xpose.msra.mxu0 0
    %5323 = vmatpush.bf16.xpose.msra.mxu0 0
    %5324 = vmatpush.bf16.xpose.msra.mxu0 0
    %5325 = vmatpush.bf16.xpose.msra.mxu0 0
    %5326 = vmatpush.bf16.xpose.msra.mxu0 0
    %5327 = vmatpush.bf16.xpose.msra.mxu0 0
    %5328 = vmatpush.bf16.xpose.msra.mxu0 %v5274
    %5329 = vmatpush.bf16.xpose.msra.mxu0 %v5270
    %5330 = vmatmul.bf16.gmra.mxu0 %v5242
    %v5331 = vpop.f32.mrf.mxu0
    %v5332 = vadd.f32 %v5319, %v5331
    %v5333 = vpop.f32.mrf.mxu0
    %5334 = vdwg.mxu0
    %v5343 = vunpack.c.l.b16 %v5104
    %v5344 = vunpack.c.h.b16 %v5104
    %v5345 = vunpack.c.l.b16 %v5105
    %v5346 = vunpack.c.h.b16 %v5105
    %v5347 = vunpack.c.l.b16 %v5106
    %v5348 = vunpack.c.h.b16 %v5106
    %v5349 = vunpack.c.l.b16 %v5107
    %v5350 = vunpack.c.h.b16 %v5107
    %v5351 = vunpack.c.l.b16 %v5108
    %v5352 = vunpack.c.h.b16 %v5108
    %v5353 = vunpack.c.l.b16 %v5109
    %v5354 = vunpack.c.h.b16 %v5109
    %v5355 = vunpack.c.l.b16 %v5110
    %v5356 = vunpack.c.h.b16 %v5110
    %v5357 = vunpack.c.l.b16 %v5111
    %v5358 = vunpack.c.h.b16 %v5111
    %v5359 = vpack.c.b16 %v5347, %v5343
    %v5360 = vpack.c.b16 %v5348, %v5344
    %v5361 = vpack.c.b16 %v5349, %v5345
    %v5362 = vpack.c.b16 %v5350, %v5346
    %v5363 = vpack.c.b16 %v5355, %v5351
    %v5364 = vpack.c.b16 %v5356, %v5352
    %v5365 = vpack.c.b16 %v5357, %v5353
    %v5366 = vpack.c.b16 %v5358, %v5354
    %5375 = vmatpush.bf16.xpose.msra.mxu0 0
    %5376 = vmatpush.bf16.xpose.msra.mxu0 0
    %5377 = vmatpush.bf16.xpose.msra.mxu0 0
    %5378 = vmatpush.bf16.xpose.msra.mxu0 0
    %5379 = vmatpush.bf16.xpose.msra.mxu0 0
    %5380 = vmatpush.bf16.xpose.msra.mxu0 0
    %5381 = vmatpush.bf16.xpose.msra.mxu0 %v5363
    %5382 = vmatpush.bf16.xpose.msra.mxu0 %v5359
    %5383 = vmatmul.bf16.gmra.mxu0 %v5112
    %v5384 = vpop.f32.mrf.mxu0
    %v5385 = vadd.f32 %v5332, %v5384
    %v5386 = vpop.f32.mrf.mxu0
    %5387 = vdwg.mxu0
    %5388 = vmatpush.bf16.xpose.msra.mxu0 0
    %5389 = vmatpush.bf16.xpose.msra.mxu0 0
    %5390 = vmatpush.bf16.xpose.msra.mxu0 0
    %5391 = vmatpush.bf16.xpose.msra.mxu0 0
    %5392 = vmatpush.bf16.xpose.msra.mxu0 0
    %5393 = vmatpush.bf16.xpose.msra.mxu0 0
    %5394 = vmatpush.bf16.xpose.msra.mxu0 %v5364
    %5395 = vmatpush.bf16.xpose.msra.mxu0 %v5360
    %5396 = vmatmul.bf16.gmra.mxu0 %v5113
    %v5397 = vpop.f32.mrf.mxu0
    %v5398 = vadd.f32 %v5385, %v5397
    %v5399 = vpop.f32.mrf.mxu0
    %5400 = vdwg.mxu0
    %5401 = vmatpush.bf16.xpose.msra.mxu0 0
    %5402 = vmatpush.bf16.xpose.msra.mxu0 0
    %5403 = vmatpush.bf16.xpose.msra.mxu0 0
    %5404 = vmatpush.bf16.xpose.msra.mxu0 0
    %5405 = vmatpush.bf16.xpose.msra.mxu0 0
    %5406 = vmatpush.bf16.xpose.msra.mxu0 0
    %5407 = vmatpush.bf16.xpose.msra.mxu0 %v5365
    %5408 = vmatpush.bf16.xpose.msra.mxu0 %v5361
    %5409 = vmatmul.bf16.gmra.mxu0 %v5114
    %v5410 = vpop.f32.mrf.mxu0
    %v5411 = vadd.f32 %v5398, %v5410
    %v5412 = vpop.f32.mrf.mxu0
    %5413 = vdwg.mxu0
    %5414 = vmatpush.bf16.xpose.msra.mxu0 0
    %5415 = vmatpush.bf16.xpose.msra.mxu0 0
    %5416 = vmatpush.bf16.xpose.msra.mxu0 0
    %5417 = vmatpush.bf16.xpose.msra.mxu0 0
    %5418 = vmatpush.bf16.xpose.msra.mxu0 0
    %5419 = vmatpush.bf16.xpose.msra.mxu0 0
    %5420 = vmatpush.bf16.xpose.msra.mxu0 %v5366
    %5421 = vmatpush.bf16.xpose.msra.mxu0 %v5362
    %5422 = vmatmul.bf16.gmra.mxu0 %v5115
    %v5423 = vpop.f32.mrf.mxu0
    %v5424 = vadd.f32 %v5411, %v5423
    %v5425 = vpop.f32.mrf.mxu0
    %5426 = vdwg.mxu0
    %v5427 = vld [vmem:[%s167 + $0x20] sm:$0xff]
    %v5428 = vld [vmem:[%s167 + $0x28] sm:$0xff]
    %v5429 = vld [vmem:[%s167 + $0x60] sm:$0xff]
    %v5430 = vld [vmem:[%s167 + $0x68] sm:$0xff]
    %v5431 = vld [vmem:[%s167 + $0xa0] sm:$0xff]
    %v5432 = vld [vmem:[%s167 + $0xa8] sm:$0xff]
    %v5433 = vld [vmem:[%s167 + $0xe0] sm:$0xff]
    %v5434 = vld [vmem:[%s167 + $0xe8] sm:$0xff]
    %s5435 = scalar_lea.vmem [#allocation10], 35
    %v5436 = vld [vmem:[%s5435] ss:$4 sm:$0xf]
    %v5438 = vperm.slane %v5436, 0
    %v5439 = vperm.slane %v5436, 1
    %v5440 = vperm.slane %v5436, 2
    %v5441 = vperm.slane %v5436, 3
    %v5454 = vunpack.c.l.b16 %v5427
    %v5455 = vunpack.c.h.b16 %v5427
    %v5456 = vunpack.c.l.b16 %v5428
    %v5457 = vunpack.c.h.b16 %v5428
    %v5458 = vunpack.c.l.b16 %v5429
    %v5459 = vunpack.c.h.b16 %v5429
    %v5460 = vunpack.c.l.b16 %v5430
    %v5461 = vunpack.c.h.b16 %v5430
    %v5462 = vunpack.c.l.b16 %v5431
    %v5463 = vunpack.c.h.b16 %v5431
    %v5464 = vunpack.c.l.b16 %v5432
    %v5465 = vunpack.c.h.b16 %v5432
    %v5466 = vunpack.c.l.b16 %v5433
    %v5467 = vunpack.c.h.b16 %v5433
    %v5468 = vunpack.c.l.b16 %v5434
    %v5469 = vunpack.c.h.b16 %v5434
    %v5470 = vpack.c.b16 %v5458, %v5454
    %v5471 = vpack.c.b16 %v5459, %v5455
    %v5472 = vpack.c.b16 %v5460, %v5456
    %v5473 = vpack.c.b16 %v5461, %v5457
    %v5474 = vpack.c.b16 %v5466, %v5462
    %v5475 = vpack.c.b16 %v5467, %v5463
    %v5476 = vpack.c.b16 %v5468, %v5464
    %v5477 = vpack.c.b16 %v5469, %v5465
    %5486 = vmatpush.bf16.msra.mxu0 0
    %5487 = vmatpush.bf16.msra.mxu0 0
    %5488 = vmatpush.bf16.msra.mxu0 0
    %5489 = vmatpush.bf16.msra.mxu0 0
    %5490 = vmatpush.bf16.msra.mxu0 0
    %5491 = vmatpush.bf16.msra.mxu0 0
    %5492 = vmatpush.bf16.msra.mxu0 %v5474
    %5493 = vmatpush.bf16.msra.mxu0 %v5470
    %5494 = vmatmul.bf16.gmra.mxu0 %v5046
    %v5495 = vpop.f32.mrf.mxu0
    %v5496 = vadd.f32 %v5438, %v5495
    %v5497 = vpop.f32.mrf.mxu0
    %5498 = vdwg.mxu0
    %5499 = vmatpush.bf16.msra.mxu0 0
    %5500 = vmatpush.bf16.msra.mxu0 0
    %5501 = vmatpush.bf16.msra.mxu0 0
    %5502 = vmatpush.bf16.msra.mxu0 0
    %5503 = vmatpush.bf16.msra.mxu0 0
    %5504 = vmatpush.bf16.msra.mxu0 0
    %5505 = vmatpush.bf16.msra.mxu0 %v5475
    %5506 = vmatpush.bf16.msra.mxu0 %v5471
    %5507 = vmatmul.bf16.gmra.mxu0 %v5046
    %v5508 = vpop.f32.mrf.mxu0
    %v5509 = vadd.f32 %v5439, %v5508
    %v5510 = vpop.f32.mrf.mxu0
    %5511 = vdwg.mxu0
    %5512 = vmatpush.bf16.msra.mxu0 0
    %5513 = vmatpush.bf16.msra.mxu0 0
    %5514 = vmatpush.bf16.msra.mxu0 0
    %5515 = vmatpush.bf16.msra.mxu0 0
    %5516 = vmatpush.bf16.msra.mxu0 0
    %5517 = vmatpush.bf16.msra.mxu0 0
    %5518 = vmatpush.bf16.msra.mxu0 %v5476
    %5519 = vmatpush.bf16.msra.mxu0 %v5472
    %5520 = vmatmul.bf16.gmra.mxu0 %v5046
    %v5521 = vpop.f32.mrf.mxu0
    %v5522 = vadd.f32 %v5440, %v5521
    %v5523 = vpop.f32.mrf.mxu0
    %5524 = vdwg.mxu0
    %5525 = vmatpush.bf16.msra.mxu0 0
    %5526 = vmatpush.bf16.msra.mxu0 0
    %5527 = vmatpush.bf16.msra.mxu0 0
    %5528 = vmatpush.bf16.msra.mxu0 0
    %5529 = vmatpush.bf16.msra.mxu0 0
    %5530 = vmatpush.bf16.msra.mxu0 0
    %5531 = vmatpush.bf16.msra.mxu0 %v5477
    %5532 = vmatpush.bf16.msra.mxu0 %v5473
    %5533 = vmatmul.bf16.gmra.mxu0 %v5046
    %v5534 = vpop.f32.mrf.mxu0
    %v5535 = vadd.f32 %v5441, %v5534
    %v5536 = vpop.f32.mrf.mxu0
    %5537 = vdwg.mxu0
    %v5538 = vmax.f32 %v5496, 0.0
    %v5539 = vmax.f32 %v5509, 0.0
    %v5540 = vmax.f32 %v5522, 0.0
    %v5541 = vmax.f32 %v5535, 0.0
    %v5542 = vld [vmem:[%s183 + $0x20] sm:$0xff]
    %v5543 = vld [vmem:[%s183 + $0x28] sm:$0xff]
    %v5544 = vld [vmem:[%s183 + $0x60] sm:$0xff]
    %v5545 = vld [vmem:[%s183 + $0x68] sm:$0xff]
    %v5546 = vld [vmem:[%s183 + $0xa0] sm:$0xff]
    %v5547 = vld [vmem:[%s183 + $0xa8] sm:$0xff]
    %v5548 = vld [vmem:[%s183 + $0xe0] sm:$0xff]
    %v5549 = vld [vmem:[%s183 + $0xe8] sm:$0xff]
    %v5550 = vpack.c.bf16 %v5538, %v5538
    %v5551 = vpack.c.bf16 %v5539, %v5539
    %v5552 = vpack.c.bf16 %v5540, %v5540
    %v5553 = vpack.c.bf16 %v5541, %v5541
    %v5562 = vunpack.c.l.b16 %v5542
    %v5563 = vunpack.c.h.b16 %v5542
    %v5564 = vunpack.c.l.b16 %v5543
    %v5565 = vunpack.c.h.b16 %v5543
    %v5566 = vunpack.c.l.b16 %v5544
    %v5567 = vunpack.c.h.b16 %v5544
    %v5568 = vunpack.c.l.b16 %v5545
    %v5569 = vunpack.c.h.b16 %v5545
    %v5570 = vunpack.c.l.b16 %v5546
    %v5571 = vunpack.c.h.b16 %v5546
    %v5572 = vunpack.c.l.b16 %v5547
    %v5573 = vunpack.c.h.b16 %v5547
    %v5574 = vunpack.c.l.b16 %v5548
    %v5575 = vunpack.c.h.b16 %v5548
    %v5576 = vunpack.c.l.b16 %v5549
    %v5577 = vunpack.c.h.b16 %v5549
    %v5578 = vpack.c.b16 %v5566, %v5562
    %v5579 = vpack.c.b16 %v5567, %v5563
    %v5580 = vpack.c.b16 %v5568, %v5564
    %v5581 = vpack.c.b16 %v5569, %v5565
    %v5582 = vpack.c.b16 %v5574, %v5570
    %v5583 = vpack.c.b16 %v5575, %v5571
    %v5584 = vpack.c.b16 %v5576, %v5572
    %v5585 = vpack.c.b16 %v5577, %v5573
    %5594 = vmatpush.bf16.xpose.msra.mxu0 0
    %5595 = vmatpush.bf16.xpose.msra.mxu0 0
    %5596 = vmatpush.bf16.xpose.msra.mxu0 0
    %5597 = vmatpush.bf16.xpose.msra.mxu0 0
    %5598 = vmatpush.bf16.xpose.msra.mxu0 0
    %5599 = vmatpush.bf16.xpose.msra.mxu0 0
    %5600 = vmatpush.bf16.xpose.msra.mxu0 %v5582
    %5601 = vmatpush.bf16.xpose.msra.mxu0 %v5578
    %5602 = vmatmul.bf16.gmra.mxu0 %v5550
    %v5603 = vpop.f32.mrf.mxu0
    %v5604 = vadd.f32 0.0, %v5603
    %v5605 = vpop.f32.mrf.mxu0
    %5606 = vdwg.mxu0
    %5607 = vmatpush.bf16.xpose.msra.mxu0 0
    %5608 = vmatpush.bf16.xpose.msra.mxu0 0
    %5609 = vmatpush.bf16.xpose.msra.mxu0 0
    %5610 = vmatpush.bf16.xpose.msra.mxu0 0
    %5611 = vmatpush.bf16.xpose.msra.mxu0 0
    %5612 = vmatpush.bf16.xpose.msra.mxu0 0
    %5613 = vmatpush.bf16.xpose.msra.mxu0 %v5583
    %5614 = vmatpush.bf16.xpose.msra.mxu0 %v5579
    %5615 = vmatmul.bf16.gmra.mxu0 %v5551
    %v5616 = vpop.f32.mrf.mxu0
    %v5617 = vadd.f32 %v5604, %v5616
    %v5618 = vpop.f32.mrf.mxu0
    %5619 = vdwg.mxu0
    %5620 = vmatpush.bf16.xpose.msra.mxu0 0
    %5621 = vmatpush.bf16.xpose.msra.mxu0 0
    %5622 = vmatpush.bf16.xpose.msra.mxu0 0
    %5623 = vmatpush.bf16.xpose.msra.mxu0 0
    %5624 = vmatpush.bf16.xpose.msra.mxu0 0
    %5625 = vmatpush.bf16.xpose.msra.mxu0 0
    %5626 = vmatpush.bf16.xpose.msra.mxu0 %v5584
    %5627 = vmatpush.bf16.xpose.msra.mxu0 %v5580
    %5628 = vmatmul.bf16.gmra.mxu0 %v5552
    %v5629 = vpop.f32.mrf.mxu0
    %v5630 = vadd.f32 %v5617, %v5629
    %v5631 = vpop.f32.mrf.mxu0
    %5632 = vdwg.mxu0
    %5633 = vmatpush.bf16.xpose.msra.mxu0 0
    %5634 = vmatpush.bf16.xpose.msra.mxu0 0
    %5635 = vmatpush.bf16.xpose.msra.mxu0 0
    %5636 = vmatpush.bf16.xpose.msra.mxu0 0
    %5637 = vmatpush.bf16.xpose.msra.mxu0 0
    %5638 = vmatpush.bf16.xpose.msra.mxu0 0
    %5639 = vmatpush.bf16.xpose.msra.mxu0 %v5585
    %5640 = vmatpush.bf16.xpose.msra.mxu0 %v5581
    %5641 = vmatmul.bf16.gmra.mxu0 %v5553
    %v5642 = vpop.f32.mrf.mxu0
    %v5643 = vadd.f32 %v5630, %v5642
    %v5644 = vpop.f32.mrf.mxu0
    %5645 = vdwg.mxu0
    %v5646 = vadd.f32 %v5424, %v5643
    %v5647 = vld [vmem:[%s167 + $0x30] sm:$0xff]
    %v5648 = vld [vmem:[%s167 + $0x38] sm:$0xff]
    %v5649 = vld [vmem:[%s167 + $0x70] sm:$0xff]
    %v5650 = vld [vmem:[%s167 + $0x78] sm:$0xff]
    %v5651 = vld [vmem:[%s167 + $0xb0] sm:$0xff]
    %v5652 = vld [vmem:[%s167 + $0xb8] sm:$0xff]
    %v5653 = vld [vmem:[%s167 + $0xf0] sm:$0xff]
    %v5654 = vld [vmem:[%s167 + $0xf8] sm:$0xff]
    %s5655 = scalar_lea.vmem [#allocation10], 51
    %v5656 = vld [vmem:[%s5655] ss:$4 sm:$0xf]
    %v5658 = vperm.slane %v5656, 0
    %v5659 = vperm.slane %v5656, 1
    %v5660 = vperm.slane %v5656, 2
    %v5661 = vperm.slane %v5656, 3
    %v5674 = vunpack.c.l.b16 %v5647
    %v5675 = vunpack.c.h.b16 %v5647
    %v5676 = vunpack.c.l.b16 %v5648
    %v5677 = vunpack.c.h.b16 %v5648
    %v5678 = vunpack.c.l.b16 %v5649
    %v5679 = vunpack.c.h.b16 %v5649
    %v5680 = vunpack.c.l.b16 %v5650
    %v5681 = vunpack.c.h.b16 %v5650
    %v5682 = vunpack.c.l.b16 %v5651
    %v5683 = vunpack.c.h.b16 %v5651
    %v5684 = vunpack.c.l.b16 %v5652
    %v5685 = vunpack.c.h.b16 %v5652
    %v5686 = vunpack.c.l.b16 %v5653
    %v5687 = vunpack.c.h.b16 %v5653
    %v5688 = vunpack.c.l.b16 %v5654
    %v5689 = vunpack.c.h.b16 %v5654
    %v5690 = vpack.c.b16 %v5678, %v5674
    %v5691 = vpack.c.b16 %v5679, %v5675
    %v5692 = vpack.c.b16 %v5680, %v5676
    %v5693 = vpack.c.b16 %v5681, %v5677
    %v5694 = vpack.c.b16 %v5686, %v5682
    %v5695 = vpack.c.b16 %v5687, %v5683
    %v5696 = vpack.c.b16 %v5688, %v5684
    %v5697 = vpack.c.b16 %v5689, %v5685
    %5706 = vmatpush.bf16.msra.mxu0 0
    %5707 = vmatpush.bf16.msra.mxu0 0
    %5708 = vmatpush.bf16.msra.mxu0 0
    %5709 = vmatpush.bf16.msra.mxu0 0
    %5710 = vmatpush.bf16.msra.mxu0 0
    %5711 = vmatpush.bf16.msra.mxu0 0
    %5712 = vmatpush.bf16.msra.mxu0 %v5694
    %5713 = vmatpush.bf16.msra.mxu0 %v5690
    %5714 = vmatmul.bf16.gmra.mxu0 %v5046
    %v5715 = vpop.f32.mrf.mxu0
    %v5716 = vadd.f32 %v5658, %v5715
    %v5717 = vpop.f32.mrf.mxu0
    %5718 = vdwg.mxu0
    %5719 = vmatpush.bf16.msra.mxu0 0
    %5720 = vmatpush.bf16.msra.mxu0 0
    %5721 = vmatpush.bf16.msra.mxu0 0
    %5722 = vmatpush.bf16.msra.mxu0 0
    %5723 = vmatpush.bf16.msra.mxu0 0
    %5724 = vmatpush.bf16.msra.mxu0 0
    %5725 = vmatpush.bf16.msra.mxu0 %v5695
    %5726 = vmatpush.bf16.msra.mxu0 %v5691
    %5727 = vmatmul.bf16.gmra.mxu0 %v5046
    %v5728 = vpop.f32.mrf.mxu0
    %v5729 = vadd.f32 %v5659, %v5728
    %v5730 = vpop.f32.mrf.mxu0
    %5731 = vdwg.mxu0
    %5732 = vmatpush.bf16.msra.mxu0 0
    %5733 = vmatpush.bf16.msra.mxu0 0
    %5734 = vmatpush.bf16.msra.mxu0 0
    %5735 = vmatpush.bf16.msra.mxu0 0
    %5736 = vmatpush.bf16.msra.mxu0 0
    %5737 = vmatpush.bf16.msra.mxu0 0
    %5738 = vmatpush.bf16.msra.mxu0 %v5696
    %5739 = vmatpush.bf16.msra.mxu0 %v5692
    %5740 = vmatmul.bf16.gmra.mxu0 %v5046
    %v5741 = vpop.f32.mrf.mxu0
    %v5742 = vadd.f32 %v5660, %v5741
    %v5743 = vpop.f32.mrf.mxu0
    %5744 = vdwg.mxu0
    %5745 = vmatpush.bf16.msra.mxu0 0
    %5746 = vmatpush.bf16.msra.mxu0 0
    %5747 = vmatpush.bf16.msra.mxu0 0
    %5748 = vmatpush.bf16.msra.mxu0 0
    %5749 = vmatpush.bf16.msra.mxu0 0
    %5750 = vmatpush.bf16.msra.mxu0 0
    %5751 = vmatpush.bf16.msra.mxu0 %v5697
    %5752 = vmatpush.bf16.msra.mxu0 %v5693
    %5753 = vmatmul.bf16.gmra.mxu0 %v5046
    %v5754 = vpop.f32.mrf.mxu0
    %v5755 = vadd.f32 %v5661, %v5754
    %v5756 = vpop.f32.mrf.mxu0
    %5757 = vdwg.mxu0
    %v5758 = vmax.f32 %v5716, 0.0
    %v5759 = vmax.f32 %v5729, 0.0
    %v5760 = vmax.f32 %v5742, 0.0
    %v5761 = vmax.f32 %v5755, 0.0
    %v5762 = vld [vmem:[%s183 + $0x30] sm:$0xff]
    %v5763 = vld [vmem:[%s183 + $0x38] sm:$0xff]
    %v5764 = vld [vmem:[%s183 + $0x70] sm:$0xff]
    %v5765 = vld [vmem:[%s183 + $0x78] sm:$0xff]
    %v5766 = vld [vmem:[%s183 + $0xb0] sm:$0xff]
    %v5767 = vld [vmem:[%s183 + $0xb8] sm:$0xff]
    %v5768 = vld [vmem:[%s183 + $0xf0] sm:$0xff]
    %v5769 = vld [vmem:[%s183 + $0xf8] sm:$0xff]
    %v5770 = vpack.c.bf16 %v5758, %v5758
    %v5771 = vpack.c.bf16 %v5759, %v5759
    %v5772 = vpack.c.bf16 %v5760, %v5760
    %v5773 = vpack.c.bf16 %v5761, %v5761
    %v5782 = vunpack.c.l.b16 %v5762
    %v5783 = vunpack.c.h.b16 %v5762
    %v5784 = vunpack.c.l.b16 %v5763
    %v5785 = vunpack.c.h.b16 %v5763
    %v5786 = vunpack.c.l.b16 %v5764
    %v5787 = vunpack.c.h.b16 %v5764
    %v5788 = vunpack.c.l.b16 %v5765
    %v5789 = vunpack.c.h.b16 %v5765
    %v5790 = vunpack.c.l.b16 %v5766
    %v5791 = vunpack.c.h.b16 %v5766
    %v5792 = vunpack.c.l.b16 %v5767
    %v5793 = vunpack.c.h.b16 %v5767
    %v5794 = vunpack.c.l.b16 %v5768
    %v5795 = vunpack.c.h.b16 %v5768
    %v5796 = vunpack.c.l.b16 %v5769
    %v5797 = vunpack.c.h.b16 %v5769
    %v5798 = vpack.c.b16 %v5786, %v5782
    %v5799 = vpack.c.b16 %v5787, %v5783
    %v5800 = vpack.c.b16 %v5788, %v5784
    %v5801 = vpack.c.b16 %v5789, %v5785
    %v5802 = vpack.c.b16 %v5794, %v5790
    %v5803 = vpack.c.b16 %v5795, %v5791
    %v5804 = vpack.c.b16 %v5796, %v5792
    %v5805 = vpack.c.b16 %v5797, %v5793
    %5814 = vmatpush.bf16.xpose.msra.mxu0 0
    %5815 = vmatpush.bf16.xpose.msra.mxu0 0
    %5816 = vmatpush.bf16.xpose.msra.mxu0 0
    %5817 = vmatpush.bf16.xpose.msra.mxu0 0
    %5818 = vmatpush.bf16.xpose.msra.mxu0 0
    %5819 = vmatpush.bf16.xpose.msra.mxu0 0
    %5820 = vmatpush.bf16.xpose.msra.mxu0 %v5802
    %5821 = vmatpush.bf16.xpose.msra.mxu0 %v5798
    %5822 = vmatmul.bf16.gmra.mxu0 %v5770
    %v5823 = vpop.f32.mrf.mxu0
    %v5824 = vadd.f32 0.0, %v5823
    %v5825 = vpop.f32.mrf.mxu0
    %5826 = vdwg.mxu0
    %5827 = vmatpush.bf16.xpose.msra.mxu0 0
    %5828 = vmatpush.bf16.xpose.msra.mxu0 0
    %5829 = vmatpush.bf16.xpose.msra.mxu0 0
    %5830 = vmatpush.bf16.xpose.msra.mxu0 0
    %5831 = vmatpush.bf16.xpose.msra.mxu0 0
    %5832 = vmatpush.bf16.xpose.msra.mxu0 0
    %5833 = vmatpush.bf16.xpose.msra.mxu0 %v5803
    %5834 = vmatpush.bf16.xpose.msra.mxu0 %v5799
    %5835 = vmatmul.bf16.gmra.mxu0 %v5771
    %v5836 = vpop.f32.mrf.mxu0
    %v5837 = vadd.f32 %v5824, %v5836
    %v5838 = vpop.f32.mrf.mxu0
    %5839 = vdwg.mxu0
    %5840 = vmatpush.bf16.xpose.msra.mxu0 0
    %5841 = vmatpush.bf16.xpose.msra.mxu0 0
    %5842 = vmatpush.bf16.xpose.msra.mxu0 0
    %5843 = vmatpush.bf16.xpose.msra.mxu0 0
    %5844 = vmatpush.bf16.xpose.msra.mxu0 0
    %5845 = vmatpush.bf16.xpose.msra.mxu0 0
    %5846 = vmatpush.bf16.xpose.msra.mxu0 %v5804
    %5847 = vmatpush.bf16.xpose.msra.mxu0 %v5800
    %5848 = vmatmul.bf16.gmra.mxu0 %v5772
    %v5849 = vpop.f32.mrf.mxu0
    %v5850 = vadd.f32 %v5837, %v5849
    %v5851 = vpop.f32.mrf.mxu0
    %5852 = vdwg.mxu0
    %5853 = vmatpush.bf16.xpose.msra.mxu0 0
    %5854 = vmatpush.bf16.xpose.msra.mxu0 0
    %5855 = vmatpush.bf16.xpose.msra.mxu0 0
    %5856 = vmatpush.bf16.xpose.msra.mxu0 0
    %5857 = vmatpush.bf16.xpose.msra.mxu0 0
    %5858 = vmatpush.bf16.xpose.msra.mxu0 0
    %5859 = vmatpush.bf16.xpose.msra.mxu0 %v5805
    %5860 = vmatpush.bf16.xpose.msra.mxu0 %v5801
    %5861 = vmatmul.bf16.gmra.mxu0 %v5773
    %v5862 = vpop.f32.mrf.mxu0
    %v5863 = vadd.f32 %v5850, %v5862
    %v5864 = vpop.f32.mrf.mxu0
    %5865 = vdwg.mxu0
    %v5866 = vadd.f32 %v5646, %v5863
    %v5867 = vld [vmem:[#allocation5 + $0xa4] sm:$0x1]
    %v5868 = vperm.slane %v5867, 0
    %v5869 = vadd.f32 %v5866, %v5868
    %v5870 = vadd.f32 %v4980, %v5869
    %v5871 = vld [vmem:[#allocation5 + $0x9f] sm:$0x1]
    %v5872 = vld [vmem:[#allocation5 + $0xa0] sm:$0x1]
    %v5873 = vsel %vm704, %v5870, 0.0
    %5874 = vadd.xlane.f32.xlu0 %v5873
    %v5875 = vpop.xlane.xlu0 %5874
    %v5876 = vmul.f32 %v5875, %v714
    %v5877 = vsub.f32 %v5870, %v5876
    %v5878 = vmul.f32 %v5877, %v5877
    %v5879 = vsel %vm704, %v5878, 0.0
    %5880 = vadd.xlane.f32.xlu0 %v5879
    %v5881 = vpop.xlane.xlu0 %5880
    %v5882 = vmul.f32 %v5881, %v714
    %v5883 = vadd.f32 %v5882, 1e-05
    %v5884 = vrsqrt.pop %v5883
    %v5885 = vmul.f32 %v5884, %v5883
    %v5886 = vmul.f32 %v5885, %v5884
    %v5887 = vmul.f32 0.5, %v5886
    %v5888 = vsub.f32 1.5, %v5887
    %v5889 = vmul.f32 %v5884, %v5888
    %vm5890 = vweird.f32 %v5883
    %vm5891 = vweird.f32 %v5884
    %vm5892 = vmor %vm5890, %vm5891
    %v5893 = vsel %vm5892, %v5884, %v5889
    %v5894 = vmul.f32 %v5877, %v5893
    %v5895 = vperm.slane %v5871, 0
    %v5896 = vmul.f32 %v5894, %v5895
    %v5897 = vperm.slane %v5872, 0
    %v5898 = vadd.f32 %v5896, %v5897
    %v5900 = vsel %vm253, %v5898, 0
    %5902 = vmatpush.xpose.msra.mxu0 0.0
    %5903 = vmatpush.xpose.msra.mxu0 0.0
    %5904 = vmatpush.xpose.msra.mxu0 0.0
    %5905 = vmatpush.xpose.msra.mxu0 0.0
    %5906 = vmatpush.xpose.msra.mxu0 0.0
    %5907 = vmatpush.xpose.msra.mxu0 0.0
    %5908 = vmatpush.xpose.msra.mxu0 0.0
    %5909 = vmatpush.xpose.msra.mxu0 0.0
    %5910 = vmatpush.xpose.msra.mxu0 0.0
    %5911 = vmatpush.xpose.msra.mxu0 0.0
    %5912 = vmatpush.xpose.msra.mxu0 0.0
    %5913 = vmatpush.xpose.msra.mxu0 0.0
    %5914 = vmatpush.xpose.msra.mxu0 0.0
    %5915 = vmatpush.xpose.msra.mxu0 0.0
    %5916 = vmatpush.xpose.msra.mxu0 0.0
    %5917 = vmatpush.xpose.msra.mxu0 %v3220
    %5918 = vmatmul.f32.gmra.mxu0 %v5900
    %v5919 = vpop.f32.mrf.mxu0
    %v5920 = vadd.f32 0.0, %v5919
    %5921 = vdwg.mxu0
    %v5922 = vmul.f32 %v5920, 0.17677669
    %v5923 = vsel %vm527, %v5922, -inf
    %5924 = vmax.xlane.f32.xlu0 %v5923
    %v5925 = vpop.xlane.xlu0 %5924
    %v5926 = vsub.f32 %v5922, %v5925
    %v5927 = vmul.f32 %v5926, 1.442695
    %v5928 = vpow.pop %v5927
    %v5929 = vsel %vm527, %v5928, 0.0
    %5930 = vadd.xlane.f32.xlu0 %v5929
    %v5931 = vpop.xlane.xlu0 %5930
    %v5932 = vrcp.pop %v5931
    %v5933 = vmul.f32 %v5931, %v5932
    %v5934 = vsub.f32 1.0, %v5933
    %v5935 = vmul.f32 %v5932, %v5934
    %v5936 = vadd.f32 %v5932, %v5935
    %vm5937 = vweird.f32 %v5931
    %vm5938 = vweird.f32 %v5932
    %vm5939 = vmor %vm5937, %vm5938
    %v5940 = vsel %vm5939, %v5932, %v5936
    %v5941 = vand.u32 2147483647, %v5931
    %vm5942 = vcmp.eq.f32.partialorder %v5941, 8.507059e+37
    %v5943 = vand.u32 %v5931, 2147483648
    %v5944 = vor.u32 1.1754944e-38, %v5943
    %v5945 = vsel %vm5942, %v5944, %v5940
    %v5946 = vmul.f32 %v5928, %v5945
    %5947 = vst.msk [vmem:[#allocation11] sm:$0x3f] %vm527, %v5946
    // Predicated region
    $region74: #{tadn_forward.1} parent=1 // pred_check
      _
    $region75: #{tadn_forward.1} parent=1 // pred_check_branch
      %5949 = sbr.rel (0) target = $region77
    $region76: #{tadn_forward.1} parent=1 // pred_region
      %5951 = vsyncadd [#allocation7], 0
      %s5953 = sshll.u32 [#allocation11], 4
      %s5954 = int_to_ptr.vmem [resolvable:$true] %s5953
      %s5955 = sshll.u32 %s9, 4
      %s5956 = int_to_ptr.hbm [resolvable:$true] %s5955
      %5958 = dma.vmem_to_hbm [thread:$0]  %s5954, 128, %s5956, [#allocation7]
    $region77: #{tadn_forward.1} parent=1 // pred_fallthru
      _
    // Predicated region
    $region78: #{tadn_forward.1} parent=1 // pred_check
      _
    $region79: #{tadn_forward.1} parent=1 // pred_check_branch
      %5960 = sbr.rel (0) target = $region81
    $region80: #{tadn_forward.1} parent=1 // pred_region
      %5962 = dma.done [#allocation7], 128
    $region81: #{tadn_forward.1} parent=1 // pred_fallthru
      _
    %5963 = vsyncpa [#allocation6], 1
    %5964 = vsyncpa [#allocation9], 1
    %5965 = vsyncpa [#allocation7], 1
  %5966 = vsyncmov [#allocation4]
  %s5967 = vpop.sfrf %5966
  %p5968 = scmp.eq.s32.totalorder %s5967, 0
  %p5969 = pneg %p5968
  %5971 = shalt.err (%p5969)
  %s5972 = scalar_lea.sflag [#allocation4], 1
  %5973 = vsyncmov %s5972
  %s5974 = vpop.sfrf %5973
  %p5975 = scmp.eq.s32.totalorder %s5974, 0
  %p5976 = pneg %p5975
  %5978 = shalt.err (%p5976)
  %s5979 = scalar_lea.sflag [#allocation4], 2
  %5980 = vsyncmov %s5979
  %s5981 = vpop.sfrf %5980
  %p5982 = scmp.eq.s32.totalorder %s5981, 0
  %p5983 = pneg %p5982
  %5985 = shalt.err (%p5983)
  %s5986 = scalar_lea.sflag [#allocation4], 3
  %5987 = vsyncmov %s5986
  %s5988 = vpop.sfrf %5987
  %p5989 = scmp.eq.s32.totalorder %s5988, 0
  %p5990 = pneg %p5989
  %5992 = shalt.err (%p5990)
  %s5993 = scalar_lea.sflag [#allocation4], 4
  %5994 = vsyncmov %s5993
  %s5995 = vpop.sfrf %5994
  %p5996 = scmp.eq.s32.totalorder %s5995, 0
  %p5997 = pneg %p5996
  %5999 = shalt.err (%p5997)
  %s6000 = scalar_lea.sflag [#allocation4], 5
  %6001 = vsyncmov %s6000
  %s6002 = vpop.sfrf %6001
  %p6003 = scmp.eq.s32.totalorder %s6002, 0
  %p6004 = pneg %p6003
  %6006 = shalt.err (%p6004)
  %s6007 = scalar_lea.sflag [#allocation4], 6
  %6008 = vsyncmov %s6007
  %s6009 = vpop.sfrf %6008
  %p6010 = scmp.eq.s32.totalorder %s6009, 0
  %p6011 = pneg %p6010
  %6013 = shalt.err (%p6011)
  %s6014 = scalar_lea.sflag [#allocation4], 7
  %6015 = vsyncmov %s6014
  %s6016 = vpop.sfrf %6015
  %p6017 = scmp.eq.s32.totalorder %s6016, 0
  %p6018 = pneg %p6017
  %6020 = shalt.err (%p6018)

</llo_original>
